<compile_context>
chip_gen: v7x
topology: tpu7x:2x2x1
jax: 0.10.0
libtpu: 0.0.40
codegen_flags: <defaults>
</compile_context>

<pallas_src>
import functools

import jax
import jax.numpy as jnp
from jax import lax
from jax.experimental import pallas as pl
from jax.experimental.pallas import tpu as pltpu

_EPS = 1e-5


def _tpu_vmem_bytes():
    try:
        return int(pltpu.get_tpu_info().vmem_capacity_bytes)
    except Exception:  # no TPU info available at trace time -> conservative
        return 64 * 1024 * 1024  # v7x per-TensorCore VMEM


_VMEM_BYTES = _tpu_vmem_bytes()
# Scoped-VMEM limit: above the 16/32 MiB defaults, safely below physical VMEM.
_VMEM_LIMIT_BYTES = int(min(_VMEM_BYTES * 3 // 4, 100 * 1024 * 1024))
# Per-activation-tile byte budget for the row-tiled (M, C) kernels: big enough
# for >=512-row tiles at realistic C (HBM roofline), capped per generation.
_TILE_CAP_BYTES = int(max(2 * 1024 * 1024,
                          min(8 * 1024 * 1024, _VMEM_BYTES // 12)))


def _compiler_params():
    return pltpu.CompilerParams(
        dimension_semantics=("parallel",),
        vmem_limit_bytes=_VMEM_LIMIT_BYTES,
    )


def _pick_tile_m(m, row_bytes, tile_m=None):
    """Row-tile size for the (M, C)-tiled kernels.

    Prefers large multiples of 256 (fills the 2x256x256 MXU on v6e/v7x and
    amortizes the ~0.35us per-grid-step overhead), then 128 (v5e 4x128x128
    MXU), then smaller powers of two.  The byte cap is derived from detected
    VMEM so v7x (64 MiB) gets smaller tiles than v5e/v6e (128 MiB).
    """
    if tile_m is not None:
        if m % tile_m != 0:
            raise ValueError(f"tile_m={tile_m} must divide M={m}")
        return tile_m
    cap = max(8, _TILE_CAP_BYTES // max(row_bytes, 1))
    for cand in range(4096, 255, -256):          # multiples of 256, largest first
        if cand <= cap and m % cand == 0:
            return cand
    for cand in (128, 64, 32, 16, 8):
        if cand <= cap and m % cand == 0:
            return cand
    # Fallback: largest multiple-of-8 divisor of M that fits the cap, so
    # awkward M still gets pipelined instead of becoming one giant block.
    start = max(8, min(m, cap) // 8 * 8)
    for cand in range(start, 7, -8):
        if m % cand == 0:
            return cand
    # TODO(synk): pad M up to a multiple of 256 (with masked stats) instead of
    # falling back to a single un-tiled block for pathological M.
    return m


# ----------------------------- Pallas kernels ------------------------------ #

def _matmul_stats_kernel(x_ref, w_ref, y_ref, st_ref, *, cdt):
    # y = x @ w on the MXU (cdt inputs, f32 accumulate).  Per-tile sum /
    # sum-of-squares are emitted so global batch-norm stats stay exact across
    # M tiles even though the stored activation may be bf16.
    y = jnp.dot(x_ref[...].astype(cdt), w_ref[...],
                preferred_element_type=jnp.float32)
    y_ref[...] = y.astype(y_ref.dtype)
    st_ref[0, 0:1, :] = jnp.sum(y, axis=0, keepdims=True)
    st_ref[0, 1:2, :] = jnp.sum(y * y, axis=0, keepdims=True)


def _bnrelu_matmul_stats_kernel(x_ref, scale_ref, shift_ref, w_ref,
                                y_ref, st_ref, *, cdt):
    # Previous stage's BN (precomputed per-channel scale/shift) + ReLU fused
    # into this stage's matmul; the stored activation (possibly bf16) is
    # upcast to f32 for the affine + ReLU, then fed to the MXU in cdt.
    a = jnp.maximum(
        x_ref[...].astype(jnp.float32) * scale_ref[...] + shift_ref[...], 0.0)
    y = jnp.dot(a.astype(cdt), w_ref[...], preferred_element_type=jnp.float32)
    y_ref[...] = y.astype(y_ref.dtype)
    st_ref[0, 0:1, :] = jnp.sum(y, axis=0, keepdims=True)
    st_ref[0, 1:2, :] = jnp.sum(y * y, axis=0, keepdims=True)


def _conv3x3_bnrelu_stats_kernel(x_ref, w_ref, scale_ref, shift_ref,
                                 y_ref, st_ref, apad_ref, *, dilation, cdt):
    # One image per grid step: BN+ReLU the (H, W, Cin) block, zero-pad it in a
    # VMEM scratch (halo strips only; the interior is fully overwritten so no
    # cross-step scratch state is relied upon), then accumulate the 3x3
    # (dilated) conv as 9 MXU matmuls.  Each tap shift is realized as an XLU
    # roll of the flattened padded buffer + aligned leading slice instead of a
    # sublane-unaligned slab copy.
    d = dilation
    _, H, W, cin = x_ref.shape
    cout = w_ref.shape[2]
    Hp, Wp = H + 2 * d, W + 2 * d

    scale = scale_ref[...].reshape(1, 1, cin)
    shift = shift_ref[...].reshape(1, 1, cin)
    a = jnp.maximum(x_ref[0].astype(jnp.float32) * scale + shift, 0.0)

    # Halo-only zeroing (cheap) + interior store.
    apad_ref[0:d, :, :] = jnp.zeros((d, Wp, cin), jnp.float32)
    apad_ref[d + H:Hp, :, :] = jnp.zeros((d, Wp, cin), jnp.float32)
    apad_ref[d:d + H, 0:d, :] = jnp.zeros((H, d, cin), jnp.float32)
    apad_ref[d:d + H, d + W:Wp, :] = jnp.zeros((H, d, cin), jnp.float32)
    apad_ref[d:d + H, d:d + W, :] = a

    # Flatten once.  For output (h, w) and tap (i, j) the padded read sits at
    # flat[(h*Wp + w) + (i*d*Wp + j*d)], so each tap is a roll by -offset of
    # the flattened buffer followed by a slice starting at row 0.  The extra
    # pad columns (w in [W, Wp)) produce garbage rows that are discarded.
    flat = apad_ref[...].reshape(Hp * Wp, cin)
    total = Hp * Wp
    rows = H * Wp
    acc = jnp.zeros((rows, cout), jnp.float32)
    for i in range(3):
        for j in range(3):
            off = i * d * Wp + j * d
            shifted = flat if off == 0 else pltpu.roll(
                flat, shift=total - off, axis=0)
            acc = acc + jnp.dot(shifted[:rows, :].astype(cdt),
                                w_ref[i * 3 + j],
                                preferred_element_type=jnp.float32)

    yv = acc.reshape(H, Wp, cout)[:, :W, :]           # drop pad columns
    y_ref[0] = yv.astype(y_ref.dtype)
    st_ref[0, 0:1, :] = jnp.sum(yv, axis=(0, 1)).reshape(1, cout)
    st_ref[0, 1:2, :] = jnp.sum(yv * yv, axis=(0, 1)).reshape(1, cout)


def _bn_add_relu_kernel(y_ref, res_ref, scale_ref, shift_ref, o_ref):
    # Final BN (precomputed scale/shift) + identity residual + ReLU, all f32.
    y = y_ref[...].astype(jnp.float32)
    r = res_ref[...].astype(jnp.float32)
    o_ref[...] = jnp.maximum(y * scale_ref[...] + shift_ref[...] + r, 0.0)


# ----------------------------- kernel wrappers ------------------------------ #

def _matmul_bn_stats(x2d, w, scale=None, shift=None, *, cdt, out_dtype,
                     tile_m=None):
    """(M, K) @ (K, C) with optional fused input-BN+ReLU; returns (y, stats)."""
    m, k = x2d.shape
    cout = w.shape[1]
    row_bytes = k * x2d.dtype.itemsize + cout * jnp.dtype(out_dtype).itemsize
    tm = _pick_tile_m(m, row_bytes, tile_m)
    n_tiles = m // tm

    x_spec = pl.BlockSpec((tm, k), lambda i: (i, 0))
    w_spec = pl.BlockSpec((k, cout), lambda i: (0, 0))
    ch_spec = pl.BlockSpec((1, k), lambda i: (0, 0))
    if scale is None:
        kernel = functools.partial(_matmul_stats_kernel, cdt=cdt)
        in_specs = [x_spec, w_spec]
        args = (x2d, w)
    else:
        kernel = functools.partial(_bnrelu_matmul_stats_kernel, cdt=cdt)
        in_specs = [x_spec, ch_spec, ch_spec, w_spec]
        args = (x2d, scale, shift, w)

    cost = pl.CostEstimate(
        flops=2 * m * k * cout,
        transcendentals=0,
        bytes_accessed=(x2d.size * x2d.dtype.itemsize
                        + w.size * w.dtype.itemsize
                        + m * cout * jnp.dtype(out_dtype).itemsize))

    return pl.pallas_call(
        kernel,
        grid=(n_tiles,),
        in_specs=in_specs,
        out_specs=(pl.BlockSpec((tm, cout), lambda i: (i, 0)),
                   pl.BlockSpec((1, 2, cout), lambda i: (i, 0, 0))),
        out_shape=(jax.ShapeDtypeStruct((m, cout), out_dtype),
                   jax.ShapeDtypeStruct((n_tiles, 2, cout), jnp.float32)),
        compiler_params=_compiler_params(),
        cost_estimate=cost,
    )(*args)


def _conv3x3_bn_relu_stats(x_img, w9, scale, shift, *, dilation, cdt,
                           out_dtype):
    """Fused bn+relu -> 3x3 (dilated) conv, gridded over images; no im2col."""
    # TODO(synk): for large H*W*C on v7x (64 MiB VMEM), tile H into strips
    # with a d-row halo and grid over (N, n_strips) so both TensorCores get
    # work even at batch 1-2.
    n, h, w, cin = x_img.shape
    cout = w9.shape[2]
    d = dilation
    kernel = functools.partial(_conv3x3_bnrelu_stats_kernel,
                               dilation=d, cdt=cdt)
    cost = pl.CostEstimate(
        flops=2 * n * h * w * 9 * cin * cout,
        transcendentals=0,
        bytes_accessed=(x_img.size * x_img.dtype.itemsize
                        + w9.size * w9.dtype.itemsize
                        + n * h * w * cout * jnp.dtype(out_dtype).itemsize))

    return pl.pallas_call(
        kernel,
        grid=(n,),
        in_specs=[
            pl.BlockSpec((1, h, w, cin), lambda i: (i, 0, 0, 0)),
            pl.BlockSpec((9, cin, cout), lambda i: (0, 0, 0)),
            pl.BlockSpec((1, cin), lambda i: (0, 0)),
            pl.BlockSpec((1, cin), lambda i: (0, 0)),
        ],
        out_specs=(pl.BlockSpec((1, h, w, cout), lambda i: (i, 0, 0, 0)),
                   pl.BlockSpec((1, 2, cout), lambda i: (i, 0, 0))),
        out_shape=(jax.ShapeDtypeStruct((n, h, w, cout), out_dtype),
                   jax.ShapeDtypeStruct((n, 2, cout), jnp.float32)),
        scratch_shapes=[pltpu.VMEM((h + 2 * d, w + 2 * d, cin), jnp.float32)],
        compiler_params=_compiler_params(),
        cost_estimate=cost,
    )(x_img, w9, scale, shift)


def _bn_add_relu(y2d, res2d, scale, shift, *, tile_m=None):
    m, c = y2d.shape
    row_bytes = c * (y2d.dtype.itemsize + res2d.dtype.itemsize + 4)
    tm = _pick_tile_m(m, row_bytes, tile_m)
    n_tiles = m // tm
    cost = pl.CostEstimate(flops=3 * m * c, transcendentals=0,
                           bytes_accessed=m * row_bytes)
    return pl.pallas_call(
        _bn_add_relu_kernel,
        grid=(n_tiles,),
        in_specs=[pl.BlockSpec((tm, c), lambda i: (i, 0)),
                  pl.BlockSpec((tm, c), lambda i: (i, 0)),
                  pl.BlockSpec((1, c), lambda i: (0, 0)),
                  pl.BlockSpec((1, c), lambda i: (0, 0))],
        out_specs=pl.BlockSpec((tm, c), lambda i: (i, 0)),
        out_shape=jax.ShapeDtypeStruct((m, c), jnp.float32),
        compiler_params=_compiler_params(),
        cost_estimate=cost,
    )(y2d, res2d, scale, shift)


def _bn_scale_shift(stats, gamma, beta, count):
    """Reduce per-tile (sum, sumsq) -> per-channel BN scale/shift (train mode)."""
    s = jnp.sum(stats[:, 0, :], axis=0)
    ss = jnp.sum(stats[:, 1, :], axis=0)
    mean = s / count
    var = jnp.maximum(ss / count - mean * mean, 0.0)   # biased variance
    # TODO(synk): E[x^2]-E[x]^2 in f32 can lose precision for very large M;
    # switch to a two-pass / Welford reduction if BN fidelity matters.
    scale = gamma * lax.rsqrt(var + _EPS)
    shift = beta - mean * scale
    return scale.reshape(1, -1), shift.reshape(1, -1)


# --------------------------------- forward --------------------------------- #

def init_params(key, inplanes, planes):
    expansion = 4
    ks = jax.random.split(key, 8)
    s = 0.1
    return {
        # conv weights in PyTorch OIHW layout
        "w1":  s * jax.random.normal(ks[0], (planes, inplanes, 1, 1), jnp.float32),
        "w2":  s * jax.random.normal(ks[1], (planes, planes, 3, 3), jnp.float32),
        "w2d": s * jax.random.normal(ks[2], (planes, planes, 3, 3), jnp.float32),
        "w3":  s * jax.random.normal(ks[3], (planes * expansion, planes, 1, 1), jnp.float32),
        "g1": 1.0 + s * jax.random.normal(ks[4], (planes,), jnp.float32),
        "b1": s * jax.random.normal(ks[5], (planes,), jnp.float32),
        "g2": jnp.ones((planes,), jnp.float32),
        "b2": jnp.zeros((planes,), jnp.float32),
        "g3": 1.0 + s * jax.random.normal(ks[6], (planes * expansion,), jnp.float32),
        "b3": s * jax.random.normal(ks[7], (planes * expansion,), jnp.float32),
    }


def bottleneck_forward_nhwc(x_nhwc, params, pd=None,
                            compute_dtype=jnp.bfloat16, tile_m=None):
    """Bottleneck.forward (stride=1, downsample=None) on NHWC input."""
    # TODO(synk): stride > 1 and the optional `downsample` submodule are not
    # implemented (this configuration uses stride=1, downsample=None).
    n, h, w, cin = x_nhwc.shape
    planes = params["w1"].shape[0]
    cexp = 4 * planes
    assert cin == cexp, "identity residual requires inplanes == planes * expansion"
    cdt = compute_dtype
    # Intermediate activations stored in the compute dtype (bf16 by default)
    # to halve HBM traffic on the memory-bound stages; stats stay f32.
    act_dt = cdt

    x = x_nhwc.astype(jnp.float32)
    m = n * h * w
    x2d = x.reshape(m, cin)

    # TODO(synk): when planes < 128, pad channel dims to a lane-dense multiple
    # of 128 (256 on v6e/v7x) to avoid masked partial stores / MXU underfill.

    # conv1 (1x1) -> per-tile stats; bn1+relu is deferred into the conv2 kernel.
    w1 = params["w1"].reshape(planes, cin).T.astype(cdt)            # (Cin, P)
    y1, st1 = _matmul_bn_stats(x2d, w1, cdt=cdt, out_dtype=act_dt,
                               tile_m=tile_m)
    scale1, shift1 = _bn_scale_shift(st1, params["g1"], params["b1"], float(m))

    # conv2 (3x3, pad=1) or pdconv2 (3x3, pad=pd, dilation=pd), bn1+relu fused.
    dil = 1 if pd is None else int(pd)
    w3x3 = params["w2"] if pd is None else params["w2d"]
    w2 = jnp.transpose(w3x3, (2, 3, 1, 0)).reshape(9, planes, planes).astype(cdt)
    y2, st2 = _conv3x3_bn_relu_stats(y1.reshape(n, h, w, planes), w2,
                                     scale1, shift1, dilation=dil, cdt=cdt,
                                     out_dtype=act_dt)
    scale2, shift2 = _bn_scale_shift(st2, params["g2"], params["b2"], float(m))

    # conv3 (1x1) with bn2+relu fused at the input.
    w3 = params["w3"].reshape(cexp, planes).T.astype(cdt)           # (P, 4P)
    y3, st3 = _matmul_bn_stats(y2.reshape(m, planes), w3,
                               scale=scale2, shift=shift2,
                               cdt=cdt, out_dtype=act_dt, tile_m=tile_m)
    scale3, shift3 = _bn_scale_shift(st3, params["g3"], params["b3"], float(m))

    # bn3 + identity residual + relu.
    out2d = _bn_add_relu(y3, x2d, scale3, shift3, tile_m=tile_m)
    return out2d.reshape(n, h, w, cexp)


def bottleneck_forward(x_nchw, params, pd=None,
                       compute_dtype=jnp.bfloat16, tile_m=None):
    """NCHW wrapper for parity with the PyTorch module.  Prefer the NHWC entry
    point when the caller can supply NHWC: each boundary transpose here is a
    full HBM read+write of the activation."""
    x_nhwc = jnp.transpose(x_nchw, (0, 2, 3, 1))
    out = bottleneck_forward_nhwc(x_nhwc, params, pd=pd,
                                  compute_dtype=compute_dtype, tile_m=tile_m)
    return jnp.transpose(out, (0, 3, 1, 2))


# ------------------------- pure-JAX reference check ------------------------- #

def _ref_conv(x_nhwc, w_oihw, dilation=1, padding=0):
    w_hwio = jnp.transpose(w_oihw, (2, 3, 1, 0))
    return lax.conv_general_dilated(
        x_nhwc, w_hwio, window_strides=(1, 1),
        padding=[(padding, padding), (padding, padding)],
        rhs_dilation=(dilation, dilation),
        dimension_numbers=("NHWC", "HWIO", "NHWC"))


def _ref_bn(y_nhwc, gamma, beta):
    mean = jnp.mean(y_nhwc, axis=(0, 1, 2), keepdims=True)
    var = jnp.mean((y_nhwc - mean) ** 2, axis=(0, 1, 2), keepdims=True)
    return (y_nhwc - mean) * lax.rsqrt(var + _EPS) * gamma + beta


def reference_forward(x_nchw, params, pd=None):
    x = jnp.transpose(x_nchw, (0, 2, 3, 1)).astype(jnp.float32)
    out = jax.nn.relu(_ref_bn(_ref_conv(x, params["w1"]), params["g1"], params["b1"]))
    if pd is None:
        out = _ref_conv(out, params["w2"], dilation=1, padding=1)
    else:
        out = _ref_conv(out, params["w2d"], dilation=pd, padding=pd)
    out = jax.nn.relu(_ref_bn(out, params["g2"], params["b2"]))
    out = _ref_bn(_ref_conv(out, params["w3"]), params["g3"], params["b3"])
    out = jax.nn.relu(out + x)
    return jnp.transpose(out, (0, 3, 1, 2))


# ---------------------------------- main ------------------------------------ #

if __name__ == "__main__":
    key = jax.random.PRNGKey(0)
    kx, kp = jax.random.split(key)

    n, planes = 2, 4
    inplanes = planes * 4          # == planes * expansion, so identity add is valid
    h = w = 16                     # M = N*H*W = 512

    x = jax.random.normal(kx, (n, inplanes, h, w), dtype=jnp.float32)
    params = init_params(kp, inplanes, planes)

    fwd = jax.jit(bottleneck_forward,
                  static_argnames=("pd", "compute_dtype", "tile_m"))

    # f32 MXU path with tile_m=128 forced -> 4 M-tiles, exercising the
    # cross-tile batch-norm statistics reduction.  Tight tolerance.
    out = jax.block_until_ready(
        fwd(x, params, pd=None, compute_dtype=jnp.float32, tile_m=128))
    ref = reference_forward(x, params, pd=None)
    assert out.shape == (n, 4 * planes, h, w)
    assert float(jnp.max(jnp.abs(out - ref))) < 2e-3

    # dilated branch (pd=2 -> pdconv2), f32 path.
    out_d = jax.block_until_ready(
        fwd(x, params, pd=2, compute_dtype=jnp.float32, tile_m=128))
    ref_d = reference_forward(x, params, pd=2)
    assert float(jnp.max(jnp.abs(out_d - ref_d))) < 2e-3

    # default path: bf16 MXU inputs AND bf16 intermediate storage
    # (f32 accumulation, f32 BN/ReLU) vs f32 reference.
    out_bf = jax.block_until_ready(fwd(x, params, pd=None))
    assert float(jnp.max(jnp.abs(out_bf - ref))) < 0.25

    print("KERNEL_OK")
</pallas_src>

<mosaic_0001>
module attributes {stable_mosaic.version = 11 : i64} {
  func.func @_matmul_stats_kernel(%arg0: i32, %arg1: memref<128x16xf32, #tpu.memory_space<vmem>>, %arg2: memref<16x4xf32, #tpu.memory_space<vmem>>, %arg3: memref<128x4xf32, #tpu.memory_space<vmem>>, %arg4: memref<1x2x4xf32, #tpu.memory_space<vmem>>) attributes {dimension_semantics = [#tpu.dimension_semantics<parallel>], iteration_bounds = array<i64: 4>, scalar_prefetch = 0 : i64, scratch_operands = 0 : i64, tpu.core_type = #tpu.core_type<tc>, window_params = [{transform_indices = @transform_0, window_bounds = array<i64: 128, 16>}, {pipeline_mode = #tpu.pipeline_mode<synchronous>, transform_indices = @transform_1, window_bounds = array<i64: 16, 4>}, {transform_indices = @transform_2, window_bounds = array<i64: 128, 4>}, {transform_indices = @transform_3, window_bounds = array<i64: 1, 2, 4>}]} {
    %c0 = arith.constant 0 : index
    %c0_0 = arith.constant 0 : index
    %0 = vector.load %arg1[%c0, %c0_0] : memref<128x16xf32, #tpu.memory_space<vmem>>, vector<128x16xf32>
    %c0_1 = arith.constant 0 : index
    %c0_2 = arith.constant 0 : index
    %1 = vector.load %arg2[%c0_1, %c0_2] : memref<16x4xf32, #tpu.memory_space<vmem>>, vector<16x4xf32>
    %cst = arith.constant dense<0.000000e+00> : vector<128x4xf32>
    %2 = tpu.matmul %0, %1, %cst {dimension_numbers = #tpu.dot_dimension_numbers<[1], [0], [0], [1], [0, 0, 1, 1], [], []>} : vector<128x16xf32>, vector<16x4xf32>, vector<128x4xf32> -> vector<128x4xf32>
    %c0_3 = arith.constant 0 : index
    %c0_4 = arith.constant 0 : index
    %3 = vector.load %arg3[%c0_3, %c0_4] : memref<128x4xf32, #tpu.memory_space<vmem>>, vector<128x4xf32>
    tpu.vector_store %arg3[%c0_3, %c0_4], %2 {strides = array<i32>} : memref<128x4xf32, #tpu.memory_space<vmem>>, vector<128x4xf32>,
    %cst_5 = arith.constant dense<0.000000e+00> : vector<4xf32>
    %4 = vector.multi_reduction <add>, %2, %cst_5 [0] : vector<128x4xf32> to vector<4xf32>
    %5 = vector.shape_cast %4 : vector<4xf32> to vector<1x4xf32>
    %c0_6 = arith.constant 0 : index
    %c0_7 = arith.constant 0 : index
    %c0_8 = arith.constant 0 : index
    %6 = vector.load %arg4[%c0_6, %c0_7, %c0_8] : memref<1x2x4xf32, #tpu.memory_space<vmem>>, vector<1x1x4xf32>
    %7 = vector.shape_cast %6 : vector<1x1x4xf32> to vector<1x4xf32>
    %8 = vector.shape_cast %5 : vector<1x4xf32> to vector<1x1x4xf32>
    tpu.vector_store %arg4[%c0_6, %c0_7, %c0_8], %8 {strides = array<i32>} : memref<1x2x4xf32, #tpu.memory_space<vmem>>, vector<1x1x4xf32>,
    %9 = arith.mulf %2, %2 : vector<128x4xf32>
    %cst_9 = arith.constant dense<0.000000e+00> : vector<4xf32>
    %10 = vector.multi_reduction <add>, %9, %cst_9 [0] : vector<128x4xf32> to vector<4xf32>
    %11 = vector.shape_cast %10 : vector<4xf32> to vector<1x4xf32>
    %c0_10 = arith.constant 0 : index
    %c1 = arith.constant 1 : index
    %c0_11 = arith.constant 0 : index
    %12 = vector.load %arg4[%c0_10, %c1, %c0_11] : memref<1x2x4xf32, #tpu.memory_space<vmem>>, vector<1x1x4xf32>
    %13 = vector.shape_cast %12 : vector<1x1x4xf32> to vector<1x4xf32>
    %14 = vector.shape_cast %11 : vector<1x4xf32> to vector<1x1x4xf32>
    tpu.vector_store %arg4[%c0_10, %c1, %c0_11], %14 {strides = array<i32>} : memref<1x2x4xf32, #tpu.memory_space<vmem>>, vector<1x1x4xf32>,
    return
  }
  func.func @transform_0(%arg0: i32) -> (i32, i32) {
    %c0_i32 = arith.constant 0 : i32
    %c0_i32_0 = arith.constant 0 : i32
    return %arg0, %c0_i32 : i32, i32
  }
  func.func @transform_1(%arg0: i32) -> (i32, i32) {
    %c0_i32 = arith.constant 0 : i32
    %c0_i32_0 = arith.constant 0 : i32
    %c0_i32_1 = arith.constant 0 : i32
    return %c0_i32, %c0_i32_0 : i32, i32
  }
  func.func @transform_2(%arg0: i32) -> (i32, i32) {
    %c0_i32 = arith.constant 0 : i32
    %c0_i32_0 = arith.constant 0 : i32
    return %arg0, %c0_i32 : i32, i32
  }
  func.func @transform_3(%arg0: i32) -> (i32, i32, i32) {
    %c0_i32 = arith.constant 0 : i32
    %c0_i32_0 = arith.constant 0 : i32
    %c0_i32_1 = arith.constant 0 : i32
    return %arg0, %c0_i32, %c0_i32_0 : i32, i32, i32
  }
}

module attributes {stable_mosaic.version = 11 : i64} {
  func.func @_bnrelu_matmul_stats_kernel(%arg0: i32, %arg1: memref<128x4xf32, #tpu.memory_space<vmem>>, %arg2: memref<1x4xf32, #tpu.memory_space<vmem>>, %arg3: memref<1x4xf32, #tpu.memory_space<vmem>>, %arg4: memref<4x16xf32, #tpu.memory_space<vmem>>, %arg5: memref<128x16xf32, #tpu.memory_space<vmem>>, %arg6: memref<1x2x16xf32, #tpu.memory_space<vmem>>) attributes {dimension_semantics = [#tpu.dimension_semantics<parallel>], iteration_bounds = array<i64: 4>, scalar_prefetch = 0 : i64, scratch_operands = 0 : i64, tpu.core_type = #tpu.core_type<tc>, window_params = [{transform_indices = @transform_0, window_bounds = array<i64: 128, 4>}, {pipeline_mode = #tpu.pipeline_mode<synchronous>, transform_indices = @transform_1, window_bounds = array<i64: 1, 4>}, {pipeline_mode = #tpu.pipeline_mode<synchronous>, transform_indices = @transform_2, window_bounds = array<i64: 1, 4>}, {pipeline_mode = #tpu.pipeline_mode<synchronous>, transform_indices = @transform_3, window_bounds = array<i64: 4, 16>}, {transform_indices = @transform_4, window_bounds = array<i64: 128, 16>}, {transform_indices = @transform_5, window_bounds = array<i64: 1, 2, 16>}]} {
    %c0 = arith.constant 0 : index
    %c0_0 = arith.constant 0 : index
    %0 = vector.load %arg1[%c0, %c0_0] : memref<128x4xf32, #tpu.memory_space<vmem>>, vector<128x4xf32>
    %c0_1 = arith.constant 0 : index
    %c0_2 = arith.constant 0 : index
    %1 = vector.load %arg2[%c0_1, %c0_2] : memref<1x4xf32, #tpu.memory_space<vmem>>, vector<1x4xf32>
    %2 = vector.broadcast %1 : vector<1x4xf32> to vector<128x4xf32>
    %3 = arith.mulf %0, %2 : vector<128x4xf32>
    %c0_3 = arith.constant 0 : index
    %c0_4 = arith.constant 0 : index
    %4 = vector.load %arg3[%c0_3, %c0_4] : memref<1x4xf32, #tpu.memory_space<vmem>>, vector<1x4xf32>
    %5 = vector.broadcast %4 : vector<1x4xf32> to vector<128x4xf32>
    %6 = arith.addf %3, %5 : vector<128x4xf32>
    %cst = arith.constant 0.000000e+00 : f32
    %7 = vector.broadcast %cst : f32 to vector<128x4xf32>
    %8 = arith.maximumf %6, %7 : vector<128x4xf32>
    %c0_5 = arith.constant 0 : index
    %c0_6 = arith.constant 0 : index
    %9 = vector.load %arg4[%c0_5, %c0_6] : memref<4x16xf32, #tpu.memory_space<vmem>>, vector<4x16xf32>
    %cst_7 = arith.constant dense<0.000000e+00> : vector<128x16xf32>
    %10 = tpu.matmul %8, %9, %cst_7 {dimension_numbers = #tpu.dot_dimension_numbers<[1], [0], [0], [1], [0, 0, 1, 1], [], []>} : vector<128x4xf32>, vector<4x16xf32>, vector<128x16xf32> -> vector<128x16xf32>
    %c0_8 = arith.constant 0 : index
    %c0_9 = arith.constant 0 : index
    %11 = vector.load %arg5[%c0_8, %c0_9] : memref<128x16xf32, #tpu.memory_space<vmem>>, vector<128x16xf32>
    tpu.vector_store %arg5[%c0_8, %c0_9], %10 {strides = array<i32>} : memref<128x16xf32, #tpu.memory_space<vmem>>, vector<128x16xf32>,
    %cst_10 = arith.constant dense<0.000000e+00> : vector<16xf32>
    %12 = vector.multi_reduction <add>, %10, %cst_10 [0] : vector<128x16xf32> to vector<16xf32>
    %13 = vector.shape_cast %12 : vector<16xf32> to vector<1x16xf32>
    %c0_11 = arith.constant 0 : index
    %c0_12 = arith.constant 0 : index
    %c0_13 = arith.constant 0 : index
    %14 = vector.load %arg6[%c0_11, %c0_12, %c0_13] : memref<1x2x16xf32, #tpu.memory_space<vmem>>, vector<1x1x16xf32>
    %15 = vector.shape_cast %14 : vector<1x1x16xf32> to vector<1x16xf32>
    %16 = vector.shape_cast %13 : vector<1x16xf32> to vector<1x1x16xf32>
    tpu.vector_store %arg6[%c0_11, %c0_12, %c0_13], %16 {strides = array<i32>} : memref<1x2x16xf32, #tpu.memory_space<vmem>>, vector<1x1x16xf32>,
    %17 = arith.mulf %10, %10 : vector<128x16xf32>
    %cst_14 = arith.constant dense<0.000000e+00> : vector<16xf32>
    %18 = vector.multi_reduction <add>, %17, %cst_14 [0] : vector<128x16xf32> to vector<16xf32>
    %19 = vector.shape_cast %18 : vector<16xf32> to vector<1x16xf32>
    %c0_15 = arith.constant 0 : index
    %c1 = arith.constant 1 : index
    %c0_16 = arith.constant 0 : index
    %20 = vector.load %arg6[%c0_15, %c1, %c0_16] : memref<1x2x16xf32, #tpu.memory_space<vmem>>, vector<1x1x16xf32>
    %21 = vector.shape_cast %20 : vector<1x1x16xf32> to vector<1x16xf32>
    %22 = vector.shape_cast %19 : vector<1x16xf32> to vector<1x1x16xf32>
    tpu.vector_store %arg6[%c0_15, %c1, %c0_16], %22 {strides = array<i32>} : memref<1x2x16xf32, #tpu.memory_space<vmem>>, vector<1x1x16xf32>,
    return
  }
  func.func @transform_0(%arg0: i32) -> (i32, i32) {
    %c0_i32 = arith.constant 0 : i32
    %c0_i32_0 = arith.constant 0 : i32
    return %arg0, %c0_i32 : i32, i32
  }
  func.func @transform_1(%arg0: i32) -> (i32, i32) {
    %c0_i32 = arith.constant 0 : i32
    %c0_i32_0 = arith.constant 0 : i32
    %c0_i32_1 = arith.constant 0 : i32
    return %c0_i32, %c0_i32_0 : i32, i32
  }
  func.func @transform_2(%arg0: i32) -> (i32, i32) {
    %c0_i32 = arith.constant 0 : i32
    %c0_i32_0 = arith.constant 0 : i32
    %c0_i32_1 = arith.constant 0 : i32
    return %c0_i32, %c0_i32_0 : i32, i32
  }
  func.func @transform_3(%arg0: i32) -> (i32, i32) {
    %c0_i32 = arith.constant 0 : i32
    %c0_i32_0 = arith.constant 0 : i32
    %c0_i32_1 = arith.constant 0 : i32
    return %c0_i32, %c0_i32_0 : i32, i32
  }
  func.func @transform_4(%arg0: i32) -> (i32, i32) {
    %c0_i32 = arith.constant 0 : i32
    %c0_i32_0 = arith.constant 0 : i32
    return %arg0, %c0_i32 : i32, i32
  }
  func.func @transform_5(%arg0: i32) -> (i32, i32, i32) {
    %c0_i32 = arith.constant 0 : i32
    %c0_i32_0 = arith.constant 0 : i32
    %c0_i32_1 = arith.constant 0 : i32
    return %arg0, %c0_i32, %c0_i32_0 : i32, i32, i32
  }
}

module attributes {stable_mosaic.version = 11 : i64} {
  func.func @_conv3x3_bnrelu_stats_kernel(%arg0: i32, %arg1: memref<1x16x16x4xf32, #tpu.memory_space<vmem>>, %arg2: memref<9x4x4xf32, #tpu.memory_space<vmem>>, %arg3: memref<1x4xf32, #tpu.memory_space<vmem>>, %arg4: memref<1x4xf32, #tpu.memory_space<vmem>>, %arg5: memref<1x16x16x4xf32, #tpu.memory_space<vmem>>, %arg6: memref<1x2x4xf32, #tpu.memory_space<vmem>>, %arg7: memref<18x18x4xf32, #tpu.memory_space<vmem>>) attributes {dimension_semantics = [#tpu.dimension_semantics<parallel>], iteration_bounds = array<i64: 2>, scalar_prefetch = 0 : i64, scratch_operands = 1 : i64, tpu.core_type = #tpu.core_type<tc>, window_params = [{transform_indices = @transform_0, window_bounds = array<i64: 1, 16, 16, 4>}, {pipeline_mode = #tpu.pipeline_mode<synchronous>, transform_indices = @transform_1, window_bounds = array<i64: 9, 4, 4>}, {pipeline_mode = #tpu.pipeline_mode<synchronous>, transform_indices = @transform_2, window_bounds = array<i64: 1, 4>}, {pipeline_mode = #tpu.pipeline_mode<synchronous>, transform_indices = @transform_3, window_bounds = array<i64: 1, 4>}, {transform_indices = @transform_4, window_bounds = array<i64: 1, 16, 16, 4>}, {transform_indices = @transform_5, window_bounds = array<i64: 1, 2, 4>}]} {
    %c0 = arith.constant 0 : index
    %c0_0 = arith.constant 0 : index
    %0 = vector.load %arg3[%c0, %c0_0] : memref<1x4xf32, #tpu.memory_space<vmem>>, vector<1x4xf32>
    %1 = vector.shape_cast %0 : vector<1x4xf32> to vector<1x1x4xf32>
    %c0_1 = arith.constant 0 : index
    %c0_2 = arith.constant 0 : index
    %2 = vector.load %arg4[%c0_1, %c0_2] : memref<1x4xf32, #tpu.memory_space<vmem>>, vector<1x4xf32>
    %3 = vector.shape_cast %2 : vector<1x4xf32> to vector<1x1x4xf32>
    %c0_3 = arith.constant 0 : index
    %c0_4 = arith.constant 0 : index
    %c0_5 = arith.constant 0 : index
    %c0_6 = arith.constant 0 : index
    %4 = vector.load %arg1[%c0_3, %c0_4, %c0_5, %c0_6] : memref<1x16x16x4xf32, #tpu.memory_space<vmem>>, vector<1x16x16x4xf32>
    %5 = vector.shape_cast %4 : vector<1x16x16x4xf32> to vector<16x16x4xf32>
    %6 = vector.broadcast %1 : vector<1x1x4xf32> to vector<16x16x4xf32>
    %7 = arith.mulf %5, %6 : vector<16x16x4xf32>
    %8 = vector.broadcast %3 : vector<1x1x4xf32> to vector<16x16x4xf32>
    %9 = arith.addf %7, %8 : vector<16x16x4xf32>
    %cst = arith.constant 0.000000e+00 : f32
    %10 = vector.broadcast %cst : f32 to vector<16x16x4xf32>
    %11 = arith.maximumf %9, %10 : vector<16x16x4xf32>
    %cst_7 = arith.constant 0.000000e+00 : f32
    %12 = vector.broadcast %cst_7 : f32 to vector<1x18x4xf32>
    %c0_8 = arith.constant 0 : index
    %c0_9 = arith.constant 0 : index
    %c0_10 = arith.constant 0 : index
    %13 = vector.load %arg7[%c0_8, %c0_9, %c0_10] : memref<18x18x4xf32, #tpu.memory_space<vmem>>, vector<1x18x4xf32>
    tpu.vector_store %arg7[%c0_8, %c0_9, %c0_10], %12 {strides = array<i32>} : memref<18x18x4xf32, #tpu.memory_space<vmem>>, vector<1x18x4xf32>,
    %cst_11 = arith.constant 0.000000e+00 : f32
    %14 = vector.broadcast %cst_11 : f32 to vector<1x18x4xf32>
    %c17 = arith.constant 17 : index
    %c0_12 = arith.constant 0 : index
    %c0_13 = arith.constant 0 : index
    %15 = vector.load %arg7[%c17, %c0_12, %c0_13] : memref<18x18x4xf32, #tpu.memory_space<vmem>>, vector<1x18x4xf32>
    tpu.vector_store %arg7[%c17, %c0_12, %c0_13], %14 {strides = array<i32>} : memref<18x18x4xf32, #tpu.memory_space<vmem>>, vector<1x18x4xf32>,
    %cst_14 = arith.constant 0.000000e+00 : f32
    %16 = vector.broadcast %cst_14 : f32 to vector<16x1x4xf32>
    %c1 = arith.constant 1 : index
    %c0_15 = arith.constant 0 : index
    %c0_16 = arith.constant 0 : index
    %17 = vector.load %arg7[%c1, %c0_15, %c0_16] : memref<18x18x4xf32, #tpu.memory_space<vmem>>, vector<16x1x4xf32>
    tpu.vector_store %arg7[%c1, %c0_15, %c0_16], %16 {strides = array<i32>} : memref<18x18x4xf32, #tpu.memory_space<vmem>>, vector<16x1x4xf32>,
    %cst_17 = arith.constant 0.000000e+00 : f32
    %18 = vector.broadcast %cst_17 : f32 to vector<16x1x4xf32>
    %c1_18 = arith.constant 1 : index
    %c17_19 = arith.constant 17 : index
    %c0_20 = arith.constant 0 : index
    %19 = vector.load %arg7[%c1_18, %c17_19, %c0_20] : memref<18x18x4xf32, #tpu.memory_space<vmem>>, vector<16x1x4xf32>
    tpu.vector_store %arg7[%c1_18, %c17_19, %c0_20], %18 {strides = array<i32>} : memref<18x18x4xf32, #tpu.memory_space<vmem>>, vector<16x1x4xf32>,
    %c1_21 = arith.constant 1 : index
    %c1_22 = arith.constant 1 : index
    %c0_23 = arith.constant 0 : index
    %20 = vector.load %arg7[%c1_21, %c1_22, %c0_23] : memref<18x18x4xf32, #tpu.memory_space<vmem>>, vector<16x16x4xf32>
    tpu.vector_store %arg7[%c1_21, %c1_22, %c0_23], %11 {strides = array<i32>} : memref<18x18x4xf32, #tpu.memory_space<vmem>>, vector<16x16x4xf32>,
    %c0_24 = arith.constant 0 : index
    %c0_25 = arith.constant 0 : index
    %c0_26 = arith.constant 0 : index
    %21 = vector.load %arg7[%c0_24, %c0_25, %c0_26] : memref<18x18x4xf32, #tpu.memory_space<vmem>>, vector<18x18x4xf32>
    %22 = vector.shape_cast %21 : vector<18x18x4xf32> to vector<324x4xf32>
    %cst_27 = arith.constant 0.000000e+00 : f32
    %23 = vector.broadcast %cst_27 : f32 to vector<288x4xf32>
    %24 = vector.extract_strided_slice %22 {offsets = [0, 0], sizes = [288, 4], strides = [1, 1]} : vector<324x4xf32> to vector<288x4xf32>
    %c0_28 = arith.constant 0 : index
    %c0_29 = arith.constant 0 : index
    %c0_30 = arith.constant 0 : index
    %25 = vector.load %arg2[%c0_28, %c0_29, %c0_30] : memref<9x4x4xf32, #tpu.memory_space<vmem>>, vector<1x4x4xf32>
    %26 = vector.shape_cast %25 : vector<1x4x4xf32> to vector<4x4xf32>
    %cst_31 = arith.constant dense<0.000000e+00> : vector<288x4xf32>
    %27 = tpu.matmul %24, %26, %cst_31 {dimension_numbers = #tpu.dot_dimension_numbers<[1], [0], [0], [1], [0, 0, 1, 1], [], []>} : vector<288x4xf32>, vector<4x4xf32>, vector<288x4xf32> -> vector<288x4xf32>
    %28 = arith.addf %23, %27 : vector<288x4xf32>
    %c323_i32 = arith.constant 323 : i32
    %29 = tpu.dynamic_rotate %22 by %c323_i32 dim 0 : vector<324x4xf32>, i32 -> vector<324x4xf32>
    %30 = vector.extract_strided_slice %29 {offsets = [0, 0], sizes = [288, 4], strides = [1, 1]} : vector<324x4xf32> to vector<288x4xf32>
    %c1_32 = arith.constant 1 : index
    %c0_33 = arith.constant 0 : index
    %c0_34 = arith.constant 0 : index
    %31 = vector.load %arg2[%c1_32, %c0_33, %c0_34] : memref<9x4x4xf32, #tpu.memory_space<vmem>>, vector<1x4x4xf32>
    %32 = vector.shape_cast %31 : vector<1x4x4xf32> to vector<4x4xf32>
    %cst_35 = arith.constant dense<0.000000e+00> : vector<288x4xf32>
    %33 = tpu.matmul %30, %32, %cst_35 {dimension_numbers = #tpu.dot_dimension_numbers<[1], [0], [0], [1], [0, 0, 1, 1], [], []>} : vector<288x4xf32>, vector<4x4xf32>, vector<288x4xf32> -> vector<288x4xf32>
    %34 = arith.addf %28, %33 : vector<288x4xf32>
    %c322_i32 = arith.constant 322 : i32
    %35 = tpu.dynamic_rotate %22 by %c322_i32 dim 0 : vector<324x4xf32>, i32 -> vector<324x4xf32>
    %36 = vector.extract_strided_slice %35 {offsets = [0, 0], sizes = [288, 4], strides = [1, 1]} : vector<324x4xf32> to vector<288x4xf32>
    %c2 = arith.constant 2 : index
    %c0_36 = arith.constant 0 : index
    %c0_37 = arith.constant 0 : index
    %37 = vector.load %arg2[%c2, %c0_36, %c0_37] : memref<9x4x4xf32, #tpu.memory_space<vmem>>, vector<1x4x4xf32>
    %38 = vector.shape_cast %37 : vector<1x4x4xf32> to vector<4x4xf32>
    %cst_38 = arith.constant dense<0.000000e+00> : vector<288x4xf32>
    %39 = tpu.matmul %36, %38, %cst_38 {dimension_numbers = #tpu.dot_dimension_numbers<[1], [0], [0], [1], [0, 0, 1, 1], [], []>} : vector<288x4xf32>, vector<4x4xf32>, vector<288x4xf32> -> vector<288x4xf32>
    %40 = arith.addf %34, %39 : vector<288x4xf32>
    %c306_i32 = arith.constant 306 : i32
    %41 = tpu.dynamic_rotate %22 by %c306_i32 dim 0 : vector<324x4xf32>, i32 -> vector<324x4xf32>
    %42 = vector.extract_strided_slice %41 {offsets = [0, 0], sizes = [288, 4], strides = [1, 1]} : vector<324x4xf32> to vector<288x4xf32>
    %c3 = arith.constant 3 : index
    %c0_39 = arith.constant 0 : index
    %c0_40 = arith.constant 0 : index
    %43 = vector.load %arg2[%c3, %c0_39, %c0_40] : memref<9x4x4xf32, #tpu.memory_space<vmem>>, vector<1x4x4xf32>
    %44 = vector.shape_cast %43 : vector<1x4x4xf32> to vector<4x4xf32>
    %cst_41 = arith.constant dense<0.000000e+00> : vector<288x4xf32>
    %45 = tpu.matmul %42, %44, %cst_41 {dimension_numbers = #tpu.dot_dimension_numbers<[1], [0], [0], [1], [0, 0, 1, 1], [], []>} : vector<288x4xf32>, vector<4x4xf32>, vector<288x4xf32> -> vector<288x4xf32>
    %46 = arith.addf %40, %45 : vector<288x4xf32>
    %c305_i32 = arith.constant 305 : i32
    %47 = tpu.dynamic_rotate %22 by %c305_i32 dim 0 : vector<324x4xf32>, i32 -> vector<324x4xf32>
    %48 = vector.extract_strided_slice %47 {offsets = [0, 0], sizes = [288, 4], strides = [1, 1]} : vector<324x4xf32> to vector<288x4xf32>
    %c4 = arith.constant 4 : index
    %c0_42 = arith.constant 0 : index
    %c0_43 = arith.constant 0 : index
    %49 = vector.load %arg2[%c4, %c0_42, %c0_43] : memref<9x4x4xf32, #tpu.memory_space<vmem>>, vector<1x4x4xf32>
    %50 = vector.shape_cast %49 : vector<1x4x4xf32> to vector<4x4xf32>
    %cst_44 = arith.constant dense<0.000000e+00> : vector<288x4xf32>
    %51 = tpu.matmul %48, %50, %cst_44 {dimension_numbers = #tpu.dot_dimension_numbers<[1], [0], [0], [1], [0, 0, 1, 1], [], []>} : vector<288x4xf32>, vector<4x4xf32>, vector<288x4xf32> -> vector<288x4xf32>
    %52 = arith.addf %46, %51 : vector<288x4xf32>
    %c304_i32 = arith.constant 304 : i32
    %53 = tpu.dynamic_rotate %22 by %c304_i32 dim 0 : vector<324x4xf32>, i32 -> vector<324x4xf32>
    %54 = vector.extract_strided_slice %53 {offsets = [0, 0], sizes = [288, 4], strides = [1, 1]} : vector<324x4xf32> to vector<288x4xf32>
    %c5 = arith.constant 5 : index
    %c0_45 = arith.constant 0 : index
    %c0_46 = arith.constant 0 : index
    %55 = vector.load %arg2[%c5, %c0_45, %c0_46] : memref<9x4x4xf32, #tpu.memory_space<vmem>>, vector<1x4x4xf32>
    %56 = vector.shape_cast %55 : vector<1x4x4xf32> to vector<4x4xf32>
    %cst_47 = arith.constant dense<0.000000e+00> : vector<288x4xf32>
    %57 = tpu.matmul %54, %56, %cst_47 {dimension_numbers = #tpu.dot_dimension_numbers<[1], [0], [0], [1], [0, 0, 1, 1], [], []>} : vector<288x4xf32>, vector<4x4xf32>, vector<288x4xf32> -> vector<288x4xf32>
    %58 = arith.addf %52, %57 : vector<288x4xf32>
    %c288_i32 = arith.constant 288 : i32
    %59 = tpu.dynamic_rotate %22 by %c288_i32 dim 0 : vector<324x4xf32>, i32 -> vector<324x4xf32>
    %60 = vector.extract_strided_slice %59 {offsets = [0, 0], sizes = [288, 4], strides = [1, 1]} : vector<324x4xf32> to vector<288x4xf32>
    %c6 = arith.constant 6 : index
    %c0_48 = arith.constant 0 : index
    %c0_49 = arith.constant 0 : index
    %61 = vector.load %arg2[%c6, %c0_48, %c0_49] : memref<9x4x4xf32, #tpu.memory_space<vmem>>, vector<1x4x4xf32>
    %62 = vector.shape_cast %61 : vector<1x4x4xf32> to vector<4x4xf32>
    %cst_50 = arith.constant dense<0.000000e+00> : vector<288x4xf32>
    %63 = tpu.matmul %60, %62, %cst_50 {dimension_numbers = #tpu.dot_dimension_numbers<[1], [0], [0], [1], [0, 0, 1, 1], [], []>} : vector<288x4xf32>, vector<4x4xf32>, vector<288x4xf32> -> vector<288x4xf32>
    %64 = arith.addf %58, %63 : vector<288x4xf32>
    %c287_i32 = arith.constant 287 : i32
    %65 = tpu.dynamic_rotate %22 by %c287_i32 dim 0 : vector<324x4xf32>, i32 -> vector<324x4xf32>
    %66 = vector.extract_strided_slice %65 {offsets = [0, 0], sizes = [288, 4], strides = [1, 1]} : vector<324x4xf32> to vector<288x4xf32>
    %c7 = arith.constant 7 : index
    %c0_51 = arith.constant 0 : index
    %c0_52 = arith.constant 0 : index
    %67 = vector.load %arg2[%c7, %c0_51, %c0_52] : memref<9x4x4xf32, #tpu.memory_space<vmem>>, vector<1x4x4xf32>
    %68 = vector.shape_cast %67 : vector<1x4x4xf32> to vector<4x4xf32>
    %cst_53 = arith.constant dense<0.000000e+00> : vector<288x4xf32>
    %69 = tpu.matmul %66, %68, %cst_53 {dimension_numbers = #tpu.dot_dimension_numbers<[1], [0], [0], [1], [0, 0, 1, 1], [], []>} : vector<288x4xf32>, vector<4x4xf32>, vector<288x4xf32> -> vector<288x4xf32>
    %70 = arith.addf %64, %69 : vector<288x4xf32>
    %c286_i32 = arith.constant 286 : i32
    %71 = tpu.dynamic_rotate %22 by %c286_i32 dim 0 : vector<324x4xf32>, i32 -> vector<324x4xf32>
    %72 = vector.extract_strided_slice %71 {offsets = [0, 0], sizes = [288, 4], strides = [1, 1]} : vector<324x4xf32> to vector<288x4xf32>
    %c8 = arith.constant 8 : index
    %c0_54 = arith.constant 0 : index
    %c0_55 = arith.constant 0 : index
    %73 = vector.load %arg2[%c8, %c0_54, %c0_55] : memref<9x4x4xf32, #tpu.memory_space<vmem>>, vector<1x4x4xf32>
    %74 = vector.shape_cast %73 : vector<1x4x4xf32> to vector<4x4xf32>
    %cst_56 = arith.constant dense<0.000000e+00> : vector<288x4xf32>
    %75 = tpu.matmul %72, %74, %cst_56 {dimension_numbers = #tpu.dot_dimension_numbers<[1], [0], [0], [1], [0, 0, 1, 1], [], []>} : vector<288x4xf32>, vector<4x4xf32>, vector<288x4xf32> -> vector<288x4xf32>
    %76 = arith.addf %70, %75 : vector<288x4xf32>
    %77 = vector.shape_cast %76 : vector<288x4xf32> to vector<16x18x4xf32>
    %78 = vector.extract_strided_slice %77 {offsets = [0, 0, 0], sizes = [16, 16, 4], strides = [1, 1, 1]} : vector<16x18x4xf32> to vector<16x16x4xf32>
    %c0_57 = arith.constant 0 : index
    %c0_58 = arith.constant 0 : index
    %c0_59 = arith.constant 0 : index
    %c0_60 = arith.constant 0 : index
    %79 = vector.load %arg5[%c0_57, %c0_58, %c0_59, %c0_60] : memref<1x16x16x4xf32, #tpu.memory_space<vmem>>, vector<1x16x16x4xf32>
    %80 = vector.shape_cast %79 : vector<1x16x16x4xf32> to vector<16x16x4xf32>
    %81 = vector.shape_cast %78 : vector<16x16x4xf32> to vector<1x16x16x4xf32>
    tpu.vector_store %arg5[%c0_57, %c0_58, %c0_59, %c0_60], %81 {strides = array<i32>} : memref<1x16x16x4xf32, #tpu.memory_space<vmem>>, vector<1x16x16x4xf32>,
    %cst_61 = arith.constant dense<0.000000e+00> : vector<4xf32>
    %82 = vector.multi_reduction <add>, %78, %cst_61 [0, 1] : vector<16x16x4xf32> to vector<4xf32>
    %83 = vector.shape_cast %82 : vector<4xf32> to vector<1x4xf32>
    %c0_62 = arith.constant 0 : index
    %c0_63 = arith.constant 0 : index
    %c0_64 = arith.constant 0 : index
    %84 = vector.load %arg6[%c0_62, %c0_63, %c0_64] : memref<1x2x4xf32, #tpu.memory_space<vmem>>, vector<1x1x4xf32>
    %85 = vector.shape_cast %84 : vector<1x1x4xf32> to vector<1x4xf32>
    %86 = vector.shape_cast %83 : vector<1x4xf32> to vector<1x1x4xf32>
    tpu.vector_store %arg6[%c0_62, %c0_63, %c0_64], %86 {strides = array<i32>} : memref<1x2x4xf32, #tpu.memory_space<vmem>>, vector<1x1x4xf32>,
    %87 = arith.mulf %78, %78 : vector<16x16x4xf32>
    %cst_65 = arith.constant dense<0.000000e+00> : vector<4xf32>
    %88 = vector.multi_reduction <add>, %87, %cst_65 [0, 1] : vector<16x16x4xf32> to vector<4xf32>
    %89 = vector.shape_cast %88 : vector<4xf32> to vector<1x4xf32>
    %c0_66 = arith.constant 0 : index
    %c1_67 = arith.constant 1 : index
    %c0_68 = arith.constant 0 : index
    %90 = vector.load %arg6[%c0_66, %c1_67, %c0_68] : memref<1x2x4xf32, #tpu.memory_space<vmem>>, vector<1x1x4xf32>
    %91 = vector.shape_cast %90 : vector<1x1x4xf32> to vector<1x4xf32>
    %92 = vector.shape_cast %89 : vector<1x4xf32> to vector<1x1x4xf32>
    tpu.vector_store %arg6[%c0_66, %c1_67, %c0_68], %92 {strides = array<i32>} : memref<1x2x4xf32, #tpu.memory_space<vmem>>, vector<1x1x4xf32>,
    return
  }
  func.func @transform_0(%arg0: i32) -> (i32, i32, i32, i32) {
    %c0_i32 = arith.constant 0 : i32
    %c0_i32_0 = arith.constant 0 : i32
    %c0_i32_1 = arith.constant 0 : i32
    %c0_i32_2 = arith.constant 0 : i32
    return %arg0, %c0_i32, %c0_i32_0, %c0_i32_1 : i32, i32, i32, i32
  }
  func.func @transform_1(%arg0: i32) -> (i32, i32, i32) {
    %c0_i32 = arith.constant 0 : i32
    %c0_i32_0 = arith.constant 0 : i32
    %c0_i32_1 = arith.constant 0 : i32
    %c0_i32_2 = arith.constant 0 : i32
    return %c0_i32, %c0_i32_0, %c0_i32_1 : i32, i32, i32
  }
  func.func @transform_2(%arg0: i32) -> (i32, i32) {
    %c0_i32 = arith.constant 0 : i32
    %c0_i32_0 = arith.constant 0 : i32
    %c0_i32_1 = arith.constant 0 : i32
    return %c0_i32, %c0_i32_0 : i32, i32
  }
  func.func @transform_3(%arg0: i32) -> (i32, i32) {
    %c0_i32 = arith.constant 0 : i32
    %c0_i32_0 = arith.constant 0 : i32
    %c0_i32_1 = arith.constant 0 : i32
    return %c0_i32, %c0_i32_0 : i32, i32
  }
  func.func @transform_4(%arg0: i32) -> (i32, i32, i32, i32) {
    %c0_i32 = arith.constant 0 : i32
    %c0_i32_0 = arith.constant 0 : i32
    %c0_i32_1 = arith.constant 0 : i32
    %c0_i32_2 = arith.constant 0 : i32
    return %arg0, %c0_i32, %c0_i32_0, %c0_i32_1 : i32, i32, i32, i32
  }
  func.func @transform_5(%arg0: i32) -> (i32, i32, i32) {
    %c0_i32 = arith.constant 0 : i32
    %c0_i32_0 = arith.constant 0 : i32
    %c0_i32_1 = arith.constant 0 : i32
    return %arg0, %c0_i32, %c0_i32_0 : i32, i32, i32
  }
}

module attributes {stable_mosaic.version = 11 : i64} {
  func.func @_bn_add_relu_kernel(%arg0: i32, %arg1: memref<128x16xf32, #tpu.memory_space<vmem>>, %arg2: memref<128x16xf32, #tpu.memory_space<vmem>>, %arg3: memref<1x16xf32, #tpu.memory_space<vmem>>, %arg4: memref<1x16xf32, #tpu.memory_space<vmem>>, %arg5: memref<128x16xf32, #tpu.memory_space<vmem>>) attributes {dimension_semantics = [#tpu.dimension_semantics<parallel>], iteration_bounds = array<i64: 4>, scalar_prefetch = 0 : i64, scratch_operands = 0 : i64, tpu.core_type = #tpu.core_type<tc>, window_params = [{transform_indices = @transform_0, window_bounds = array<i64: 128, 16>}, {transform_indices = @transform_1, window_bounds = array<i64: 128, 16>}, {pipeline_mode = #tpu.pipeline_mode<synchronous>, transform_indices = @transform_2, window_bounds = array<i64: 1, 16>}, {pipeline_mode = #tpu.pipeline_mode<synchronous>, transform_indices = @transform_3, window_bounds = array<i64: 1, 16>}, {transform_indices = @transform_4, window_bounds = array<i64: 128, 16>}]} {
    %c0 = arith.constant 0 : index
    %c0_0 = arith.constant 0 : index
    %0 = vector.load %arg1[%c0, %c0_0] : memref<128x16xf32, #tpu.memory_space<vmem>>, vector<128x16xf32>
    %c0_1 = arith.constant 0 : index
    %c0_2 = arith.constant 0 : index
    %1 = vector.load %arg2[%c0_1, %c0_2] : memref<128x16xf32, #tpu.memory_space<vmem>>, vector<128x16xf32>
    %c0_3 = arith.constant 0 : index
    %c0_4 = arith.constant 0 : index
    %2 = vector.load %arg3[%c0_3, %c0_4] : memref<1x16xf32, #tpu.memory_space<vmem>>, vector<1x16xf32>
    %3 = vector.broadcast %2 : vector<1x16xf32> to vector<128x16xf32>
    %4 = arith.mulf %0, %3 : vector<128x16xf32>
    %c0_5 = arith.constant 0 : index
    %c0_6 = arith.constant 0 : index
    %5 = vector.load %arg4[%c0_5, %c0_6] : memref<1x16xf32, #tpu.memory_space<vmem>>, vector<1x16xf32>
    %6 = vector.broadcast %5 : vector<1x16xf32> to vector<128x16xf32>
    %7 = arith.addf %4, %6 : vector<128x16xf32>
    %8 = arith.addf %7, %1 : vector<128x16xf32>
    %cst = arith.constant 0.000000e+00 : f32
    %9 = vector.broadcast %cst : f32 to vector<128x16xf32>
    %10 = arith.maximumf %8, %9 : vector<128x16xf32>
    %c0_7 = arith.constant 0 : index
    %c0_8 = arith.constant 0 : index
    %11 = vector.load %arg5[%c0_7, %c0_8] : memref<128x16xf32, #tpu.memory_space<vmem>>, vector<128x16xf32>
    tpu.vector_store %arg5[%c0_7, %c0_8], %10 {strides = array<i32>} : memref<128x16xf32, #tpu.memory_space<vmem>>, vector<128x16xf32>,
    return
  }
  func.func @transform_0(%arg0: i32) -> (i32, i32) {
    %c0_i32 = arith.constant 0 : i32
    %c0_i32_0 = arith.constant 0 : i32
    return %arg0, %c0_i32 : i32, i32
  }
  func.func @transform_1(%arg0: i32) -> (i32, i32) {
    %c0_i32 = arith.constant 0 : i32
    %c0_i32_0 = arith.constant 0 : i32
    return %arg0, %c0_i32 : i32, i32
  }
  func.func @transform_2(%arg0: i32) -> (i32, i32) {
    %c0_i32 = arith.constant 0 : i32
    %c0_i32_0 = arith.constant 0 : i32
    %c0_i32_1 = arith.constant 0 : i32
    return %c0_i32, %c0_i32_0 : i32, i32
  }
  func.func @transform_3(%arg0: i32) -> (i32, i32) {
    %c0_i32 = arith.constant 0 : i32
    %c0_i32_0 = arith.constant 0 : i32
    %c0_i32_1 = arith.constant 0 : i32
    return %c0_i32, %c0_i32_0 : i32, i32
  }
  func.func @transform_4(%arg0: i32) -> (i32, i32) {
    %c0_i32 = arith.constant 0 : i32
    %c0_i32_0 = arith.constant 0 : i32
    return %arg0, %c0_i32 : i32, i32
  }
}

</mosaic_0001>

<llo_original>
// kernel: bottleneck_forward.4
$region0: #{bottleneck_forward.4}
  #allocation0 [shape = 'u32[]', space=smem, size = 0x4, offset = 0x4, fixed_abs, tag = 'smem constant byte address 0x4 - core index']
  #allocation1 [shape = 'u32[144,128]{1,0:T(1,128)}', space=vmem, size = 0x12000, scoped, tag = 'internal scratch']
  %s0 = inlined_call_operand.vmem [shape: f32[512,16], index: 0, kind: input, shape index: {}]
  %s1 = inlined_call_operand.vmem [shape: f32[16,4], index: 1, kind: input, shape index: {}]
  %s2 = inlined_call_operand.vmem [shape: f32[512,4], index: 2, kind: output, shape index: {0}]
  %s3 = inlined_call_operand.vmem [shape: f32[4,2,4], index: 3, kind: output, shape index: {1}]
  %4 = xla_tuple %s2, %s3
  %s5 = sld [smem:[#allocation0]]
  $region49: #{bottleneck_forward.4} parent=0
    _
  %s7 = ssub.s32 1, %s5
  %s8 = scalar_select 0, %s7, %s5
  loop: start=0, step=1, limit=6
  $region2: #{bottleneck_forward.4} parent=0 // loop_pre_header
    _
  $region3: #{bottleneck_forward.4} parent=0 // loop_header
    %s10 = sphi 0, %s14
    %p11 = scmp.ge.s32.totalorder %s10, 6
    %s20 = sphi 0, %s22
    %s23 = sphi 0, %s20
    %s24 = sphi 0, %s23
    %s40 = sphi 0, %s24
    %s44 = sphi 0, %s44
    %s46 = sphi 0, %s44
    %s47 = sphi 0, %s46
    %s61 = sphi 0, %s47
    %s67 = sphi 0, %s69
    %s70 = sphi 0, %s67
    %s71 = sphi 0, %s70
    %s87 = sphi 0, %s71
    %s93 = sphi 0, %s95
    %s96 = sphi 0, %s93
    %s97 = sphi 0, %s96
    %s113 = sphi 0, %s97
  $region4: #{bottleneck_forward.4} parent=0 // loop_header_branch
    %13 = sbr.rel (%p11) target = $region8
  $region5: #{bottleneck_forward.4} parent=0 // loop_body
    %s15 = ssub.s32 %s10, 1
    %s16 = ssub.s32 %s10, 2
    %s17 = sadd.s32 %s10, 1
    %s18 = ssub.s32 %s10, %s17
    %p19 = scmp.eq.s32.totalorder %s18, 0
    %s21 = sadd.s32 %s20, 1
    %s22 = scalar_select %p19, %s20, %s21
    %p25 = pneg %p19
    %p26 = scmp.eq.s32.totalorder %s10, 3
    %p27 = por %p25, %p26
    %p28 = scmp.ne.s32.totalorder %s20, %s23
    %p29 = scmp.eq.s32.totalorder %s10, 0
    %p30 = por %p28, %p29
    %p31 = scmp.ne.s32.totalorder %s20, %s23
    %p32 = scmp.eq.s32.totalorder %s15, 3
    %p33 = por %p31, %p32
    %p34 = scmp.ne.s32.totalorder %s23, %s24
    %p35 = scmp.eq.s32.totalorder %s15, 0
    %p36 = por %p34, %p35
    %p37 = scmp.ne.s32.totalorder %s23, %s24
    %p38 = scmp.eq.s32.totalorder %s16, 3
    %p39 = por %p37, %p38
    %p41 = scmp.ne.s32.totalorder %s24, %s40
    %p42 = scmp.eq.s32.totalorder %s16, 0
    %p43 = por %p41, %p42
    %s45 = sadd.s32 %s44, 1
    %p48 = scmp.eq.s32.totalorder %s10, 3
    %p49 = scmp.ne.s32.totalorder %s44, %s46
    %p50 = scmp.eq.s32.totalorder %s10, 0
    %p51 = por %p49, %p50
    %p52 = scmp.ne.s32.totalorder %s44, %s46
    %p53 = scmp.eq.s32.totalorder %s15, 3
    %p54 = por %p52, %p53
    %p55 = scmp.ne.s32.totalorder %s46, %s47
    %p56 = scmp.eq.s32.totalorder %s15, 0
    %p57 = por %p55, %p56
    %p58 = scmp.ne.s32.totalorder %s46, %s47
    %p59 = scmp.eq.s32.totalorder %s16, 3
    %p60 = por %p58, %p59
    %p62 = scmp.ne.s32.totalorder %s47, %s61
    %p63 = scmp.eq.s32.totalorder %s16, 0
    %p64 = por %p62, %p63
    %s65 = ssub.s32 %s10, %s17
    %p66 = scmp.eq.s32.totalorder %s65, 0
    %s68 = sadd.s32 %s67, 1
    %s69 = scalar_select %p66, %s67, %s68
    %p72 = pneg %p66
    %p73 = scmp.eq.s32.totalorder %s10, 3
    %p74 = por %p72, %p73
    %p75 = scmp.ne.s32.totalorder %s67, %s70
    %p76 = scmp.eq.s32.totalorder %s10, 0
    %p77 = por %p75, %p76
    %p78 = scmp.ne.s32.totalorder %s67, %s70
    %p79 = scmp.eq.s32.totalorder %s15, 3
    %p80 = por %p78, %p79
    %p81 = scmp.ne.s32.totalorder %s70, %s71
    %p82 = scmp.eq.s32.totalorder %s15, 0
    %p83 = por %p81, %p82
    %p84 = scmp.ne.s32.totalorder %s70, %s71
    %p85 = scmp.eq.s32.totalorder %s16, 3
    %p86 = por %p84, %p85
    %p88 = scmp.ne.s32.totalorder %s71, %s87
    %p89 = scmp.eq.s32.totalorder %s16, 0
    %p90 = por %p88, %p89
    %s91 = ssub.s32 %s10, %s17
    %p92 = scmp.eq.s32.totalorder %s91, 0
    %s94 = sadd.s32 %s93, 1
    %s95 = scalar_select %p92, %s93, %s94
    %p98 = pneg %p92
    %p99 = scmp.eq.s32.totalorder %s10, 3
    %p100 = por %p98, %p99
    %p101 = scmp.ne.s32.totalorder %s93, %s96
    %p102 = scmp.eq.s32.totalorder %s10, 0
    %p103 = por %p101, %p102
    %p104 = scmp.ne.s32.totalorder %s93, %s96
    %p105 = scmp.eq.s32.totalorder %s15, 3
    %p106 = por %p104, %p105
    %p107 = scmp.ne.s32.totalorder %s96, %s97
    %p108 = scmp.eq.s32.totalorder %s15, 0
    %p109 = por %p107, %p108
    %p110 = scmp.ne.s32.totalorder %s96, %s97
    %p111 = scmp.eq.s32.totalorder %s16, 3
    %p112 = por %p110, %p111
    %p114 = scmp.ne.s32.totalorder %s97, %s113
    %p115 = scmp.eq.s32.totalorder %s16, 0
    %p116 = por %p114, %p115
    %p117 = scmp.le.s32.totalorder 1, %s10
    %p118 = scmp.lt.s32.totalorder %s10, 5
    %p119 = pnand %p117, %p118
    %p120 = pneg %p119
    // Predicated region
    $region9: #{bottleneck_forward.4} parent=5 // pred_check
      _
    $region10: #{bottleneck_forward.4} parent=5 // pred_check_branch
      %122 = sbr.rel (%p119) target = $region12
    $region11: #{bottleneck_forward.4} parent=5 // pred_region
      %s123 = ssub.s32 %s10, 1
      // Predicated region
      $region13: #{bottleneck_forward.4} parent=11 // pred_check
        %p124 = pneg %p57
      $region14: #{bottleneck_forward.4} parent=11 // pred_check_branch
        %126 = sbr.rel (%p124) target = $region16
      $region15: #{bottleneck_forward.4} parent=11 // pred_region
        _
      $region16: #{bottleneck_forward.4} parent=11 // pred_fallthru
        _
    $region12: #{bottleneck_forward.4} parent=5 // pred_fallthru
      _
    %p127 = scmp.lt.s32.totalorder %s10, 4
    // Predicated region
    $region17: #{bottleneck_forward.4} parent=5 // pred_check
      %p128 = pneg %p127
    $region18: #{bottleneck_forward.4} parent=5 // pred_check_branch
      %130 = sbr.rel (%p128) target = $region20
    $region19: #{bottleneck_forward.4} parent=5 // pred_region
      // Predicated region
      $region21: #{bottleneck_forward.4} parent=19 // pred_check
        %p131 = pneg %p30
      $region22: #{bottleneck_forward.4} parent=19 // pred_check_branch
        %133 = sbr.rel (%p131) target = $region24
      $region23: #{bottleneck_forward.4} parent=19 // pred_region
        %s134 = smul.u32 16, %s10
        %p135 = scmp.lt.s32.totalorder %s134, 63
        %s136 = scalar_select %p135, %s134, 63
        %s137 = smul.addr %s136, 8
        %s138 = scalar_lea.vmem %s0, %s137
        %s139 = smul.u32 16, %s10
      $region24: #{bottleneck_forward.4} parent=19 // pred_fallthru
        _
    $region20: #{bottleneck_forward.4} parent=5 // pred_fallthru
      _
    %p140 = scmp.le.s32.totalorder 1, %s10
    %p141 = scmp.lt.s32.totalorder %s10, 5
    %p142 = pnand %p140, %p141
    %p143 = pneg %p142
    // Predicated region
    $region25: #{bottleneck_forward.4} parent=5 // pred_check
      _
    $region26: #{bottleneck_forward.4} parent=5 // pred_check_branch
      %145 = sbr.rel (%p142) target = $region28
    $region27: #{bottleneck_forward.4} parent=5 // pred_region
      %s146 = ssub.s32 %s10, 1
      %s147 = smul.u32 16, %s15
      %p148 = scmp.lt.s32.totalorder %s147, 63
      %s149 = scalar_select %p148, %s147, 63
      %s150 = smul.addr %s149, 8
      %s151 = scalar_lea.vmem %s0, %s150
      %p152 = pneg %p36
      %p153 = pneg %p33
      %p154 = pneg %p57
      %p155 = pneg %p54
      %p156 = pneg %p83
      %p157 = pneg %p80
      %s158 = smul.u32 16, %s15
      %p159 = scmp.lt.s32.totalorder %s158, 63
      %s160 = scalar_select %p159, %s158, 63
      %s161 = smul.addr %s160, 8
      %s162 = scalar_lea.vmem %s2, %s161
      %p163 = pneg %p109
      %p164 = pneg %p106
      %p165 = scmp.lt.s32.totalorder %s15, 3
      %s166 = scalar_select %p165, %s15, 3
      %s167 = smul.addr %s166, 2
      %s168 = scalar_lea.vmem %s3, %s167
      %s169 = smul.u32 16, %s15
      %p170 = scmp.lt.s32.totalorder %s169, 63
      %s171 = scalar_select %p170, %s169, 63
      %s172 = smul.addr %s171, 8
      %s173 = scalar_lea.vmem %s0, %s172
      %s174 = smul.u32 16, %s15
      %s175 = smul.u32 16, %s15
      %p176 = scmp.lt.s32.totalorder %s175, 63
      %s177 = scalar_select %p176, %s175, 63
      %s178 = smul.addr %s177, 8
      %s179 = scalar_lea.vmem %s2, %s178
      %s180 = smul.u32 16, %s15
      %p181 = scmp.lt.s32.totalorder %s15, 3
      %s182 = scalar_select %p181, %s15, 3
      %s183 = smul.addr %s182, 2
      %s184 = scalar_lea.vmem %s3, %s183
      %v185 = vld [vmem:[%s173] sm:$0xff]
      %v186 = vld [vmem:[%s173 + $0x8] sm:$0xff]
      %v187 = vld [vmem:[%s173 + $0x10] sm:$0xff]
      %v188 = vld [vmem:[%s173 + $0x18] sm:$0xff]
      %v189 = vld [vmem:[%s173 + $0x20] sm:$0xff]
      %v190 = vld [vmem:[%s173 + $0x28] sm:$0xff]
      %v191 = vld [vmem:[%s173 + $0x30] sm:$0xff]
      %v192 = vld [vmem:[%s173 + $0x38] sm:$0xff]
      %v193 = vld [vmem:[%s173 + $0x40] sm:$0xff]
      %v194 = vld [vmem:[%s173 + $0x48] sm:$0xff]
      %v195 = vld [vmem:[%s173 + $0x50] sm:$0xff]
      %v196 = vld [vmem:[%s173 + $0x58] sm:$0xff]
      %v197 = vld [vmem:[%s173 + $0x60] sm:$0xff]
      %v198 = vld [vmem:[%s173 + $0x68] sm:$0xff]
      %v199 = vld [vmem:[%s173 + $0x70] sm:$0xff]
      %v200 = vld [vmem:[%s173 + $0x78] sm:$0xff]
      %v201 = vld [vmem:[%s1] sm:$0xff]
      %v202 = vld [vmem:[%s1 + $0x8] sm:$0xff]
      %vm203 = vcmask 130048
      %v205 = vsel %vm203, %v185, 0
      %v208 = vsel %vm203, %v186, 0
      %v211 = vsel %vm203, %v187, 0
      %v214 = vsel %vm203, %v188, 0
      %v217 = vsel %vm203, %v189, 0
      %v220 = vsel %vm203, %v190, 0
      %v223 = vsel %vm203, %v191, 0
      %v226 = vsel %vm203, %v192, 0
      %v229 = vsel %vm203, %v193, 0
      %v232 = vsel %vm203, %v194, 0
      %v235 = vsel %vm203, %v195, 0
      %v238 = vsel %vm203, %v196, 0
      %v241 = vsel %vm203, %v197, 0
      %v244 = vsel %vm203, %v198, 0
      %v247 = vsel %vm203, %v199, 0
      %v250 = vsel %vm203, %v200, 0
      %252 = vmatprep.subr.mxu0 0.0
      %253 = vmatpush1.msra.mxu0 %v201
      %254 = vmatprep.subr.mxu0 0.0
      %255 = vmatpush1.msra.mxu0 %v202
      %256 = vmatprep.subr.mxu0 0.0
      %257 = vmatpush1.msra.mxu0 0.0
      %258 = vmatprep.subr.mxu0 0.0
      %259 = vmatpush1.msra.mxu0 0.0
      %260 = vmatprep.subr.mxu0 0.0
      %261 = vmatpush1.msra.mxu0 0.0
      %262 = vmatprep.subr.mxu0 0.0
      %263 = vmatpush1.msra.mxu0 0.0
      %264 = vmatprep.subr.mxu0 0.0
      %265 = vmatpush1.msra.mxu0 0.0
      %266 = vmatprep.subr.mxu0 0.0
      %267 = vmatpush1.msra.mxu0 0.0
      %268 = vmatprep.subr.mxu0 0.0
      %269 = vmatpush1.msra.mxu0 0.0
      %270 = vmatprep.subr.mxu0 0.0
      %271 = vmatpush1.msra.mxu0 0.0
      %272 = vmatprep.subr.mxu0 0.0
      %273 = vmatpush1.msra.mxu0 0.0
      %274 = vmatprep.subr.mxu0 0.0
      %275 = vmatpush1.msra.mxu0 0.0
      %276 = vmatprep.subr.mxu0 0.0
      %277 = vmatpush1.msra.mxu0 0.0
      %278 = vmatprep.subr.mxu0 0.0
      %279 = vmatpush1.msra.mxu0 0.0
      %280 = vmatprep.subr.mxu0 0.0
      %281 = vmatpush1.msra.mxu0 0.0
      %282 = vmatprep.subr.mxu0 0.0
      %283 = vmatpush1.msra.mxu0 0.0
      %284 = vmatprep.subr.mxu0 0.0
      %285 = vmatpush1.msra.mxu0 0.0
      %286 = vmatprep.subr.mxu0 0.0
      %287 = vmatpush1.msra.mxu0 0.0
      %288 = vmatprep.subr.mxu0 0.0
      %289 = vmatpush1.msra.mxu0 0.0
      %290 = vmatprep.subr.mxu0 0.0
      %291 = vmatpush1.msra.mxu0 0.0
      %292 = vmatprep.subr.mxu0 0.0
      %293 = vmatpush1.msra.mxu0 0.0
      %294 = vmatprep.subr.mxu0 0.0
      %295 = vmatpush1.msra.mxu0 0.0
      %296 = vmatprep.subr.mxu0 0.0
      %297 = vmatpush1.msra.mxu0 0.0
      %298 = vmatprep.subr.mxu0 0.0
      %299 = vmatpush1.msra.mxu0 0.0
      %300 = vmatprep.subr.mxu0 0.0
      %301 = vmatpush1.msra.mxu0 0.0
      %302 = vmatprep.subr.mxu0 0.0
      %303 = vmatpush1.msra.mxu0 0.0
      %304 = vmatprep.subr.mxu0 0.0
      %305 = vmatpush1.msra.mxu0 0.0
      %306 = vmatprep.subr.mxu0 0.0
      %307 = vmatpush1.msra.mxu0 0.0
      %308 = vmatprep.subr.mxu0 0.0
      %309 = vmatpush1.msra.mxu0 0.0
      %310 = vmatprep.subr.mxu0 0.0
      %311 = vmatpush1.msra.mxu0 0.0
      %312 = vmatprep.subr.mxu0 0.0
      %313 = vmatpush1.msra.mxu0 0.0
      %314 = vmatprep.subr.mxu0 0.0
      %315 = vmatpush1.msra.mxu0 0.0
      %316 = vmatprep.mubr.f32.mxu0 0.0
      %317 = vmatmul.mubr.f32.gmra.mrb[0].mxu0 %v205
      %v318 = vpop.f32.mrb[0].mxu0
      %v319 = vadd.f32 0.0, %v318
      %v320 = vpop.f32.mrb[0].mxu0
      %321 = vmatprep.mubr.f32.mxu0 0.0
      %322 = vmatmul.mubr.f32.gmra.mrb[0].mxu0 %v208
      %v323 = vpop.f32.mrb[0].mxu0
      %v324 = vadd.f32 0.0, %v323
      %v325 = vpop.f32.mrb[0].mxu0
      %326 = vmatprep.mubr.f32.mxu0 0.0
      %327 = vmatmul.mubr.f32.gmra.mrb[0].mxu0 %v211
      %v328 = vpop.f32.mrb[0].mxu0
      %v329 = vadd.f32 0.0, %v328
      %v330 = vpop.f32.mrb[0].mxu0
      %331 = vmatprep.mubr.f32.mxu0 0.0
      %332 = vmatmul.mubr.f32.gmra.mrb[0].mxu0 %v214
      %v333 = vpop.f32.mrb[0].mxu0
      %v334 = vadd.f32 0.0, %v333
      %v335 = vpop.f32.mrb[0].mxu0
      %336 = vmatprep.mubr.f32.mxu0 0.0
      %337 = vmatmul.mubr.f32.gmra.mrb[0].mxu0 %v217
      %v338 = vpop.f32.mrb[0].mxu0
      %v339 = vadd.f32 0.0, %v338
      %v340 = vpop.f32.mrb[0].mxu0
      %341 = vmatprep.mubr.f32.mxu0 0.0
      %342 = vmatmul.mubr.f32.gmra.mrb[0].mxu0 %v220
      %v343 = vpop.f32.mrb[0].mxu0
      %v344 = vadd.f32 0.0, %v343
      %v345 = vpop.f32.mrb[0].mxu0
      %346 = vmatprep.mubr.f32.mxu0 0.0
      %347 = vmatmul.mubr.f32.gmra.mrb[0].mxu0 %v223
      %v348 = vpop.f32.mrb[0].mxu0
      %v349 = vadd.f32 0.0, %v348
      %v350 = vpop.f32.mrb[0].mxu0
      %351 = vmatprep.mubr.f32.mxu0 0.0
      %352 = vmatmul.mubr.f32.gmra.mrb[0].mxu0 %v226
      %v353 = vpop.f32.mrb[0].mxu0
      %v354 = vadd.f32 0.0, %v353
      %v355 = vpop.f32.mrb[0].mxu0
      %356 = vmatprep.mubr.f32.mxu0 0.0
      %357 = vmatmul.mubr.f32.gmra.mrb[0].mxu0 %v229
      %v358 = vpop.f32.mrb[0].mxu0
      %v359 = vadd.f32 0.0, %v358
      %v360 = vpop.f32.mrb[0].mxu0
      %361 = vmatprep.mubr.f32.mxu0 0.0
      %362 = vmatmul.mubr.f32.gmra.mrb[0].mxu0 %v232
      %v363 = vpop.f32.mrb[0].mxu0
      %v364 = vadd.f32 0.0, %v363
      %v365 = vpop.f32.mrb[0].mxu0
      %366 = vmatprep.mubr.f32.mxu0 0.0
      %367 = vmatmul.mubr.f32.gmra.mrb[0].mxu0 %v235
      %v368 = vpop.f32.mrb[0].mxu0
      %v369 = vadd.f32 0.0, %v368
      %v370 = vpop.f32.mrb[0].mxu0
      %371 = vmatprep.mubr.f32.mxu0 0.0
      %372 = vmatmul.mubr.f32.gmra.mrb[0].mxu0 %v238
      %v373 = vpop.f32.mrb[0].mxu0
      %v374 = vadd.f32 0.0, %v373
      %v375 = vpop.f32.mrb[0].mxu0
      %376 = vmatprep.mubr.f32.mxu0 0.0
      %377 = vmatmul.mubr.f32.gmra.mrb[0].mxu0 %v241
      %v378 = vpop.f32.mrb[0].mxu0
      %v379 = vadd.f32 0.0, %v378
      %v380 = vpop.f32.mrb[0].mxu0
      %381 = vmatprep.mubr.f32.mxu0 0.0
      %382 = vmatmul.mubr.f32.gmra.mrb[0].mxu0 %v244
      %v383 = vpop.f32.mrb[0].mxu0
      %v384 = vadd.f32 0.0, %v383
      %v385 = vpop.f32.mrb[0].mxu0
      %386 = vmatprep.mubr.f32.mxu0 0.0
      %387 = vmatmul.mubr.f32.gmra.mrb[0].mxu0 %v247
      %v388 = vpop.f32.mrb[0].mxu0
      %v389 = vadd.f32 0.0, %v388
      %v390 = vpop.f32.mrb[0].mxu0
      %391 = vmatprep.mubr.f32.mxu0 0.0
      %392 = vmatmul.mubr.f32.gmra.mrb[0].mxu0 %v250
      %v393 = vpop.f32.mrb[0].mxu0
      %v394 = vadd.f32 0.0, %v393
      %v395 = vpop.f32.mrb[0].mxu0
      %396 = vdwg.mxu0
      %vm397 = vcmask 31744
      %398 = vst.msk [vmem:[%s179] sm:$0xff] %vm397, %v319
      %399 = vst.msk [vmem:[%s179 + $0x8] sm:$0xff] %vm397, %v324
      %400 = vst.msk [vmem:[%s179 + $0x10] sm:$0xff] %vm397, %v329
      %401 = vst.msk [vmem:[%s179 + $0x18] sm:$0xff] %vm397, %v334
      %402 = vst.msk [vmem:[%s179 + $0x20] sm:$0xff] %vm397, %v339
      %403 = vst.msk [vmem:[%s179 + $0x28] sm:$0xff] %vm397, %v344
      %404 = vst.msk [vmem:[%s179 + $0x30] sm:$0xff] %vm397, %v349
      %405 = vst.msk [vmem:[%s179 + $0x38] sm:$0xff] %vm397, %v354
      %406 = vst.msk [vmem:[%s179 + $0x40] sm:$0xff] %vm397, %v359
      %407 = vst.msk [vmem:[%s179 + $0x48] sm:$0xff] %vm397, %v364
      %408 = vst.msk [vmem:[%s179 + $0x50] sm:$0xff] %vm397, %v369
      %409 = vst.msk [vmem:[%s179 + $0x58] sm:$0xff] %vm397, %v374
      %410 = vst.msk [vmem:[%s179 + $0x60] sm:$0xff] %vm397, %v379
      %411 = vst.msk [vmem:[%s179 + $0x68] sm:$0xff] %vm397, %v384
      %412 = vst.msk [vmem:[%s179 + $0x70] sm:$0xff] %vm397, %v389
      %413 = vst.msk [vmem:[%s179 + $0x78] sm:$0xff] %vm397, %v394
      %v414 = vsel %vm397, %v319, 0.0
      %v415 = vsel %vm397, %v324, 0.0
      %v416 = vadd.f32 %v414, %v415
      %v417 = vsel %vm397, %v329, 0.0
      %v418 = vadd.f32 %v416, %v417
      %v419 = vsel %vm397, %v334, 0.0
      %v420 = vadd.f32 %v418, %v419
      %v421 = vsel %vm397, %v339, 0.0
      %v422 = vadd.f32 %v420, %v421
      %v423 = vsel %vm397, %v344, 0.0
      %v424 = vadd.f32 %v422, %v423
      %v425 = vsel %vm397, %v349, 0.0
      %v426 = vadd.f32 %v424, %v425
      %v427 = vsel %vm397, %v354, 0.0
      %v428 = vadd.f32 %v426, %v427
      %v429 = vsel %vm397, %v359, 0.0
      %v430 = vadd.f32 %v428, %v429
      %v431 = vsel %vm397, %v364, 0.0
      %v432 = vadd.f32 %v430, %v431
      %v433 = vsel %vm397, %v369, 0.0
      %v434 = vadd.f32 %v432, %v433
      %v435 = vsel %vm397, %v374, 0.0
      %v436 = vadd.f32 %v434, %v435
      %v437 = vsel %vm397, %v379, 0.0
      %v438 = vadd.f32 %v436, %v437
      %v439 = vsel %vm397, %v384, 0.0
      %v440 = vadd.f32 %v438, %v439
      %v441 = vsel %vm397, %v389, 0.0
      %v442 = vadd.f32 %v440, %v441
      %v443 = vsel %vm397, %v394, 0.0
      %v444 = vadd.f32 %v442, %v443
      %v445 = vrot.slane %v444, 4
      %v446 = vadd.f32 %v444, %v445
      %v447 = vrot.slane %v446, 2
      %v448 = vadd.f32 %v446, %v447
      %v449 = vrot.slane %v448, 1
      %v450 = vadd.f32 %v448, %v449
      %vm451 = vcmask 24576
      %452 = vst.msk [vmem:[%s184] sm:$0x1] %vm451, %v450
      %v453 = vmul.f32 %v319, %v319
      %v454 = vmul.f32 %v324, %v324
      %v455 = vmul.f32 %v329, %v329
      %v456 = vmul.f32 %v334, %v334
      %v457 = vmul.f32 %v339, %v339
      %v458 = vmul.f32 %v344, %v344
      %v459 = vmul.f32 %v349, %v349
      %v460 = vmul.f32 %v354, %v354
      %v461 = vmul.f32 %v359, %v359
      %v462 = vmul.f32 %v364, %v364
      %v463 = vmul.f32 %v369, %v369
      %v464 = vmul.f32 %v374, %v374
      %v465 = vmul.f32 %v379, %v379
      %v466 = vmul.f32 %v384, %v384
      %v467 = vmul.f32 %v389, %v389
      %v468 = vmul.f32 %v394, %v394
      %v469 = vsel %vm397, %v453, 0.0
      %v470 = vsel %vm397, %v454, 0.0
      %v471 = vadd.f32 %v469, %v470
      %v472 = vsel %vm397, %v455, 0.0
      %v473 = vadd.f32 %v471, %v472
      %v474 = vsel %vm397, %v456, 0.0
      %v475 = vadd.f32 %v473, %v474
      %v476 = vsel %vm397, %v457, 0.0
      %v477 = vadd.f32 %v475, %v476
      %v478 = vsel %vm397, %v458, 0.0
      %v479 = vadd.f32 %v477, %v478
      %v480 = vsel %vm397, %v459, 0.0
      %v481 = vadd.f32 %v479, %v480
      %v482 = vsel %vm397, %v460, 0.0
      %v483 = vadd.f32 %v481, %v482
      %v484 = vsel %vm397, %v461, 0.0
      %v485 = vadd.f32 %v483, %v484
      %v486 = vsel %vm397, %v462, 0.0
      %v487 = vadd.f32 %v485, %v486
      %v488 = vsel %vm397, %v463, 0.0
      %v489 = vadd.f32 %v487, %v488
      %v490 = vsel %vm397, %v464, 0.0
      %v491 = vadd.f32 %v489, %v490
      %v492 = vsel %vm397, %v465, 0.0
      %v493 = vadd.f32 %v491, %v492
      %v494 = vsel %vm397, %v466, 0.0
      %v495 = vadd.f32 %v493, %v494
      %v496 = vsel %vm397, %v467, 0.0
      %v497 = vadd.f32 %v495, %v496
      %v498 = vsel %vm397, %v468, 0.0
      %v499 = vadd.f32 %v497, %v498
      %v500 = vrot.slane %v499, 4
      %v501 = vadd.f32 %v499, %v500
      %v502 = vrot.slane %v501, 2
      %v503 = vadd.f32 %v501, %v502
      %v504 = vrot.slane %v503, 1
      %v505 = vadd.f32 %v503, %v504
      %506 = vst.msk [vmem:[%s184 + $0x1] sm:$0x1] %vm451, %v505
      %s507 = smul.u32 16, %s15
      %p508 = scmp.lt.s32.totalorder %s507, 63
      %s509 = scalar_select %p508, %s507, 63
      %s510 = smul.addr %s509, 8
      %s511 = scalar_lea.vmem %s2, %s510
      %p512 = scmp.lt.s32.totalorder %s15, 3
      %s513 = scalar_select %p512, %s15, 3
      %s514 = smul.addr %s513, 2
      %s515 = scalar_lea.vmem %s3, %s514
      // Predicated region
      $region29: #{bottleneck_forward.4} parent=27 // pred_check
        %p516 = pneg %p80
      $region30: #{bottleneck_forward.4} parent=27 // pred_check_branch
        %518 = sbr.rel (%p516) target = $region32
      $region31: #{bottleneck_forward.4} parent=27 // pred_region
        %s519 = smul.u32 16, %s15
      $region32: #{bottleneck_forward.4} parent=27 // pred_fallthru
        _
      // Predicated region
      $region33: #{bottleneck_forward.4} parent=27 // pred_check
        %p520 = pneg %p106
      $region34: #{bottleneck_forward.4} parent=27 // pred_check_branch
        %522 = sbr.rel (%p520) target = $region36
      $region35: #{bottleneck_forward.4} parent=27 // pred_region
        _
      $region36: #{bottleneck_forward.4} parent=27 // pred_fallthru
        _
    $region28: #{bottleneck_forward.4} parent=5 // pred_fallthru
      _
    %p523 = scmp.le.s32.totalorder 2, %s10
    // Predicated region
    $region37: #{bottleneck_forward.4} parent=5 // pred_check
      %p524 = pneg %p523
    $region38: #{bottleneck_forward.4} parent=5 // pred_check_branch
      %526 = sbr.rel (%p524) target = $region40
    $region39: #{bottleneck_forward.4} parent=5 // pred_region
      %s527 = ssub.s32 %s10, 2
      // Predicated region
      $region41: #{bottleneck_forward.4} parent=39 // pred_check
        %p528 = pneg %p86
      $region42: #{bottleneck_forward.4} parent=39 // pred_check_branch
        %530 = sbr.rel (%p528) target = $region44
      $region43: #{bottleneck_forward.4} parent=39 // pred_region
        %s531 = smul.u32 16, %s16
        %p532 = scmp.lt.s32.totalorder %s531, 63
        %s533 = scalar_select %p532, %s531, 63
        %s534 = smul.addr %s533, 8
        %s535 = scalar_lea.vmem %s2, %s534
      $region44: #{bottleneck_forward.4} parent=39 // pred_fallthru
        _
      // Predicated region
      $region45: #{bottleneck_forward.4} parent=39 // pred_check
        %p536 = pneg %p112
      $region46: #{bottleneck_forward.4} parent=39 // pred_check_branch
        %538 = sbr.rel (%p536) target = $region48
      $region47: #{bottleneck_forward.4} parent=39 // pred_region
        %p539 = scmp.lt.s32.totalorder %s16, 3
        %s540 = scalar_select %p539, %s16, 3
        %s541 = smul.addr %s540, 2
        %s542 = scalar_lea.vmem %s3, %s541
      $region48: #{bottleneck_forward.4} parent=39 // pred_fallthru
        _
    $region40: #{bottleneck_forward.4} parent=5 // pred_fallthru
      _
  $region6: #{bottleneck_forward.4} parent=0 // loop_footer
    %s14 = sadd.s32 1, %s10
  $region7: #{bottleneck_forward.4} parent=0 // loop_footer_branch
    %9 = sbr.rel target = $region3
  $region8: #{bottleneck_forward.4} parent=0 // loop_exit
    _

// kernel: bottleneck_forward.6
$region0: #{bottleneck_forward.6}
  #allocation0 [shape = 'u32[]', space=smem, size = 0x4, offset = 0x4, fixed_abs, tag = 'smem constant byte address 0x4 - core index']
  #allocation1 [shape = 'u32[144,128]{1,0:T(1,128)}', space=vmem, size = 0x12000, scoped, tag = 'internal scratch']
  %s0 = inlined_call_operand.vmem [shape: f32[512,4], index: 0, kind: input, shape index: {}]
  %s1 = inlined_call_operand.vmem [shape: f32[1,4], index: 1, kind: input, shape index: {}]
  %s2 = inlined_call_operand.vmem [shape: f32[1,4], index: 2, kind: input, shape index: {}]
  %s3 = inlined_call_operand.vmem [shape: f32[4,16], index: 3, kind: input, shape index: {}]
  %s4 = inlined_call_operand.vmem [shape: f32[512,16], index: 4, kind: output, shape index: {0}]
  %s5 = inlined_call_operand.vmem [shape: f32[4,2,16], index: 5, kind: output, shape index: {1}]
  %6 = xla_tuple %s4, %s5
  %s7 = sld [smem:[#allocation0]]
  $region57: #{bottleneck_forward.6} parent=0
    _
  %s9 = ssub.s32 1, %s7
  %s10 = scalar_select 0, %s9, %s7
  loop: start=0, step=1, limit=6
  $region2: #{bottleneck_forward.6} parent=0 // loop_pre_header
    _
  $region3: #{bottleneck_forward.6} parent=0 // loop_header
    %s12 = sphi 0, %s16
    %p13 = scmp.ge.s32.totalorder %s12, 6
    %s22 = sphi 0, %s24
    %s25 = sphi 0, %s22
    %s26 = sphi 0, %s25
    %s42 = sphi 0, %s26
    %s46 = sphi 0, %s46
    %s48 = sphi 0, %s46
    %s49 = sphi 0, %s48
    %s63 = sphi 0, %s49
    %s67 = sphi 0, %s67
    %s69 = sphi 0, %s67
    %s70 = sphi 0, %s69
    %s84 = sphi 0, %s70
    %s88 = sphi 0, %s88
    %s90 = sphi 0, %s88
    %s91 = sphi 0, %s90
    %s105 = sphi 0, %s91
    %s111 = sphi 0, %s113
    %s114 = sphi 0, %s111
    %s115 = sphi 0, %s114
    %s131 = sphi 0, %s115
    %s137 = sphi 0, %s139
    %s140 = sphi 0, %s137
    %s141 = sphi 0, %s140
    %s157 = sphi 0, %s141
  $region4: #{bottleneck_forward.6} parent=0 // loop_header_branch
    %15 = sbr.rel (%p13) target = $region8
  $region5: #{bottleneck_forward.6} parent=0 // loop_body
    %s17 = ssub.s32 %s12, 1
    %s18 = ssub.s32 %s12, 2
    %s19 = sadd.s32 %s12, 1
    %s20 = ssub.s32 %s12, %s19
    %p21 = scmp.eq.s32.totalorder %s20, 0
    %s23 = sadd.s32 %s22, 1
    %s24 = scalar_select %p21, %s22, %s23
    %p27 = pneg %p21
    %p28 = scmp.eq.s32.totalorder %s12, 3
    %p29 = por %p27, %p28
    %p30 = scmp.ne.s32.totalorder %s22, %s25
    %p31 = scmp.eq.s32.totalorder %s12, 0
    %p32 = por %p30, %p31
    %p33 = scmp.ne.s32.totalorder %s22, %s25
    %p34 = scmp.eq.s32.totalorder %s17, 3
    %p35 = por %p33, %p34
    %p36 = scmp.ne.s32.totalorder %s25, %s26
    %p37 = scmp.eq.s32.totalorder %s17, 0
    %p38 = por %p36, %p37
    %p39 = scmp.ne.s32.totalorder %s25, %s26
    %p40 = scmp.eq.s32.totalorder %s18, 3
    %p41 = por %p39, %p40
    %p43 = scmp.ne.s32.totalorder %s26, %s42
    %p44 = scmp.eq.s32.totalorder %s18, 0
    %p45 = por %p43, %p44
    %s47 = sadd.s32 %s46, 1
    %p50 = scmp.eq.s32.totalorder %s12, 3
    %p51 = scmp.ne.s32.totalorder %s46, %s48
    %p52 = scmp.eq.s32.totalorder %s12, 0
    %p53 = por %p51, %p52
    %p54 = scmp.ne.s32.totalorder %s46, %s48
    %p55 = scmp.eq.s32.totalorder %s17, 3
    %p56 = por %p54, %p55
    %p57 = scmp.ne.s32.totalorder %s48, %s49
    %p58 = scmp.eq.s32.totalorder %s17, 0
    %p59 = por %p57, %p58
    %p60 = scmp.ne.s32.totalorder %s48, %s49
    %p61 = scmp.eq.s32.totalorder %s18, 3
    %p62 = por %p60, %p61
    %p64 = scmp.ne.s32.totalorder %s49, %s63
    %p65 = scmp.eq.s32.totalorder %s18, 0
    %p66 = por %p64, %p65
    %s68 = sadd.s32 %s67, 1
    %p71 = scmp.eq.s32.totalorder %s12, 3
    %p72 = scmp.ne.s32.totalorder %s67, %s69
    %p73 = scmp.eq.s32.totalorder %s12, 0
    %p74 = por %p72, %p73
    %p75 = scmp.ne.s32.totalorder %s67, %s69
    %p76 = scmp.eq.s32.totalorder %s17, 3
    %p77 = por %p75, %p76
    %p78 = scmp.ne.s32.totalorder %s69, %s70
    %p79 = scmp.eq.s32.totalorder %s17, 0
    %p80 = por %p78, %p79
    %p81 = scmp.ne.s32.totalorder %s69, %s70
    %p82 = scmp.eq.s32.totalorder %s18, 3
    %p83 = por %p81, %p82
    %p85 = scmp.ne.s32.totalorder %s70, %s84
    %p86 = scmp.eq.s32.totalorder %s18, 0
    %p87 = por %p85, %p86
    %s89 = sadd.s32 %s88, 1
    %p92 = scmp.eq.s32.totalorder %s12, 3
    %p93 = scmp.ne.s32.totalorder %s88, %s90
    %p94 = scmp.eq.s32.totalorder %s12, 0
    %p95 = por %p93, %p94
    %p96 = scmp.ne.s32.totalorder %s88, %s90
    %p97 = scmp.eq.s32.totalorder %s17, 3
    %p98 = por %p96, %p97
    %p99 = scmp.ne.s32.totalorder %s90, %s91
    %p100 = scmp.eq.s32.totalorder %s17, 0
    %p101 = por %p99, %p100
    %p102 = scmp.ne.s32.totalorder %s90, %s91
    %p103 = scmp.eq.s32.totalorder %s18, 3
    %p104 = por %p102, %p103
    %p106 = scmp.ne.s32.totalorder %s91, %s105
    %p107 = scmp.eq.s32.totalorder %s18, 0
    %p108 = por %p106, %p107
    %s109 = ssub.s32 %s12, %s19
    %p110 = scmp.eq.s32.totalorder %s109, 0
    %s112 = sadd.s32 %s111, 1
    %s113 = scalar_select %p110, %s111, %s112
    %p116 = pneg %p110
    %p117 = scmp.eq.s32.totalorder %s12, 3
    %p118 = por %p116, %p117
    %p119 = scmp.ne.s32.totalorder %s111, %s114
    %p120 = scmp.eq.s32.totalorder %s12, 0
    %p121 = por %p119, %p120
    %p122 = scmp.ne.s32.totalorder %s111, %s114
    %p123 = scmp.eq.s32.totalorder %s17, 3
    %p124 = por %p122, %p123
    %p125 = scmp.ne.s32.totalorder %s114, %s115
    %p126 = scmp.eq.s32.totalorder %s17, 0
    %p127 = por %p125, %p126
    %p128 = scmp.ne.s32.totalorder %s114, %s115
    %p129 = scmp.eq.s32.totalorder %s18, 3
    %p130 = por %p128, %p129
    %p132 = scmp.ne.s32.totalorder %s115, %s131
    %p133 = scmp.eq.s32.totalorder %s18, 0
    %p134 = por %p132, %p133
    %s135 = ssub.s32 %s12, %s19
    %p136 = scmp.eq.s32.totalorder %s135, 0
    %s138 = sadd.s32 %s137, 1
    %s139 = scalar_select %p136, %s137, %s138
    %p142 = pneg %p136
    %p143 = scmp.eq.s32.totalorder %s12, 3
    %p144 = por %p142, %p143
    %p145 = scmp.ne.s32.totalorder %s137, %s140
    %p146 = scmp.eq.s32.totalorder %s12, 0
    %p147 = por %p145, %p146
    %p148 = scmp.ne.s32.totalorder %s137, %s140
    %p149 = scmp.eq.s32.totalorder %s17, 3
    %p150 = por %p148, %p149
    %p151 = scmp.ne.s32.totalorder %s140, %s141
    %p152 = scmp.eq.s32.totalorder %s17, 0
    %p153 = por %p151, %p152
    %p154 = scmp.ne.s32.totalorder %s140, %s141
    %p155 = scmp.eq.s32.totalorder %s18, 3
    %p156 = por %p154, %p155
    %p158 = scmp.ne.s32.totalorder %s141, %s157
    %p159 = scmp.eq.s32.totalorder %s18, 0
    %p160 = por %p158, %p159
    %p161 = scmp.le.s32.totalorder 1, %s12
    %p162 = scmp.lt.s32.totalorder %s12, 5
    %p163 = pnand %p161, %p162
    %p164 = pneg %p163
    // Predicated region
    $region9: #{bottleneck_forward.6} parent=5 // pred_check
      _
    $region10: #{bottleneck_forward.6} parent=5 // pred_check_branch
      %166 = sbr.rel (%p163) target = $region12
    $region11: #{bottleneck_forward.6} parent=5 // pred_region
      %s167 = ssub.s32 %s12, 1
      // Predicated region
      $region13: #{bottleneck_forward.6} parent=11 // pred_check
        %p168 = pneg %p59
      $region14: #{bottleneck_forward.6} parent=11 // pred_check_branch
        %170 = sbr.rel (%p168) target = $region16
      $region15: #{bottleneck_forward.6} parent=11 // pred_region
        _
      $region16: #{bottleneck_forward.6} parent=11 // pred_fallthru
        _
      // Predicated region
      $region17: #{bottleneck_forward.6} parent=11 // pred_check
        %p171 = pneg %p80
      $region18: #{bottleneck_forward.6} parent=11 // pred_check_branch
        %173 = sbr.rel (%p171) target = $region20
      $region19: #{bottleneck_forward.6} parent=11 // pred_region
        _
      $region20: #{bottleneck_forward.6} parent=11 // pred_fallthru
        _
      // Predicated region
      $region21: #{bottleneck_forward.6} parent=11 // pred_check
        %p174 = pneg %p101
      $region22: #{bottleneck_forward.6} parent=11 // pred_check_branch
        %176 = sbr.rel (%p174) target = $region24
      $region23: #{bottleneck_forward.6} parent=11 // pred_region
        _
      $region24: #{bottleneck_forward.6} parent=11 // pred_fallthru
        _
    $region12: #{bottleneck_forward.6} parent=5 // pred_fallthru
      _
    %p177 = scmp.lt.s32.totalorder %s12, 4
    // Predicated region
    $region25: #{bottleneck_forward.6} parent=5 // pred_check
      %p178 = pneg %p177
    $region26: #{bottleneck_forward.6} parent=5 // pred_check_branch
      %180 = sbr.rel (%p178) target = $region28
    $region27: #{bottleneck_forward.6} parent=5 // pred_region
      // Predicated region
      $region29: #{bottleneck_forward.6} parent=27 // pred_check
        %p181 = pneg %p32
      $region30: #{bottleneck_forward.6} parent=27 // pred_check_branch
        %183 = sbr.rel (%p181) target = $region32
      $region31: #{bottleneck_forward.6} parent=27 // pred_region
        %s184 = smul.u32 16, %s12
        %p185 = scmp.lt.s32.totalorder %s184, 63
        %s186 = scalar_select %p185, %s184, 63
        %s187 = smul.addr %s186, 8
        %s188 = scalar_lea.vmem %s0, %s187
        %s189 = smul.u32 16, %s12
      $region32: #{bottleneck_forward.6} parent=27 // pred_fallthru
        _
    $region28: #{bottleneck_forward.6} parent=5 // pred_fallthru
      _
    %p190 = scmp.le.s32.totalorder 1, %s12
    %p191 = scmp.lt.s32.totalorder %s12, 5
    %p192 = pnand %p190, %p191
    %p193 = pneg %p192
    // Predicated region
    $region33: #{bottleneck_forward.6} parent=5 // pred_check
      _
    $region34: #{bottleneck_forward.6} parent=5 // pred_check_branch
      %195 = sbr.rel (%p192) target = $region36
    $region35: #{bottleneck_forward.6} parent=5 // pred_region
      %s196 = ssub.s32 %s12, 1
      %s197 = smul.u32 16, %s17
      %p198 = scmp.lt.s32.totalorder %s197, 63
      %s199 = scalar_select %p198, %s197, 63
      %s200 = smul.addr %s199, 8
      %s201 = scalar_lea.vmem %s0, %s200
      %p202 = pneg %p38
      %p203 = pneg %p35
      %p204 = pneg %p59
      %p205 = pneg %p56
      %p206 = pneg %p80
      %p207 = pneg %p77
      %p208 = pneg %p101
      %p209 = pneg %p98
      %p210 = pneg %p127
      %p211 = pneg %p124
      %s212 = smul.u32 16, %s17
      %p213 = scmp.lt.s32.totalorder %s212, 63
      %s214 = scalar_select %p213, %s212, 63
      %s215 = smul.addr %s214, 8
      %s216 = scalar_lea.vmem %s4, %s215
      %p217 = pneg %p153
      %p218 = pneg %p150
      %p219 = scmp.lt.s32.totalorder %s17, 3
      %s220 = scalar_select %p219, %s17, 3
      %s221 = smul.addr %s220, 2
      %s222 = scalar_lea.vmem %s5, %s221
      %s223 = smul.u32 16, %s17
      %p224 = scmp.lt.s32.totalorder %s223, 63
      %s225 = scalar_select %p224, %s223, 63
      %s226 = smul.addr %s225, 8
      %s227 = scalar_lea.vmem %s0, %s226
      %s228 = smul.u32 16, %s17
      %s229 = smul.u32 16, %s17
      %p230 = scmp.lt.s32.totalorder %s229, 63
      %s231 = scalar_select %p230, %s229, 63
      %s232 = smul.addr %s231, 8
      %s233 = scalar_lea.vmem %s4, %s232
      %s234 = smul.u32 16, %s17
      %p235 = scmp.lt.s32.totalorder %s17, 3
      %s236 = scalar_select %p235, %s17, 3
      %s237 = smul.addr %s236, 2
      %s238 = scalar_lea.vmem %s5, %s237
      %v239 = vld [vmem:[%s227] sm:$0xff]
      %v240 = vld [vmem:[%s227 + $0x8] sm:$0xff]
      %v241 = vld [vmem:[%s227 + $0x10] sm:$0xff]
      %v242 = vld [vmem:[%s227 + $0x18] sm:$0xff]
      %v243 = vld [vmem:[%s227 + $0x20] sm:$0xff]
      %v244 = vld [vmem:[%s227 + $0x28] sm:$0xff]
      %v245 = vld [vmem:[%s227 + $0x30] sm:$0xff]
      %v246 = vld [vmem:[%s227 + $0x38] sm:$0xff]
      %v247 = vld [vmem:[%s227 + $0x40] sm:$0xff]
      %v248 = vld [vmem:[%s227 + $0x48] sm:$0xff]
      %v249 = vld [vmem:[%s227 + $0x50] sm:$0xff]
      %v250 = vld [vmem:[%s227 + $0x58] sm:$0xff]
      %v251 = vld [vmem:[%s227 + $0x60] sm:$0xff]
      %v252 = vld [vmem:[%s227 + $0x68] sm:$0xff]
      %v253 = vld [vmem:[%s227 + $0x70] sm:$0xff]
      %v254 = vld [vmem:[%s227 + $0x78] sm:$0xff]
      %v255 = vld [vmem:[%s1] sm:$0x1]
      %v257 = vlaneseq
      %v258 = vshrl.u32 %v257, 7
      %v259 = vsub.s32 0, %v258
      %v260 = vrot.slane %v255, %v259
      %v262 = vmul.f32 %v239, %v260
      %v263 = vmul.f32 %v240, %v260
      %v264 = vmul.f32 %v241, %v260
      %v265 = vmul.f32 %v242, %v260
      %v266 = vmul.f32 %v243, %v260
      %v267 = vmul.f32 %v244, %v260
      %v268 = vmul.f32 %v245, %v260
      %v269 = vmul.f32 %v246, %v260
      %v270 = vmul.f32 %v247, %v260
      %v271 = vmul.f32 %v248, %v260
      %v272 = vmul.f32 %v249, %v260
      %v273 = vmul.f32 %v250, %v260
      %v274 = vmul.f32 %v251, %v260
      %v275 = vmul.f32 %v252, %v260
      %v276 = vmul.f32 %v253, %v260
      %v277 = vmul.f32 %v254, %v260
      %v278 = vld [vmem:[%s2] sm:$0x1]
      %v280 = vlaneseq
      %v281 = vshrl.u32 %v280, 7
      %v282 = vsub.s32 0, %v281
      %v283 = vrot.slane %v278, %v282
      %v285 = vadd.f32 %v262, %v283
      %v286 = vadd.f32 %v263, %v283
      %v287 = vadd.f32 %v264, %v283
      %v288 = vadd.f32 %v265, %v283
      %v289 = vadd.f32 %v266, %v283
      %v290 = vadd.f32 %v267, %v283
      %v291 = vadd.f32 %v268, %v283
      %v292 = vadd.f32 %v269, %v283
      %v293 = vadd.f32 %v270, %v283
      %v294 = vadd.f32 %v271, %v283
      %v295 = vadd.f32 %v272, %v283
      %v296 = vadd.f32 %v273, %v283
      %v297 = vadd.f32 %v274, %v283
      %v298 = vadd.f32 %v275, %v283
      %v299 = vadd.f32 %v276, %v283
      %v300 = vadd.f32 %v277, %v283
      %v301 = vmax.f32 %v285, 0.0
      %v302 = vmax.f32 %v286, 0.0
      %v303 = vmax.f32 %v287, 0.0
      %v304 = vmax.f32 %v288, 0.0
      %v305 = vmax.f32 %v289, 0.0
      %v306 = vmax.f32 %v290, 0.0
      %v307 = vmax.f32 %v291, 0.0
      %v308 = vmax.f32 %v292, 0.0
      %v309 = vmax.f32 %v293, 0.0
      %v310 = vmax.f32 %v294, 0.0
      %v311 = vmax.f32 %v295, 0.0
      %v312 = vmax.f32 %v296, 0.0
      %v313 = vmax.f32 %v297, 0.0
      %v314 = vmax.f32 %v298, 0.0
      %v315 = vmax.f32 %v299, 0.0
      %v316 = vmax.f32 %v300, 0.0
      %v317 = vld [vmem:[%s3] sm:$0xf]
      %vm318 = vcmask 31744
      %v320 = vsel %vm318, %v301, 0
      %v323 = vsel %vm318, %v302, 0
      %v326 = vsel %vm318, %v303, 0
      %v329 = vsel %vm318, %v304, 0
      %v332 = vsel %vm318, %v305, 0
      %v335 = vsel %vm318, %v306, 0
      %v338 = vsel %vm318, %v307, 0
      %v341 = vsel %vm318, %v308, 0
      %v344 = vsel %vm318, %v309, 0
      %v347 = vsel %vm318, %v310, 0
      %v350 = vsel %vm318, %v311, 0
      %v353 = vsel %vm318, %v312, 0
      %v356 = vsel %vm318, %v313, 0
      %v359 = vsel %vm318, %v314, 0
      %v362 = vsel %vm318, %v315, 0
      %v365 = vsel %vm318, %v316, 0
      %vm367 = vcmask 1043456
      %v369 = vsel %vm367, %v317, 0
      %371 = vmatprep.subr.mxu0 0.0
      %372 = vmatpush1.msra.mxu0 %v369
      %373 = vmatprep.subr.mxu0 0.0
      %374 = vmatpush1.msra.mxu0 0.0
      %375 = vmatprep.subr.mxu0 0.0
      %376 = vmatpush1.msra.mxu0 0.0
      %377 = vmatprep.subr.mxu0 0.0
      %378 = vmatpush1.msra.mxu0 0.0
      %379 = vmatprep.subr.mxu0 0.0
      %380 = vmatpush1.msra.mxu0 0.0
      %381 = vmatprep.subr.mxu0 0.0
      %382 = vmatpush1.msra.mxu0 0.0
      %383 = vmatprep.subr.mxu0 0.0
      %384 = vmatpush1.msra.mxu0 0.0
      %385 = vmatprep.subr.mxu0 0.0
      %386 = vmatpush1.msra.mxu0 0.0
      %387 = vmatprep.subr.mxu0 0.0
      %388 = vmatpush1.msra.mxu0 0.0
      %389 = vmatprep.subr.mxu0 0.0
      %390 = vmatpush1.msra.mxu0 0.0
      %391 = vmatprep.subr.mxu0 0.0
      %392 = vmatpush1.msra.mxu0 0.0
      %393 = vmatprep.subr.mxu0 0.0
      %394 = vmatpush1.msra.mxu0 0.0
      %395 = vmatprep.subr.mxu0 0.0
      %396 = vmatpush1.msra.mxu0 0.0
      %397 = vmatprep.subr.mxu0 0.0
      %398 = vmatpush1.msra.mxu0 0.0
      %399 = vmatprep.subr.mxu0 0.0
      %400 = vmatpush1.msra.mxu0 0.0
      %401 = vmatprep.subr.mxu0 0.0
      %402 = vmatpush1.msra.mxu0 0.0
      %403 = vmatprep.subr.mxu0 0.0
      %404 = vmatpush1.msra.mxu0 0.0
      %405 = vmatprep.subr.mxu0 0.0
      %406 = vmatpush1.msra.mxu0 0.0
      %407 = vmatprep.subr.mxu0 0.0
      %408 = vmatpush1.msra.mxu0 0.0
      %409 = vmatprep.subr.mxu0 0.0
      %410 = vmatpush1.msra.mxu0 0.0
      %411 = vmatprep.subr.mxu0 0.0
      %412 = vmatpush1.msra.mxu0 0.0
      %413 = vmatprep.subr.mxu0 0.0
      %414 = vmatpush1.msra.mxu0 0.0
      %415 = vmatprep.subr.mxu0 0.0
      %416 = vmatpush1.msra.mxu0 0.0
      %417 = vmatprep.subr.mxu0 0.0
      %418 = vmatpush1.msra.mxu0 0.0
      %419 = vmatprep.subr.mxu0 0.0
      %420 = vmatpush1.msra.mxu0 0.0
      %421 = vmatprep.subr.mxu0 0.0
      %422 = vmatpush1.msra.mxu0 0.0
      %423 = vmatprep.subr.mxu0 0.0
      %424 = vmatpush1.msra.mxu0 0.0
      %425 = vmatprep.subr.mxu0 0.0
      %426 = vmatpush1.msra.mxu0 0.0
      %427 = vmatprep.subr.mxu0 0.0
      %428 = vmatpush1.msra.mxu0 0.0
      %429 = vmatprep.subr.mxu0 0.0
      %430 = vmatpush1.msra.mxu0 0.0
      %431 = vmatprep.subr.mxu0 0.0
      %432 = vmatpush1.msra.mxu0 0.0
      %433 = vmatprep.subr.mxu0 0.0
      %434 = vmatpush1.msra.mxu0 0.0
      %435 = vmatprep.mubr.f32.mxu0 0.0
      %436 = vmatmul.mubr.f32.gmra.mrb[0].mxu0 %v320
      %v437 = vpop.f32.mrb[0].mxu0
      %v438 = vadd.f32 0.0, %v437
      %v439 = vpop.f32.mrb[0].mxu0
      %440 = vmatprep.mubr.f32.mxu0 0.0
      %441 = vmatmul.mubr.f32.gmra.mrb[0].mxu0 %v323
      %v442 = vpop.f32.mrb[0].mxu0
      %v443 = vadd.f32 0.0, %v442
      %v444 = vpop.f32.mrb[0].mxu0
      %445 = vmatprep.mubr.f32.mxu0 0.0
      %446 = vmatmul.mubr.f32.gmra.mrb[0].mxu0 %v326
      %v447 = vpop.f32.mrb[0].mxu0
      %v448 = vadd.f32 0.0, %v447
      %v449 = vpop.f32.mrb[0].mxu0
      %450 = vmatprep.mubr.f32.mxu0 0.0
      %451 = vmatmul.mubr.f32.gmra.mrb[0].mxu0 %v329
      %v452 = vpop.f32.mrb[0].mxu0
      %v453 = vadd.f32 0.0, %v452
      %v454 = vpop.f32.mrb[0].mxu0
      %455 = vmatprep.mubr.f32.mxu0 0.0
      %456 = vmatmul.mubr.f32.gmra.mrb[0].mxu0 %v332
      %v457 = vpop.f32.mrb[0].mxu0
      %v458 = vadd.f32 0.0, %v457
      %v459 = vpop.f32.mrb[0].mxu0
      %460 = vmatprep.mubr.f32.mxu0 0.0
      %461 = vmatmul.mubr.f32.gmra.mrb[0].mxu0 %v335
      %v462 = vpop.f32.mrb[0].mxu0
      %v463 = vadd.f32 0.0, %v462
      %v464 = vpop.f32.mrb[0].mxu0
      %465 = vmatprep.mubr.f32.mxu0 0.0
      %466 = vmatmul.mubr.f32.gmra.mrb[0].mxu0 %v338
      %v467 = vpop.f32.mrb[0].mxu0
      %v468 = vadd.f32 0.0, %v467
      %v469 = vpop.f32.mrb[0].mxu0
      %470 = vmatprep.mubr.f32.mxu0 0.0
      %471 = vmatmul.mubr.f32.gmra.mrb[0].mxu0 %v341
      %v472 = vpop.f32.mrb[0].mxu0
      %v473 = vadd.f32 0.0, %v472
      %v474 = vpop.f32.mrb[0].mxu0
      %475 = vmatprep.mubr.f32.mxu0 0.0
      %476 = vmatmul.mubr.f32.gmra.mrb[0].mxu0 %v344
      %v477 = vpop.f32.mrb[0].mxu0
      %v478 = vadd.f32 0.0, %v477
      %v479 = vpop.f32.mrb[0].mxu0
      %480 = vmatprep.mubr.f32.mxu0 0.0
      %481 = vmatmul.mubr.f32.gmra.mrb[0].mxu0 %v347
      %v482 = vpop.f32.mrb[0].mxu0
      %v483 = vadd.f32 0.0, %v482
      %v484 = vpop.f32.mrb[0].mxu0
      %485 = vmatprep.mubr.f32.mxu0 0.0
      %486 = vmatmul.mubr.f32.gmra.mrb[0].mxu0 %v350
      %v487 = vpop.f32.mrb[0].mxu0
      %v488 = vadd.f32 0.0, %v487
      %v489 = vpop.f32.mrb[0].mxu0
      %490 = vmatprep.mubr.f32.mxu0 0.0
      %491 = vmatmul.mubr.f32.gmra.mrb[0].mxu0 %v353
      %v492 = vpop.f32.mrb[0].mxu0
      %v493 = vadd.f32 0.0, %v492
      %v494 = vpop.f32.mrb[0].mxu0
      %495 = vmatprep.mubr.f32.mxu0 0.0
      %496 = vmatmul.mubr.f32.gmra.mrb[0].mxu0 %v356
      %v497 = vpop.f32.mrb[0].mxu0
      %v498 = vadd.f32 0.0, %v497
      %v499 = vpop.f32.mrb[0].mxu0
      %500 = vmatprep.mubr.f32.mxu0 0.0
      %501 = vmatmul.mubr.f32.gmra.mrb[0].mxu0 %v359
      %v502 = vpop.f32.mrb[0].mxu0
      %v503 = vadd.f32 0.0, %v502
      %v504 = vpop.f32.mrb[0].mxu0
      %505 = vmatprep.mubr.f32.mxu0 0.0
      %506 = vmatmul.mubr.f32.gmra.mrb[0].mxu0 %v362
      %v507 = vpop.f32.mrb[0].mxu0
      %v508 = vadd.f32 0.0, %v507
      %v509 = vpop.f32.mrb[0].mxu0
      %510 = vmatprep.mubr.f32.mxu0 0.0
      %511 = vmatmul.mubr.f32.gmra.mrb[0].mxu0 %v365
      %v512 = vpop.f32.mrb[0].mxu0
      %v513 = vadd.f32 0.0, %v512
      %v514 = vpop.f32.mrb[0].mxu0
      %515 = vdwg.mxu0
      %vm516 = vcmask 130048
      %517 = vst.msk [vmem:[%s233] sm:$0xff] %vm516, %v438
      %518 = vst.msk [vmem:[%s233 + $0x8] sm:$0xff] %vm516, %v443
      %519 = vst.msk [vmem:[%s233 + $0x10] sm:$0xff] %vm516, %v448
      %520 = vst.msk [vmem:[%s233 + $0x18] sm:$0xff] %vm516, %v453
      %521 = vst.msk [vmem:[%s233 + $0x20] sm:$0xff] %vm516, %v458
      %522 = vst.msk [vmem:[%s233 + $0x28] sm:$0xff] %vm516, %v463
      %523 = vst.msk [vmem:[%s233 + $0x30] sm:$0xff] %vm516, %v468
      %524 = vst.msk [vmem:[%s233 + $0x38] sm:$0xff] %vm516, %v473
      %525 = vst.msk [vmem:[%s233 + $0x40] sm:$0xff] %vm516, %v478
      %526 = vst.msk [vmem:[%s233 + $0x48] sm:$0xff] %vm516, %v483
      %527 = vst.msk [vmem:[%s233 + $0x50] sm:$0xff] %vm516, %v488
      %528 = vst.msk [vmem:[%s233 + $0x58] sm:$0xff] %vm516, %v493
      %529 = vst.msk [vmem:[%s233 + $0x60] sm:$0xff] %vm516, %v498
      %530 = vst.msk [vmem:[%s233 + $0x68] sm:$0xff] %vm516, %v503
      %531 = vst.msk [vmem:[%s233 + $0x70] sm:$0xff] %vm516, %v508
      %532 = vst.msk [vmem:[%s233 + $0x78] sm:$0xff] %vm516, %v513
      %v533 = vsel %vm516, %v438, 0.0
      %v534 = vsel %vm516, %v443, 0.0
      %v535 = vadd.f32 %v533, %v534
      %v536 = vsel %vm516, %v448, 0.0
      %v537 = vadd.f32 %v535, %v536
      %v538 = vsel %vm516, %v453, 0.0
      %v539 = vadd.f32 %v537, %v538
      %v540 = vsel %vm516, %v458, 0.0
      %v541 = vadd.f32 %v539, %v540
      %v542 = vsel %vm516, %v463, 0.0
      %v543 = vadd.f32 %v541, %v542
      %v544 = vsel %vm516, %v468, 0.0
      %v545 = vadd.f32 %v543, %v544
      %v546 = vsel %vm516, %v473, 0.0
      %v547 = vadd.f32 %v545, %v546
      %v548 = vsel %vm516, %v478, 0.0
      %v549 = vadd.f32 %v547, %v548
      %v550 = vsel %vm516, %v483, 0.0
      %v551 = vadd.f32 %v549, %v550
      %v552 = vsel %vm516, %v488, 0.0
      %v553 = vadd.f32 %v551, %v552
      %v554 = vsel %vm516, %v493, 0.0
      %v555 = vadd.f32 %v553, %v554
      %v556 = vsel %vm516, %v498, 0.0
      %v557 = vadd.f32 %v555, %v556
      %v558 = vsel %vm516, %v503, 0.0
      %v559 = vadd.f32 %v557, %v558
      %v560 = vsel %vm516, %v508, 0.0
      %v561 = vadd.f32 %v559, %v560
      %v562 = vsel %vm516, %v513, 0.0
      %v563 = vadd.f32 %v561, %v562
      %v564 = vrot.slane %v563, 4
      %v565 = vadd.f32 %v563, %v564
      %v566 = vrot.slane %v565, 2
      %v567 = vadd.f32 %v565, %v566
      %v568 = vrot.slane %v567, 1
      %v569 = vadd.f32 %v567, %v568
      %vm570 = vcmask 122880
      %571 = vst.msk [vmem:[%s238] sm:$0x1] %vm570, %v569
      %v572 = vmul.f32 %v438, %v438
      %v573 = vmul.f32 %v443, %v443
      %v574 = vmul.f32 %v448, %v448
      %v575 = vmul.f32 %v453, %v453
      %v576 = vmul.f32 %v458, %v458
      %v577 = vmul.f32 %v463, %v463
      %v578 = vmul.f32 %v468, %v468
      %v579 = vmul.f32 %v473, %v473
      %v580 = vmul.f32 %v478, %v478
      %v581 = vmul.f32 %v483, %v483
      %v582 = vmul.f32 %v488, %v488
      %v583 = vmul.f32 %v493, %v493
      %v584 = vmul.f32 %v498, %v498
      %v585 = vmul.f32 %v503, %v503
      %v586 = vmul.f32 %v508, %v508
      %v587 = vmul.f32 %v513, %v513
      %v588 = vsel %vm516, %v572, 0.0
      %v589 = vsel %vm516, %v573, 0.0
      %v590 = vadd.f32 %v588, %v589
      %v591 = vsel %vm516, %v574, 0.0
      %v592 = vadd.f32 %v590, %v591
      %v593 = vsel %vm516, %v575, 0.0
      %v594 = vadd.f32 %v592, %v593
      %v595 = vsel %vm516, %v576, 0.0
      %v596 = vadd.f32 %v594, %v595
      %v597 = vsel %vm516, %v577, 0.0
      %v598 = vadd.f32 %v596, %v597
      %v599 = vsel %vm516, %v578, 0.0
      %v600 = vadd.f32 %v598, %v599
      %v601 = vsel %vm516, %v579, 0.0
      %v602 = vadd.f32 %v600, %v601
      %v603 = vsel %vm516, %v580, 0.0
      %v604 = vadd.f32 %v602, %v603
      %v605 = vsel %vm516, %v581, 0.0
      %v606 = vadd.f32 %v604, %v605
      %v607 = vsel %vm516, %v582, 0.0
      %v608 = vadd.f32 %v606, %v607
      %v609 = vsel %vm516, %v583, 0.0
      %v610 = vadd.f32 %v608, %v609
      %v611 = vsel %vm516, %v584, 0.0
      %v612 = vadd.f32 %v610, %v611
      %v613 = vsel %vm516, %v585, 0.0
      %v614 = vadd.f32 %v612, %v613
      %v615 = vsel %vm516, %v586, 0.0
      %v616 = vadd.f32 %v614, %v615
      %v617 = vsel %vm516, %v587, 0.0
      %v618 = vadd.f32 %v616, %v617
      %v619 = vrot.slane %v618, 4
      %v620 = vadd.f32 %v618, %v619
      %v621 = vrot.slane %v620, 2
      %v622 = vadd.f32 %v620, %v621
      %v623 = vrot.slane %v622, 1
      %v624 = vadd.f32 %v622, %v623
      %625 = vst.msk [vmem:[%s238 + $0x1] sm:$0x1] %vm570, %v624
      %s626 = smul.u32 16, %s17
      %p627 = scmp.lt.s32.totalorder %s626, 63
      %s628 = scalar_select %p627, %s626, 63
      %s629 = smul.addr %s628, 8
      %s630 = scalar_lea.vmem %s4, %s629
      %p631 = scmp.lt.s32.totalorder %s17, 3
      %s632 = scalar_select %p631, %s17, 3
      %s633 = smul.addr %s632, 2
      %s634 = scalar_lea.vmem %s5, %s633
      // Predicated region
      $region37: #{bottleneck_forward.6} parent=35 // pred_check
        %p635 = pneg %p124
      $region38: #{bottleneck_forward.6} parent=35 // pred_check_branch
        %637 = sbr.rel (%p635) target = $region40
      $region39: #{bottleneck_forward.6} parent=35 // pred_region
        %s638 = smul.u32 16, %s17
      $region40: #{bottleneck_forward.6} parent=35 // pred_fallthru
        _
      // Predicated region
      $region41: #{bottleneck_forward.6} parent=35 // pred_check
        %p639 = pneg %p150
      $region42: #{bottleneck_forward.6} parent=35 // pred_check_branch
        %641 = sbr.rel (%p639) target = $region44
      $region43: #{bottleneck_forward.6} parent=35 // pred_region
        _
      $region44: #{bottleneck_forward.6} parent=35 // pred_fallthru
        _
    $region36: #{bottleneck_forward.6} parent=5 // pred_fallthru
      _
    %p642 = scmp.le.s32.totalorder 2, %s12
    // Predicated region
    $region45: #{bottleneck_forward.6} parent=5 // pred_check
      %p643 = pneg %p642
    $region46: #{bottleneck_forward.6} parent=5 // pred_check_branch
      %645 = sbr.rel (%p643) target = $region48
    $region47: #{bottleneck_forward.6} parent=5 // pred_region
      %s646 = ssub.s32 %s12, 2
      // Predicated region
      $region49: #{bottleneck_forward.6} parent=47 // pred_check
        %p647 = pneg %p130
      $region50: #{bottleneck_forward.6} parent=47 // pred_check_branch
        %649 = sbr.rel (%p647) target = $region52
      $region51: #{bottleneck_forward.6} parent=47 // pred_region
        %s650 = smul.u32 16, %s18
        %p651 = scmp.lt.s32.totalorder %s650, 63
        %s652 = scalar_select %p651, %s650, 63
        %s653 = smul.addr %s652, 8
        %s654 = scalar_lea.vmem %s4, %s653
      $region52: #{bottleneck_forward.6} parent=47 // pred_fallthru
        _
      // Predicated region
      $region53: #{bottleneck_forward.6} parent=47 // pred_check
        %p655 = pneg %p156
      $region54: #{bottleneck_forward.6} parent=47 // pred_check_branch
        %657 = sbr.rel (%p655) target = $region56
      $region55: #{bottleneck_forward.6} parent=47 // pred_region
        %p658 = scmp.lt.s32.totalorder %s18, 3
        %s659 = scalar_select %p658, %s18, 3
        %s660 = smul.addr %s659, 2
        %s661 = scalar_lea.vmem %s5, %s660
      $region56: #{bottleneck_forward.6} parent=47 // pred_fallthru
        _
    $region48: #{bottleneck_forward.6} parent=5 // pred_fallthru
      _
  $region6: #{bottleneck_forward.6} parent=0 // loop_footer
    %s16 = sadd.s32 1, %s12
  $region7: #{bottleneck_forward.6} parent=0 // loop_footer_branch
    %11 = sbr.rel target = $region3
  $region8: #{bottleneck_forward.6} parent=0 // loop_exit
    _

// kernel: bottleneck_forward.7
$region0: #{bottleneck_forward.7}
  #allocation0 [shape = 'u32[]', space=smem, size = 0x4, offset = 0x4, fixed_abs, tag = 'smem constant byte address 0x4 - core index']
  #allocation1 [shape = 'u32[144,128]{1,0:T(1,128)}', space=vmem, size = 0x12000, scoped, tag = 'internal scratch']
  %s0 = inlined_call_operand.vmem [shape: f32[512,16], index: 0, kind: input, shape index: {}]
  %s1 = inlined_call_operand.vmem [shape: f32[512,16], index: 1, kind: input, shape index: {}]
  %s2 = inlined_call_operand.vmem [shape: f32[1,16], index: 2, kind: input, shape index: {}]
  %s3 = inlined_call_operand.vmem [shape: f32[1,16], index: 3, kind: input, shape index: {}]
  %s4 = inlined_call_operand.vmem [shape: f32[512,16], index: 4, kind: output, shape index: {}]
  %s5 = sld [smem:[#allocation0]]
  $region49: #{bottleneck_forward.7} parent=0
    _
  %s7 = ssub.s32 1, %s5
  %s8 = scalar_select 0, %s7, %s5
  loop: start=0, step=1, limit=6
  $region2: #{bottleneck_forward.7} parent=0 // loop_pre_header
    _
  $region3: #{bottleneck_forward.7} parent=0 // loop_header
    %s10 = sphi 0, %s14
    %p11 = scmp.ge.s32.totalorder %s10, 6
    %s20 = sphi 0, %s22
    %s23 = sphi 0, %s20
    %s24 = sphi 0, %s23
    %s40 = sphi 0, %s24
    %s46 = sphi 0, %s48
    %s49 = sphi 0, %s46
    %s50 = sphi 0, %s49
    %s66 = sphi 0, %s50
    %s70 = sphi 0, %s70
    %s72 = sphi 0, %s70
    %s73 = sphi 0, %s72
    %s87 = sphi 0, %s73
    %s91 = sphi 0, %s91
    %s93 = sphi 0, %s91
    %s94 = sphi 0, %s93
    %s108 = sphi 0, %s94
    %s114 = sphi 0, %s116
    %s117 = sphi 0, %s114
    %s118 = sphi 0, %s117
    %s134 = sphi 0, %s118
  $region4: #{bottleneck_forward.7} parent=0 // loop_header_branch
    %13 = sbr.rel (%p11) target = $region8
  $region5: #{bottleneck_forward.7} parent=0 // loop_body
    %s15 = ssub.s32 %s10, 1
    %s16 = ssub.s32 %s10, 2
    %s17 = sadd.s32 %s10, 1
    %s18 = ssub.s32 %s10, %s17
    %p19 = scmp.eq.s32.totalorder %s18, 0
    %s21 = sadd.s32 %s20, 1
    %s22 = scalar_select %p19, %s20, %s21
    %p25 = pneg %p19
    %p26 = scmp.eq.s32.totalorder %s10, 3
    %p27 = por %p25, %p26
    %p28 = scmp.ne.s32.totalorder %s20, %s23
    %p29 = scmp.eq.s32.totalorder %s10, 0
    %p30 = por %p28, %p29
    %p31 = scmp.ne.s32.totalorder %s20, %s23
    %p32 = scmp.eq.s32.totalorder %s15, 3
    %p33 = por %p31, %p32
    %p34 = scmp.ne.s32.totalorder %s23, %s24
    %p35 = scmp.eq.s32.totalorder %s15, 0
    %p36 = por %p34, %p35
    %p37 = scmp.ne.s32.totalorder %s23, %s24
    %p38 = scmp.eq.s32.totalorder %s16, 3
    %p39 = por %p37, %p38
    %p41 = scmp.ne.s32.totalorder %s24, %s40
    %p42 = scmp.eq.s32.totalorder %s16, 0
    %p43 = por %p41, %p42
    %s44 = ssub.s32 %s10, %s17
    %p45 = scmp.eq.s32.totalorder %s44, 0
    %s47 = sadd.s32 %s46, 1
    %s48 = scalar_select %p45, %s46, %s47
    %p51 = pneg %p45
    %p52 = scmp.eq.s32.totalorder %s10, 3
    %p53 = por %p51, %p52
    %p54 = scmp.ne.s32.totalorder %s46, %s49
    %p55 = scmp.eq.s32.totalorder %s10, 0
    %p56 = por %p54, %p55
    %p57 = scmp.ne.s32.totalorder %s46, %s49
    %p58 = scmp.eq.s32.totalorder %s15, 3
    %p59 = por %p57, %p58
    %p60 = scmp.ne.s32.totalorder %s49, %s50
    %p61 = scmp.eq.s32.totalorder %s15, 0
    %p62 = por %p60, %p61
    %p63 = scmp.ne.s32.totalorder %s49, %s50
    %p64 = scmp.eq.s32.totalorder %s16, 3
    %p65 = por %p63, %p64
    %p67 = scmp.ne.s32.totalorder %s50, %s66
    %p68 = scmp.eq.s32.totalorder %s16, 0
    %p69 = por %p67, %p68
    %s71 = sadd.s32 %s70, 1
    %p74 = scmp.eq.s32.totalorder %s10, 3
    %p75 = scmp.ne.s32.totalorder %s70, %s72
    %p76 = scmp.eq.s32.totalorder %s10, 0
    %p77 = por %p75, %p76
    %p78 = scmp.ne.s32.totalorder %s70, %s72
    %p79 = scmp.eq.s32.totalorder %s15, 3
    %p80 = por %p78, %p79
    %p81 = scmp.ne.s32.totalorder %s72, %s73
    %p82 = scmp.eq.s32.totalorder %s15, 0
    %p83 = por %p81, %p82
    %p84 = scmp.ne.s32.totalorder %s72, %s73
    %p85 = scmp.eq.s32.totalorder %s16, 3
    %p86 = por %p84, %p85
    %p88 = scmp.ne.s32.totalorder %s73, %s87
    %p89 = scmp.eq.s32.totalorder %s16, 0
    %p90 = por %p88, %p89
    %s92 = sadd.s32 %s91, 1
    %p95 = scmp.eq.s32.totalorder %s10, 3
    %p96 = scmp.ne.s32.totalorder %s91, %s93
    %p97 = scmp.eq.s32.totalorder %s10, 0
    %p98 = por %p96, %p97
    %p99 = scmp.ne.s32.totalorder %s91, %s93
    %p100 = scmp.eq.s32.totalorder %s15, 3
    %p101 = por %p99, %p100
    %p102 = scmp.ne.s32.totalorder %s93, %s94
    %p103 = scmp.eq.s32.totalorder %s15, 0
    %p104 = por %p102, %p103
    %p105 = scmp.ne.s32.totalorder %s93, %s94
    %p106 = scmp.eq.s32.totalorder %s16, 3
    %p107 = por %p105, %p106
    %p109 = scmp.ne.s32.totalorder %s94, %s108
    %p110 = scmp.eq.s32.totalorder %s16, 0
    %p111 = por %p109, %p110
    %s112 = ssub.s32 %s10, %s17
    %p113 = scmp.eq.s32.totalorder %s112, 0
    %s115 = sadd.s32 %s114, 1
    %s116 = scalar_select %p113, %s114, %s115
    %p119 = pneg %p113
    %p120 = scmp.eq.s32.totalorder %s10, 3
    %p121 = por %p119, %p120
    %p122 = scmp.ne.s32.totalorder %s114, %s117
    %p123 = scmp.eq.s32.totalorder %s10, 0
    %p124 = por %p122, %p123
    %p125 = scmp.ne.s32.totalorder %s114, %s117
    %p126 = scmp.eq.s32.totalorder %s15, 3
    %p127 = por %p125, %p126
    %p128 = scmp.ne.s32.totalorder %s117, %s118
    %p129 = scmp.eq.s32.totalorder %s15, 0
    %p130 = por %p128, %p129
    %p131 = scmp.ne.s32.totalorder %s117, %s118
    %p132 = scmp.eq.s32.totalorder %s16, 3
    %p133 = por %p131, %p132
    %p135 = scmp.ne.s32.totalorder %s118, %s134
    %p136 = scmp.eq.s32.totalorder %s16, 0
    %p137 = por %p135, %p136
    %p138 = scmp.le.s32.totalorder 1, %s10
    %p139 = scmp.lt.s32.totalorder %s10, 5
    %p140 = pnand %p138, %p139
    %p141 = pneg %p140
    // Predicated region
    $region9: #{bottleneck_forward.7} parent=5 // pred_check
      _
    $region10: #{bottleneck_forward.7} parent=5 // pred_check_branch
      %143 = sbr.rel (%p140) target = $region12
    $region11: #{bottleneck_forward.7} parent=5 // pred_region
      %s144 = ssub.s32 %s10, 1
      // Predicated region
      $region13: #{bottleneck_forward.7} parent=11 // pred_check
        %p145 = pneg %p83
      $region14: #{bottleneck_forward.7} parent=11 // pred_check_branch
        %147 = sbr.rel (%p145) target = $region16
      $region15: #{bottleneck_forward.7} parent=11 // pred_region
        _
      $region16: #{bottleneck_forward.7} parent=11 // pred_fallthru
        _
      // Predicated region
      $region17: #{bottleneck_forward.7} parent=11 // pred_check
        %p148 = pneg %p104
      $region18: #{bottleneck_forward.7} parent=11 // pred_check_branch
        %150 = sbr.rel (%p148) target = $region20
      $region19: #{bottleneck_forward.7} parent=11 // pred_region
        _
      $region20: #{bottleneck_forward.7} parent=11 // pred_fallthru
        _
    $region12: #{bottleneck_forward.7} parent=5 // pred_fallthru
      _
    %p151 = scmp.lt.s32.totalorder %s10, 4
    // Predicated region
    $region21: #{bottleneck_forward.7} parent=5 // pred_check
      %p152 = pneg %p151
    $region22: #{bottleneck_forward.7} parent=5 // pred_check_branch
      %154 = sbr.rel (%p152) target = $region24
    $region23: #{bottleneck_forward.7} parent=5 // pred_region
      // Predicated region
      $region25: #{bottleneck_forward.7} parent=23 // pred_check
        %p155 = pneg %p30
      $region26: #{bottleneck_forward.7} parent=23 // pred_check_branch
        %157 = sbr.rel (%p155) target = $region28
      $region27: #{bottleneck_forward.7} parent=23 // pred_region
        %s158 = smul.u32 16, %s10
        %p159 = scmp.lt.s32.totalorder %s158, 63
        %s160 = scalar_select %p159, %s158, 63
        %s161 = smul.addr %s160, 8
        %s162 = scalar_lea.vmem %s0, %s161
        %s163 = smul.u32 16, %s10
      $region28: #{bottleneck_forward.7} parent=23 // pred_fallthru
        _
      // Predicated region
      $region29: #{bottleneck_forward.7} parent=23 // pred_check
        %p164 = pneg %p56
      $region30: #{bottleneck_forward.7} parent=23 // pred_check_branch
        %166 = sbr.rel (%p164) target = $region32
      $region31: #{bottleneck_forward.7} parent=23 // pred_region
        %s167 = smul.u32 16, %s10
        %p168 = scmp.lt.s32.totalorder %s167, 63
        %s169 = scalar_select %p168, %s167, 63
        %s170 = smul.addr %s169, 8
        %s171 = scalar_lea.vmem %s1, %s170
        %s172 = smul.u32 16, %s10
      $region32: #{bottleneck_forward.7} parent=23 // pred_fallthru
        _
    $region24: #{bottleneck_forward.7} parent=5 // pred_fallthru
      _
    %p173 = scmp.le.s32.totalorder 1, %s10
    %p174 = scmp.lt.s32.totalorder %s10, 5
    %p175 = pnand %p173, %p174
    %p176 = pneg %p175
    // Predicated region
    $region33: #{bottleneck_forward.7} parent=5 // pred_check
      _
    $region34: #{bottleneck_forward.7} parent=5 // pred_check_branch
      %178 = sbr.rel (%p175) target = $region36
    $region35: #{bottleneck_forward.7} parent=5 // pred_region
      %s179 = ssub.s32 %s10, 1
      %s180 = smul.u32 16, %s15
      %p181 = scmp.lt.s32.totalorder %s180, 63
      %s182 = scalar_select %p181, %s180, 63
      %s183 = smul.addr %s182, 8
      %s184 = scalar_lea.vmem %s0, %s183
      %p185 = pneg %p36
      %p186 = pneg %p33
      %s187 = smul.u32 16, %s15
      %p188 = scmp.lt.s32.totalorder %s187, 63
      %s189 = scalar_select %p188, %s187, 63
      %s190 = smul.addr %s189, 8
      %s191 = scalar_lea.vmem %s1, %s190
      %p192 = pneg %p62
      %p193 = pneg %p59
      %p194 = pneg %p83
      %p195 = pneg %p80
      %p196 = pneg %p104
      %p197 = pneg %p101
      %p198 = pneg %p130
      %p199 = pneg %p127
      %s200 = smul.u32 16, %s15
      %p201 = scmp.lt.s32.totalorder %s200, 63
      %s202 = scalar_select %p201, %s200, 63
      %s203 = smul.addr %s202, 8
      %s204 = scalar_lea.vmem %s4, %s203
      %s205 = smul.u32 16, %s15
      %p206 = scmp.lt.s32.totalorder %s205, 63
      %s207 = scalar_select %p206, %s205, 63
      %s208 = smul.addr %s207, 8
      %s209 = scalar_lea.vmem %s0, %s208
      %s210 = smul.u32 16, %s15
      %s211 = smul.u32 16, %s15
      %p212 = scmp.lt.s32.totalorder %s211, 63
      %s213 = scalar_select %p212, %s211, 63
      %s214 = smul.addr %s213, 8
      %s215 = scalar_lea.vmem %s1, %s214
      %s216 = smul.u32 16, %s15
      %s217 = smul.u32 16, %s15
      %p218 = scmp.lt.s32.totalorder %s217, 63
      %s219 = scalar_select %p218, %s217, 63
      %s220 = smul.addr %s219, 8
      %s221 = scalar_lea.vmem %s4, %s220
      %s222 = smul.u32 16, %s15
      %v223 = vld [vmem:[%s209] sm:$0xff]
      %v224 = vld [vmem:[%s209 + $0x8] sm:$0xff]
      %v225 = vld [vmem:[%s209 + $0x10] sm:$0xff]
      %v226 = vld [vmem:[%s209 + $0x18] sm:$0xff]
      %v227 = vld [vmem:[%s209 + $0x20] sm:$0xff]
      %v228 = vld [vmem:[%s209 + $0x28] sm:$0xff]
      %v229 = vld [vmem:[%s209 + $0x30] sm:$0xff]
      %v230 = vld [vmem:[%s209 + $0x38] sm:$0xff]
      %v231 = vld [vmem:[%s209 + $0x40] sm:$0xff]
      %v232 = vld [vmem:[%s209 + $0x48] sm:$0xff]
      %v233 = vld [vmem:[%s209 + $0x50] sm:$0xff]
      %v234 = vld [vmem:[%s209 + $0x58] sm:$0xff]
      %v235 = vld [vmem:[%s209 + $0x60] sm:$0xff]
      %v236 = vld [vmem:[%s209 + $0x68] sm:$0xff]
      %v237 = vld [vmem:[%s209 + $0x70] sm:$0xff]
      %v238 = vld [vmem:[%s209 + $0x78] sm:$0xff]
      %v239 = vld [vmem:[%s215] sm:$0xff]
      %v240 = vld [vmem:[%s215 + $0x8] sm:$0xff]
      %v241 = vld [vmem:[%s215 + $0x10] sm:$0xff]
      %v242 = vld [vmem:[%s215 + $0x18] sm:$0xff]
      %v243 = vld [vmem:[%s215 + $0x20] sm:$0xff]
      %v244 = vld [vmem:[%s215 + $0x28] sm:$0xff]
      %v245 = vld [vmem:[%s215 + $0x30] sm:$0xff]
      %v246 = vld [vmem:[%s215 + $0x38] sm:$0xff]
      %v247 = vld [vmem:[%s215 + $0x40] sm:$0xff]
      %v248 = vld [vmem:[%s215 + $0x48] sm:$0xff]
      %v249 = vld [vmem:[%s215 + $0x50] sm:$0xff]
      %v250 = vld [vmem:[%s215 + $0x58] sm:$0xff]
      %v251 = vld [vmem:[%s215 + $0x60] sm:$0xff]
      %v252 = vld [vmem:[%s215 + $0x68] sm:$0xff]
      %v253 = vld [vmem:[%s215 + $0x70] sm:$0xff]
      %v254 = vld [vmem:[%s215 + $0x78] sm:$0xff]
      %v255 = vld [vmem:[%s2] sm:$0x1]
      %v257 = vlaneseq
      %v258 = vshrl.u32 %v257, 7
      %v259 = vsub.s32 0, %v258
      %v260 = vrot.slane %v255, %v259
      %v262 = vmul.f32 %v223, %v260
      %v263 = vmul.f32 %v224, %v260
      %v264 = vmul.f32 %v225, %v260
      %v265 = vmul.f32 %v226, %v260
      %v266 = vmul.f32 %v227, %v260
      %v267 = vmul.f32 %v228, %v260
      %v268 = vmul.f32 %v229, %v260
      %v269 = vmul.f32 %v230, %v260
      %v270 = vmul.f32 %v231, %v260
      %v271 = vmul.f32 %v232, %v260
      %v272 = vmul.f32 %v233, %v260
      %v273 = vmul.f32 %v234, %v260
      %v274 = vmul.f32 %v235, %v260
      %v275 = vmul.f32 %v236, %v260
      %v276 = vmul.f32 %v237, %v260
      %v277 = vmul.f32 %v238, %v260
      %v278 = vld [vmem:[%s3] sm:$0x1]
      %v280 = vlaneseq
      %v281 = vshrl.u32 %v280, 7
      %v282 = vsub.s32 0, %v281
      %v283 = vrot.slane %v278, %v282
      %v285 = vadd.f32 %v262, %v283
      %v286 = vadd.f32 %v263, %v283
      %v287 = vadd.f32 %v264, %v283
      %v288 = vadd.f32 %v265, %v283
      %v289 = vadd.f32 %v266, %v283
      %v290 = vadd.f32 %v267, %v283
      %v291 = vadd.f32 %v268, %v283
      %v292 = vadd.f32 %v269, %v283
      %v293 = vadd.f32 %v270, %v283
      %v294 = vadd.f32 %v271, %v283
      %v295 = vadd.f32 %v272, %v283
      %v296 = vadd.f32 %v273, %v283
      %v297 = vadd.f32 %v274, %v283
      %v298 = vadd.f32 %v275, %v283
      %v299 = vadd.f32 %v276, %v283
      %v300 = vadd.f32 %v277, %v283
      %v301 = vadd.f32 %v285, %v239
      %v302 = vadd.f32 %v286, %v240
      %v303 = vadd.f32 %v287, %v241
      %v304 = vadd.f32 %v288, %v242
      %v305 = vadd.f32 %v289, %v243
      %v306 = vadd.f32 %v290, %v244
      %v307 = vadd.f32 %v291, %v245
      %v308 = vadd.f32 %v292, %v246
      %v309 = vadd.f32 %v293, %v247
      %v310 = vadd.f32 %v294, %v248
      %v311 = vadd.f32 %v295, %v249
      %v312 = vadd.f32 %v296, %v250
      %v313 = vadd.f32 %v297, %v251
      %v314 = vadd.f32 %v298, %v252
      %v315 = vadd.f32 %v299, %v253
      %v316 = vadd.f32 %v300, %v254
      %v317 = vmax.f32 %v301, 0.0
      %v318 = vmax.f32 %v302, 0.0
      %v319 = vmax.f32 %v303, 0.0
      %v320 = vmax.f32 %v304, 0.0
      %v321 = vmax.f32 %v305, 0.0
      %v322 = vmax.f32 %v306, 0.0
      %v323 = vmax.f32 %v307, 0.0
      %v324 = vmax.f32 %v308, 0.0
      %v325 = vmax.f32 %v309, 0.0
      %v326 = vmax.f32 %v310, 0.0
      %v327 = vmax.f32 %v311, 0.0
      %v328 = vmax.f32 %v312, 0.0
      %v329 = vmax.f32 %v313, 0.0
      %v330 = vmax.f32 %v314, 0.0
      %v331 = vmax.f32 %v315, 0.0
      %v332 = vmax.f32 %v316, 0.0
      %vm333 = vcmask 130048
      %334 = vst.msk [vmem:[%s221] sm:$0xff] %vm333, %v317
      %335 = vst.msk [vmem:[%s221 + $0x8] sm:$0xff] %vm333, %v318
      %336 = vst.msk [vmem:[%s221 + $0x10] sm:$0xff] %vm333, %v319
      %337 = vst.msk [vmem:[%s221 + $0x18] sm:$0xff] %vm333, %v320
      %338 = vst.msk [vmem:[%s221 + $0x20] sm:$0xff] %vm333, %v321
      %339 = vst.msk [vmem:[%s221 + $0x28] sm:$0xff] %vm333, %v322
      %340 = vst.msk [vmem:[%s221 + $0x30] sm:$0xff] %vm333, %v323
      %341 = vst.msk [vmem:[%s221 + $0x38] sm:$0xff] %vm333, %v324
      %342 = vst.msk [vmem:[%s221 + $0x40] sm:$0xff] %vm333, %v325
      %343 = vst.msk [vmem:[%s221 + $0x48] sm:$0xff] %vm333, %v326
      %344 = vst.msk [vmem:[%s221 + $0x50] sm:$0xff] %vm333, %v327
      %345 = vst.msk [vmem:[%s221 + $0x58] sm:$0xff] %vm333, %v328
      %346 = vst.msk [vmem:[%s221 + $0x60] sm:$0xff] %vm333, %v329
      %347 = vst.msk [vmem:[%s221 + $0x68] sm:$0xff] %vm333, %v330
      %348 = vst.msk [vmem:[%s221 + $0x70] sm:$0xff] %vm333, %v331
      %349 = vst.msk [vmem:[%s221 + $0x78] sm:$0xff] %vm333, %v332
      %s350 = smul.u32 16, %s15
      %p351 = scmp.lt.s32.totalorder %s350, 63
      %s352 = scalar_select %p351, %s350, 63
      %s353 = smul.addr %s352, 8
      %s354 = scalar_lea.vmem %s4, %s353
      // Predicated region
      $region37: #{bottleneck_forward.7} parent=35 // pred_check
        %p355 = pneg %p127
      $region38: #{bottleneck_forward.7} parent=35 // pred_check_branch
        %357 = sbr.rel (%p355) target = $region40
      $region39: #{bottleneck_forward.7} parent=35 // pred_region
        %s358 = smul.u32 16, %s15
      $region40: #{bottleneck_forward.7} parent=35 // pred_fallthru
        _
    $region36: #{bottleneck_forward.7} parent=5 // pred_fallthru
      _
    %p359 = scmp.le.s32.totalorder 2, %s10
    // Predicated region
    $region41: #{bottleneck_forward.7} parent=5 // pred_check
      %p360 = pneg %p359
    $region42: #{bottleneck_forward.7} parent=5 // pred_check_branch
      %362 = sbr.rel (%p360) target = $region44
    $region43: #{bottleneck_forward.7} parent=5 // pred_region
      %s363 = ssub.s32 %s10, 2
      // Predicated region
      $region45: #{bottleneck_forward.7} parent=43 // pred_check
        %p364 = pneg %p133
      $region46: #{bottleneck_forward.7} parent=43 // pred_check_branch
        %366 = sbr.rel (%p364) target = $region48
      $region47: #{bottleneck_forward.7} parent=43 // pred_region
        %s367 = smul.u32 16, %s16
        %p368 = scmp.lt.s32.totalorder %s367, 63
        %s369 = scalar_select %p368, %s367, 63
        %s370 = smul.addr %s369, 8
        %s371 = scalar_lea.vmem %s4, %s370
      $region48: #{bottleneck_forward.7} parent=43 // pred_fallthru
        _
    $region44: #{bottleneck_forward.7} parent=5 // pred_fallthru
      _
  $region6: #{bottleneck_forward.7} parent=0 // loop_footer
    %s14 = sadd.s32 1, %s10
  $region7: #{bottleneck_forward.7} parent=0 // loop_footer_branch
    %9 = sbr.rel target = $region3
  $region8: #{bottleneck_forward.7} parent=0 // loop_exit
    _

// kernel: bottleneck_forward.5
$region0: #{bottleneck_forward.5}
  #allocation0 [shape = 'u32[]', space=smem, size = 0x4, offset = 0x4, fixed_abs, tag = 'smem constant byte address 0x4 - core index']
  #allocation1 [shape = 'u32[144,128]{1,0:T(1,128)}', space=vmem, size = 0x12000, scoped, tag = 'internal scratch']
  #allocation2 [shape = 'f32[18,18,4]{2,1,0:T(8,128)}', space=vmem, size = 0x36000, scoped, tag = 'scratch operand']
  %s0 = inlined_call_operand.vmem [shape: f32[2,16,16,4], index: 0, kind: input, shape index: {}]
  %s1 = inlined_call_operand.vmem [shape: f32[9,4,4], index: 1, kind: input, shape index: {}]
  %s2 = inlined_call_operand.vmem [shape: f32[1,4], index: 2, kind: input, shape index: {}]
  %s3 = inlined_call_operand.vmem [shape: f32[1,4], index: 3, kind: input, shape index: {}]
  %s4 = inlined_call_operand.vmem [shape: f32[2,16,16,4], index: 4, kind: output, shape index: {0}]
  %s5 = inlined_call_operand.vmem [shape: f32[2,2,4], index: 5, kind: output, shape index: {1}]
  %6 = xla_tuple %s4, %s5
  %s7 = sld [smem:[#allocation0]]
  $region57: #{bottleneck_forward.5} parent=0
    _
  %s9 = ssub.s32 1, %s7
  %s10 = scalar_select 0, %s9, %s7
  loop: start=0, step=1, limit=4
  $region2: #{bottleneck_forward.5} parent=0 // loop_pre_header
    _
  $region3: #{bottleneck_forward.5} parent=0 // loop_header
    %s12 = sphi 0, %s16
    %p13 = scmp.ge.s32.totalorder %s12, 4
    %s22 = sphi 0, %s24
    %s25 = sphi 0, %s22
    %s26 = sphi 0, %s25
    %s42 = sphi 0, %s26
    %s46 = sphi 0, %s46
    %s48 = sphi 0, %s46
    %s49 = sphi 0, %s48
    %s63 = sphi 0, %s49
    %s67 = sphi 0, %s67
    %s69 = sphi 0, %s67
    %s70 = sphi 0, %s69
    %s84 = sphi 0, %s70
    %s88 = sphi 0, %s88
    %s90 = sphi 0, %s88
    %s91 = sphi 0, %s90
    %s105 = sphi 0, %s91
    %s111 = sphi 0, %s113
    %s114 = sphi 0, %s111
    %s115 = sphi 0, %s114
    %s131 = sphi 0, %s115
    %s137 = sphi 0, %s139
    %s140 = sphi 0, %s137
    %s141 = sphi 0, %s140
    %s157 = sphi 0, %s141
  $region4: #{bottleneck_forward.5} parent=0 // loop_header_branch
    %15 = sbr.rel (%p13) target = $region8
  $region5: #{bottleneck_forward.5} parent=0 // loop_body
    %s17 = ssub.s32 %s12, 1
    %s18 = ssub.s32 %s12, 2
    %s19 = sadd.s32 %s12, 1
    %s20 = ssub.s32 %s12, %s19
    %p21 = scmp.eq.s32.totalorder %s20, 0
    %s23 = sadd.s32 %s22, 1
    %s24 = scalar_select %p21, %s22, %s23
    %p27 = pneg %p21
    %p28 = scmp.eq.s32.totalorder %s12, 1
    %p29 = por %p27, %p28
    %p30 = scmp.ne.s32.totalorder %s22, %s25
    %p31 = scmp.eq.s32.totalorder %s12, 0
    %p32 = por %p30, %p31
    %p33 = scmp.ne.s32.totalorder %s22, %s25
    %p34 = scmp.eq.s32.totalorder %s17, 1
    %p35 = por %p33, %p34
    %p36 = scmp.ne.s32.totalorder %s25, %s26
    %p37 = scmp.eq.s32.totalorder %s17, 0
    %p38 = por %p36, %p37
    %p39 = scmp.ne.s32.totalorder %s25, %s26
    %p40 = scmp.eq.s32.totalorder %s18, 1
    %p41 = por %p39, %p40
    %p43 = scmp.ne.s32.totalorder %s26, %s42
    %p44 = scmp.eq.s32.totalorder %s18, 0
    %p45 = por %p43, %p44
    %s47 = sadd.s32 %s46, 1
    %p50 = scmp.eq.s32.totalorder %s12, 1
    %p51 = scmp.ne.s32.totalorder %s46, %s48
    %p52 = scmp.eq.s32.totalorder %s12, 0
    %p53 = por %p51, %p52
    %p54 = scmp.ne.s32.totalorder %s46, %s48
    %p55 = scmp.eq.s32.totalorder %s17, 1
    %p56 = por %p54, %p55
    %p57 = scmp.ne.s32.totalorder %s48, %s49
    %p58 = scmp.eq.s32.totalorder %s17, 0
    %p59 = por %p57, %p58
    %p60 = scmp.ne.s32.totalorder %s48, %s49
    %p61 = scmp.eq.s32.totalorder %s18, 1
    %p62 = por %p60, %p61
    %p64 = scmp.ne.s32.totalorder %s49, %s63
    %p65 = scmp.eq.s32.totalorder %s18, 0
    %p66 = por %p64, %p65
    %s68 = sadd.s32 %s67, 1
    %p71 = scmp.eq.s32.totalorder %s12, 1
    %p72 = scmp.ne.s32.totalorder %s67, %s69
    %p73 = scmp.eq.s32.totalorder %s12, 0
    %p74 = por %p72, %p73
    %p75 = scmp.ne.s32.totalorder %s67, %s69
    %p76 = scmp.eq.s32.totalorder %s17, 1
    %p77 = por %p75, %p76
    %p78 = scmp.ne.s32.totalorder %s69, %s70
    %p79 = scmp.eq.s32.totalorder %s17, 0
    %p80 = por %p78, %p79
    %p81 = scmp.ne.s32.totalorder %s69, %s70
    %p82 = scmp.eq.s32.totalorder %s18, 1
    %p83 = por %p81, %p82
    %p85 = scmp.ne.s32.totalorder %s70, %s84
    %p86 = scmp.eq.s32.totalorder %s18, 0
    %p87 = por %p85, %p86
    %s89 = sadd.s32 %s88, 1
    %p92 = scmp.eq.s32.totalorder %s12, 1
    %p93 = scmp.ne.s32.totalorder %s88, %s90
    %p94 = scmp.eq.s32.totalorder %s12, 0
    %p95 = por %p93, %p94
    %p96 = scmp.ne.s32.totalorder %s88, %s90
    %p97 = scmp.eq.s32.totalorder %s17, 1
    %p98 = por %p96, %p97
    %p99 = scmp.ne.s32.totalorder %s90, %s91
    %p100 = scmp.eq.s32.totalorder %s17, 0
    %p101 = por %p99, %p100
    %p102 = scmp.ne.s32.totalorder %s90, %s91
    %p103 = scmp.eq.s32.totalorder %s18, 1
    %p104 = por %p102, %p103
    %p106 = scmp.ne.s32.totalorder %s91, %s105
    %p107 = scmp.eq.s32.totalorder %s18, 0
    %p108 = por %p106, %p107
    %s109 = ssub.s32 %s12, %s19
    %p110 = scmp.eq.s32.totalorder %s109, 0
    %s112 = sadd.s32 %s111, 1
    %s113 = scalar_select %p110, %s111, %s112
    %p116 = pneg %p110
    %p117 = scmp.eq.s32.totalorder %s12, 1
    %p118 = por %p116, %p117
    %p119 = scmp.ne.s32.totalorder %s111, %s114
    %p120 = scmp.eq.s32.totalorder %s12, 0
    %p121 = por %p119, %p120
    %p122 = scmp.ne.s32.totalorder %s111, %s114
    %p123 = scmp.eq.s32.totalorder %s17, 1
    %p124 = por %p122, %p123
    %p125 = scmp.ne.s32.totalorder %s114, %s115
    %p126 = scmp.eq.s32.totalorder %s17, 0
    %p127 = por %p125, %p126
    %p128 = scmp.ne.s32.totalorder %s114, %s115
    %p129 = scmp.eq.s32.totalorder %s18, 1
    %p130 = por %p128, %p129
    %p132 = scmp.ne.s32.totalorder %s115, %s131
    %p133 = scmp.eq.s32.totalorder %s18, 0
    %p134 = por %p132, %p133
    %s135 = ssub.s32 %s12, %s19
    %p136 = scmp.eq.s32.totalorder %s135, 0
    %s138 = sadd.s32 %s137, 1
    %s139 = scalar_select %p136, %s137, %s138
    %p142 = pneg %p136
    %p143 = scmp.eq.s32.totalorder %s12, 1
    %p144 = por %p142, %p143
    %p145 = scmp.ne.s32.totalorder %s137, %s140
    %p146 = scmp.eq.s32.totalorder %s12, 0
    %p147 = por %p145, %p146
    %p148 = scmp.ne.s32.totalorder %s137, %s140
    %p149 = scmp.eq.s32.totalorder %s17, 1
    %p150 = por %p148, %p149
    %p151 = scmp.ne.s32.totalorder %s140, %s141
    %p152 = scmp.eq.s32.totalorder %s17, 0
    %p153 = por %p151, %p152
    %p154 = scmp.ne.s32.totalorder %s140, %s141
    %p155 = scmp.eq.s32.totalorder %s18, 1
    %p156 = por %p154, %p155
    %p158 = scmp.ne.s32.totalorder %s141, %s157
    %p159 = scmp.eq.s32.totalorder %s18, 0
    %p160 = por %p158, %p159
    %p161 = scmp.le.s32.totalorder 1, %s12
    %p162 = scmp.lt.s32.totalorder %s12, 3
    %p163 = pnand %p161, %p162
    %p164 = pneg %p163
    // Predicated region
    $region9: #{bottleneck_forward.5} parent=5 // pred_check
      _
    $region10: #{bottleneck_forward.5} parent=5 // pred_check_branch
      %166 = sbr.rel (%p163) target = $region12
    $region11: #{bottleneck_forward.5} parent=5 // pred_region
      %s167 = ssub.s32 %s12, 1
      // Predicated region
      $region13: #{bottleneck_forward.5} parent=11 // pred_check
        %p168 = pneg %p59
      $region14: #{bottleneck_forward.5} parent=11 // pred_check_branch
        %170 = sbr.rel (%p168) target = $region16
      $region15: #{bottleneck_forward.5} parent=11 // pred_region
        _
      $region16: #{bottleneck_forward.5} parent=11 // pred_fallthru
        _
      // Predicated region
      $region17: #{bottleneck_forward.5} parent=11 // pred_check
        %p171 = pneg %p80
      $region18: #{bottleneck_forward.5} parent=11 // pred_check_branch
        %173 = sbr.rel (%p171) target = $region20
      $region19: #{bottleneck_forward.5} parent=11 // pred_region
        _
      $region20: #{bottleneck_forward.5} parent=11 // pred_fallthru
        _
      // Predicated region
      $region21: #{bottleneck_forward.5} parent=11 // pred_check
        %p174 = pneg %p101
      $region22: #{bottleneck_forward.5} parent=11 // pred_check_branch
        %176 = sbr.rel (%p174) target = $region24
      $region23: #{bottleneck_forward.5} parent=11 // pred_region
        _
      $region24: #{bottleneck_forward.5} parent=11 // pred_fallthru
        _
    $region12: #{bottleneck_forward.5} parent=5 // pred_fallthru
      _
    %p177 = scmp.lt.s32.totalorder %s12, 2
    // Predicated region
    $region25: #{bottleneck_forward.5} parent=5 // pred_check
      %p178 = pneg %p177
    $region26: #{bottleneck_forward.5} parent=5 // pred_check_branch
      %180 = sbr.rel (%p178) target = $region28
    $region27: #{bottleneck_forward.5} parent=5 // pred_region
      // Predicated region
      $region29: #{bottleneck_forward.5} parent=27 // pred_check
        %p181 = pneg %p32
      $region30: #{bottleneck_forward.5} parent=27 // pred_check_branch
        %183 = sbr.rel (%p181) target = $region32
      $region31: #{bottleneck_forward.5} parent=27 // pred_region
        %p184 = scmp.lt.s32.totalorder %s12, 1
        %s185 = scalar_select %p184, %s12, 1
        %s186 = smul.addr %s185, 32
        %s187 = smul.addr %s186, 8
        %s188 = scalar_lea.vmem %s0, %s187
      $region32: #{bottleneck_forward.5} parent=27 // pred_fallthru
        _
    $region28: #{bottleneck_forward.5} parent=5 // pred_fallthru
      _
    %p189 = scmp.le.s32.totalorder 1, %s12
    %p190 = scmp.lt.s32.totalorder %s12, 3
    %p191 = pnand %p189, %p190
    %p192 = pneg %p191
    // Predicated region
    $region33: #{bottleneck_forward.5} parent=5 // pred_check
      _
    $region34: #{bottleneck_forward.5} parent=5 // pred_check_branch
      %194 = sbr.rel (%p191) target = $region36
    $region35: #{bottleneck_forward.5} parent=5 // pred_region
      %s195 = ssub.s32 %s12, 1
      %p196 = scmp.lt.s32.totalorder %s17, 1
      %s197 = scalar_select %p196, %s17, 1
      %s198 = smul.addr %s197, 32
      %s199 = smul.addr %s198, 8
      %s200 = scalar_lea.vmem %s0, %s199
      %p201 = pneg %p38
      %p202 = pneg %p35
      %p203 = pneg %p59
      %p204 = pneg %p56
      %p205 = pneg %p80
      %p206 = pneg %p77
      %p207 = pneg %p101
      %p208 = pneg %p98
      %p209 = pneg %p127
      %p210 = pneg %p124
      %p211 = scmp.lt.s32.totalorder %s17, 1
      %s212 = scalar_select %p211, %s17, 1
      %s213 = smul.addr %s212, 32
      %s214 = smul.addr %s213, 8
      %s215 = scalar_lea.vmem %s4, %s214
      %p216 = pneg %p153
      %p217 = pneg %p150
      %p218 = scmp.lt.s32.totalorder %s17, 1
      %s219 = scalar_select %p218, %s17, 1
      %s220 = smul.addr %s219, 2
      %s221 = scalar_lea.vmem %s5, %s220
      %p222 = scmp.lt.s32.totalorder %s17, 1
      %s223 = scalar_select %p222, %s17, 1
      %s224 = smul.addr %s223, 32
      %s225 = smul.addr %s224, 8
      %s226 = scalar_lea.vmem %s0, %s225
      %p227 = scmp.lt.s32.totalorder %s17, 1
      %s228 = scalar_select %p227, %s17, 1
      %s229 = smul.addr %s228, 32
      %s230 = smul.addr %s229, 8
      %s231 = scalar_lea.vmem %s4, %s230
      %p232 = scmp.lt.s32.totalorder %s17, 1
      %s233 = scalar_select %p232, %s17, 1
      %s234 = smul.addr %s233, 2
      %s235 = scalar_lea.vmem %s5, %s234
      %v236 = vld [vmem:[%s2] sm:$0x1]
      %v237 = vld [vmem:[%s3] sm:$0x1]
      %v238 = vld [vmem:[%s226] sm:$0xff]
      %v239 = vld [vmem:[%s226 + $0x8] sm:$0xff]
      %v240 = vld [vmem:[%s226 + $0x10] sm:$0xff]
      %v241 = vld [vmem:[%s226 + $0x18] sm:$0xff]
      %v242 = vld [vmem:[%s226 + $0x20] sm:$0xff]
      %v243 = vld [vmem:[%s226 + $0x28] sm:$0xff]
      %v244 = vld [vmem:[%s226 + $0x30] sm:$0xff]
      %v245 = vld [vmem:[%s226 + $0x38] sm:$0xff]
      %v246 = vld [vmem:[%s226 + $0x40] sm:$0xff]
      %v247 = vld [vmem:[%s226 + $0x48] sm:$0xff]
      %v248 = vld [vmem:[%s226 + $0x50] sm:$0xff]
      %v249 = vld [vmem:[%s226 + $0x58] sm:$0xff]
      %v250 = vld [vmem:[%s226 + $0x60] sm:$0xff]
      %v251 = vld [vmem:[%s226 + $0x68] sm:$0xff]
      %v252 = vld [vmem:[%s226 + $0x70] sm:$0xff]
      %v253 = vld [vmem:[%s226 + $0x78] sm:$0xff]
      %v254 = vld [vmem:[%s226 + $0x80] sm:$0xff]
      %v255 = vld [vmem:[%s226 + $0x88] sm:$0xff]
      %v256 = vld [vmem:[%s226 + $0x90] sm:$0xff]
      %v257 = vld [vmem:[%s226 + $0x98] sm:$0xff]
      %v258 = vld [vmem:[%s226 + $0xa0] sm:$0xff]
      %v259 = vld [vmem:[%s226 + $0xa8] sm:$0xff]
      %v260 = vld [vmem:[%s226 + $0xb0] sm:$0xff]
      %v261 = vld [vmem:[%s226 + $0xb8] sm:$0xff]
      %v262 = vld [vmem:[%s226 + $0xc0] sm:$0xff]
      %v263 = vld [vmem:[%s226 + $0xc8] sm:$0xff]
      %v264 = vld [vmem:[%s226 + $0xd0] sm:$0xff]
      %v265 = vld [vmem:[%s226 + $0xd8] sm:$0xff]
      %v266 = vld [vmem:[%s226 + $0xe0] sm:$0xff]
      %v267 = vld [vmem:[%s226 + $0xe8] sm:$0xff]
      %v268 = vld [vmem:[%s226 + $0xf0] sm:$0xff]
      %v269 = vld [vmem:[%s226 + $0xf8] sm:$0xff]
      %v271 = vlaneseq
      %v272 = vshrl.u32 %v271, 7
      %v273 = vsub.s32 0, %v272
      %v274 = vrot.slane %v236, %v273
      %v276 = vmul.f32 %v238, %v274
      %v277 = vmul.f32 %v239, %v274
      %v278 = vmul.f32 %v240, %v274
      %v279 = vmul.f32 %v241, %v274
      %v280 = vmul.f32 %v242, %v274
      %v281 = vmul.f32 %v243, %v274
      %v282 = vmul.f32 %v244, %v274
      %v283 = vmul.f32 %v245, %v274
      %v284 = vmul.f32 %v246, %v274
      %v285 = vmul.f32 %v247, %v274
      %v286 = vmul.f32 %v248, %v274
      %v287 = vmul.f32 %v249, %v274
      %v288 = vmul.f32 %v250, %v274
      %v289 = vmul.f32 %v251, %v274
      %v290 = vmul.f32 %v252, %v274
      %v291 = vmul.f32 %v253, %v274
      %v292 = vmul.f32 %v254, %v274
      %v293 = vmul.f32 %v255, %v274
      %v294 = vmul.f32 %v256, %v274
      %v295 = vmul.f32 %v257, %v274
      %v296 = vmul.f32 %v258, %v274
      %v297 = vmul.f32 %v259, %v274
      %v298 = vmul.f32 %v260, %v274
      %v299 = vmul.f32 %v261, %v274
      %v300 = vmul.f32 %v262, %v274
      %v301 = vmul.f32 %v263, %v274
      %v302 = vmul.f32 %v264, %v274
      %v303 = vmul.f32 %v265, %v274
      %v304 = vmul.f32 %v266, %v274
      %v305 = vmul.f32 %v267, %v274
      %v306 = vmul.f32 %v268, %v274
      %v307 = vmul.f32 %v269, %v274
      %v309 = vlaneseq
      %v310 = vshrl.u32 %v309, 7
      %v311 = vsub.s32 0, %v310
      %v312 = vrot.slane %v237, %v311
      %v314 = vadd.f32 %v276, %v312
      %v315 = vadd.f32 %v277, %v312
      %v316 = vadd.f32 %v278, %v312
      %v317 = vadd.f32 %v279, %v312
      %v318 = vadd.f32 %v280, %v312
      %v319 = vadd.f32 %v281, %v312
      %v320 = vadd.f32 %v282, %v312
      %v321 = vadd.f32 %v283, %v312
      %v322 = vadd.f32 %v284, %v312
      %v323 = vadd.f32 %v285, %v312
      %v324 = vadd.f32 %v286, %v312
      %v325 = vadd.f32 %v287, %v312
      %v326 = vadd.f32 %v288, %v312
      %v327 = vadd.f32 %v289, %v312
      %v328 = vadd.f32 %v290, %v312
      %v329 = vadd.f32 %v291, %v312
      %v330 = vadd.f32 %v292, %v312
      %v331 = vadd.f32 %v293, %v312
      %v332 = vadd.f32 %v294, %v312
      %v333 = vadd.f32 %v295, %v312
      %v334 = vadd.f32 %v296, %v312
      %v335 = vadd.f32 %v297, %v312
      %v336 = vadd.f32 %v298, %v312
      %v337 = vadd.f32 %v299, %v312
      %v338 = vadd.f32 %v300, %v312
      %v339 = vadd.f32 %v301, %v312
      %v340 = vadd.f32 %v302, %v312
      %v341 = vadd.f32 %v303, %v312
      %v342 = vadd.f32 %v304, %v312
      %v343 = vadd.f32 %v305, %v312
      %v344 = vadd.f32 %v306, %v312
      %v345 = vadd.f32 %v307, %v312
      %v346 = vmax.f32 %v314, 0.0
      %v347 = vmax.f32 %v315, 0.0
      %v348 = vmax.f32 %v316, 0.0
      %v349 = vmax.f32 %v317, 0.0
      %v350 = vmax.f32 %v318, 0.0
      %v351 = vmax.f32 %v319, 0.0
      %v352 = vmax.f32 %v320, 0.0
      %v353 = vmax.f32 %v321, 0.0
      %v354 = vmax.f32 %v322, 0.0
      %v355 = vmax.f32 %v323, 0.0
      %v356 = vmax.f32 %v324, 0.0
      %v357 = vmax.f32 %v325, 0.0
      %v358 = vmax.f32 %v326, 0.0
      %v359 = vmax.f32 %v327, 0.0
      %v360 = vmax.f32 %v328, 0.0
      %v361 = vmax.f32 %v329, 0.0
      %v362 = vmax.f32 %v330, 0.0
      %v363 = vmax.f32 %v331, 0.0
      %v364 = vmax.f32 %v332, 0.0
      %v365 = vmax.f32 %v333, 0.0
      %v366 = vmax.f32 %v334, 0.0
      %v367 = vmax.f32 %v335, 0.0
      %v368 = vmax.f32 %v336, 0.0
      %v369 = vmax.f32 %v337, 0.0
      %v370 = vmax.f32 %v338, 0.0
      %v371 = vmax.f32 %v339, 0.0
      %v372 = vmax.f32 %v340, 0.0
      %v373 = vmax.f32 %v341, 0.0
      %v374 = vmax.f32 %v342, 0.0
      %v375 = vmax.f32 %v343, 0.0
      %v376 = vmax.f32 %v344, 0.0
      %v377 = vmax.f32 %v345, 0.0
      %vm378 = vcmask 31744
      %379 = vst.msk [vmem:[#allocation2] sm:$0xff] %vm378, 0.0
      %380 = vst.msk [vmem:[#allocation2 + $0x8] sm:$0xff] %vm378, 0.0
      %vm381 = vcmask 25600
      %382 = vst.msk [vmem:[#allocation2 + $0x10] sm:$0x3] %vm381, 0.0
      %s383 = scalar_lea.vmem [#allocation2], 408
      %384 = vst.msk [vmem:[%s383] sm:$0xff] %vm378, 0.0
      %385 = vst.msk [vmem:[%s383 + $0x8] sm:$0xff] %vm378, 0.0
      %386 = vst.msk [vmem:[%s383 + $0x10] sm:$0x3] %vm381, 0.0
      %s387 = scalar_lea.vmem [#allocation2], 24
      %vm388 = vcmask 24576
      %389 = vst.msk [vmem:[%s387] sm:$0x1] %vm388, 0.0
      %390 = vst.msk [vmem:[%s387 + $0x18] sm:$0x1] %vm388, 0.0
      %391 = vst.msk [vmem:[%s387 + $0x30] sm:$0x1] %vm388, 0.0
      %392 = vst.msk [vmem:[%s387 + $0x48] sm:$0x1] %vm388, 0.0
      %393 = vst.msk [vmem:[%s387 + $0x60] sm:$0x1] %vm388, 0.0
      %394 = vst.msk [vmem:[%s387 + $0x78] sm:$0x1] %vm388, 0.0
      %395 = vst.msk [vmem:[%s387 + $0x90] sm:$0x1] %vm388, 0.0
      %396 = vst.msk [vmem:[%s387 + $0xa8] sm:$0x1] %vm388, 0.0
      %397 = vst.msk [vmem:[%s387 + $0xc0] sm:$0x1] %vm388, 0.0
      %398 = vst.msk [vmem:[%s387 + $0xd8] sm:$0x1] %vm388, 0.0
      %399 = vst.msk [vmem:[%s387 + $0xf0] sm:$0x1] %vm388, 0.0
      %400 = vst.msk [vmem:[%s387 + $0x108] sm:$0x1] %vm388, 0.0
      %401 = vst.msk [vmem:[%s387 + $0x120] sm:$0x1] %vm388, 0.0
      %402 = vst.msk [vmem:[%s387 + $0x138] sm:$0x1] %vm388, 0.0
      %403 = vst.msk [vmem:[%s387 + $0x150] sm:$0x1] %vm388, 0.0
      %404 = vst.msk [vmem:[%s387 + $0x168] sm:$0x1] %vm388, 0.0
      %405 = vst.msk [vmem:[%s387 + $0x11] sm:$0x1] %vm388, 0.0
      %406 = vst.msk [vmem:[%s387 + $0x29] sm:$0x1] %vm388, 0.0
      %407 = vst.msk [vmem:[%s387 + $0x41] sm:$0x1] %vm388, 0.0
      %408 = vst.msk [vmem:[%s387 + $0x59] sm:$0x1] %vm388, 0.0
      %409 = vst.msk [vmem:[%s387 + $0x71] sm:$0x1] %vm388, 0.0
      %410 = vst.msk [vmem:[%s387 + $0x89] sm:$0x1] %vm388, 0.0
      %411 = vst.msk [vmem:[%s387 + $0xa1] sm:$0x1] %vm388, 0.0
      %412 = vst.msk [vmem:[%s387 + $0xb9] sm:$0x1] %vm388, 0.0
      %413 = vst.msk [vmem:[%s387 + $0xd1] sm:$0x1] %vm388, 0.0
      %414 = vst.msk [vmem:[%s387 + $0xe9] sm:$0x1] %vm388, 0.0
      %415 = vst.msk [vmem:[%s387 + $0x101] sm:$0x1] %vm388, 0.0
      %416 = vst.msk [vmem:[%s387 + $0x119] sm:$0x1] %vm388, 0.0
      %417 = vst.msk [vmem:[%s387 + $0x131] sm:$0x1] %vm388, 0.0
      %418 = vst.msk [vmem:[%s387 + $0x149] sm:$0x1] %vm388, 0.0
      %419 = vst.msk [vmem:[%s387 + $0x161] sm:$0x1] %vm388, 0.0
      %420 = vst.msk [vmem:[%s387 + $0x179] sm:$0x1] %vm388, 0.0
      %421 = vst.msk [vmem:[%s387 + $0x1] sm:$0xff] %vm378, %v346
      %422 = vst.msk [vmem:[%s387 + $0x9] sm:$0xff] %vm378, %v347
      %423 = vst.msk [vmem:[%s387 + $0x19] sm:$0xff] %vm378, %v348
      %424 = vst.msk [vmem:[%s387 + $0x21] sm:$0xff] %vm378, %v349
      %425 = vst.msk [vmem:[%s387 + $0x31] sm:$0xff] %vm378, %v350
      %426 = vst.msk [vmem:[%s387 + $0x39] sm:$0xff] %vm378, %v351
      %427 = vst.msk [vmem:[%s387 + $0x49] sm:$0xff] %vm378, %v352
      %428 = vst.msk [vmem:[%s387 + $0x51] sm:$0xff] %vm378, %v353
      %429 = vst.msk [vmem:[%s387 + $0x61] sm:$0xff] %vm378, %v354
      %430 = vst.msk [vmem:[%s387 + $0x69] sm:$0xff] %vm378, %v355
      %431 = vst.msk [vmem:[%s387 + $0x79] sm:$0xff] %vm378, %v356
      %432 = vst.msk [vmem:[%s387 + $0x81] sm:$0xff] %vm378, %v357
      %433 = vst.msk [vmem:[%s387 + $0x91] sm:$0xff] %vm378, %v358
      %434 = vst.msk [vmem:[%s387 + $0x99] sm:$0xff] %vm378, %v359
      %435 = vst.msk [vmem:[%s387 + $0xa9] sm:$0xff] %vm378, %v360
      %436 = vst.msk [vmem:[%s387 + $0xb1] sm:$0xff] %vm378, %v361
      %437 = vst.msk [vmem:[%s387 + $0xc1] sm:$0xff] %vm378, %v362
      %438 = vst.msk [vmem:[%s387 + $0xc9] sm:$0xff] %vm378, %v363
      %439 = vst.msk [vmem:[%s387 + $0xd9] sm:$0xff] %vm378, %v364
      %440 = vst.msk [vmem:[%s387 + $0xe1] sm:$0xff] %vm378, %v365
      %441 = vst.msk [vmem:[%s387 + $0xf1] sm:$0xff] %vm378, %v366
      %442 = vst.msk [vmem:[%s387 + $0xf9] sm:$0xff] %vm378, %v367
      %443 = vst.msk [vmem:[%s387 + $0x109] sm:$0xff] %vm378, %v368
      %444 = vst.msk [vmem:[%s387 + $0x111] sm:$0xff] %vm378, %v369
      %445 = vst.msk [vmem:[%s387 + $0x121] sm:$0xff] %vm378, %v370
      %446 = vst.msk [vmem:[%s387 + $0x129] sm:$0xff] %vm378, %v371
      %447 = vst.msk [vmem:[%s387 + $0x139] sm:$0xff] %vm378, %v372
      %448 = vst.msk [vmem:[%s387 + $0x141] sm:$0xff] %vm378, %v373
      %449 = vst.msk [vmem:[%s387 + $0x151] sm:$0xff] %vm378, %v374
      %450 = vst.msk [vmem:[%s387 + $0x159] sm:$0xff] %vm378, %v375
      %451 = vst.msk [vmem:[%s387 + $0x169] sm:$0xff] %vm378, %v376
      %452 = vst.msk [vmem:[%s387 + $0x171] sm:$0xff] %vm378, %v377
      %v453 = vld [vmem:[#allocation2] sm:$0xff]
      %v454 = vld [vmem:[#allocation2 + $0x8] sm:$0xff]
      %v455 = vld [vmem:[#allocation2 + $0x10] sm:$0x3]
      %v456 = vld [vmem:[#allocation2 + $0x18] sm:$0xff]
      %v457 = vld [vmem:[#allocation2 + $0x20] sm:$0xff]
      %v458 = vld [vmem:[#allocation2 + $0x28] sm:$0x3]
      %v459 = vld [vmem:[#allocation2 + $0x30] sm:$0xff]
      %v460 = vld [vmem:[#allocation2 + $0x38] sm:$0xff]
      %v461 = vld [vmem:[#allocation2 + $0x40] sm:$0x3]
      %v462 = vld [vmem:[#allocation2 + $0x48] sm:$0xff]
      %v463 = vld [vmem:[#allocation2 + $0x50] sm:$0xff]
      %v464 = vld [vmem:[#allocation2 + $0x58] sm:$0x3]
      %v465 = vld [vmem:[#allocation2 + $0x60] sm:$0xff]
      %v466 = vld [vmem:[#allocation2 + $0x68] sm:$0xff]
      %v467 = vld [vmem:[#allocation2 + $0x70] sm:$0x3]
      %v468 = vld [vmem:[#allocation2 + $0x78] sm:$0xff]
      %v469 = vld [vmem:[#allocation2 + $0x80] sm:$0xff]
      %v470 = vld [vmem:[#allocation2 + $0x88] sm:$0x3]
      %v471 = vld [vmem:[#allocation2 + $0x90] sm:$0xff]
      %v472 = vld [vmem:[#allocation2 + $0x98] sm:$0xff]
      %v473 = vld [vmem:[#allocation2 + $0xa0] sm:$0x3]
      %v474 = vld [vmem:[#allocation2 + $0xa8] sm:$0xff]
      %v475 = vld [vmem:[#allocation2 + $0xb0] sm:$0xff]
      %v476 = vld [vmem:[#allocation2 + $0xb8] sm:$0x3]
      %v477 = vld [vmem:[#allocation2 + $0xc0] sm:$0xff]
      %v478 = vld [vmem:[#allocation2 + $0xc8] sm:$0xff]
      %v479 = vld [vmem:[#allocation2 + $0xd0] sm:$0x3]
      %v480 = vld [vmem:[#allocation2 + $0xd8] sm:$0xff]
      %v481 = vld [vmem:[#allocation2 + $0xe0] sm:$0xff]
      %v482 = vld [vmem:[#allocation2 + $0xe8] sm:$0x3]
      %v483 = vld [vmem:[#allocation2 + $0xf0] sm:$0xff]
      %v484 = vld [vmem:[#allocation2 + $0xf8] sm:$0xff]
      %v485 = vld [vmem:[#allocation2 + $0x100] sm:$0x3]
      %v486 = vld [vmem:[#allocation2 + $0x108] sm:$0xff]
      %v487 = vld [vmem:[#allocation2 + $0x110] sm:$0xff]
      %v488 = vld [vmem:[#allocation2 + $0x118] sm:$0x3]
      %v489 = vld [vmem:[#allocation2 + $0x120] sm:$0xff]
      %v490 = vld [vmem:[#allocation2 + $0x128] sm:$0xff]
      %v491 = vld [vmem:[#allocation2 + $0x130] sm:$0x3]
      %v492 = vld [vmem:[#allocation2 + $0x138] sm:$0xff]
      %v493 = vld [vmem:[#allocation2 + $0x140] sm:$0xff]
      %v494 = vld [vmem:[#allocation2 + $0x148] sm:$0x3]
      %v495 = vld [vmem:[#allocation2 + $0x150] sm:$0xff]
      %v496 = vld [vmem:[#allocation2 + $0x158] sm:$0xff]
      %v497 = vld [vmem:[#allocation2 + $0x160] sm:$0x3]
      %v498 = vld [vmem:[#allocation2 + $0x168] sm:$0xff]
      %v499 = vld [vmem:[#allocation2 + $0x170] sm:$0xff]
      %v500 = vld [vmem:[#allocation2 + $0x178] sm:$0x3]
      %v501 = vld [vmem:[#allocation2 + $0x180] sm:$0xff]
      %v502 = vld [vmem:[#allocation2 + $0x188] sm:$0xff]
      %v503 = vld [vmem:[#allocation2 + $0x190] sm:$0x3]
      %v504 = vld [vmem:[#allocation2 + $0x198] sm:$0xff]
      %v505 = vld [vmem:[#allocation2 + $0x1a0] sm:$0xff]
      %v506 = vld [vmem:[#allocation2 + $0x1a8] sm:$0x3]
      %v561 = vcombine.high %v453, %v453
      %v563 = vunpack.c.l.s4 1983009808
      %v564 = vunpack.c.0.s8 %v563
      %v565 = vlaneseq
      %v566 = vshrl.u32 %v565, 7
      %v567 = vsub.s32 %v564, %v566
      %v568 = vrot.slane %v453, %v567
      %v570 = vunpack.c.l.s4 1983009808
      %v571 = vunpack.c.0.s8 %v570
      %v572 = vlaneseq
      %v573 = vshrl.u32 %v572, 7
      %v574 = vsub.s32 %v571, %v573
      %v575 = vrot.slane %v561, %v574
      %v576 = vcombine.high %v568, %v568
      %v577 = vcombine.high %v575, %v575
      %v578 = vcombine.high %v454, %v454
      %v580 = vunpack.c.l.s4 1983009808
      %v581 = vunpack.c.0.s8 %v580
      %v582 = vlaneseq
      %v583 = vshrl.u32 %v582, 7
      %v584 = vsub.s32 %v581, %v583
      %v585 = vrot.slane %v454, %v584
      %v587 = vunpack.c.l.s4 1983009808
      %v588 = vunpack.c.0.s8 %v587
      %v589 = vlaneseq
      %v590 = vshrl.u32 %v589, 7
      %v591 = vsub.s32 %v588, %v590
      %v592 = vrot.slane %v578, %v591
      %v593 = vcombine.high %v585, %v585
      %v594 = vcombine.high %v592, %v592
      %v596 = vunpack.c.l.s4 1983009808
      %v597 = vunpack.c.0.s8 %v596
      %v598 = vlaneseq
      %v599 = vshrl.u32 %v598, 7
      %v600 = vsub.s32 %v597, %v599
      %v601 = vrot.slane %v455, %v600
      %v602 = vcombine.high %v456, %v456
      %v604 = vunpack.c.l.s4 1983009808
      %v605 = vunpack.c.0.s8 %v604
      %v606 = vlaneseq
      %v607 = vshrl.u32 %v606, 7
      %v608 = vsub.s32 %v605, %v607
      %v609 = vrot.slane %v456, %v608
      %v611 = vunpack.c.l.s4 1983009808
      %v612 = vunpack.c.0.s8 %v611
      %v613 = vlaneseq
      %v614 = vshrl.u32 %v613, 7
      %v615 = vsub.s32 %v612, %v614
      %v616 = vrot.slane %v602, %v615
      %v617 = vcombine.high %v609, %v609
      %v618 = vcombine.high %v616, %v616
      %v619 = vcombine.high %v457, %v457
      %v621 = vunpack.c.l.s4 1983009808
      %v622 = vunpack.c.0.s8 %v621
      %v623 = vlaneseq
      %v624 = vshrl.u32 %v623, 7
      %v625 = vsub.s32 %v622, %v624
      %v626 = vrot.slane %v457, %v625
      %v628 = vunpack.c.l.s4 1983009808
      %v629 = vunpack.c.0.s8 %v628
      %v630 = vlaneseq
      %v631 = vshrl.u32 %v630, 7
      %v632 = vsub.s32 %v629, %v631
      %v633 = vrot.slane %v619, %v632
      %v634 = vcombine.high %v626, %v626
      %v635 = vcombine.high %v633, %v633
      %v637 = vunpack.c.l.s4 1983009808
      %v638 = vunpack.c.0.s8 %v637
      %v639 = vlaneseq
      %v640 = vshrl.u32 %v639, 7
      %v641 = vsub.s32 %v638, %v640
      %v642 = vrot.slane %v458, %v641
      %v643 = vcombine.high %v459, %v459
      %v645 = vunpack.c.l.s4 1983009808
      %v646 = vunpack.c.0.s8 %v645
      %v647 = vlaneseq
      %v648 = vshrl.u32 %v647, 7
      %v649 = vsub.s32 %v646, %v648
      %v650 = vrot.slane %v459, %v649
      %v652 = vunpack.c.l.s4 1983009808
      %v653 = vunpack.c.0.s8 %v652
      %v654 = vlaneseq
      %v655 = vshrl.u32 %v654, 7
      %v656 = vsub.s32 %v653, %v655
      %v657 = vrot.slane %v643, %v656
      %v658 = vcombine.high %v650, %v650
      %v659 = vcombine.high %v657, %v657
      %v660 = vcombine.high %v460, %v460
      %v662 = vunpack.c.l.s4 1983009808
      %v663 = vunpack.c.0.s8 %v662
      %v664 = vlaneseq
      %v665 = vshrl.u32 %v664, 7
      %v666 = vsub.s32 %v663, %v665
      %v667 = vrot.slane %v460, %v666
      %v669 = vunpack.c.l.s4 1983009808
      %v670 = vunpack.c.0.s8 %v669
      %v671 = vlaneseq
      %v672 = vshrl.u32 %v671, 7
      %v673 = vsub.s32 %v670, %v672
      %v674 = vrot.slane %v660, %v673
      %v675 = vcombine.high %v667, %v667
      %v676 = vcombine.high %v674, %v674
      %v678 = vunpack.c.l.s4 1983009808
      %v679 = vunpack.c.0.s8 %v678
      %v680 = vlaneseq
      %v681 = vshrl.u32 %v680, 7
      %v682 = vsub.s32 %v679, %v681
      %v683 = vrot.slane %v461, %v682
      %v684 = vcombine.high %v462, %v462
      %v686 = vunpack.c.l.s4 1983009808
      %v687 = vunpack.c.0.s8 %v686
      %v688 = vlaneseq
      %v689 = vshrl.u32 %v688, 7
      %v690 = vsub.s32 %v687, %v689
      %v691 = vrot.slane %v462, %v690
      %v693 = vunpack.c.l.s4 1983009808
      %v694 = vunpack.c.0.s8 %v693
      %v695 = vlaneseq
      %v696 = vshrl.u32 %v695, 7
      %v697 = vsub.s32 %v694, %v696
      %v698 = vrot.slane %v684, %v697
      %v699 = vcombine.high %v691, %v691
      %v700 = vcombine.high %v698, %v698
      %v701 = vcombine.high %v463, %v463
      %v703 = vunpack.c.l.s4 1983009808
      %v704 = vunpack.c.0.s8 %v703
      %v705 = vlaneseq
      %v706 = vshrl.u32 %v705, 7
      %v707 = vsub.s32 %v704, %v706
      %v708 = vrot.slane %v463, %v707
      %v710 = vunpack.c.l.s4 1983009808
      %v711 = vunpack.c.0.s8 %v710
      %v712 = vlaneseq
      %v713 = vshrl.u32 %v712, 7
      %v714 = vsub.s32 %v711, %v713
      %v715 = vrot.slane %v701, %v714
      %v716 = vcombine.high %v708, %v708
      %v717 = vcombine.high %v715, %v715
      %v719 = vunpack.c.l.s4 1983009808
      %v720 = vunpack.c.0.s8 %v719
      %v721 = vlaneseq
      %v722 = vshrl.u32 %v721, 7
      %v723 = vsub.s32 %v720, %v722
      %v724 = vrot.slane %v464, %v723
      %v725 = vcombine.high %v465, %v465
      %v727 = vunpack.c.l.s4 1983009808
      %v728 = vunpack.c.0.s8 %v727
      %v729 = vlaneseq
      %v730 = vshrl.u32 %v729, 7
      %v731 = vsub.s32 %v728, %v730
      %v732 = vrot.slane %v465, %v731
      %v734 = vunpack.c.l.s4 1983009808
      %v735 = vunpack.c.0.s8 %v734
      %v736 = vlaneseq
      %v737 = vshrl.u32 %v736, 7
      %v738 = vsub.s32 %v735, %v737
      %v739 = vrot.slane %v725, %v738
      %v740 = vcombine.high %v732, %v732
      %v741 = vcombine.high %v739, %v739
      %v742 = vcombine.high %v466, %v466
      %v744 = vunpack.c.l.s4 1983009808
      %v745 = vunpack.c.0.s8 %v744
      %v746 = vlaneseq
      %v747 = vshrl.u32 %v746, 7
      %v748 = vsub.s32 %v745, %v747
      %v749 = vrot.slane %v466, %v748
      %v751 = vunpack.c.l.s4 1983009808
      %v752 = vunpack.c.0.s8 %v751
      %v753 = vlaneseq
      %v754 = vshrl.u32 %v753, 7
      %v755 = vsub.s32 %v752, %v754
      %v756 = vrot.slane %v742, %v755
      %v757 = vcombine.high %v749, %v749
      %v758 = vcombine.high %v756, %v756
      %v760 = vunpack.c.l.s4 1983009808
      %v761 = vunpack.c.0.s8 %v760
      %v762 = vlaneseq
      %v763 = vshrl.u32 %v762, 7
      %v764 = vsub.s32 %v761, %v763
      %v765 = vrot.slane %v467, %v764
      %v766 = vcombine.high %v468, %v468
      %v768 = vunpack.c.l.s4 1983009808
      %v769 = vunpack.c.0.s8 %v768
      %v770 = vlaneseq
      %v771 = vshrl.u32 %v770, 7
      %v772 = vsub.s32 %v769, %v771
      %v773 = vrot.slane %v468, %v772
      %v775 = vunpack.c.l.s4 1983009808
      %v776 = vunpack.c.0.s8 %v775
      %v777 = vlaneseq
      %v778 = vshrl.u32 %v777, 7
      %v779 = vsub.s32 %v776, %v778
      %v780 = vrot.slane %v766, %v779
      %v781 = vcombine.high %v773, %v773
      %v782 = vcombine.high %v780, %v780
      %v783 = vcombine.high %v469, %v469
      %v785 = vunpack.c.l.s4 1983009808
      %v786 = vunpack.c.0.s8 %v785
      %v787 = vlaneseq
      %v788 = vshrl.u32 %v787, 7
      %v789 = vsub.s32 %v786, %v788
      %v790 = vrot.slane %v469, %v789
      %v792 = vunpack.c.l.s4 1983009808
      %v793 = vunpack.c.0.s8 %v792
      %v794 = vlaneseq
      %v795 = vshrl.u32 %v794, 7
      %v796 = vsub.s32 %v793, %v795
      %v797 = vrot.slane %v783, %v796
      %v798 = vcombine.high %v790, %v790
      %v799 = vcombine.high %v797, %v797
      %v801 = vunpack.c.l.s4 1983009808
      %v802 = vunpack.c.0.s8 %v801
      %v803 = vlaneseq
      %v804 = vshrl.u32 %v803, 7
      %v805 = vsub.s32 %v802, %v804
      %v806 = vrot.slane %v470, %v805
      %v807 = vcombine.high %v471, %v471
      %v809 = vunpack.c.l.s4 1983009808
      %v810 = vunpack.c.0.s8 %v809
      %v811 = vlaneseq
      %v812 = vshrl.u32 %v811, 7
      %v813 = vsub.s32 %v810, %v812
      %v814 = vrot.slane %v471, %v813
      %v816 = vunpack.c.l.s4 1983009808
      %v817 = vunpack.c.0.s8 %v816
      %v818 = vlaneseq
      %v819 = vshrl.u32 %v818, 7
      %v820 = vsub.s32 %v817, %v819
      %v821 = vrot.slane %v807, %v820
      %v822 = vcombine.high %v814, %v814
      %v823 = vcombine.high %v821, %v821
      %v824 = vcombine.high %v472, %v472
      %v826 = vunpack.c.l.s4 1983009808
      %v827 = vunpack.c.0.s8 %v826
      %v828 = vlaneseq
      %v829 = vshrl.u32 %v828, 7
      %v830 = vsub.s32 %v827, %v829
      %v831 = vrot.slane %v472, %v830
      %v833 = vunpack.c.l.s4 1983009808
      %v834 = vunpack.c.0.s8 %v833
      %v835 = vlaneseq
      %v836 = vshrl.u32 %v835, 7
      %v837 = vsub.s32 %v834, %v836
      %v838 = vrot.slane %v824, %v837
      %v839 = vcombine.high %v831, %v831
      %v840 = vcombine.high %v838, %v838
      %v842 = vunpack.c.l.s4 1983009808
      %v843 = vunpack.c.0.s8 %v842
      %v844 = vlaneseq
      %v845 = vshrl.u32 %v844, 7
      %v846 = vsub.s32 %v843, %v845
      %v847 = vrot.slane %v473, %v846
      %v848 = vcombine.high %v474, %v474
      %v850 = vunpack.c.l.s4 1983009808
      %v851 = vunpack.c.0.s8 %v850
      %v852 = vlaneseq
      %v853 = vshrl.u32 %v852, 7
      %v854 = vsub.s32 %v851, %v853
      %v855 = vrot.slane %v474, %v854
      %v857 = vunpack.c.l.s4 1983009808
      %v858 = vunpack.c.0.s8 %v857
      %v859 = vlaneseq
      %v860 = vshrl.u32 %v859, 7
      %v861 = vsub.s32 %v858, %v860
      %v862 = vrot.slane %v848, %v861
      %v863 = vcombine.high %v855, %v855
      %v864 = vcombine.high %v862, %v862
      %v865 = vcombine.high %v475, %v475
      %v867 = vunpack.c.l.s4 1983009808
      %v868 = vunpack.c.0.s8 %v867
      %v869 = vlaneseq
      %v870 = vshrl.u32 %v869, 7
      %v871 = vsub.s32 %v868, %v870
      %v872 = vrot.slane %v475, %v871
      %v874 = vunpack.c.l.s4 1983009808
      %v875 = vunpack.c.0.s8 %v874
      %v876 = vlaneseq
      %v877 = vshrl.u32 %v876, 7
      %v878 = vsub.s32 %v875, %v877
      %v879 = vrot.slane %v865, %v878
      %v880 = vcombine.high %v872, %v872
      %v881 = vcombine.high %v879, %v879
      %v883 = vunpack.c.l.s4 1983009808
      %v884 = vunpack.c.0.s8 %v883
      %v885 = vlaneseq
      %v886 = vshrl.u32 %v885, 7
      %v887 = vsub.s32 %v884, %v886
      %v888 = vrot.slane %v476, %v887
      %v889 = vcombine.high %v477, %v477
      %v891 = vunpack.c.l.s4 1983009808
      %v892 = vunpack.c.0.s8 %v891
      %v893 = vlaneseq
      %v894 = vshrl.u32 %v893, 7
      %v895 = vsub.s32 %v892, %v894
      %v896 = vrot.slane %v477, %v895
      %v898 = vunpack.c.l.s4 1983009808
      %v899 = vunpack.c.0.s8 %v898
      %v900 = vlaneseq
      %v901 = vshrl.u32 %v900, 7
      %v902 = vsub.s32 %v899, %v901
      %v903 = vrot.slane %v889, %v902
      %v904 = vcombine.high %v896, %v896
      %v905 = vcombine.high %v903, %v903
      %v906 = vcombine.high %v478, %v478
      %v908 = vunpack.c.l.s4 1983009808
      %v909 = vunpack.c.0.s8 %v908
      %v910 = vlaneseq
      %v911 = vshrl.u32 %v910, 7
      %v912 = vsub.s32 %v909, %v911
      %v913 = vrot.slane %v478, %v912
      %v915 = vunpack.c.l.s4 1983009808
      %v916 = vunpack.c.0.s8 %v915
      %v917 = vlaneseq
      %v918 = vshrl.u32 %v917, 7
      %v919 = vsub.s32 %v916, %v918
      %v920 = vrot.slane %v906, %v919
      %v921 = vcombine.high %v913, %v913
      %v922 = vcombine.high %v920, %v920
      %v924 = vunpack.c.l.s4 1983009808
      %v925 = vunpack.c.0.s8 %v924
      %v926 = vlaneseq
      %v927 = vshrl.u32 %v926, 7
      %v928 = vsub.s32 %v925, %v927
      %v929 = vrot.slane %v479, %v928
      %v930 = vcombine.high %v480, %v480
      %v932 = vunpack.c.l.s4 1983009808
      %v933 = vunpack.c.0.s8 %v932
      %v934 = vlaneseq
      %v935 = vshrl.u32 %v934, 7
      %v936 = vsub.s32 %v933, %v935
      %v937 = vrot.slane %v480, %v936
      %v939 = vunpack.c.l.s4 1983009808
      %v940 = vunpack.c.0.s8 %v939
      %v941 = vlaneseq
      %v942 = vshrl.u32 %v941, 7
      %v943 = vsub.s32 %v940, %v942
      %v944 = vrot.slane %v930, %v943
      %v945 = vcombine.high %v937, %v937
      %v946 = vcombine.high %v944, %v944
      %v947 = vcombine.high %v481, %v481
      %v949 = vunpack.c.l.s4 1983009808
      %v950 = vunpack.c.0.s8 %v949
      %v951 = vlaneseq
      %v952 = vshrl.u32 %v951, 7
      %v953 = vsub.s32 %v950, %v952
      %v954 = vrot.slane %v481, %v953
      %v956 = vunpack.c.l.s4 1983009808
      %v957 = vunpack.c.0.s8 %v956
      %v958 = vlaneseq
      %v959 = vshrl.u32 %v958, 7
      %v960 = vsub.s32 %v957, %v959
      %v961 = vrot.slane %v947, %v960
      %v962 = vcombine.high %v954, %v954
      %v963 = vcombine.high %v961, %v961
      %v965 = vunpack.c.l.s4 1983009808
      %v966 = vunpack.c.0.s8 %v965
      %v967 = vlaneseq
      %v968 = vshrl.u32 %v967, 7
      %v969 = vsub.s32 %v966, %v968
      %v970 = vrot.slane %v482, %v969
      %v971 = vcombine.high %v483, %v483
      %v973 = vunpack.c.l.s4 1983009808
      %v974 = vunpack.c.0.s8 %v973
      %v975 = vlaneseq
      %v976 = vshrl.u32 %v975, 7
      %v977 = vsub.s32 %v974, %v976
      %v978 = vrot.slane %v483, %v977
      %v980 = vunpack.c.l.s4 1983009808
      %v981 = vunpack.c.0.s8 %v980
      %v982 = vlaneseq
      %v983 = vshrl.u32 %v982, 7
      %v984 = vsub.s32 %v981, %v983
      %v985 = vrot.slane %v971, %v984
      %v986 = vcombine.high %v978, %v978
      %v987 = vcombine.high %v985, %v985
      %v988 = vcombine.high %v484, %v484
      %v990 = vunpack.c.l.s4 1983009808
      %v991 = vunpack.c.0.s8 %v990
      %v992 = vlaneseq
      %v993 = vshrl.u32 %v992, 7
      %v994 = vsub.s32 %v991, %v993
      %v995 = vrot.slane %v484, %v994
      %v997 = vunpack.c.l.s4 1983009808
      %v998 = vunpack.c.0.s8 %v997
      %v999 = vlaneseq
      %v1000 = vshrl.u32 %v999, 7
      %v1001 = vsub.s32 %v998, %v1000
      %v1002 = vrot.slane %v988, %v1001
      %v1003 = vcombine.high %v995, %v995
      %v1004 = vcombine.high %v1002, %v1002
      %v1006 = vunpack.c.l.s4 1983009808
      %v1007 = vunpack.c.0.s8 %v1006
      %v1008 = vlaneseq
      %v1009 = vshrl.u32 %v1008, 7
      %v1010 = vsub.s32 %v1007, %v1009
      %v1011 = vrot.slane %v485, %v1010
      %v1012 = vcombine.high %v486, %v486
      %v1014 = vunpack.c.l.s4 1983009808
      %v1015 = vunpack.c.0.s8 %v1014
      %v1016 = vlaneseq
      %v1017 = vshrl.u32 %v1016, 7
      %v1018 = vsub.s32 %v1015, %v1017
      %v1019 = vrot.slane %v486, %v1018
      %v1021 = vunpack.c.l.s4 1983009808
      %v1022 = vunpack.c.0.s8 %v1021
      %v1023 = vlaneseq
      %v1024 = vshrl.u32 %v1023, 7
      %v1025 = vsub.s32 %v1022, %v1024
      %v1026 = vrot.slane %v1012, %v1025
      %v1027 = vcombine.high %v1019, %v1019
      %v1028 = vcombine.high %v1026, %v1026
      %v1029 = vcombine.high %v487, %v487
      %v1031 = vunpack.c.l.s4 1983009808
      %v1032 = vunpack.c.0.s8 %v1031
      %v1033 = vlaneseq
      %v1034 = vshrl.u32 %v1033, 7
      %v1035 = vsub.s32 %v1032, %v1034
      %v1036 = vrot.slane %v487, %v1035
      %v1038 = vunpack.c.l.s4 1983009808
      %v1039 = vunpack.c.0.s8 %v1038
      %v1040 = vlaneseq
      %v1041 = vshrl.u32 %v1040, 7
      %v1042 = vsub.s32 %v1039, %v1041
      %v1043 = vrot.slane %v1029, %v1042
      %v1044 = vcombine.high %v1036, %v1036
      %v1045 = vcombine.high %v1043, %v1043
      %v1047 = vunpack.c.l.s4 1983009808
      %v1048 = vunpack.c.0.s8 %v1047
      %v1049 = vlaneseq
      %v1050 = vshrl.u32 %v1049, 7
      %v1051 = vsub.s32 %v1048, %v1050
      %v1052 = vrot.slane %v488, %v1051
      %v1053 = vcombine.high %v489, %v489
      %v1055 = vunpack.c.l.s4 1983009808
      %v1056 = vunpack.c.0.s8 %v1055
      %v1057 = vlaneseq
      %v1058 = vshrl.u32 %v1057, 7
      %v1059 = vsub.s32 %v1056, %v1058
      %v1060 = vrot.slane %v489, %v1059
      %v1062 = vunpack.c.l.s4 1983009808
      %v1063 = vunpack.c.0.s8 %v1062
      %v1064 = vlaneseq
      %v1065 = vshrl.u32 %v1064, 7
      %v1066 = vsub.s32 %v1063, %v1065
      %v1067 = vrot.slane %v1053, %v1066
      %v1068 = vcombine.high %v1060, %v1060
      %v1069 = vcombine.high %v1067, %v1067
      %v1070 = vcombine.high %v490, %v490
      %v1072 = vunpack.c.l.s4 1983009808
      %v1073 = vunpack.c.0.s8 %v1072
      %v1074 = vlaneseq
      %v1075 = vshrl.u32 %v1074, 7
      %v1076 = vsub.s32 %v1073, %v1075
      %v1077 = vrot.slane %v490, %v1076
      %v1079 = vunpack.c.l.s4 1983009808
      %v1080 = vunpack.c.0.s8 %v1079
      %v1081 = vlaneseq
      %v1082 = vshrl.u32 %v1081, 7
      %v1083 = vsub.s32 %v1080, %v1082
      %v1084 = vrot.slane %v1070, %v1083
      %v1085 = vcombine.high %v1077, %v1077
      %v1086 = vcombine.high %v1084, %v1084
      %v1088 = vunpack.c.l.s4 1983009808
      %v1089 = vunpack.c.0.s8 %v1088
      %v1090 = vlaneseq
      %v1091 = vshrl.u32 %v1090, 7
      %v1092 = vsub.s32 %v1089, %v1091
      %v1093 = vrot.slane %v491, %v1092
      %v1094 = vcombine.high %v492, %v492
      %v1096 = vunpack.c.l.s4 1983009808
      %v1097 = vunpack.c.0.s8 %v1096
      %v1098 = vlaneseq
      %v1099 = vshrl.u32 %v1098, 7
      %v1100 = vsub.s32 %v1097, %v1099
      %v1101 = vrot.slane %v492, %v1100
      %v1103 = vunpack.c.l.s4 1983009808
      %v1104 = vunpack.c.0.s8 %v1103
      %v1105 = vlaneseq
      %v1106 = vshrl.u32 %v1105, 7
      %v1107 = vsub.s32 %v1104, %v1106
      %v1108 = vrot.slane %v1094, %v1107
      %v1109 = vcombine.high %v1101, %v1101
      %v1110 = vcombine.high %v1108, %v1108
      %v1111 = vcombine.high %v493, %v493
      %v1113 = vunpack.c.l.s4 1983009808
      %v1114 = vunpack.c.0.s8 %v1113
      %v1115 = vlaneseq
      %v1116 = vshrl.u32 %v1115, 7
      %v1117 = vsub.s32 %v1114, %v1116
      %v1118 = vrot.slane %v493, %v1117
      %v1120 = vunpack.c.l.s4 1983009808
      %v1121 = vunpack.c.0.s8 %v1120
      %v1122 = vlaneseq
      %v1123 = vshrl.u32 %v1122, 7
      %v1124 = vsub.s32 %v1121, %v1123
      %v1125 = vrot.slane %v1111, %v1124
      %v1126 = vcombine.high %v1118, %v1118
      %v1127 = vcombine.high %v1125, %v1125
      %v1129 = vunpack.c.l.s4 1983009808
      %v1130 = vunpack.c.0.s8 %v1129
      %v1131 = vlaneseq
      %v1132 = vshrl.u32 %v1131, 7
      %v1133 = vsub.s32 %v1130, %v1132
      %v1134 = vrot.slane %v494, %v1133
      %v1135 = vcombine.high %v495, %v495
      %v1137 = vunpack.c.l.s4 1983009808
      %v1138 = vunpack.c.0.s8 %v1137
      %v1139 = vlaneseq
      %v1140 = vshrl.u32 %v1139, 7
      %v1141 = vsub.s32 %v1138, %v1140
      %v1142 = vrot.slane %v495, %v1141
      %v1144 = vunpack.c.l.s4 1983009808
      %v1145 = vunpack.c.0.s8 %v1144
      %v1146 = vlaneseq
      %v1147 = vshrl.u32 %v1146, 7
      %v1148 = vsub.s32 %v1145, %v1147
      %v1149 = vrot.slane %v1135, %v1148
      %v1150 = vcombine.high %v1142, %v1142
      %v1151 = vcombine.high %v1149, %v1149
      %v1152 = vcombine.high %v496, %v496
      %v1154 = vunpack.c.l.s4 1983009808
      %v1155 = vunpack.c.0.s8 %v1154
      %v1156 = vlaneseq
      %v1157 = vshrl.u32 %v1156, 7
      %v1158 = vsub.s32 %v1155, %v1157
      %v1159 = vrot.slane %v496, %v1158
      %v1161 = vunpack.c.l.s4 1983009808
      %v1162 = vunpack.c.0.s8 %v1161
      %v1163 = vlaneseq
      %v1164 = vshrl.u32 %v1163, 7
      %v1165 = vsub.s32 %v1162, %v1164
      %v1166 = vrot.slane %v1152, %v1165
      %v1167 = vcombine.high %v1159, %v1159
      %v1168 = vcombine.high %v1166, %v1166
      %v1170 = vunpack.c.l.s4 1983009808
      %v1171 = vunpack.c.0.s8 %v1170
      %v1172 = vlaneseq
      %v1173 = vshrl.u32 %v1172, 7
      %v1174 = vsub.s32 %v1171, %v1173
      %v1175 = vrot.slane %v497, %v1174
      %v1176 = vcombine.high %v498, %v498
      %v1178 = vunpack.c.l.s4 1983009808
      %v1179 = vunpack.c.0.s8 %v1178
      %v1180 = vlaneseq
      %v1181 = vshrl.u32 %v1180, 7
      %v1182 = vsub.s32 %v1179, %v1181
      %v1183 = vrot.slane %v498, %v1182
      %v1185 = vunpack.c.l.s4 1983009808
      %v1186 = vunpack.c.0.s8 %v1185
      %v1187 = vlaneseq
      %v1188 = vshrl.u32 %v1187, 7
      %v1189 = vsub.s32 %v1186, %v1188
      %v1190 = vrot.slane %v1176, %v1189
      %v1191 = vcombine.high %v1183, %v1183
      %v1192 = vcombine.high %v1190, %v1190
      %v1193 = vcombine.high %v499, %v499
      %v1195 = vunpack.c.l.s4 1983009808
      %v1196 = vunpack.c.0.s8 %v1195
      %v1197 = vlaneseq
      %v1198 = vshrl.u32 %v1197, 7
      %v1199 = vsub.s32 %v1196, %v1198
      %v1200 = vrot.slane %v499, %v1199
      %v1202 = vunpack.c.l.s4 1983009808
      %v1203 = vunpack.c.0.s8 %v1202
      %v1204 = vlaneseq
      %v1205 = vshrl.u32 %v1204, 7
      %v1206 = vsub.s32 %v1203, %v1205
      %v1207 = vrot.slane %v1193, %v1206
      %v1208 = vcombine.high %v1200, %v1200
      %v1209 = vcombine.high %v1207, %v1207
      %v1211 = vunpack.c.l.s4 1983009808
      %v1212 = vunpack.c.0.s8 %v1211
      %v1213 = vlaneseq
      %v1214 = vshrl.u32 %v1213, 7
      %v1215 = vsub.s32 %v1212, %v1214
      %v1216 = vrot.slane %v500, %v1215
      %v1217 = vcombine.high %v501, %v501
      %v1219 = vunpack.c.l.s4 1983009808
      %v1220 = vunpack.c.0.s8 %v1219
      %v1221 = vlaneseq
      %v1222 = vshrl.u32 %v1221, 7
      %v1223 = vsub.s32 %v1220, %v1222
      %v1224 = vrot.slane %v501, %v1223
      %v1226 = vunpack.c.l.s4 1983009808
      %v1227 = vunpack.c.0.s8 %v1226
      %v1228 = vlaneseq
      %v1229 = vshrl.u32 %v1228, 7
      %v1230 = vsub.s32 %v1227, %v1229
      %v1231 = vrot.slane %v1217, %v1230
      %v1232 = vcombine.high %v1224, %v1224
      %v1233 = vcombine.high %v1231, %v1231
      %v1234 = vcombine.high %v502, %v502
      %v1236 = vunpack.c.l.s4 1983009808
      %v1237 = vunpack.c.0.s8 %v1236
      %v1238 = vlaneseq
      %v1239 = vshrl.u32 %v1238, 7
      %v1240 = vsub.s32 %v1237, %v1239
      %v1241 = vrot.slane %v502, %v1240
      %v1243 = vunpack.c.l.s4 1983009808
      %v1244 = vunpack.c.0.s8 %v1243
      %v1245 = vlaneseq
      %v1246 = vshrl.u32 %v1245, 7
      %v1247 = vsub.s32 %v1244, %v1246
      %v1248 = vrot.slane %v1234, %v1247
      %v1249 = vcombine.high %v1241, %v1241
      %v1250 = vcombine.high %v1248, %v1248
      %v1252 = vunpack.c.l.s4 1983009808
      %v1253 = vunpack.c.0.s8 %v1252
      %v1254 = vlaneseq
      %v1255 = vshrl.u32 %v1254, 7
      %v1256 = vsub.s32 %v1253, %v1255
      %v1257 = vrot.slane %v503, %v1256
      %v1258 = vcombine.high %v504, %v504
      %v1260 = vunpack.c.l.s4 1983009808
      %v1261 = vunpack.c.0.s8 %v1260
      %v1262 = vlaneseq
      %v1263 = vshrl.u32 %v1262, 7
      %v1264 = vsub.s32 %v1261, %v1263
      %v1265 = vrot.slane %v504, %v1264
      %v1267 = vunpack.c.l.s4 1983009808
      %v1268 = vunpack.c.0.s8 %v1267
      %v1269 = vlaneseq
      %v1270 = vshrl.u32 %v1269, 7
      %v1271 = vsub.s32 %v1268, %v1270
      %v1272 = vrot.slane %v1258, %v1271
      %v1273 = vcombine.high %v1265, %v1265
      %v1274 = vcombine.high %v1272, %v1272
      %v1275 = vcombine.high %v505, %v505
      %v1277 = vunpack.c.l.s4 1983009808
      %v1278 = vunpack.c.0.s8 %v1277
      %v1279 = vlaneseq
      %v1280 = vshrl.u32 %v1279, 7
      %v1281 = vsub.s32 %v1278, %v1280
      %v1282 = vrot.slane %v505, %v1281
      %v1284 = vunpack.c.l.s4 1983009808
      %v1285 = vunpack.c.0.s8 %v1284
      %v1286 = vlaneseq
      %v1287 = vshrl.u32 %v1286, 7
      %v1288 = vsub.s32 %v1285, %v1287
      %v1289 = vrot.slane %v1275, %v1288
      %v1290 = vcombine.high %v1282, %v1282
      %v1291 = vcombine.high %v1289, %v1289
      %v1293 = vunpack.c.l.s4 1983009808
      %v1294 = vunpack.c.0.s8 %v1293
      %v1295 = vlaneseq
      %v1296 = vshrl.u32 %v1295, 7
      %v1297 = vsub.s32 %v1294, %v1296
      %v1298 = vrot.slane %v506, %v1297
      %v1299 = vld [vmem:[%s1] sm:$0xf]
      %v1300 = vcombine.low %v568, %v576
      %v1301 = vcombine.low %v575, %v577
      %v1303 = vunpack.c.l.s4 1983009808
      %v1304 = vunpack.c.0.s8 %v1303
      %v1305 = vlaneseq
      %v1306 = vshrl.u32 %v1305, 7
      %v1307 = vsub.s32 %v1304, %v1306
      %v1308 = vrot.slane %v1300, %v1307
      %v1310 = vunpack.c.l.s4 1983009808
      %v1311 = vunpack.c.0.s8 %v1310
      %v1312 = vlaneseq
      %v1313 = vshrl.u32 %v1312, 7
      %v1314 = vsub.s32 %v1311, %v1313
      %v1315 = vrot.slane %v1301, %v1314
      %v1316 = vcombine.low %v1308, %v1315
      %v1317 = vcombine.low %v585, %v593
      %v1318 = vcombine.low %v592, %v594
      %v1320 = vunpack.c.l.s4 1983009808
      %v1321 = vunpack.c.0.s8 %v1320
      %v1322 = vlaneseq
      %v1323 = vshrl.u32 %v1322, 7
      %v1324 = vsub.s32 %v1321, %v1323
      %v1325 = vrot.slane %v1317, %v1324
      %v1327 = vunpack.c.l.s4 1983009808
      %v1328 = vunpack.c.0.s8 %v1327
      %v1329 = vlaneseq
      %v1330 = vshrl.u32 %v1329, 7
      %v1331 = vsub.s32 %v1328, %v1330
      %v1332 = vrot.slane %v1318, %v1331
      %v1333 = vcombine.low %v1325, %v1332
      %v1334 = vcombine.low %v601, %v609
      %v1335 = vcombine.low %v617, %v616
      %v1337 = vunpack.c.l.s4 1983009808
      %v1338 = vunpack.c.0.s8 %v1337
      %v1339 = vlaneseq
      %v1340 = vshrl.u32 %v1339, 7
      %v1341 = vsub.s32 %v1338, %v1340
      %v1342 = vrot.slane %v1334, %v1341
      %v1344 = vunpack.c.l.s4 1983009808
      %v1345 = vunpack.c.0.s8 %v1344
      %v1346 = vlaneseq
      %v1347 = vshrl.u32 %v1346, 7
      %v1348 = vsub.s32 %v1345, %v1347
      %v1349 = vrot.slane %v1335, %v1348
      %v1350 = vcombine.low %v1342, %v1349
      %v1351 = vcombine.low %v618, %v626
      %v1352 = vcombine.low %v634, %v633
      %v1354 = vunpack.c.l.s4 1983009808
      %v1355 = vunpack.c.0.s8 %v1354
      %v1356 = vlaneseq
      %v1357 = vshrl.u32 %v1356, 7
      %v1358 = vsub.s32 %v1355, %v1357
      %v1359 = vrot.slane %v1351, %v1358
      %v1361 = vunpack.c.l.s4 1983009808
      %v1362 = vunpack.c.0.s8 %v1361
      %v1363 = vlaneseq
      %v1364 = vshrl.u32 %v1363, 7
      %v1365 = vsub.s32 %v1362, %v1364
      %v1366 = vrot.slane %v1352, %v1365
      %v1367 = vcombine.low %v1359, %v1366
      %v1368 = vcombine.low %v635, %v642
      %v1369 = vcombine.low %v650, %v658
      %v1371 = vunpack.c.l.s4 1983009808
      %v1372 = vunpack.c.0.s8 %v1371
      %v1373 = vlaneseq
      %v1374 = vshrl.u32 %v1373, 7
      %v1375 = vsub.s32 %v1372, %v1374
      %v1376 = vrot.slane %v1368, %v1375
      %v1378 = vunpack.c.l.s4 1983009808
      %v1379 = vunpack.c.0.s8 %v1378
      %v1380 = vlaneseq
      %v1381 = vshrl.u32 %v1380, 7
      %v1382 = vsub.s32 %v1379, %v1381
      %v1383 = vrot.slane %v1369, %v1382
      %v1384 = vcombine.low %v1376, %v1383
      %v1385 = vcombine.low %v657, %v659
      %v1386 = vcombine.low %v667, %v675
      %v1388 = vunpack.c.l.s4 1983009808
      %v1389 = vunpack.c.0.s8 %v1388
      %v1390 = vlaneseq
      %v1391 = vshrl.u32 %v1390, 7
      %v1392 = vsub.s32 %v1389, %v1391
      %v1393 = vrot.slane %v1385, %v1392
      %v1395 = vunpack.c.l.s4 1983009808
      %v1396 = vunpack.c.0.s8 %v1395
      %v1397 = vlaneseq
      %v1398 = vshrl.u32 %v1397, 7
      %v1399 = vsub.s32 %v1396, %v1398
      %v1400 = vrot.slane %v1386, %v1399
      %v1401 = vcombine.low %v1393, %v1400
      %v1402 = vcombine.low %v674, %v676
      %v1403 = vcombine.low %v683, %v691
      %v1405 = vunpack.c.l.s4 1983009808
      %v1406 = vunpack.c.0.s8 %v1405
      %v1407 = vlaneseq
      %v1408 = vshrl.u32 %v1407, 7
      %v1409 = vsub.s32 %v1406, %v1408
      %v1410 = vrot.slane %v1402, %v1409
      %v1412 = vunpack.c.l.s4 1983009808
      %v1413 = vunpack.c.0.s8 %v1412
      %v1414 = vlaneseq
      %v1415 = vshrl.u32 %v1414, 7
      %v1416 = vsub.s32 %v1413, %v1415
      %v1417 = vrot.slane %v1403, %v1416
      %v1418 = vcombine.low %v1410, %v1417
      %v1419 = vcombine.low %v699, %v698
      %v1420 = vcombine.low %v700, %v708
      %v1422 = vunpack.c.l.s4 1983009808
      %v1423 = vunpack.c.0.s8 %v1422
      %v1424 = vlaneseq
      %v1425 = vshrl.u32 %v1424, 7
      %v1426 = vsub.s32 %v1423, %v1425
      %v1427 = vrot.slane %v1419, %v1426
      %v1429 = vunpack.c.l.s4 1983009808
      %v1430 = vunpack.c.0.s8 %v1429
      %v1431 = vlaneseq
      %v1432 = vshrl.u32 %v1431, 7
      %v1433 = vsub.s32 %v1430, %v1432
      %v1434 = vrot.slane %v1420, %v1433
      %v1435 = vcombine.low %v1427, %v1434
      %v1436 = vcombine.low %v716, %v715
      %v1437 = vcombine.low %v717, %v724
      %v1439 = vunpack.c.l.s4 1983009808
      %v1440 = vunpack.c.0.s8 %v1439
      %v1441 = vlaneseq
      %v1442 = vshrl.u32 %v1441, 7
      %v1443 = vsub.s32 %v1440, %v1442
      %v1444 = vrot.slane %v1436, %v1443
      %v1446 = vunpack.c.l.s4 1983009808
      %v1447 = vunpack.c.0.s8 %v1446
      %v1448 = vlaneseq
      %v1449 = vshrl.u32 %v1448, 7
      %v1450 = vsub.s32 %v1447, %v1449
      %v1451 = vrot.slane %v1437, %v1450
      %v1452 = vcombine.low %v1444, %v1451
      %v1453 = vcombine.low %v732, %v740
      %v1454 = vcombine.low %v739, %v741
      %v1456 = vunpack.c.l.s4 1983009808
      %v1457 = vunpack.c.0.s8 %v1456
      %v1458 = vlaneseq
      %v1459 = vshrl.u32 %v1458, 7
      %v1460 = vsub.s32 %v1457, %v1459
      %v1461 = vrot.slane %v1453, %v1460
      %v1463 = vunpack.c.l.s4 1983009808
      %v1464 = vunpack.c.0.s8 %v1463
      %v1465 = vlaneseq
      %v1466 = vshrl.u32 %v1465, 7
      %v1467 = vsub.s32 %v1464, %v1466
      %v1468 = vrot.slane %v1454, %v1467
      %v1469 = vcombine.low %v1461, %v1468
      %v1470 = vcombine.low %v749, %v757
      %v1471 = vcombine.low %v756, %v758
      %v1473 = vunpack.c.l.s4 1983009808
      %v1474 = vunpack.c.0.s8 %v1473
      %v1475 = vlaneseq
      %v1476 = vshrl.u32 %v1475, 7
      %v1477 = vsub.s32 %v1474, %v1476
      %v1478 = vrot.slane %v1470, %v1477
      %v1480 = vunpack.c.l.s4 1983009808
      %v1481 = vunpack.c.0.s8 %v1480
      %v1482 = vlaneseq
      %v1483 = vshrl.u32 %v1482, 7
      %v1484 = vsub.s32 %v1481, %v1483
      %v1485 = vrot.slane %v1471, %v1484
      %v1486 = vcombine.low %v1478, %v1485
      %v1487 = vcombine.low %v765, %v773
      %v1488 = vcombine.low %v781, %v780
      %v1490 = vunpack.c.l.s4 1983009808
      %v1491 = vunpack.c.0.s8 %v1490
      %v1492 = vlaneseq
      %v1493 = vshrl.u32 %v1492, 7
      %v1494 = vsub.s32 %v1491, %v1493
      %v1495 = vrot.slane %v1487, %v1494
      %v1497 = vunpack.c.l.s4 1983009808
      %v1498 = vunpack.c.0.s8 %v1497
      %v1499 = vlaneseq
      %v1500 = vshrl.u32 %v1499, 7
      %v1501 = vsub.s32 %v1498, %v1500
      %v1502 = vrot.slane %v1488, %v1501
      %v1503 = vcombine.low %v1495, %v1502
      %v1504 = vcombine.low %v782, %v790
      %v1505 = vcombine.low %v798, %v797
      %v1507 = vunpack.c.l.s4 1983009808
      %v1508 = vunpack.c.0.s8 %v1507
      %v1509 = vlaneseq
      %v1510 = vshrl.u32 %v1509, 7
      %v1511 = vsub.s32 %v1508, %v1510
      %v1512 = vrot.slane %v1504, %v1511
      %v1514 = vunpack.c.l.s4 1983009808
      %v1515 = vunpack.c.0.s8 %v1514
      %v1516 = vlaneseq
      %v1517 = vshrl.u32 %v1516, 7
      %v1518 = vsub.s32 %v1515, %v1517
      %v1519 = vrot.slane %v1505, %v1518
      %v1520 = vcombine.low %v1512, %v1519
      %v1521 = vcombine.low %v799, %v806
      %v1522 = vcombine.low %v814, %v822
      %v1524 = vunpack.c.l.s4 1983009808
      %v1525 = vunpack.c.0.s8 %v1524
      %v1526 = vlaneseq
      %v1527 = vshrl.u32 %v1526, 7
      %v1528 = vsub.s32 %v1525, %v1527
      %v1529 = vrot.slane %v1521, %v1528
      %v1531 = vunpack.c.l.s4 1983009808
      %v1532 = vunpack.c.0.s8 %v1531
      %v1533 = vlaneseq
      %v1534 = vshrl.u32 %v1533, 7
      %v1535 = vsub.s32 %v1532, %v1534
      %v1536 = vrot.slane %v1522, %v1535
      %v1537 = vcombine.low %v1529, %v1536
      %v1538 = vcombine.low %v821, %v823
      %v1539 = vcombine.low %v831, %v839
      %v1541 = vunpack.c.l.s4 1983009808
      %v1542 = vunpack.c.0.s8 %v1541
      %v1543 = vlaneseq
      %v1544 = vshrl.u32 %v1543, 7
      %v1545 = vsub.s32 %v1542, %v1544
      %v1546 = vrot.slane %v1538, %v1545
      %v1548 = vunpack.c.l.s4 1983009808
      %v1549 = vunpack.c.0.s8 %v1548
      %v1550 = vlaneseq
      %v1551 = vshrl.u32 %v1550, 7
      %v1552 = vsub.s32 %v1549, %v1551
      %v1553 = vrot.slane %v1539, %v1552
      %v1554 = vcombine.low %v1546, %v1553
      %v1555 = vcombine.low %v838, %v840
      %v1556 = vcombine.low %v847, %v855
      %v1558 = vunpack.c.l.s4 1983009808
      %v1559 = vunpack.c.0.s8 %v1558
      %v1560 = vlaneseq
      %v1561 = vshrl.u32 %v1560, 7
      %v1562 = vsub.s32 %v1559, %v1561
      %v1563 = vrot.slane %v1555, %v1562
      %v1565 = vunpack.c.l.s4 1983009808
      %v1566 = vunpack.c.0.s8 %v1565
      %v1567 = vlaneseq
      %v1568 = vshrl.u32 %v1567, 7
      %v1569 = vsub.s32 %v1566, %v1568
      %v1570 = vrot.slane %v1556, %v1569
      %v1571 = vcombine.low %v1563, %v1570
      %v1572 = vcombine.low %v863, %v862
      %v1573 = vcombine.low %v864, %v872
      %v1575 = vunpack.c.l.s4 1983009808
      %v1576 = vunpack.c.0.s8 %v1575
      %v1577 = vlaneseq
      %v1578 = vshrl.u32 %v1577, 7
      %v1579 = vsub.s32 %v1576, %v1578
      %v1580 = vrot.slane %v1572, %v1579
      %v1582 = vunpack.c.l.s4 1983009808
      %v1583 = vunpack.c.0.s8 %v1582
      %v1584 = vlaneseq
      %v1585 = vshrl.u32 %v1584, 7
      %v1586 = vsub.s32 %v1583, %v1585
      %v1587 = vrot.slane %v1573, %v1586
      %v1588 = vcombine.low %v1580, %v1587
      %v1589 = vcombine.low %v880, %v879
      %v1590 = vcombine.low %v881, %v888
      %v1592 = vunpack.c.l.s4 1983009808
      %v1593 = vunpack.c.0.s8 %v1592
      %v1594 = vlaneseq
      %v1595 = vshrl.u32 %v1594, 7
      %v1596 = vsub.s32 %v1593, %v1595
      %v1597 = vrot.slane %v1589, %v1596
      %v1599 = vunpack.c.l.s4 1983009808
      %v1600 = vunpack.c.0.s8 %v1599
      %v1601 = vlaneseq
      %v1602 = vshrl.u32 %v1601, 7
      %v1603 = vsub.s32 %v1600, %v1602
      %v1604 = vrot.slane %v1590, %v1603
      %v1605 = vcombine.low %v1597, %v1604
      %v1606 = vcombine.low %v896, %v904
      %v1607 = vcombine.low %v903, %v905
      %v1609 = vunpack.c.l.s4 1983009808
      %v1610 = vunpack.c.0.s8 %v1609
      %v1611 = vlaneseq
      %v1612 = vshrl.u32 %v1611, 7
      %v1613 = vsub.s32 %v1610, %v1612
      %v1614 = vrot.slane %v1606, %v1613
      %v1616 = vunpack.c.l.s4 1983009808
      %v1617 = vunpack.c.0.s8 %v1616
      %v1618 = vlaneseq
      %v1619 = vshrl.u32 %v1618, 7
      %v1620 = vsub.s32 %v1617, %v1619
      %v1621 = vrot.slane %v1607, %v1620
      %v1622 = vcombine.low %v1614, %v1621
      %v1623 = vcombine.low %v913, %v921
      %v1624 = vcombine.low %v920, %v922
      %v1626 = vunpack.c.l.s4 1983009808
      %v1627 = vunpack.c.0.s8 %v1626
      %v1628 = vlaneseq
      %v1629 = vshrl.u32 %v1628, 7
      %v1630 = vsub.s32 %v1627, %v1629
      %v1631 = vrot.slane %v1623, %v1630
      %v1633 = vunpack.c.l.s4 1983009808
      %v1634 = vunpack.c.0.s8 %v1633
      %v1635 = vlaneseq
      %v1636 = vshrl.u32 %v1635, 7
      %v1637 = vsub.s32 %v1634, %v1636
      %v1638 = vrot.slane %v1624, %v1637
      %v1639 = vcombine.low %v1631, %v1638
      %v1640 = vcombine.low %v929, %v937
      %v1641 = vcombine.low %v945, %v944
      %v1643 = vunpack.c.l.s4 1983009808
      %v1644 = vunpack.c.0.s8 %v1643
      %v1645 = vlaneseq
      %v1646 = vshrl.u32 %v1645, 7
      %v1647 = vsub.s32 %v1644, %v1646
      %v1648 = vrot.slane %v1640, %v1647
      %v1650 = vunpack.c.l.s4 1983009808
      %v1651 = vunpack.c.0.s8 %v1650
      %v1652 = vlaneseq
      %v1653 = vshrl.u32 %v1652, 7
      %v1654 = vsub.s32 %v1651, %v1653
      %v1655 = vrot.slane %v1641, %v1654
      %v1656 = vcombine.low %v1648, %v1655
      %v1657 = vcombine.low %v946, %v954
      %v1658 = vcombine.low %v962, %v961
      %v1660 = vunpack.c.l.s4 1983009808
      %v1661 = vunpack.c.0.s8 %v1660
      %v1662 = vlaneseq
      %v1663 = vshrl.u32 %v1662, 7
      %v1664 = vsub.s32 %v1661, %v1663
      %v1665 = vrot.slane %v1657, %v1664
      %v1667 = vunpack.c.l.s4 1983009808
      %v1668 = vunpack.c.0.s8 %v1667
      %v1669 = vlaneseq
      %v1670 = vshrl.u32 %v1669, 7
      %v1671 = vsub.s32 %v1668, %v1670
      %v1672 = vrot.slane %v1658, %v1671
      %v1673 = vcombine.low %v1665, %v1672
      %v1674 = vcombine.low %v963, %v970
      %v1675 = vcombine.low %v978, %v986
      %v1677 = vunpack.c.l.s4 1983009808
      %v1678 = vunpack.c.0.s8 %v1677
      %v1679 = vlaneseq
      %v1680 = vshrl.u32 %v1679, 7
      %v1681 = vsub.s32 %v1678, %v1680
      %v1682 = vrot.slane %v1674, %v1681
      %v1684 = vunpack.c.l.s4 1983009808
      %v1685 = vunpack.c.0.s8 %v1684
      %v1686 = vlaneseq
      %v1687 = vshrl.u32 %v1686, 7
      %v1688 = vsub.s32 %v1685, %v1687
      %v1689 = vrot.slane %v1675, %v1688
      %v1690 = vcombine.low %v1682, %v1689
      %v1691 = vcombine.low %v985, %v987
      %v1692 = vcombine.low %v995, %v1003
      %v1694 = vunpack.c.l.s4 1983009808
      %v1695 = vunpack.c.0.s8 %v1694
      %v1696 = vlaneseq
      %v1697 = vshrl.u32 %v1696, 7
      %v1698 = vsub.s32 %v1695, %v1697
      %v1699 = vrot.slane %v1691, %v1698
      %v1701 = vunpack.c.l.s4 1983009808
      %v1702 = vunpack.c.0.s8 %v1701
      %v1703 = vlaneseq
      %v1704 = vshrl.u32 %v1703, 7
      %v1705 = vsub.s32 %v1702, %v1704
      %v1706 = vrot.slane %v1692, %v1705
      %v1707 = vcombine.low %v1699, %v1706
      %v1708 = vcombine.low %v1002, %v1004
      %v1709 = vcombine.low %v1011, %v1019
      %v1711 = vunpack.c.l.s4 1983009808
      %v1712 = vunpack.c.0.s8 %v1711
      %v1713 = vlaneseq
      %v1714 = vshrl.u32 %v1713, 7
      %v1715 = vsub.s32 %v1712, %v1714
      %v1716 = vrot.slane %v1708, %v1715
      %v1718 = vunpack.c.l.s4 1983009808
      %v1719 = vunpack.c.0.s8 %v1718
      %v1720 = vlaneseq
      %v1721 = vshrl.u32 %v1720, 7
      %v1722 = vsub.s32 %v1719, %v1721
      %v1723 = vrot.slane %v1709, %v1722
      %v1724 = vcombine.low %v1716, %v1723
      %v1725 = vcombine.low %v1027, %v1026
      %v1726 = vcombine.low %v1028, %v1036
      %v1728 = vunpack.c.l.s4 1983009808
      %v1729 = vunpack.c.0.s8 %v1728
      %v1730 = vlaneseq
      %v1731 = vshrl.u32 %v1730, 7
      %v1732 = vsub.s32 %v1729, %v1731
      %v1733 = vrot.slane %v1725, %v1732
      %v1735 = vunpack.c.l.s4 1983009808
      %v1736 = vunpack.c.0.s8 %v1735
      %v1737 = vlaneseq
      %v1738 = vshrl.u32 %v1737, 7
      %v1739 = vsub.s32 %v1736, %v1738
      %v1740 = vrot.slane %v1726, %v1739
      %v1741 = vcombine.low %v1733, %v1740
      %v1742 = vcombine.low %v1044, %v1043
      %v1743 = vcombine.low %v1045, %v1052
      %v1745 = vunpack.c.l.s4 1983009808
      %v1746 = vunpack.c.0.s8 %v1745
      %v1747 = vlaneseq
      %v1748 = vshrl.u32 %v1747, 7
      %v1749 = vsub.s32 %v1746, %v1748
      %v1750 = vrot.slane %v1742, %v1749
      %v1752 = vunpack.c.l.s4 1983009808
      %v1753 = vunpack.c.0.s8 %v1752
      %v1754 = vlaneseq
      %v1755 = vshrl.u32 %v1754, 7
      %v1756 = vsub.s32 %v1753, %v1755
      %v1757 = vrot.slane %v1743, %v1756
      %v1758 = vcombine.low %v1750, %v1757
      %v1759 = vcombine.low %v1060, %v1068
      %v1760 = vcombine.low %v1067, %v1069
      %v1762 = vunpack.c.l.s4 1983009808
      %v1763 = vunpack.c.0.s8 %v1762
      %v1764 = vlaneseq
      %v1765 = vshrl.u32 %v1764, 7
      %v1766 = vsub.s32 %v1763, %v1765
      %v1767 = vrot.slane %v1759, %v1766
      %v1769 = vunpack.c.l.s4 1983009808
      %v1770 = vunpack.c.0.s8 %v1769
      %v1771 = vlaneseq
      %v1772 = vshrl.u32 %v1771, 7
      %v1773 = vsub.s32 %v1770, %v1772
      %v1774 = vrot.slane %v1760, %v1773
      %v1775 = vcombine.low %v1767, %v1774
      %v1776 = vcombine.low %v1077, %v1085
      %v1777 = vcombine.low %v1084, %v1086
      %v1779 = vunpack.c.l.s4 1983009808
      %v1780 = vunpack.c.0.s8 %v1779
      %v1781 = vlaneseq
      %v1782 = vshrl.u32 %v1781, 7
      %v1783 = vsub.s32 %v1780, %v1782
      %v1784 = vrot.slane %v1776, %v1783
      %v1786 = vunpack.c.l.s4 1983009808
      %v1787 = vunpack.c.0.s8 %v1786
      %v1788 = vlaneseq
      %v1789 = vshrl.u32 %v1788, 7
      %v1790 = vsub.s32 %v1787, %v1789
      %v1791 = vrot.slane %v1777, %v1790
      %v1792 = vcombine.low %v1784, %v1791
      %v1793 = vcombine.low %v1093, %v1101
      %v1794 = vcombine.low %v1109, %v1108
      %v1796 = vunpack.c.l.s4 1983009808
      %v1797 = vunpack.c.0.s8 %v1796
      %v1798 = vlaneseq
      %v1799 = vshrl.u32 %v1798, 7
      %v1800 = vsub.s32 %v1797, %v1799
      %v1801 = vrot.slane %v1793, %v1800
      %v1803 = vunpack.c.l.s4 1983009808
      %v1804 = vunpack.c.0.s8 %v1803
      %v1805 = vlaneseq
      %v1806 = vshrl.u32 %v1805, 7
      %v1807 = vsub.s32 %v1804, %v1806
      %v1808 = vrot.slane %v1794, %v1807
      %v1809 = vcombine.low %v1801, %v1808
      %v1810 = vcombine.low %v1110, %v1118
      %v1811 = vcombine.low %v1126, %v1125
      %v1813 = vunpack.c.l.s4 1983009808
      %v1814 = vunpack.c.0.s8 %v1813
      %v1815 = vlaneseq
      %v1816 = vshrl.u32 %v1815, 7
      %v1817 = vsub.s32 %v1814, %v1816
      %v1818 = vrot.slane %v1810, %v1817
      %v1820 = vunpack.c.l.s4 1983009808
      %v1821 = vunpack.c.0.s8 %v1820
      %v1822 = vlaneseq
      %v1823 = vshrl.u32 %v1822, 7
      %v1824 = vsub.s32 %v1821, %v1823
      %v1825 = vrot.slane %v1811, %v1824
      %v1826 = vcombine.low %v1818, %v1825
      %v1827 = vcombine.low %v1127, %v1134
      %v1828 = vcombine.low %v1142, %v1150
      %v1830 = vunpack.c.l.s4 1983009808
      %v1831 = vunpack.c.0.s8 %v1830
      %v1832 = vlaneseq
      %v1833 = vshrl.u32 %v1832, 7
      %v1834 = vsub.s32 %v1831, %v1833
      %v1835 = vrot.slane %v1827, %v1834
      %v1837 = vunpack.c.l.s4 1983009808
      %v1838 = vunpack.c.0.s8 %v1837
      %v1839 = vlaneseq
      %v1840 = vshrl.u32 %v1839, 7
      %v1841 = vsub.s32 %v1838, %v1840
      %v1842 = vrot.slane %v1828, %v1841
      %v1843 = vcombine.low %v1835, %v1842
      %v1844 = vcombine.low %v1149, %v1151
      %v1845 = vcombine.low %v1159, %v1167
      %v1847 = vunpack.c.l.s4 1983009808
      %v1848 = vunpack.c.0.s8 %v1847
      %v1849 = vlaneseq
      %v1850 = vshrl.u32 %v1849, 7
      %v1851 = vsub.s32 %v1848, %v1850
      %v1852 = vrot.slane %v1844, %v1851
      %v1854 = vunpack.c.l.s4 1983009808
      %v1855 = vunpack.c.0.s8 %v1854
      %v1856 = vlaneseq
      %v1857 = vshrl.u32 %v1856, 7
      %v1858 = vsub.s32 %v1855, %v1857
      %v1859 = vrot.slane %v1845, %v1858
      %v1860 = vcombine.low %v1852, %v1859
      %v1861 = vcombine.low %v1166, %v1168
      %v1862 = vcombine.low %v1175, %v1183
      %v1864 = vunpack.c.l.s4 1983009808
      %v1865 = vunpack.c.0.s8 %v1864
      %v1866 = vlaneseq
      %v1867 = vshrl.u32 %v1866, 7
      %v1868 = vsub.s32 %v1865, %v1867
      %v1869 = vrot.slane %v1861, %v1868
      %v1871 = vunpack.c.l.s4 1983009808
      %v1872 = vunpack.c.0.s8 %v1871
      %v1873 = vlaneseq
      %v1874 = vshrl.u32 %v1873, 7
      %v1875 = vsub.s32 %v1872, %v1874
      %v1876 = vrot.slane %v1862, %v1875
      %v1877 = vcombine.low %v1869, %v1876
      %v1878 = vcombine.low %v1191, %v1190
      %v1879 = vcombine.low %v1192, %v1200
      %v1881 = vunpack.c.l.s4 1983009808
      %v1882 = vunpack.c.0.s8 %v1881
      %v1883 = vlaneseq
      %v1884 = vshrl.u32 %v1883, 7
      %v1885 = vsub.s32 %v1882, %v1884
      %v1886 = vrot.slane %v1878, %v1885
      %v1888 = vunpack.c.l.s4 1983009808
      %v1889 = vunpack.c.0.s8 %v1888
      %v1890 = vlaneseq
      %v1891 = vshrl.u32 %v1890, 7
      %v1892 = vsub.s32 %v1889, %v1891
      %v1893 = vrot.slane %v1879, %v1892
      %v1894 = vcombine.low %v1886, %v1893
      %v1895 = vcombine.low %v1208, %v1207
      %v1896 = vcombine.low %v1209, %v1216
      %v1898 = vunpack.c.l.s4 1983009808
      %v1899 = vunpack.c.0.s8 %v1898
      %v1900 = vlaneseq
      %v1901 = vshrl.u32 %v1900, 7
      %v1902 = vsub.s32 %v1899, %v1901
      %v1903 = vrot.slane %v1895, %v1902
      %v1905 = vunpack.c.l.s4 1983009808
      %v1906 = vunpack.c.0.s8 %v1905
      %v1907 = vlaneseq
      %v1908 = vshrl.u32 %v1907, 7
      %v1909 = vsub.s32 %v1906, %v1908
      %v1910 = vrot.slane %v1896, %v1909
      %v1911 = vcombine.low %v1903, %v1910
      %v1912 = vcombine.low %v1224, %v1232
      %v1913 = vcombine.low %v1231, %v1233
      %v1915 = vunpack.c.l.s4 1983009808
      %v1916 = vunpack.c.0.s8 %v1915
      %v1917 = vlaneseq
      %v1918 = vshrl.u32 %v1917, 7
      %v1919 = vsub.s32 %v1916, %v1918
      %v1920 = vrot.slane %v1912, %v1919
      %v1922 = vunpack.c.l.s4 1983009808
      %v1923 = vunpack.c.0.s8 %v1922
      %v1924 = vlaneseq
      %v1925 = vshrl.u32 %v1924, 7
      %v1926 = vsub.s32 %v1923, %v1925
      %v1927 = vrot.slane %v1913, %v1926
      %v1928 = vcombine.low %v1920, %v1927
      %s1929 = scalar_lea.vmem %s1, 4
      %v1930 = vld [vmem:[%s1929] sm:$0xf]
      %vm1931 = vcmask 1046528
      %v1932 = vrot.slane %v1316, 1
      %v1933 = vrot.slane %v1333, 1
      %v1934 = vsel %vm1931, %v1932, %v1933
      %v1935 = vrot.slane %v1350, 1
      %v1936 = vsel %vm1931, %v1933, %v1935
      %v1937 = vrot.slane %v1367, 1
      %v1938 = vsel %vm1931, %v1935, %v1937
      %v1939 = vrot.slane %v1384, 1
      %v1940 = vsel %vm1931, %v1937, %v1939
      %v1941 = vrot.slane %v1401, 1
      %v1942 = vsel %vm1931, %v1939, %v1941
      %v1943 = vrot.slane %v1418, 1
      %v1944 = vsel %vm1931, %v1941, %v1943
      %v1945 = vrot.slane %v1435, 1
      %v1946 = vsel %vm1931, %v1943, %v1945
      %v1947 = vrot.slane %v1452, 1
      %v1948 = vsel %vm1931, %v1945, %v1947
      %v1949 = vrot.slane %v1469, 1
      %v1950 = vsel %vm1931, %v1947, %v1949
      %v1951 = vrot.slane %v1486, 1
      %v1952 = vsel %vm1931, %v1949, %v1951
      %v1953 = vrot.slane %v1503, 1
      %v1954 = vsel %vm1931, %v1951, %v1953
      %v1955 = vrot.slane %v1520, 1
      %v1956 = vsel %vm1931, %v1953, %v1955
      %v1957 = vrot.slane %v1537, 1
      %v1958 = vsel %vm1931, %v1955, %v1957
      %v1959 = vrot.slane %v1554, 1
      %v1960 = vsel %vm1931, %v1957, %v1959
      %v1961 = vrot.slane %v1571, 1
      %v1962 = vsel %vm1931, %v1959, %v1961
      %v1963 = vrot.slane %v1588, 1
      %v1964 = vsel %vm1931, %v1961, %v1963
      %v1965 = vrot.slane %v1605, 1
      %v1966 = vsel %vm1931, %v1963, %v1965
      %v1967 = vrot.slane %v1622, 1
      %v1968 = vsel %vm1931, %v1965, %v1967
      %v1969 = vrot.slane %v1639, 1
      %v1970 = vsel %vm1931, %v1967, %v1969
      %v1971 = vrot.slane %v1656, 1
      %v1972 = vsel %vm1931, %v1969, %v1971
      %v1973 = vrot.slane %v1673, 1
      %v1974 = vsel %vm1931, %v1971, %v1973
      %v1975 = vrot.slane %v1690, 1
      %v1976 = vsel %vm1931, %v1973, %v1975
      %v1977 = vrot.slane %v1707, 1
      %v1978 = vsel %vm1931, %v1975, %v1977
      %v1979 = vrot.slane %v1724, 1
      %v1980 = vsel %vm1931, %v1977, %v1979
      %v1981 = vrot.slane %v1741, 1
      %v1982 = vsel %vm1931, %v1979, %v1981
      %v1983 = vrot.slane %v1758, 1
      %v1984 = vsel %vm1931, %v1981, %v1983
      %v1985 = vrot.slane %v1775, 1
      %v1986 = vsel %vm1931, %v1983, %v1985
      %v1987 = vrot.slane %v1792, 1
      %v1988 = vsel %vm1931, %v1985, %v1987
      %v1989 = vrot.slane %v1809, 1
      %v1990 = vsel %vm1931, %v1987, %v1989
      %v1991 = vrot.slane %v1826, 1
      %v1992 = vsel %vm1931, %v1989, %v1991
      %v1993 = vrot.slane %v1843, 1
      %v1994 = vsel %vm1931, %v1991, %v1993
      %v1995 = vrot.slane %v1860, 1
      %v1996 = vsel %vm1931, %v1993, %v1995
      %v1997 = vrot.slane %v1877, 1
      %v1998 = vsel %vm1931, %v1995, %v1997
      %v1999 = vrot.slane %v1894, 1
      %v2000 = vsel %vm1931, %v1997, %v1999
      %v2001 = vrot.slane %v1911, 1
      %v2002 = vsel %vm1931, %v1999, %v2001
      %v2003 = vrot.slane %v1928, 1
      %v2004 = vsel %vm1931, %v2001, %v2003
      %v2005 = vsel %vm378, %v1934, 0
      %v2007 = vsel %vm378, %v1936, 0
      %v2009 = vsel %vm378, %v1938, 0
      %v2011 = vsel %vm378, %v1940, 0
      %v2013 = vsel %vm378, %v1942, 0
      %v2015 = vsel %vm378, %v1944, 0
      %v2017 = vsel %vm378, %v1946, 0
      %v2019 = vsel %vm378, %v1948, 0
      %v2021 = vsel %vm378, %v1950, 0
      %v2023 = vsel %vm378, %v1952, 0
      %v2025 = vsel %vm378, %v1954, 0
      %v2027 = vsel %vm378, %v1956, 0
      %v2029 = vsel %vm378, %v1958, 0
      %v2031 = vsel %vm378, %v1960, 0
      %v2033 = vsel %vm378, %v1962, 0
      %v2035 = vsel %vm378, %v1964, 0
      %v2037 = vsel %vm378, %v1966, 0
      %v2039 = vsel %vm378, %v1968, 0
      %v2041 = vsel %vm378, %v1970, 0
      %v2043 = vsel %vm378, %v1972, 0
      %v2045 = vsel %vm378, %v1974, 0
      %v2047 = vsel %vm378, %v1976, 0
      %v2049 = vsel %vm378, %v1978, 0
      %v2051 = vsel %vm378, %v1980, 0
      %v2053 = vsel %vm378, %v1982, 0
      %v2055 = vsel %vm378, %v1984, 0
      %v2057 = vsel %vm378, %v1986, 0
      %v2059 = vsel %vm378, %v1988, 0
      %v2061 = vsel %vm378, %v1990, 0
      %v2063 = vsel %vm378, %v1992, 0
      %v2065 = vsel %vm378, %v1994, 0
      %v2067 = vsel %vm378, %v1996, 0
      %v2069 = vsel %vm378, %v1998, 0
      %v2071 = vsel %vm378, %v2000, 0
      %v2073 = vsel %vm378, %v2002, 0
      %v2075 = vsel %vm378, %v2004, 0
      %vm2077 = vcmask 1043456
      %v2079 = vsel %vm2077, %v1930, 0
      %2081 = vmatprep.subr.mxu0 0.0
      %2082 = vmatpush1.msra.mxu0 %v2079
      %2083 = vmatprep.subr.mxu0 0.0
      %2084 = vmatpush1.msra.mxu0 0.0
      %2085 = vmatprep.subr.mxu0 0.0
      %2086 = vmatpush1.msra.mxu0 0.0
      %2087 = vmatprep.subr.mxu0 0.0
      %2088 = vmatpush1.msra.mxu0 0.0
      %2089 = vmatprep.subr.mxu0 0.0
      %2090 = vmatpush1.msra.mxu0 0.0
      %2091 = vmatprep.subr.mxu0 0.0
      %2092 = vmatpush1.msra.mxu0 0.0
      %2093 = vmatprep.subr.mxu0 0.0
      %2094 = vmatpush1.msra.mxu0 0.0
      %2095 = vmatprep.subr.mxu0 0.0
      %2096 = vmatpush1.msra.mxu0 0.0
      %2097 = vmatprep.subr.mxu0 0.0
      %2098 = vmatpush1.msra.mxu0 0.0
      %2099 = vmatprep.subr.mxu0 0.0
      %2100 = vmatpush1.msra.mxu0 0.0
      %2101 = vmatprep.subr.mxu0 0.0
      %2102 = vmatpush1.msra.mxu0 0.0
      %2103 = vmatprep.subr.mxu0 0.0
      %2104 = vmatpush1.msra.mxu0 0.0
      %2105 = vmatprep.subr.mxu0 0.0
      %2106 = vmatpush1.msra.mxu0 0.0
      %2107 = vmatprep.subr.mxu0 0.0
      %2108 = vmatpush1.msra.mxu0 0.0
      %2109 = vmatprep.subr.mxu0 0.0
      %2110 = vmatpush1.msra.mxu0 0.0
      %2111 = vmatprep.subr.mxu0 0.0
      %2112 = vmatpush1.msra.mxu0 0.0
      %2113 = vmatprep.subr.mxu0 0.0
      %2114 = vmatpush1.msra.mxu0 0.0
      %2115 = vmatprep.subr.mxu0 0.0
      %2116 = vmatpush1.msra.mxu0 0.0
      %2117 = vmatprep.subr.mxu0 0.0
      %2118 = vmatpush1.msra.mxu0 0.0
      %2119 = vmatprep.subr.mxu0 0.0
      %2120 = vmatpush1.msra.mxu0 0.0
      %2121 = vmatprep.subr.mxu0 0.0
      %2122 = vmatpush1.msra.mxu0 0.0
      %2123 = vmatprep.subr.mxu0 0.0
      %2124 = vmatpush1.msra.mxu0 0.0
      %2125 = vmatprep.subr.mxu0 0.0
      %2126 = vmatpush1.msra.mxu0 0.0
      %2127 = vmatprep.subr.mxu0 0.0
      %2128 = vmatpush1.msra.mxu0 0.0
      %2129 = vmatprep.subr.mxu0 0.0
      %2130 = vmatpush1.msra.mxu0 0.0
      %2131 = vmatprep.subr.mxu0 0.0
      %2132 = vmatpush1.msra.mxu0 0.0
      %2133 = vmatprep.subr.mxu0 0.0
      %2134 = vmatpush1.msra.mxu0 0.0
      %2135 = vmatprep.subr.mxu0 0.0
      %2136 = vmatpush1.msra.mxu0 0.0
      %2137 = vmatprep.subr.mxu0 0.0
      %2138 = vmatpush1.msra.mxu0 0.0
      %2139 = vmatprep.subr.mxu0 0.0
      %2140 = vmatpush1.msra.mxu0 0.0
      %2141 = vmatprep.subr.mxu0 0.0
      %2142 = vmatpush1.msra.mxu0 0.0
      %2143 = vmatprep.subr.mxu0 0.0
      %2144 = vmatpush1.msra.mxu0 0.0
      %2145 = vmatprep.mubr.f32.mxu0 0.0
      %2146 = vmatmul.mubr.f32.gmra.mrb[0].mxu0 %v2005
      %v2147 = vpop.f32.mrb[0].mxu0
      %v2148 = vadd.f32 0.0, %v2147
      %v2149 = vpop.f32.mrb[0].mxu0
      %2150 = vmatprep.mubr.f32.mxu0 0.0
      %2151 = vmatmul.mubr.f32.gmra.mrb[0].mxu0 %v2007
      %v2152 = vpop.f32.mrb[0].mxu0
      %v2153 = vadd.f32 0.0, %v2152
      %v2154 = vpop.f32.mrb[0].mxu0
      %2155 = vmatprep.mubr.f32.mxu0 0.0
      %2156 = vmatmul.mubr.f32.gmra.mrb[0].mxu0 %v2009
      %v2157 = vpop.f32.mrb[0].mxu0
      %v2158 = vadd.f32 0.0, %v2157
      %v2159 = vpop.f32.mrb[0].mxu0
      %2160 = vmatprep.mubr.f32.mxu0 0.0
      %2161 = vmatmul.mubr.f32.gmra.mrb[0].mxu0 %v2011
      %v2162 = vpop.f32.mrb[0].mxu0
      %v2163 = vadd.f32 0.0, %v2162
      %v2164 = vpop.f32.mrb[0].mxu0
      %2165 = vmatprep.mubr.f32.mxu0 0.0
      %2166 = vmatmul.mubr.f32.gmra.mrb[0].mxu0 %v2013
      %v2167 = vpop.f32.mrb[0].mxu0
      %v2168 = vadd.f32 0.0, %v2167
      %v2169 = vpop.f32.mrb[0].mxu0
      %2170 = vmatprep.mubr.f32.mxu0 0.0
      %2171 = vmatmul.mubr.f32.gmra.mrb[0].mxu0 %v2015
      %v2172 = vpop.f32.mrb[0].mxu0
      %v2173 = vadd.f32 0.0, %v2172
      %v2174 = vpop.f32.mrb[0].mxu0
      %2175 = vmatprep.mubr.f32.mxu0 0.0
      %2176 = vmatmul.mubr.f32.gmra.mrb[0].mxu0 %v2017
      %v2177 = vpop.f32.mrb[0].mxu0
      %v2178 = vadd.f32 0.0, %v2177
      %v2179 = vpop.f32.mrb[0].mxu0
      %2180 = vmatprep.mubr.f32.mxu0 0.0
      %2181 = vmatmul.mubr.f32.gmra.mrb[0].mxu0 %v2019
      %v2182 = vpop.f32.mrb[0].mxu0
      %v2183 = vadd.f32 0.0, %v2182
      %v2184 = vpop.f32.mrb[0].mxu0
      %2185 = vmatprep.mubr.f32.mxu0 0.0
      %2186 = vmatmul.mubr.f32.gmra.mrb[0].mxu0 %v2021
      %v2187 = vpop.f32.mrb[0].mxu0
      %v2188 = vadd.f32 0.0, %v2187
      %v2189 = vpop.f32.mrb[0].mxu0
      %2190 = vmatprep.mubr.f32.mxu0 0.0
      %2191 = vmatmul.mubr.f32.gmra.mrb[0].mxu0 %v2023
      %v2192 = vpop.f32.mrb[0].mxu0
      %v2193 = vadd.f32 0.0, %v2192
      %v2194 = vpop.f32.mrb[0].mxu0
      %2195 = vmatprep.mubr.f32.mxu0 0.0
      %2196 = vmatmul.mubr.f32.gmra.mrb[0].mxu0 %v2025
      %v2197 = vpop.f32.mrb[0].mxu0
      %v2198 = vadd.f32 0.0, %v2197
      %v2199 = vpop.f32.mrb[0].mxu0
      %2200 = vmatprep.mubr.f32.mxu0 0.0
      %2201 = vmatmul.mubr.f32.gmra.mrb[0].mxu0 %v2027
      %v2202 = vpop.f32.mrb[0].mxu0
      %v2203 = vadd.f32 0.0, %v2202
      %v2204 = vpop.f32.mrb[0].mxu0
      %2205 = vmatprep.mubr.f32.mxu0 0.0
      %2206 = vmatmul.mubr.f32.gmra.mrb[0].mxu0 %v2029
      %v2207 = vpop.f32.mrb[0].mxu0
      %v2208 = vadd.f32 0.0, %v2207
      %v2209 = vpop.f32.mrb[0].mxu0
      %2210 = vmatprep.mubr.f32.mxu0 0.0
      %2211 = vmatmul.mubr.f32.gmra.mrb[0].mxu0 %v2031
      %v2212 = vpop.f32.mrb[0].mxu0
      %v2213 = vadd.f32 0.0, %v2212
      %v2214 = vpop.f32.mrb[0].mxu0
      %2215 = vmatprep.mubr.f32.mxu0 0.0
      %2216 = vmatmul.mubr.f32.gmra.mrb[0].mxu0 %v2033
      %v2217 = vpop.f32.mrb[0].mxu0
      %v2218 = vadd.f32 0.0, %v2217
      %v2219 = vpop.f32.mrb[0].mxu0
      %2220 = vmatprep.mubr.f32.mxu0 0.0
      %2221 = vmatmul.mubr.f32.gmra.mrb[0].mxu0 %v2035
      %v2222 = vpop.f32.mrb[0].mxu0
      %v2223 = vadd.f32 0.0, %v2222
      %v2224 = vpop.f32.mrb[0].mxu0
      %2225 = vmatprep.mubr.f32.mxu0 0.0
      %2226 = vmatmul.mubr.f32.gmra.mrb[0].mxu0 %v2037
      %v2227 = vpop.f32.mrb[0].mxu0
      %v2228 = vadd.f32 0.0, %v2227
      %v2229 = vpop.f32.mrb[0].mxu0
      %2230 = vmatprep.mubr.f32.mxu0 0.0
      %2231 = vmatmul.mubr.f32.gmra.mrb[0].mxu0 %v2039
      %v2232 = vpop.f32.mrb[0].mxu0
      %v2233 = vadd.f32 0.0, %v2232
      %v2234 = vpop.f32.mrb[0].mxu0
      %2235 = vmatprep.mubr.f32.mxu0 0.0
      %2236 = vmatmul.mubr.f32.gmra.mrb[0].mxu0 %v2041
      %v2237 = vpop.f32.mrb[0].mxu0
      %v2238 = vadd.f32 0.0, %v2237
      %v2239 = vpop.f32.mrb[0].mxu0
      %2240 = vmatprep.mubr.f32.mxu0 0.0
      %2241 = vmatmul.mubr.f32.gmra.mrb[0].mxu0 %v2043
      %v2242 = vpop.f32.mrb[0].mxu0
      %v2243 = vadd.f32 0.0, %v2242
      %v2244 = vpop.f32.mrb[0].mxu0
      %2245 = vmatprep.mubr.f32.mxu0 0.0
      %2246 = vmatmul.mubr.f32.gmra.mrb[0].mxu0 %v2045
      %v2247 = vpop.f32.mrb[0].mxu0
      %v2248 = vadd.f32 0.0, %v2247
      %v2249 = vpop.f32.mrb[0].mxu0
      %2250 = vmatprep.mubr.f32.mxu0 0.0
      %2251 = vmatmul.mubr.f32.gmra.mrb[0].mxu0 %v2047
      %v2252 = vpop.f32.mrb[0].mxu0
      %v2253 = vadd.f32 0.0, %v2252
      %v2254 = vpop.f32.mrb[0].mxu0
      %2255 = vmatprep.mubr.f32.mxu0 0.0
      %2256 = vmatmul.mubr.f32.gmra.mrb[0].mxu0 %v2049
      %v2257 = vpop.f32.mrb[0].mxu0
      %v2258 = vadd.f32 0.0, %v2257
      %v2259 = vpop.f32.mrb[0].mxu0
      %2260 = vmatprep.mubr.f32.mxu0 0.0
      %2261 = vmatmul.mubr.f32.gmra.mrb[0].mxu0 %v2051
      %v2262 = vpop.f32.mrb[0].mxu0
      %v2263 = vadd.f32 0.0, %v2262
      %v2264 = vpop.f32.mrb[0].mxu0
      %2265 = vmatprep.mubr.f32.mxu0 0.0
      %2266 = vmatmul.mubr.f32.gmra.mrb[0].mxu0 %v2053
      %v2267 = vpop.f32.mrb[0].mxu0
      %v2268 = vadd.f32 0.0, %v2267
      %v2269 = vpop.f32.mrb[0].mxu0
      %2270 = vmatprep.mubr.f32.mxu0 0.0
      %2271 = vmatmul.mubr.f32.gmra.mrb[0].mxu0 %v2055
      %v2272 = vpop.f32.mrb[0].mxu0
      %v2273 = vadd.f32 0.0, %v2272
      %v2274 = vpop.f32.mrb[0].mxu0
      %2275 = vmatprep.mubr.f32.mxu0 0.0
      %2276 = vmatmul.mubr.f32.gmra.mrb[0].mxu0 %v2057
      %v2277 = vpop.f32.mrb[0].mxu0
      %v2278 = vadd.f32 0.0, %v2277
      %v2279 = vpop.f32.mrb[0].mxu0
      %2280 = vmatprep.mubr.f32.mxu0 0.0
      %2281 = vmatmul.mubr.f32.gmra.mrb[0].mxu0 %v2059
      %v2282 = vpop.f32.mrb[0].mxu0
      %v2283 = vadd.f32 0.0, %v2282
      %v2284 = vpop.f32.mrb[0].mxu0
      %2285 = vmatprep.mubr.f32.mxu0 0.0
      %2286 = vmatmul.mubr.f32.gmra.mrb[0].mxu0 %v2061
      %v2287 = vpop.f32.mrb[0].mxu0
      %v2288 = vadd.f32 0.0, %v2287
      %v2289 = vpop.f32.mrb[0].mxu0
      %2290 = vmatprep.mubr.f32.mxu0 0.0
      %2291 = vmatmul.mubr.f32.gmra.mrb[0].mxu0 %v2063
      %v2292 = vpop.f32.mrb[0].mxu0
      %v2293 = vadd.f32 0.0, %v2292
      %v2294 = vpop.f32.mrb[0].mxu0
      %2295 = vmatprep.mubr.f32.mxu0 0.0
      %2296 = vmatmul.mubr.f32.gmra.mrb[0].mxu0 %v2065
      %v2297 = vpop.f32.mrb[0].mxu0
      %v2298 = vadd.f32 0.0, %v2297
      %v2299 = vpop.f32.mrb[0].mxu0
      %2300 = vmatprep.mubr.f32.mxu0 0.0
      %2301 = vmatmul.mubr.f32.gmra.mrb[0].mxu0 %v2067
      %v2302 = vpop.f32.mrb[0].mxu0
      %v2303 = vadd.f32 0.0, %v2302
      %v2304 = vpop.f32.mrb[0].mxu0
      %2305 = vmatprep.mubr.f32.mxu0 0.0
      %2306 = vmatmul.mubr.f32.gmra.mrb[0].mxu0 %v2069
      %v2307 = vpop.f32.mrb[0].mxu0
      %v2308 = vadd.f32 0.0, %v2307
      %v2309 = vpop.f32.mrb[0].mxu0
      %2310 = vmatprep.mubr.f32.mxu0 0.0
      %2311 = vmatmul.mubr.f32.gmra.mrb[0].mxu0 %v2071
      %v2312 = vpop.f32.mrb[0].mxu0
      %v2313 = vadd.f32 0.0, %v2312
      %v2314 = vpop.f32.mrb[0].mxu0
      %2315 = vmatprep.mubr.f32.mxu0 0.0
      %2316 = vmatmul.mubr.f32.gmra.mrb[0].mxu0 %v2073
      %v2317 = vpop.f32.mrb[0].mxu0
      %v2318 = vadd.f32 0.0, %v2317
      %v2319 = vpop.f32.mrb[0].mxu0
      %2320 = vmatprep.mubr.f32.mxu0 0.0
      %2321 = vmatmul.mubr.f32.gmra.mrb[0].mxu0 %v2075
      %v2322 = vpop.f32.mrb[0].mxu0
      %v2323 = vadd.f32 0.0, %v2322
      %v2324 = vpop.f32.mrb[0].mxu0
      %2325 = vdwg.mxu0
      %v2326 = vsel %vm378, %v1316, 0
      %v2328 = vsel %vm378, %v1333, 0
      %v2330 = vsel %vm378, %v1350, 0
      %v2332 = vsel %vm378, %v1367, 0
      %v2334 = vsel %vm378, %v1384, 0
      %v2336 = vsel %vm378, %v1401, 0
      %v2338 = vsel %vm378, %v1418, 0
      %v2340 = vsel %vm378, %v1435, 0
      %v2342 = vsel %vm378, %v1452, 0
      %v2344 = vsel %vm378, %v1469, 0
      %v2346 = vsel %vm378, %v1486, 0
      %v2348 = vsel %vm378, %v1503, 0
      %v2350 = vsel %vm378, %v1520, 0
      %v2352 = vsel %vm378, %v1537, 0
      %v2354 = vsel %vm378, %v1554, 0
      %v2356 = vsel %vm378, %v1571, 0
      %v2358 = vsel %vm378, %v1588, 0
      %v2360 = vsel %vm378, %v1605, 0
      %v2362 = vsel %vm378, %v1622, 0
      %v2364 = vsel %vm378, %v1639, 0
      %v2366 = vsel %vm378, %v1656, 0
      %v2368 = vsel %vm378, %v1673, 0
      %v2370 = vsel %vm378, %v1690, 0
      %v2372 = vsel %vm378, %v1707, 0
      %v2374 = vsel %vm378, %v1724, 0
      %v2376 = vsel %vm378, %v1741, 0
      %v2378 = vsel %vm378, %v1758, 0
      %v2380 = vsel %vm378, %v1775, 0
      %v2382 = vsel %vm378, %v1792, 0
      %v2384 = vsel %vm378, %v1809, 0
      %v2386 = vsel %vm378, %v1826, 0
      %v2388 = vsel %vm378, %v1843, 0
      %v2390 = vsel %vm378, %v1860, 0
      %v2392 = vsel %vm378, %v1877, 0
      %v2394 = vsel %vm378, %v1894, 0
      %v2396 = vsel %vm378, %v1911, 0
      %v2399 = vsel %vm2077, %v1299, 0
      %2401 = vmatprep.subr.mxu0 0.0
      %2402 = vmatpush1.msra.mxu0 %v2399
      %2403 = vmatprep.subr.mxu0 0.0
      %2404 = vmatpush1.msra.mxu0 0.0
      %2405 = vmatprep.subr.mxu0 0.0
      %2406 = vmatpush1.msra.mxu0 0.0
      %2407 = vmatprep.subr.mxu0 0.0
      %2408 = vmatpush1.msra.mxu0 0.0
      %2409 = vmatprep.subr.mxu0 0.0
      %2410 = vmatpush1.msra.mxu0 0.0
      %2411 = vmatprep.subr.mxu0 0.0
      %2412 = vmatpush1.msra.mxu0 0.0
      %2413 = vmatprep.subr.mxu0 0.0
      %2414 = vmatpush1.msra.mxu0 0.0
      %2415 = vmatprep.subr.mxu0 0.0
      %2416 = vmatpush1.msra.mxu0 0.0
      %2417 = vmatprep.subr.mxu0 0.0
      %2418 = vmatpush1.msra.mxu0 0.0
      %2419 = vmatprep.subr.mxu0 0.0
      %2420 = vmatpush1.msra.mxu0 0.0
      %2421 = vmatprep.subr.mxu0 0.0
      %2422 = vmatpush1.msra.mxu0 0.0
      %2423 = vmatprep.subr.mxu0 0.0
      %2424 = vmatpush1.msra.mxu0 0.0
      %2425 = vmatprep.subr.mxu0 0.0
      %2426 = vmatpush1.msra.mxu0 0.0
      %2427 = vmatprep.subr.mxu0 0.0
      %2428 = vmatpush1.msra.mxu0 0.0
      %2429 = vmatprep.subr.mxu0 0.0
      %2430 = vmatpush1.msra.mxu0 0.0
      %2431 = vmatprep.subr.mxu0 0.0
      %2432 = vmatpush1.msra.mxu0 0.0
      %2433 = vmatprep.subr.mxu0 0.0
      %2434 = vmatpush1.msra.mxu0 0.0
      %2435 = vmatprep.subr.mxu0 0.0
      %2436 = vmatpush1.msra.mxu0 0.0
      %2437 = vmatprep.subr.mxu0 0.0
      %2438 = vmatpush1.msra.mxu0 0.0
      %2439 = vmatprep.subr.mxu0 0.0
      %2440 = vmatpush1.msra.mxu0 0.0
      %2441 = vmatprep.subr.mxu0 0.0
      %2442 = vmatpush1.msra.mxu0 0.0
      %2443 = vmatprep.subr.mxu0 0.0
      %2444 = vmatpush1.msra.mxu0 0.0
      %2445 = vmatprep.subr.mxu0 0.0
      %2446 = vmatpush1.msra.mxu0 0.0
      %2447 = vmatprep.subr.mxu0 0.0
      %2448 = vmatpush1.msra.mxu0 0.0
      %2449 = vmatprep.subr.mxu0 0.0
      %2450 = vmatpush1.msra.mxu0 0.0
      %2451 = vmatprep.subr.mxu0 0.0
      %2452 = vmatpush1.msra.mxu0 0.0
      %2453 = vmatprep.subr.mxu0 0.0
      %2454 = vmatpush1.msra.mxu0 0.0
      %2455 = vmatprep.subr.mxu0 0.0
      %2456 = vmatpush1.msra.mxu0 0.0
      %2457 = vmatprep.subr.mxu0 0.0
      %2458 = vmatpush1.msra.mxu0 0.0
      %2459 = vmatprep.subr.mxu0 0.0
      %2460 = vmatpush1.msra.mxu0 0.0
      %2461 = vmatprep.subr.mxu0 0.0
      %2462 = vmatpush1.msra.mxu0 0.0
      %2463 = vmatprep.subr.mxu0 0.0
      %2464 = vmatpush1.msra.mxu0 0.0
      %2465 = vmatprep.mubr.f32.mxu0 0.0
      %2466 = vmatmul.mubr.f32.gmra.mrb[0].mxu0 %v2326
      %v2467 = vpop.f32.mrb[0].mxu0
      %v2468 = vadd.f32 %v2148, %v2467
      %v2469 = vpop.f32.mrb[0].mxu0
      %2470 = vmatprep.mubr.f32.mxu0 0.0
      %2471 = vmatmul.mubr.f32.gmra.mrb[0].mxu0 %v2328
      %v2472 = vpop.f32.mrb[0].mxu0
      %v2473 = vadd.f32 %v2153, %v2472
      %v2474 = vpop.f32.mrb[0].mxu0
      %2475 = vmatprep.mubr.f32.mxu0 0.0
      %2476 = vmatmul.mubr.f32.gmra.mrb[0].mxu0 %v2330
      %v2477 = vpop.f32.mrb[0].mxu0
      %v2478 = vadd.f32 %v2158, %v2477
      %v2479 = vpop.f32.mrb[0].mxu0
      %2480 = vmatprep.mubr.f32.mxu0 0.0
      %2481 = vmatmul.mubr.f32.gmra.mrb[0].mxu0 %v2332
      %v2482 = vpop.f32.mrb[0].mxu0
      %v2483 = vadd.f32 %v2163, %v2482
      %v2484 = vpop.f32.mrb[0].mxu0
      %2485 = vmatprep.mubr.f32.mxu0 0.0
      %2486 = vmatmul.mubr.f32.gmra.mrb[0].mxu0 %v2334
      %v2487 = vpop.f32.mrb[0].mxu0
      %v2488 = vadd.f32 %v2168, %v2487
      %v2489 = vpop.f32.mrb[0].mxu0
      %2490 = vmatprep.mubr.f32.mxu0 0.0
      %2491 = vmatmul.mubr.f32.gmra.mrb[0].mxu0 %v2336
      %v2492 = vpop.f32.mrb[0].mxu0
      %v2493 = vadd.f32 %v2173, %v2492
      %v2494 = vpop.f32.mrb[0].mxu0
      %2495 = vmatprep.mubr.f32.mxu0 0.0
      %2496 = vmatmul.mubr.f32.gmra.mrb[0].mxu0 %v2338
      %v2497 = vpop.f32.mrb[0].mxu0
      %v2498 = vadd.f32 %v2178, %v2497
      %v2499 = vpop.f32.mrb[0].mxu0
      %2500 = vmatprep.mubr.f32.mxu0 0.0
      %2501 = vmatmul.mubr.f32.gmra.mrb[0].mxu0 %v2340
      %v2502 = vpop.f32.mrb[0].mxu0
      %v2503 = vadd.f32 %v2183, %v2502
      %v2504 = vpop.f32.mrb[0].mxu0
      %2505 = vmatprep.mubr.f32.mxu0 0.0
      %2506 = vmatmul.mubr.f32.gmra.mrb[0].mxu0 %v2342
      %v2507 = vpop.f32.mrb[0].mxu0
      %v2508 = vadd.f32 %v2188, %v2507
      %v2509 = vpop.f32.mrb[0].mxu0
      %2510 = vmatprep.mubr.f32.mxu0 0.0
      %2511 = vmatmul.mubr.f32.gmra.mrb[0].mxu0 %v2344
      %v2512 = vpop.f32.mrb[0].mxu0
      %v2513 = vadd.f32 %v2193, %v2512
      %v2514 = vpop.f32.mrb[0].mxu0
      %2515 = vmatprep.mubr.f32.mxu0 0.0
      %2516 = vmatmul.mubr.f32.gmra.mrb[0].mxu0 %v2346
      %v2517 = vpop.f32.mrb[0].mxu0
      %v2518 = vadd.f32 %v2198, %v2517
      %v2519 = vpop.f32.mrb[0].mxu0
      %2520 = vmatprep.mubr.f32.mxu0 0.0
      %2521 = vmatmul.mubr.f32.gmra.mrb[0].mxu0 %v2348
      %v2522 = vpop.f32.mrb[0].mxu0
      %v2523 = vadd.f32 %v2203, %v2522
      %v2524 = vpop.f32.mrb[0].mxu0
      %2525 = vmatprep.mubr.f32.mxu0 0.0
      %2526 = vmatmul.mubr.f32.gmra.mrb[0].mxu0 %v2350
      %v2527 = vpop.f32.mrb[0].mxu0
      %v2528 = vadd.f32 %v2208, %v2527
      %v2529 = vpop.f32.mrb[0].mxu0
      %2530 = vmatprep.mubr.f32.mxu0 0.0
      %2531 = vmatmul.mubr.f32.gmra.mrb[0].mxu0 %v2352
      %v2532 = vpop.f32.mrb[0].mxu0
      %v2533 = vadd.f32 %v2213, %v2532
      %v2534 = vpop.f32.mrb[0].mxu0
      %2535 = vmatprep.mubr.f32.mxu0 0.0
      %2536 = vmatmul.mubr.f32.gmra.mrb[0].mxu0 %v2354
      %v2537 = vpop.f32.mrb[0].mxu0
      %v2538 = vadd.f32 %v2218, %v2537
      %v2539 = vpop.f32.mrb[0].mxu0
      %2540 = vmatprep.mubr.f32.mxu0 0.0
      %2541 = vmatmul.mubr.f32.gmra.mrb[0].mxu0 %v2356
      %v2542 = vpop.f32.mrb[0].mxu0
      %v2543 = vadd.f32 %v2223, %v2542
      %v2544 = vpop.f32.mrb[0].mxu0
      %2545 = vmatprep.mubr.f32.mxu0 0.0
      %2546 = vmatmul.mubr.f32.gmra.mrb[0].mxu0 %v2358
      %v2547 = vpop.f32.mrb[0].mxu0
      %v2548 = vadd.f32 %v2228, %v2547
      %v2549 = vpop.f32.mrb[0].mxu0
      %2550 = vmatprep.mubr.f32.mxu0 0.0
      %2551 = vmatmul.mubr.f32.gmra.mrb[0].mxu0 %v2360
      %v2552 = vpop.f32.mrb[0].mxu0
      %v2553 = vadd.f32 %v2233, %v2552
      %v2554 = vpop.f32.mrb[0].mxu0
      %2555 = vmatprep.mubr.f32.mxu0 0.0
      %2556 = vmatmul.mubr.f32.gmra.mrb[0].mxu0 %v2362
      %v2557 = vpop.f32.mrb[0].mxu0
      %v2558 = vadd.f32 %v2238, %v2557
      %v2559 = vpop.f32.mrb[0].mxu0
      %2560 = vmatprep.mubr.f32.mxu0 0.0
      %2561 = vmatmul.mubr.f32.gmra.mrb[0].mxu0 %v2364
      %v2562 = vpop.f32.mrb[0].mxu0
      %v2563 = vadd.f32 %v2243, %v2562
      %v2564 = vpop.f32.mrb[0].mxu0
      %2565 = vmatprep.mubr.f32.mxu0 0.0
      %2566 = vmatmul.mubr.f32.gmra.mrb[0].mxu0 %v2366
      %v2567 = vpop.f32.mrb[0].mxu0
      %v2568 = vadd.f32 %v2248, %v2567
      %v2569 = vpop.f32.mrb[0].mxu0
      %2570 = vmatprep.mubr.f32.mxu0 0.0
      %2571 = vmatmul.mubr.f32.gmra.mrb[0].mxu0 %v2368
      %v2572 = vpop.f32.mrb[0].mxu0
      %v2573 = vadd.f32 %v2253, %v2572
      %v2574 = vpop.f32.mrb[0].mxu0
      %2575 = vmatprep.mubr.f32.mxu0 0.0
      %2576 = vmatmul.mubr.f32.gmra.mrb[0].mxu0 %v2370
      %v2577 = vpop.f32.mrb[0].mxu0
      %v2578 = vadd.f32 %v2258, %v2577
      %v2579 = vpop.f32.mrb[0].mxu0
      %2580 = vmatprep.mubr.f32.mxu0 0.0
      %2581 = vmatmul.mubr.f32.gmra.mrb[0].mxu0 %v2372
      %v2582 = vpop.f32.mrb[0].mxu0
      %v2583 = vadd.f32 %v2263, %v2582
      %v2584 = vpop.f32.mrb[0].mxu0
      %2585 = vmatprep.mubr.f32.mxu0 0.0
      %2586 = vmatmul.mubr.f32.gmra.mrb[0].mxu0 %v2374
      %v2587 = vpop.f32.mrb[0].mxu0
      %v2588 = vadd.f32 %v2268, %v2587
      %v2589 = vpop.f32.mrb[0].mxu0
      %2590 = vmatprep.mubr.f32.mxu0 0.0
      %2591 = vmatmul.mubr.f32.gmra.mrb[0].mxu0 %v2376
      %v2592 = vpop.f32.mrb[0].mxu0
      %v2593 = vadd.f32 %v2273, %v2592
      %v2594 = vpop.f32.mrb[0].mxu0
      %2595 = vmatprep.mubr.f32.mxu0 0.0
      %2596 = vmatmul.mubr.f32.gmra.mrb[0].mxu0 %v2378
      %v2597 = vpop.f32.mrb[0].mxu0
      %v2598 = vadd.f32 %v2278, %v2597
      %v2599 = vpop.f32.mrb[0].mxu0
      %2600 = vmatprep.mubr.f32.mxu0 0.0
      %2601 = vmatmul.mubr.f32.gmra.mrb[0].mxu0 %v2380
      %v2602 = vpop.f32.mrb[0].mxu0
      %v2603 = vadd.f32 %v2283, %v2602
      %v2604 = vpop.f32.mrb[0].mxu0
      %2605 = vmatprep.mubr.f32.mxu0 0.0
      %2606 = vmatmul.mubr.f32.gmra.mrb[0].mxu0 %v2382
      %v2607 = vpop.f32.mrb[0].mxu0
      %v2608 = vadd.f32 %v2288, %v2607
      %v2609 = vpop.f32.mrb[0].mxu0
      %2610 = vmatprep.mubr.f32.mxu0 0.0
      %2611 = vmatmul.mubr.f32.gmra.mrb[0].mxu0 %v2384
      %v2612 = vpop.f32.mrb[0].mxu0
      %v2613 = vadd.f32 %v2293, %v2612
      %v2614 = vpop.f32.mrb[0].mxu0
      %2615 = vmatprep.mubr.f32.mxu0 0.0
      %2616 = vmatmul.mubr.f32.gmra.mrb[0].mxu0 %v2386
      %v2617 = vpop.f32.mrb[0].mxu0
      %v2618 = vadd.f32 %v2298, %v2617
      %v2619 = vpop.f32.mrb[0].mxu0
      %2620 = vmatprep.mubr.f32.mxu0 0.0
      %2621 = vmatmul.mubr.f32.gmra.mrb[0].mxu0 %v2388
      %v2622 = vpop.f32.mrb[0].mxu0
      %v2623 = vadd.f32 %v2303, %v2622
      %v2624 = vpop.f32.mrb[0].mxu0
      %2625 = vmatprep.mubr.f32.mxu0 0.0
      %2626 = vmatmul.mubr.f32.gmra.mrb[0].mxu0 %v2390
      %v2627 = vpop.f32.mrb[0].mxu0
      %v2628 = vadd.f32 %v2308, %v2627
      %v2629 = vpop.f32.mrb[0].mxu0
      %2630 = vmatprep.mubr.f32.mxu0 0.0
      %2631 = vmatmul.mubr.f32.gmra.mrb[0].mxu0 %v2392
      %v2632 = vpop.f32.mrb[0].mxu0
      %v2633 = vadd.f32 %v2313, %v2632
      %v2634 = vpop.f32.mrb[0].mxu0
      %2635 = vmatprep.mubr.f32.mxu0 0.0
      %2636 = vmatmul.mubr.f32.gmra.mrb[0].mxu0 %v2394
      %v2637 = vpop.f32.mrb[0].mxu0
      %v2638 = vadd.f32 %v2318, %v2637
      %v2639 = vpop.f32.mrb[0].mxu0
      %2640 = vmatprep.mubr.f32.mxu0 0.0
      %2641 = vmatmul.mubr.f32.gmra.mrb[0].mxu0 %v2396
      %v2642 = vpop.f32.mrb[0].mxu0
      %v2643 = vadd.f32 %v2323, %v2642
      %v2644 = vpop.f32.mrb[0].mxu0
      %2645 = vdwg.mxu0
      %s2646 = scalar_lea.vmem %s1, 8
      %v2647 = vld [vmem:[%s2646] sm:$0xf]
      %vm2648 = vcmask 1045504
      %v2649 = vrot.slane %v1316, 2
      %v2650 = vrot.slane %v1333, 2
      %v2651 = vsel %vm2648, %v2649, %v2650
      %v2652 = vrot.slane %v1350, 2
      %v2653 = vsel %vm2648, %v2650, %v2652
      %v2654 = vrot.slane %v1367, 2
      %v2655 = vsel %vm2648, %v2652, %v2654
      %v2656 = vrot.slane %v1384, 2
      %v2657 = vsel %vm2648, %v2654, %v2656
      %v2658 = vrot.slane %v1401, 2
      %v2659 = vsel %vm2648, %v2656, %v2658
      %v2660 = vrot.slane %v1418, 2
      %v2661 = vsel %vm2648, %v2658, %v2660
      %v2662 = vrot.slane %v1435, 2
      %v2663 = vsel %vm2648, %v2660, %v2662
      %v2664 = vrot.slane %v1452, 2
      %v2665 = vsel %vm2648, %v2662, %v2664
      %v2666 = vrot.slane %v1469, 2
      %v2667 = vsel %vm2648, %v2664, %v2666
      %v2668 = vrot.slane %v1486, 2
      %v2669 = vsel %vm2648, %v2666, %v2668
      %v2670 = vrot.slane %v1503, 2
      %v2671 = vsel %vm2648, %v2668, %v2670
      %v2672 = vrot.slane %v1520, 2
      %v2673 = vsel %vm2648, %v2670, %v2672
      %v2674 = vrot.slane %v1537, 2
      %v2675 = vsel %vm2648, %v2672, %v2674
      %v2676 = vrot.slane %v1554, 2
      %v2677 = vsel %vm2648, %v2674, %v2676
      %v2678 = vrot.slane %v1571, 2
      %v2679 = vsel %vm2648, %v2676, %v2678
      %v2680 = vrot.slane %v1588, 2
      %v2681 = vsel %vm2648, %v2678, %v2680
      %v2682 = vrot.slane %v1605, 2
      %v2683 = vsel %vm2648, %v2680, %v2682
      %v2684 = vrot.slane %v1622, 2
      %v2685 = vsel %vm2648, %v2682, %v2684
      %v2686 = vrot.slane %v1639, 2
      %v2687 = vsel %vm2648, %v2684, %v2686
      %v2688 = vrot.slane %v1656, 2
      %v2689 = vsel %vm2648, %v2686, %v2688
      %v2690 = vrot.slane %v1673, 2
      %v2691 = vsel %vm2648, %v2688, %v2690
      %v2692 = vrot.slane %v1690, 2
      %v2693 = vsel %vm2648, %v2690, %v2692
      %v2694 = vrot.slane %v1707, 2
      %v2695 = vsel %vm2648, %v2692, %v2694
      %v2696 = vrot.slane %v1724, 2
      %v2697 = vsel %vm2648, %v2694, %v2696
      %v2698 = vrot.slane %v1741, 2
      %v2699 = vsel %vm2648, %v2696, %v2698
      %v2700 = vrot.slane %v1758, 2
      %v2701 = vsel %vm2648, %v2698, %v2700
      %v2702 = vrot.slane %v1775, 2
      %v2703 = vsel %vm2648, %v2700, %v2702
      %v2704 = vrot.slane %v1792, 2
      %v2705 = vsel %vm2648, %v2702, %v2704
      %v2706 = vrot.slane %v1809, 2
      %v2707 = vsel %vm2648, %v2704, %v2706
      %v2708 = vrot.slane %v1826, 2
      %v2709 = vsel %vm2648, %v2706, %v2708
      %v2710 = vrot.slane %v1843, 2
      %v2711 = vsel %vm2648, %v2708, %v2710
      %v2712 = vrot.slane %v1860, 2
      %v2713 = vsel %vm2648, %v2710, %v2712
      %v2714 = vrot.slane %v1877, 2
      %v2715 = vsel %vm2648, %v2712, %v2714
      %v2716 = vrot.slane %v1894, 2
      %v2717 = vsel %vm2648, %v2714, %v2716
      %v2718 = vrot.slane %v1911, 2
      %v2719 = vsel %vm2648, %v2716, %v2718
      %v2720 = vrot.slane %v1928, 2
      %v2721 = vsel %vm2648, %v2718, %v2720
      %v2722 = vsel %vm378, %v2651, 0
      %v2724 = vsel %vm378, %v2653, 0
      %v2726 = vsel %vm378, %v2655, 0
      %v2728 = vsel %vm378, %v2657, 0
      %v2730 = vsel %vm378, %v2659, 0
      %v2732 = vsel %vm378, %v2661, 0
      %v2734 = vsel %vm378, %v2663, 0
      %v2736 = vsel %vm378, %v2665, 0
      %v2738 = vsel %vm378, %v2667, 0
      %v2740 = vsel %vm378, %v2669, 0
      %v2742 = vsel %vm378, %v2671, 0
      %v2744 = vsel %vm378, %v2673, 0
      %v2746 = vsel %vm378, %v2675, 0
      %v2748 = vsel %vm378, %v2677, 0
      %v2750 = vsel %vm378, %v2679, 0
      %v2752 = vsel %vm378, %v2681, 0
      %v2754 = vsel %vm378, %v2683, 0
      %v2756 = vsel %vm378, %v2685, 0
      %v2758 = vsel %vm378, %v2687, 0
      %v2760 = vsel %vm378, %v2689, 0
      %v2762 = vsel %vm378, %v2691, 0
      %v2764 = vsel %vm378, %v2693, 0
      %v2766 = vsel %vm378, %v2695, 0
      %v2768 = vsel %vm378, %v2697, 0
      %v2770 = vsel %vm378, %v2699, 0
      %v2772 = vsel %vm378, %v2701, 0
      %v2774 = vsel %vm378, %v2703, 0
      %v2776 = vsel %vm378, %v2705, 0
      %v2778 = vsel %vm378, %v2707, 0
      %v2780 = vsel %vm378, %v2709, 0
      %v2782 = vsel %vm378, %v2711, 0
      %v2784 = vsel %vm378, %v2713, 0
      %v2786 = vsel %vm378, %v2715, 0
      %v2788 = vsel %vm378, %v2717, 0
      %v2790 = vsel %vm378, %v2719, 0
      %v2792 = vsel %vm378, %v2721, 0
      %v2795 = vsel %vm2077, %v2647, 0
      %2797 = vmatprep.subr.mxu0 0.0
      %2798 = vmatpush1.msra.mxu0 %v2795
      %2799 = vmatprep.subr.mxu0 0.0
      %2800 = vmatpush1.msra.mxu0 0.0
      %2801 = vmatprep.subr.mxu0 0.0
      %2802 = vmatpush1.msra.mxu0 0.0
      %2803 = vmatprep.subr.mxu0 0.0
      %2804 = vmatpush1.msra.mxu0 0.0
      %2805 = vmatprep.subr.mxu0 0.0
      %2806 = vmatpush1.msra.mxu0 0.0
      %2807 = vmatprep.subr.mxu0 0.0
      %2808 = vmatpush1.msra.mxu0 0.0
      %2809 = vmatprep.subr.mxu0 0.0
      %2810 = vmatpush1.msra.mxu0 0.0
      %2811 = vmatprep.subr.mxu0 0.0
      %2812 = vmatpush1.msra.mxu0 0.0
      %2813 = vmatprep.subr.mxu0 0.0
      %2814 = vmatpush1.msra.mxu0 0.0
      %2815 = vmatprep.subr.mxu0 0.0
      %2816 = vmatpush1.msra.mxu0 0.0
      %2817 = vmatprep.subr.mxu0 0.0
      %2818 = vmatpush1.msra.mxu0 0.0
      %2819 = vmatprep.subr.mxu0 0.0
      %2820 = vmatpush1.msra.mxu0 0.0
      %2821 = vmatprep.subr.mxu0 0.0
      %2822 = vmatpush1.msra.mxu0 0.0
      %2823 = vmatprep.subr.mxu0 0.0
      %2824 = vmatpush1.msra.mxu0 0.0
      %2825 = vmatprep.subr.mxu0 0.0
      %2826 = vmatpush1.msra.mxu0 0.0
      %2827 = vmatprep.subr.mxu0 0.0
      %2828 = vmatpush1.msra.mxu0 0.0
      %2829 = vmatprep.subr.mxu0 0.0
      %2830 = vmatpush1.msra.mxu0 0.0
      %2831 = vmatprep.subr.mxu0 0.0
      %2832 = vmatpush1.msra.mxu0 0.0
      %2833 = vmatprep.subr.mxu0 0.0
      %2834 = vmatpush1.msra.mxu0 0.0
      %2835 = vmatprep.subr.mxu0 0.0
      %2836 = vmatpush1.msra.mxu0 0.0
      %2837 = vmatprep.subr.mxu0 0.0
      %2838 = vmatpush1.msra.mxu0 0.0
      %2839 = vmatprep.subr.mxu0 0.0
      %2840 = vmatpush1.msra.mxu0 0.0
      %2841 = vmatprep.subr.mxu0 0.0
      %2842 = vmatpush1.msra.mxu0 0.0
      %2843 = vmatprep.subr.mxu0 0.0
      %2844 = vmatpush1.msra.mxu0 0.0
      %2845 = vmatprep.subr.mxu0 0.0
      %2846 = vmatpush1.msra.mxu0 0.0
      %2847 = vmatprep.subr.mxu0 0.0
      %2848 = vmatpush1.msra.mxu0 0.0
      %2849 = vmatprep.subr.mxu0 0.0
      %2850 = vmatpush1.msra.mxu0 0.0
      %2851 = vmatprep.subr.mxu0 0.0
      %2852 = vmatpush1.msra.mxu0 0.0
      %2853 = vmatprep.subr.mxu0 0.0
      %2854 = vmatpush1.msra.mxu0 0.0
      %2855 = vmatprep.subr.mxu0 0.0
      %2856 = vmatpush1.msra.mxu0 0.0
      %2857 = vmatprep.subr.mxu0 0.0
      %2858 = vmatpush1.msra.mxu0 0.0
      %2859 = vmatprep.subr.mxu0 0.0
      %2860 = vmatpush1.msra.mxu0 0.0
      %2861 = vmatprep.mubr.f32.mxu0 0.0
      %2862 = vmatmul.mubr.f32.gmra.mrb[0].mxu0 %v2722
      %v2863 = vpop.f32.mrb[0].mxu0
      %v2864 = vadd.f32 0.0, %v2863
      %v2865 = vpop.f32.mrb[0].mxu0
      %2866 = vmatprep.mubr.f32.mxu0 0.0
      %2867 = vmatmul.mubr.f32.gmra.mrb[0].mxu0 %v2724
      %v2868 = vpop.f32.mrb[0].mxu0
      %v2869 = vadd.f32 0.0, %v2868
      %v2870 = vpop.f32.mrb[0].mxu0
      %2871 = vmatprep.mubr.f32.mxu0 0.0
      %2872 = vmatmul.mubr.f32.gmra.mrb[0].mxu0 %v2726
      %v2873 = vpop.f32.mrb[0].mxu0
      %v2874 = vadd.f32 0.0, %v2873
      %v2875 = vpop.f32.mrb[0].mxu0
      %2876 = vmatprep.mubr.f32.mxu0 0.0
      %2877 = vmatmul.mubr.f32.gmra.mrb[0].mxu0 %v2728
      %v2878 = vpop.f32.mrb[0].mxu0
      %v2879 = vadd.f32 0.0, %v2878
      %v2880 = vpop.f32.mrb[0].mxu0
      %2881 = vmatprep.mubr.f32.mxu0 0.0
      %2882 = vmatmul.mubr.f32.gmra.mrb[0].mxu0 %v2730
      %v2883 = vpop.f32.mrb[0].mxu0
      %v2884 = vadd.f32 0.0, %v2883
      %v2885 = vpop.f32.mrb[0].mxu0
      %2886 = vmatprep.mubr.f32.mxu0 0.0
      %2887 = vmatmul.mubr.f32.gmra.mrb[0].mxu0 %v2732
      %v2888 = vpop.f32.mrb[0].mxu0
      %v2889 = vadd.f32 0.0, %v2888
      %v2890 = vpop.f32.mrb[0].mxu0
      %2891 = vmatprep.mubr.f32.mxu0 0.0
      %2892 = vmatmul.mubr.f32.gmra.mrb[0].mxu0 %v2734
      %v2893 = vpop.f32.mrb[0].mxu0
      %v2894 = vadd.f32 0.0, %v2893
      %v2895 = vpop.f32.mrb[0].mxu0
      %2896 = vmatprep.mubr.f32.mxu0 0.0
      %2897 = vmatmul.mubr.f32.gmra.mrb[0].mxu0 %v2736
      %v2898 = vpop.f32.mrb[0].mxu0
      %v2899 = vadd.f32 0.0, %v2898
      %v2900 = vpop.f32.mrb[0].mxu0
      %2901 = vmatprep.mubr.f32.mxu0 0.0
      %2902 = vmatmul.mubr.f32.gmra.mrb[0].mxu0 %v2738
      %v2903 = vpop.f32.mrb[0].mxu0
      %v2904 = vadd.f32 0.0, %v2903
      %v2905 = vpop.f32.mrb[0].mxu0
      %2906 = vmatprep.mubr.f32.mxu0 0.0
      %2907 = vmatmul.mubr.f32.gmra.mrb[0].mxu0 %v2740
      %v2908 = vpop.f32.mrb[0].mxu0
      %v2909 = vadd.f32 0.0, %v2908
      %v2910 = vpop.f32.mrb[0].mxu0
      %2911 = vmatprep.mubr.f32.mxu0 0.0
      %2912 = vmatmul.mubr.f32.gmra.mrb[0].mxu0 %v2742
      %v2913 = vpop.f32.mrb[0].mxu0
      %v2914 = vadd.f32 0.0, %v2913
      %v2915 = vpop.f32.mrb[0].mxu0
      %2916 = vmatprep.mubr.f32.mxu0 0.0
      %2917 = vmatmul.mubr.f32.gmra.mrb[0].mxu0 %v2744
      %v2918 = vpop.f32.mrb[0].mxu0
      %v2919 = vadd.f32 0.0, %v2918
      %v2920 = vpop.f32.mrb[0].mxu0
      %2921 = vmatprep.mubr.f32.mxu0 0.0
      %2922 = vmatmul.mubr.f32.gmra.mrb[0].mxu0 %v2746
      %v2923 = vpop.f32.mrb[0].mxu0
      %v2924 = vadd.f32 0.0, %v2923
      %v2925 = vpop.f32.mrb[0].mxu0
      %2926 = vmatprep.mubr.f32.mxu0 0.0
      %2927 = vmatmul.mubr.f32.gmra.mrb[0].mxu0 %v2748
      %v2928 = vpop.f32.mrb[0].mxu0
      %v2929 = vadd.f32 0.0, %v2928
      %v2930 = vpop.f32.mrb[0].mxu0
      %2931 = vmatprep.mubr.f32.mxu0 0.0
      %2932 = vmatmul.mubr.f32.gmra.mrb[0].mxu0 %v2750
      %v2933 = vpop.f32.mrb[0].mxu0
      %v2934 = vadd.f32 0.0, %v2933
      %v2935 = vpop.f32.mrb[0].mxu0
      %2936 = vmatprep.mubr.f32.mxu0 0.0
      %2937 = vmatmul.mubr.f32.gmra.mrb[0].mxu0 %v2752
      %v2938 = vpop.f32.mrb[0].mxu0
      %v2939 = vadd.f32 0.0, %v2938
      %v2940 = vpop.f32.mrb[0].mxu0
      %2941 = vmatprep.mubr.f32.mxu0 0.0
      %2942 = vmatmul.mubr.f32.gmra.mrb[0].mxu0 %v2754
      %v2943 = vpop.f32.mrb[0].mxu0
      %v2944 = vadd.f32 0.0, %v2943
      %v2945 = vpop.f32.mrb[0].mxu0
      %2946 = vmatprep.mubr.f32.mxu0 0.0
      %2947 = vmatmul.mubr.f32.gmra.mrb[0].mxu0 %v2756
      %v2948 = vpop.f32.mrb[0].mxu0
      %v2949 = vadd.f32 0.0, %v2948
      %v2950 = vpop.f32.mrb[0].mxu0
      %2951 = vmatprep.mubr.f32.mxu0 0.0
      %2952 = vmatmul.mubr.f32.gmra.mrb[0].mxu0 %v2758
      %v2953 = vpop.f32.mrb[0].mxu0
      %v2954 = vadd.f32 0.0, %v2953
      %v2955 = vpop.f32.mrb[0].mxu0
      %2956 = vmatprep.mubr.f32.mxu0 0.0
      %2957 = vmatmul.mubr.f32.gmra.mrb[0].mxu0 %v2760
      %v2958 = vpop.f32.mrb[0].mxu0
      %v2959 = vadd.f32 0.0, %v2958
      %v2960 = vpop.f32.mrb[0].mxu0
      %2961 = vmatprep.mubr.f32.mxu0 0.0
      %2962 = vmatmul.mubr.f32.gmra.mrb[0].mxu0 %v2762
      %v2963 = vpop.f32.mrb[0].mxu0
      %v2964 = vadd.f32 0.0, %v2963
      %v2965 = vpop.f32.mrb[0].mxu0
      %2966 = vmatprep.mubr.f32.mxu0 0.0
      %2967 = vmatmul.mubr.f32.gmra.mrb[0].mxu0 %v2764
      %v2968 = vpop.f32.mrb[0].mxu0
      %v2969 = vadd.f32 0.0, %v2968
      %v2970 = vpop.f32.mrb[0].mxu0
      %2971 = vmatprep.mubr.f32.mxu0 0.0
      %2972 = vmatmul.mubr.f32.gmra.mrb[0].mxu0 %v2766
      %v2973 = vpop.f32.mrb[0].mxu0
      %v2974 = vadd.f32 0.0, %v2973
      %v2975 = vpop.f32.mrb[0].mxu0
      %2976 = vmatprep.mubr.f32.mxu0 0.0
      %2977 = vmatmul.mubr.f32.gmra.mrb[0].mxu0 %v2768
      %v2978 = vpop.f32.mrb[0].mxu0
      %v2979 = vadd.f32 0.0, %v2978
      %v2980 = vpop.f32.mrb[0].mxu0
      %2981 = vmatprep.mubr.f32.mxu0 0.0
      %2982 = vmatmul.mubr.f32.gmra.mrb[0].mxu0 %v2770
      %v2983 = vpop.f32.mrb[0].mxu0
      %v2984 = vadd.f32 0.0, %v2983
      %v2985 = vpop.f32.mrb[0].mxu0
      %2986 = vmatprep.mubr.f32.mxu0 0.0
      %2987 = vmatmul.mubr.f32.gmra.mrb[0].mxu0 %v2772
      %v2988 = vpop.f32.mrb[0].mxu0
      %v2989 = vadd.f32 0.0, %v2988
      %v2990 = vpop.f32.mrb[0].mxu0
      %2991 = vmatprep.mubr.f32.mxu0 0.0
      %2992 = vmatmul.mubr.f32.gmra.mrb[0].mxu0 %v2774
      %v2993 = vpop.f32.mrb[0].mxu0
      %v2994 = vadd.f32 0.0, %v2993
      %v2995 = vpop.f32.mrb[0].mxu0
      %2996 = vmatprep.mubr.f32.mxu0 0.0
      %2997 = vmatmul.mubr.f32.gmra.mrb[0].mxu0 %v2776
      %v2998 = vpop.f32.mrb[0].mxu0
      %v2999 = vadd.f32 0.0, %v2998
      %v3000 = vpop.f32.mrb[0].mxu0
      %3001 = vmatprep.mubr.f32.mxu0 0.0
      %3002 = vmatmul.mubr.f32.gmra.mrb[0].mxu0 %v2778
      %v3003 = vpop.f32.mrb[0].mxu0
      %v3004 = vadd.f32 0.0, %v3003
      %v3005 = vpop.f32.mrb[0].mxu0
      %3006 = vmatprep.mubr.f32.mxu0 0.0
      %3007 = vmatmul.mubr.f32.gmra.mrb[0].mxu0 %v2780
      %v3008 = vpop.f32.mrb[0].mxu0
      %v3009 = vadd.f32 0.0, %v3008
      %v3010 = vpop.f32.mrb[0].mxu0
      %3011 = vmatprep.mubr.f32.mxu0 0.0
      %3012 = vmatmul.mubr.f32.gmra.mrb[0].mxu0 %v2782
      %v3013 = vpop.f32.mrb[0].mxu0
      %v3014 = vadd.f32 0.0, %v3013
      %v3015 = vpop.f32.mrb[0].mxu0
      %3016 = vmatprep.mubr.f32.mxu0 0.0
      %3017 = vmatmul.mubr.f32.gmra.mrb[0].mxu0 %v2784
      %v3018 = vpop.f32.mrb[0].mxu0
      %v3019 = vadd.f32 0.0, %v3018
      %v3020 = vpop.f32.mrb[0].mxu0
      %3021 = vmatprep.mubr.f32.mxu0 0.0
      %3022 = vmatmul.mubr.f32.gmra.mrb[0].mxu0 %v2786
      %v3023 = vpop.f32.mrb[0].mxu0
      %v3024 = vadd.f32 0.0, %v3023
      %v3025 = vpop.f32.mrb[0].mxu0
      %3026 = vmatprep.mubr.f32.mxu0 0.0
      %3027 = vmatmul.mubr.f32.gmra.mrb[0].mxu0 %v2788
      %v3028 = vpop.f32.mrb[0].mxu0
      %v3029 = vadd.f32 0.0, %v3028
      %v3030 = vpop.f32.mrb[0].mxu0
      %3031 = vmatprep.mubr.f32.mxu0 0.0
      %3032 = vmatmul.mubr.f32.gmra.mrb[0].mxu0 %v2790
      %v3033 = vpop.f32.mrb[0].mxu0
      %v3034 = vadd.f32 0.0, %v3033
      %v3035 = vpop.f32.mrb[0].mxu0
      %3036 = vmatprep.mubr.f32.mxu0 0.0
      %3037 = vmatmul.mubr.f32.gmra.mrb[0].mxu0 %v2792
      %v3038 = vpop.f32.mrb[0].mxu0
      %v3039 = vadd.f32 0.0, %v3038
      %v3040 = vpop.f32.mrb[0].mxu0
      %3041 = vdwg.mxu0
      %v3042 = vadd.f32 %v2468, %v2864
      %v3043 = vadd.f32 %v2473, %v2869
      %v3044 = vadd.f32 %v2478, %v2874
      %v3045 = vadd.f32 %v2483, %v2879
      %v3046 = vadd.f32 %v2488, %v2884
      %v3047 = vadd.f32 %v2493, %v2889
      %v3048 = vadd.f32 %v2498, %v2894
      %v3049 = vadd.f32 %v2503, %v2899
      %v3050 = vadd.f32 %v2508, %v2904
      %v3051 = vadd.f32 %v2513, %v2909
      %v3052 = vadd.f32 %v2518, %v2914
      %v3053 = vadd.f32 %v2523, %v2919
      %v3054 = vadd.f32 %v2528, %v2924
      %v3055 = vadd.f32 %v2533, %v2929
      %v3056 = vadd.f32 %v2538, %v2934
      %v3057 = vadd.f32 %v2543, %v2939
      %v3058 = vadd.f32 %v2548, %v2944
      %v3059 = vadd.f32 %v2553, %v2949
      %v3060 = vadd.f32 %v2558, %v2954
      %v3061 = vadd.f32 %v2563, %v2959
      %v3062 = vadd.f32 %v2568, %v2964
      %v3063 = vadd.f32 %v2573, %v2969
      %v3064 = vadd.f32 %v2578, %v2974
      %v3065 = vadd.f32 %v2583, %v2979
      %v3066 = vadd.f32 %v2588, %v2984
      %v3067 = vadd.f32 %v2593, %v2989
      %v3068 = vadd.f32 %v2598, %v2994
      %v3069 = vadd.f32 %v2603, %v2999
      %v3070 = vadd.f32 %v2608, %v3004
      %v3071 = vadd.f32 %v2613, %v3009
      %v3072 = vadd.f32 %v2618, %v3014
      %v3073 = vadd.f32 %v2623, %v3019
      %v3074 = vadd.f32 %v2628, %v3024
      %v3075 = vadd.f32 %v2633, %v3029
      %v3076 = vadd.f32 %v2638, %v3034
      %v3077 = vadd.f32 %v2643, %v3039
      %v3078 = vcombine.low %v1241, %v1249
      %v3079 = vcombine.low %v1248, %v1250
      %v3081 = vunpack.c.l.s4 1983009808
      %v3082 = vunpack.c.0.s8 %v3081
      %v3083 = vlaneseq
      %v3084 = vshrl.u32 %v3083, 7
      %v3085 = vsub.s32 %v3082, %v3084
      %v3086 = vrot.slane %v3078, %v3085
      %v3088 = vunpack.c.l.s4 1983009808
      %v3089 = vunpack.c.0.s8 %v3088
      %v3090 = vlaneseq
      %v3091 = vshrl.u32 %v3090, 7
      %v3092 = vsub.s32 %v3089, %v3091
      %v3093 = vrot.slane %v3079, %v3092
      %v3094 = vcombine.low %v3086, %v3093
      %v3095 = vcombine.low %v1257, %v1265
      %v3096 = vcombine.low %v1273, %v1272
      %v3098 = vunpack.c.l.s4 1983009808
      %v3099 = vunpack.c.0.s8 %v3098
      %v3100 = vlaneseq
      %v3101 = vshrl.u32 %v3100, 7
      %v3102 = vsub.s32 %v3099, %v3101
      %v3103 = vrot.slane %v3095, %v3102
      %v3105 = vunpack.c.l.s4 1983009808
      %v3106 = vunpack.c.0.s8 %v3105
      %v3107 = vlaneseq
      %v3108 = vshrl.u32 %v3107, 7
      %v3109 = vsub.s32 %v3106, %v3108
      %v3110 = vrot.slane %v3096, %v3109
      %v3111 = vcombine.low %v3103, %v3110
      %s3112 = scalar_lea.vmem %s1, 12
      %v3113 = vld [vmem:[%s3112] sm:$0xf]
      %v3114 = vrot.slane %v3094, 2
      %v3115 = vsel %vm2648, %v2720, %v3114
      %v3116 = vrot.slane %v3111, 2
      %v3117 = vsel %vm2648, %v3114, %v3116
      %v3118 = vsel %vm378, %v3115, 0
      %v3120 = vsel %vm378, %v3117, 0
      %v3123 = vsel %vm2077, %v3113, 0
      %3125 = vmatprep.subr.mxu0 0.0
      %3126 = vmatpush1.msra.mxu0 %v3123
      %3127 = vmatprep.subr.mxu0 0.0
      %3128 = vmatpush1.msra.mxu0 0.0
      %3129 = vmatprep.subr.mxu0 0.0
      %3130 = vmatpush1.msra.mxu0 0.0
      %3131 = vmatprep.subr.mxu0 0.0
      %3132 = vmatpush1.msra.mxu0 0.0
      %3133 = vmatprep.subr.mxu0 0.0
      %3134 = vmatpush1.msra.mxu0 0.0
      %3135 = vmatprep.subr.mxu0 0.0
      %3136 = vmatpush1.msra.mxu0 0.0
      %3137 = vmatprep.subr.mxu0 0.0
      %3138 = vmatpush1.msra.mxu0 0.0
      %3139 = vmatprep.subr.mxu0 0.0
      %3140 = vmatpush1.msra.mxu0 0.0
      %3141 = vmatprep.subr.mxu0 0.0
      %3142 = vmatpush1.msra.mxu0 0.0
      %3143 = vmatprep.subr.mxu0 0.0
      %3144 = vmatpush1.msra.mxu0 0.0
      %3145 = vmatprep.subr.mxu0 0.0
      %3146 = vmatpush1.msra.mxu0 0.0
      %3147 = vmatprep.subr.mxu0 0.0
      %3148 = vmatpush1.msra.mxu0 0.0
      %3149 = vmatprep.subr.mxu0 0.0
      %3150 = vmatpush1.msra.mxu0 0.0
      %3151 = vmatprep.subr.mxu0 0.0
      %3152 = vmatpush1.msra.mxu0 0.0
      %3153 = vmatprep.subr.mxu0 0.0
      %3154 = vmatpush1.msra.mxu0 0.0
      %3155 = vmatprep.subr.mxu0 0.0
      %3156 = vmatpush1.msra.mxu0 0.0
      %3157 = vmatprep.subr.mxu0 0.0
      %3158 = vmatpush1.msra.mxu0 0.0
      %3159 = vmatprep.subr.mxu0 0.0
      %3160 = vmatpush1.msra.mxu0 0.0
      %3161 = vmatprep.subr.mxu0 0.0
      %3162 = vmatpush1.msra.mxu0 0.0
      %3163 = vmatprep.subr.mxu0 0.0
      %3164 = vmatpush1.msra.mxu0 0.0
      %3165 = vmatprep.subr.mxu0 0.0
      %3166 = vmatpush1.msra.mxu0 0.0
      %3167 = vmatprep.subr.mxu0 0.0
      %3168 = vmatpush1.msra.mxu0 0.0
      %3169 = vmatprep.subr.mxu0 0.0
      %3170 = vmatpush1.msra.mxu0 0.0
      %3171 = vmatprep.subr.mxu0 0.0
      %3172 = vmatpush1.msra.mxu0 0.0
      %3173 = vmatprep.subr.mxu0 0.0
      %3174 = vmatpush1.msra.mxu0 0.0
      %3175 = vmatprep.subr.mxu0 0.0
      %3176 = vmatpush1.msra.mxu0 0.0
      %3177 = vmatprep.subr.mxu0 0.0
      %3178 = vmatpush1.msra.mxu0 0.0
      %3179 = vmatprep.subr.mxu0 0.0
      %3180 = vmatpush1.msra.mxu0 0.0
      %3181 = vmatprep.subr.mxu0 0.0
      %3182 = vmatpush1.msra.mxu0 0.0
      %3183 = vmatprep.subr.mxu0 0.0
      %3184 = vmatpush1.msra.mxu0 0.0
      %3185 = vmatprep.subr.mxu0 0.0
      %3186 = vmatpush1.msra.mxu0 0.0
      %3187 = vmatprep.subr.mxu0 0.0
      %3188 = vmatpush1.msra.mxu0 0.0
      %3189 = vmatprep.mubr.f32.mxu0 0.0
      %3190 = vmatmul.mubr.f32.gmra.mrb[0].mxu0 %v2726
      %v3191 = vpop.f32.mrb[0].mxu0
      %v3192 = vadd.f32 0.0, %v3191
      %v3193 = vpop.f32.mrb[0].mxu0
      %3194 = vmatprep.mubr.f32.mxu0 0.0
      %3195 = vmatmul.mubr.f32.gmra.mrb[0].mxu0 %v2728
      %v3196 = vpop.f32.mrb[0].mxu0
      %v3197 = vadd.f32 0.0, %v3196
      %v3198 = vpop.f32.mrb[0].mxu0
      %3199 = vmatprep.mubr.f32.mxu0 0.0
      %3200 = vmatmul.mubr.f32.gmra.mrb[0].mxu0 %v2730
      %v3201 = vpop.f32.mrb[0].mxu0
      %v3202 = vadd.f32 0.0, %v3201
      %v3203 = vpop.f32.mrb[0].mxu0
      %3204 = vmatprep.mubr.f32.mxu0 0.0
      %3205 = vmatmul.mubr.f32.gmra.mrb[0].mxu0 %v2732
      %v3206 = vpop.f32.mrb[0].mxu0
      %v3207 = vadd.f32 0.0, %v3206
      %v3208 = vpop.f32.mrb[0].mxu0
      %3209 = vmatprep.mubr.f32.mxu0 0.0
      %3210 = vmatmul.mubr.f32.gmra.mrb[0].mxu0 %v2734
      %v3211 = vpop.f32.mrb[0].mxu0
      %v3212 = vadd.f32 0.0, %v3211
      %v3213 = vpop.f32.mrb[0].mxu0
      %3214 = vmatprep.mubr.f32.mxu0 0.0
      %3215 = vmatmul.mubr.f32.gmra.mrb[0].mxu0 %v2736
      %v3216 = vpop.f32.mrb[0].mxu0
      %v3217 = vadd.f32 0.0, %v3216
      %v3218 = vpop.f32.mrb[0].mxu0
      %3219 = vmatprep.mubr.f32.mxu0 0.0
      %3220 = vmatmul.mubr.f32.gmra.mrb[0].mxu0 %v2738
      %v3221 = vpop.f32.mrb[0].mxu0
      %v3222 = vadd.f32 0.0, %v3221
      %v3223 = vpop.f32.mrb[0].mxu0
      %3224 = vmatprep.mubr.f32.mxu0 0.0
      %3225 = vmatmul.mubr.f32.gmra.mrb[0].mxu0 %v2740
      %v3226 = vpop.f32.mrb[0].mxu0
      %v3227 = vadd.f32 0.0, %v3226
      %v3228 = vpop.f32.mrb[0].mxu0
      %3229 = vmatprep.mubr.f32.mxu0 0.0
      %3230 = vmatmul.mubr.f32.gmra.mrb[0].mxu0 %v2742
      %v3231 = vpop.f32.mrb[0].mxu0
      %v3232 = vadd.f32 0.0, %v3231
      %v3233 = vpop.f32.mrb[0].mxu0
      %3234 = vmatprep.mubr.f32.mxu0 0.0
      %3235 = vmatmul.mubr.f32.gmra.mrb[0].mxu0 %v2744
      %v3236 = vpop.f32.mrb[0].mxu0
      %v3237 = vadd.f32 0.0, %v3236
      %v3238 = vpop.f32.mrb[0].mxu0
      %3239 = vmatprep.mubr.f32.mxu0 0.0
      %3240 = vmatmul.mubr.f32.gmra.mrb[0].mxu0 %v2746
      %v3241 = vpop.f32.mrb[0].mxu0
      %v3242 = vadd.f32 0.0, %v3241
      %v3243 = vpop.f32.mrb[0].mxu0
      %3244 = vmatprep.mubr.f32.mxu0 0.0
      %3245 = vmatmul.mubr.f32.gmra.mrb[0].mxu0 %v2748
      %v3246 = vpop.f32.mrb[0].mxu0
      %v3247 = vadd.f32 0.0, %v3246
      %v3248 = vpop.f32.mrb[0].mxu0
      %3249 = vmatprep.mubr.f32.mxu0 0.0
      %3250 = vmatmul.mubr.f32.gmra.mrb[0].mxu0 %v2750
      %v3251 = vpop.f32.mrb[0].mxu0
      %v3252 = vadd.f32 0.0, %v3251
      %v3253 = vpop.f32.mrb[0].mxu0
      %3254 = vmatprep.mubr.f32.mxu0 0.0
      %3255 = vmatmul.mubr.f32.gmra.mrb[0].mxu0 %v2752
      %v3256 = vpop.f32.mrb[0].mxu0
      %v3257 = vadd.f32 0.0, %v3256
      %v3258 = vpop.f32.mrb[0].mxu0
      %3259 = vmatprep.mubr.f32.mxu0 0.0
      %3260 = vmatmul.mubr.f32.gmra.mrb[0].mxu0 %v2754
      %v3261 = vpop.f32.mrb[0].mxu0
      %v3262 = vadd.f32 0.0, %v3261
      %v3263 = vpop.f32.mrb[0].mxu0
      %3264 = vmatprep.mubr.f32.mxu0 0.0
      %3265 = vmatmul.mubr.f32.gmra.mrb[0].mxu0 %v2756
      %v3266 = vpop.f32.mrb[0].mxu0
      %v3267 = vadd.f32 0.0, %v3266
      %v3268 = vpop.f32.mrb[0].mxu0
      %3269 = vmatprep.mubr.f32.mxu0 0.0
      %3270 = vmatmul.mubr.f32.gmra.mrb[0].mxu0 %v2758
      %v3271 = vpop.f32.mrb[0].mxu0
      %v3272 = vadd.f32 0.0, %v3271
      %v3273 = vpop.f32.mrb[0].mxu0
      %3274 = vmatprep.mubr.f32.mxu0 0.0
      %3275 = vmatmul.mubr.f32.gmra.mrb[0].mxu0 %v2760
      %v3276 = vpop.f32.mrb[0].mxu0
      %v3277 = vadd.f32 0.0, %v3276
      %v3278 = vpop.f32.mrb[0].mxu0
      %3279 = vmatprep.mubr.f32.mxu0 0.0
      %3280 = vmatmul.mubr.f32.gmra.mrb[0].mxu0 %v2762
      %v3281 = vpop.f32.mrb[0].mxu0
      %v3282 = vadd.f32 0.0, %v3281
      %v3283 = vpop.f32.mrb[0].mxu0
      %3284 = vmatprep.mubr.f32.mxu0 0.0
      %3285 = vmatmul.mubr.f32.gmra.mrb[0].mxu0 %v2764
      %v3286 = vpop.f32.mrb[0].mxu0
      %v3287 = vadd.f32 0.0, %v3286
      %v3288 = vpop.f32.mrb[0].mxu0
      %3289 = vmatprep.mubr.f32.mxu0 0.0
      %3290 = vmatmul.mubr.f32.gmra.mrb[0].mxu0 %v2766
      %v3291 = vpop.f32.mrb[0].mxu0
      %v3292 = vadd.f32 0.0, %v3291
      %v3293 = vpop.f32.mrb[0].mxu0
      %3294 = vmatprep.mubr.f32.mxu0 0.0
      %3295 = vmatmul.mubr.f32.gmra.mrb[0].mxu0 %v2768
      %v3296 = vpop.f32.mrb[0].mxu0
      %v3297 = vadd.f32 0.0, %v3296
      %v3298 = vpop.f32.mrb[0].mxu0
      %3299 = vmatprep.mubr.f32.mxu0 0.0
      %3300 = vmatmul.mubr.f32.gmra.mrb[0].mxu0 %v2770
      %v3301 = vpop.f32.mrb[0].mxu0
      %v3302 = vadd.f32 0.0, %v3301
      %v3303 = vpop.f32.mrb[0].mxu0
      %3304 = vmatprep.mubr.f32.mxu0 0.0
      %3305 = vmatmul.mubr.f32.gmra.mrb[0].mxu0 %v2772
      %v3306 = vpop.f32.mrb[0].mxu0
      %v3307 = vadd.f32 0.0, %v3306
      %v3308 = vpop.f32.mrb[0].mxu0
      %3309 = vmatprep.mubr.f32.mxu0 0.0
      %3310 = vmatmul.mubr.f32.gmra.mrb[0].mxu0 %v2774
      %v3311 = vpop.f32.mrb[0].mxu0
      %v3312 = vadd.f32 0.0, %v3311
      %v3313 = vpop.f32.mrb[0].mxu0
      %3314 = vmatprep.mubr.f32.mxu0 0.0
      %3315 = vmatmul.mubr.f32.gmra.mrb[0].mxu0 %v2776
      %v3316 = vpop.f32.mrb[0].mxu0
      %v3317 = vadd.f32 0.0, %v3316
      %v3318 = vpop.f32.mrb[0].mxu0
      %3319 = vmatprep.mubr.f32.mxu0 0.0
      %3320 = vmatmul.mubr.f32.gmra.mrb[0].mxu0 %v2778
      %v3321 = vpop.f32.mrb[0].mxu0
      %v3322 = vadd.f32 0.0, %v3321
      %v3323 = vpop.f32.mrb[0].mxu0
      %3324 = vmatprep.mubr.f32.mxu0 0.0
      %3325 = vmatmul.mubr.f32.gmra.mrb[0].mxu0 %v2780
      %v3326 = vpop.f32.mrb[0].mxu0
      %v3327 = vadd.f32 0.0, %v3326
      %v3328 = vpop.f32.mrb[0].mxu0
      %3329 = vmatprep.mubr.f32.mxu0 0.0
      %3330 = vmatmul.mubr.f32.gmra.mrb[0].mxu0 %v2782
      %v3331 = vpop.f32.mrb[0].mxu0
      %v3332 = vadd.f32 0.0, %v3331
      %v3333 = vpop.f32.mrb[0].mxu0
      %3334 = vmatprep.mubr.f32.mxu0 0.0
      %3335 = vmatmul.mubr.f32.gmra.mrb[0].mxu0 %v2784
      %v3336 = vpop.f32.mrb[0].mxu0
      %v3337 = vadd.f32 0.0, %v3336
      %v3338 = vpop.f32.mrb[0].mxu0
      %3339 = vmatprep.mubr.f32.mxu0 0.0
      %3340 = vmatmul.mubr.f32.gmra.mrb[0].mxu0 %v2786
      %v3341 = vpop.f32.mrb[0].mxu0
      %v3342 = vadd.f32 0.0, %v3341
      %v3343 = vpop.f32.mrb[0].mxu0
      %3344 = vmatprep.mubr.f32.mxu0 0.0
      %3345 = vmatmul.mubr.f32.gmra.mrb[0].mxu0 %v2788
      %v3346 = vpop.f32.mrb[0].mxu0
      %v3347 = vadd.f32 0.0, %v3346
      %v3348 = vpop.f32.mrb[0].mxu0
      %3349 = vmatprep.mubr.f32.mxu0 0.0
      %3350 = vmatmul.mubr.f32.gmra.mrb[0].mxu0 %v2790
      %v3351 = vpop.f32.mrb[0].mxu0
      %v3352 = vadd.f32 0.0, %v3351
      %v3353 = vpop.f32.mrb[0].mxu0
      %3354 = vmatprep.mubr.f32.mxu0 0.0
      %3355 = vmatmul.mubr.f32.gmra.mrb[0].mxu0 %v2792
      %v3356 = vpop.f32.mrb[0].mxu0
      %v3357 = vadd.f32 0.0, %v3356
      %v3358 = vpop.f32.mrb[0].mxu0
      %3359 = vmatprep.mubr.f32.mxu0 0.0
      %3360 = vmatmul.mubr.f32.gmra.mrb[0].mxu0 %v3118
      %v3361 = vpop.f32.mrb[0].mxu0
      %v3362 = vadd.f32 0.0, %v3361
      %v3363 = vpop.f32.mrb[0].mxu0
      %3364 = vmatprep.mubr.f32.mxu0 0.0
      %3365 = vmatmul.mubr.f32.gmra.mrb[0].mxu0 %v3120
      %v3366 = vpop.f32.mrb[0].mxu0
      %v3367 = vadd.f32 0.0, %v3366
      %v3368 = vpop.f32.mrb[0].mxu0
      %3369 = vdwg.mxu0
      %v3370 = vadd.f32 %v3042, %v3192
      %v3371 = vadd.f32 %v3043, %v3197
      %v3372 = vadd.f32 %v3044, %v3202
      %v3373 = vadd.f32 %v3045, %v3207
      %v3374 = vadd.f32 %v3046, %v3212
      %v3375 = vadd.f32 %v3047, %v3217
      %v3376 = vadd.f32 %v3048, %v3222
      %v3377 = vadd.f32 %v3049, %v3227
      %v3378 = vadd.f32 %v3050, %v3232
      %v3379 = vadd.f32 %v3051, %v3237
      %v3380 = vadd.f32 %v3052, %v3242
      %v3381 = vadd.f32 %v3053, %v3247
      %v3382 = vadd.f32 %v3054, %v3252
      %v3383 = vadd.f32 %v3055, %v3257
      %v3384 = vadd.f32 %v3056, %v3262
      %v3385 = vadd.f32 %v3057, %v3267
      %v3386 = vadd.f32 %v3058, %v3272
      %v3387 = vadd.f32 %v3059, %v3277
      %v3388 = vadd.f32 %v3060, %v3282
      %v3389 = vadd.f32 %v3061, %v3287
      %v3390 = vadd.f32 %v3062, %v3292
      %v3391 = vadd.f32 %v3063, %v3297
      %v3392 = vadd.f32 %v3064, %v3302
      %v3393 = vadd.f32 %v3065, %v3307
      %v3394 = vadd.f32 %v3066, %v3312
      %v3395 = vadd.f32 %v3067, %v3317
      %v3396 = vadd.f32 %v3068, %v3322
      %v3397 = vadd.f32 %v3069, %v3327
      %v3398 = vadd.f32 %v3070, %v3332
      %v3399 = vadd.f32 %v3071, %v3337
      %v3400 = vadd.f32 %v3072, %v3342
      %v3401 = vadd.f32 %v3073, %v3347
      %v3402 = vadd.f32 %v3074, %v3352
      %v3403 = vadd.f32 %v3075, %v3357
      %v3404 = vadd.f32 %v3076, %v3362
      %v3405 = vadd.f32 %v3077, %v3367
      %s3406 = scalar_lea.vmem %s1, 16
      %v3407 = vld [vmem:[%s3406] sm:$0xf]
      %vm3408 = vcmask 1044480
      %v3409 = vrot.slane %v1350, 3
      %v3410 = vrot.slane %v1367, 3
      %v3411 = vsel %vm3408, %v3409, %v3410
      %v3412 = vrot.slane %v1384, 3
      %v3413 = vsel %vm3408, %v3410, %v3412
      %v3414 = vrot.slane %v1401, 3
      %v3415 = vsel %vm3408, %v3412, %v3414
      %v3416 = vrot.slane %v1418, 3
      %v3417 = vsel %vm3408, %v3414, %v3416
      %v3418 = vrot.slane %v1435, 3
      %v3419 = vsel %vm3408, %v3416, %v3418
      %v3420 = vrot.slane %v1452, 3
      %v3421 = vsel %vm3408, %v3418, %v3420
      %v3422 = vrot.slane %v1469, 3
      %v3423 = vsel %vm3408, %v3420, %v3422
      %v3424 = vrot.slane %v1486, 3
      %v3425 = vsel %vm3408, %v3422, %v3424
      %v3426 = vrot.slane %v1503, 3
      %v3427 = vsel %vm3408, %v3424, %v3426
      %v3428 = vrot.slane %v1520, 3
      %v3429 = vsel %vm3408, %v3426, %v3428
      %v3430 = vrot.slane %v1537, 3
      %v3431 = vsel %vm3408, %v3428, %v3430
      %v3432 = vrot.slane %v1554, 3
      %v3433 = vsel %vm3408, %v3430, %v3432
      %v3434 = vrot.slane %v1571, 3
      %v3435 = vsel %vm3408, %v3432, %v3434
      %v3436 = vrot.slane %v1588, 3
      %v3437 = vsel %vm3408, %v3434, %v3436
      %v3438 = vrot.slane %v1605, 3
      %v3439 = vsel %vm3408, %v3436, %v3438
      %v3440 = vrot.slane %v1622, 3
      %v3441 = vsel %vm3408, %v3438, %v3440
      %v3442 = vrot.slane %v1639, 3
      %v3443 = vsel %vm3408, %v3440, %v3442
      %v3444 = vrot.slane %v1656, 3
      %v3445 = vsel %vm3408, %v3442, %v3444
      %v3446 = vrot.slane %v1673, 3
      %v3447 = vsel %vm3408, %v3444, %v3446
      %v3448 = vrot.slane %v1690, 3
      %v3449 = vsel %vm3408, %v3446, %v3448
      %v3450 = vrot.slane %v1707, 3
      %v3451 = vsel %vm3408, %v3448, %v3450
      %v3452 = vrot.slane %v1724, 3
      %v3453 = vsel %vm3408, %v3450, %v3452
      %v3454 = vrot.slane %v1741, 3
      %v3455 = vsel %vm3408, %v3452, %v3454
      %v3456 = vrot.slane %v1758, 3
      %v3457 = vsel %vm3408, %v3454, %v3456
      %v3458 = vrot.slane %v1775, 3
      %v3459 = vsel %vm3408, %v3456, %v3458
      %v3460 = vrot.slane %v1792, 3
      %v3461 = vsel %vm3408, %v3458, %v3460
      %v3462 = vrot.slane %v1809, 3
      %v3463 = vsel %vm3408, %v3460, %v3462
      %v3464 = vrot.slane %v1826, 3
      %v3465 = vsel %vm3408, %v3462, %v3464
      %v3466 = vrot.slane %v1843, 3
      %v3467 = vsel %vm3408, %v3464, %v3466
      %v3468 = vrot.slane %v1860, 3
      %v3469 = vsel %vm3408, %v3466, %v3468
      %v3470 = vrot.slane %v1877, 3
      %v3471 = vsel %vm3408, %v3468, %v3470
      %v3472 = vrot.slane %v1894, 3
      %v3473 = vsel %vm3408, %v3470, %v3472
      %v3474 = vrot.slane %v1911, 3
      %v3475 = vsel %vm3408, %v3472, %v3474
      %v3476 = vrot.slane %v1928, 3
      %v3477 = vsel %vm3408, %v3474, %v3476
      %v3478 = vrot.slane %v3094, 3
      %v3479 = vsel %vm3408, %v3476, %v3478
      %v3480 = vrot.slane %v3111, 3
      %v3481 = vsel %vm3408, %v3478, %v3480
      %v3482 = vsel %vm378, %v3411, 0
      %v3484 = vsel %vm378, %v3413, 0
      %v3486 = vsel %vm378, %v3415, 0
      %v3488 = vsel %vm378, %v3417, 0
      %v3490 = vsel %vm378, %v3419, 0
      %v3492 = vsel %vm378, %v3421, 0
      %v3494 = vsel %vm378, %v3423, 0
      %v3496 = vsel %vm378, %v3425, 0
      %v3498 = vsel %vm378, %v3427, 0
      %v3500 = vsel %vm378, %v3429, 0
      %v3502 = vsel %vm378, %v3431, 0
      %v3504 = vsel %vm378, %v3433, 0
      %v3506 = vsel %vm378, %v3435, 0
      %v3508 = vsel %vm378, %v3437, 0
      %v3510 = vsel %vm378, %v3439, 0
      %v3512 = vsel %vm378, %v3441, 0
      %v3514 = vsel %vm378, %v3443, 0
      %v3516 = vsel %vm378, %v3445, 0
      %v3518 = vsel %vm378, %v3447, 0
      %v3520 = vsel %vm378, %v3449, 0
      %v3522 = vsel %vm378, %v3451, 0
      %v3524 = vsel %vm378, %v3453, 0
      %v3526 = vsel %vm378, %v3455, 0
      %v3528 = vsel %vm378, %v3457, 0
      %v3530 = vsel %vm378, %v3459, 0
      %v3532 = vsel %vm378, %v3461, 0
      %v3534 = vsel %vm378, %v3463, 0
      %v3536 = vsel %vm378, %v3465, 0
      %v3538 = vsel %vm378, %v3467, 0
      %v3540 = vsel %vm378, %v3469, 0
      %v3542 = vsel %vm378, %v3471, 0
      %v3544 = vsel %vm378, %v3473, 0
      %v3546 = vsel %vm378, %v3475, 0
      %v3548 = vsel %vm378, %v3477, 0
      %v3550 = vsel %vm378, %v3479, 0
      %v3552 = vsel %vm378, %v3481, 0
      %v3555 = vsel %vm2077, %v3407, 0
      %3557 = vmatprep.subr.mxu0 0.0
      %3558 = vmatpush1.msra.mxu0 %v3555
      %3559 = vmatprep.subr.mxu0 0.0
      %3560 = vmatpush1.msra.mxu0 0.0
      %3561 = vmatprep.subr.mxu0 0.0
      %3562 = vmatpush1.msra.mxu0 0.0
      %3563 = vmatprep.subr.mxu0 0.0
      %3564 = vmatpush1.msra.mxu0 0.0
      %3565 = vmatprep.subr.mxu0 0.0
      %3566 = vmatpush1.msra.mxu0 0.0
      %3567 = vmatprep.subr.mxu0 0.0
      %3568 = vmatpush1.msra.mxu0 0.0
      %3569 = vmatprep.subr.mxu0 0.0
      %3570 = vmatpush1.msra.mxu0 0.0
      %3571 = vmatprep.subr.mxu0 0.0
      %3572 = vmatpush1.msra.mxu0 0.0
      %3573 = vmatprep.subr.mxu0 0.0
      %3574 = vmatpush1.msra.mxu0 0.0
      %3575 = vmatprep.subr.mxu0 0.0
      %3576 = vmatpush1.msra.mxu0 0.0
      %3577 = vmatprep.subr.mxu0 0.0
      %3578 = vmatpush1.msra.mxu0 0.0
      %3579 = vmatprep.subr.mxu0 0.0
      %3580 = vmatpush1.msra.mxu0 0.0
      %3581 = vmatprep.subr.mxu0 0.0
      %3582 = vmatpush1.msra.mxu0 0.0
      %3583 = vmatprep.subr.mxu0 0.0
      %3584 = vmatpush1.msra.mxu0 0.0
      %3585 = vmatprep.subr.mxu0 0.0
      %3586 = vmatpush1.msra.mxu0 0.0
      %3587 = vmatprep.subr.mxu0 0.0
      %3588 = vmatpush1.msra.mxu0 0.0
      %3589 = vmatprep.subr.mxu0 0.0
      %3590 = vmatpush1.msra.mxu0 0.0
      %3591 = vmatprep.subr.mxu0 0.0
      %3592 = vmatpush1.msra.mxu0 0.0
      %3593 = vmatprep.subr.mxu0 0.0
      %3594 = vmatpush1.msra.mxu0 0.0
      %3595 = vmatprep.subr.mxu0 0.0
      %3596 = vmatpush1.msra.mxu0 0.0
      %3597 = vmatprep.subr.mxu0 0.0
      %3598 = vmatpush1.msra.mxu0 0.0
      %3599 = vmatprep.subr.mxu0 0.0
      %3600 = vmatpush1.msra.mxu0 0.0
      %3601 = vmatprep.subr.mxu0 0.0
      %3602 = vmatpush1.msra.mxu0 0.0
      %3603 = vmatprep.subr.mxu0 0.0
      %3604 = vmatpush1.msra.mxu0 0.0
      %3605 = vmatprep.subr.mxu0 0.0
      %3606 = vmatpush1.msra.mxu0 0.0
      %3607 = vmatprep.subr.mxu0 0.0
      %3608 = vmatpush1.msra.mxu0 0.0
      %3609 = vmatprep.subr.mxu0 0.0
      %3610 = vmatpush1.msra.mxu0 0.0
      %3611 = vmatprep.subr.mxu0 0.0
      %3612 = vmatpush1.msra.mxu0 0.0
      %3613 = vmatprep.subr.mxu0 0.0
      %3614 = vmatpush1.msra.mxu0 0.0
      %3615 = vmatprep.subr.mxu0 0.0
      %3616 = vmatpush1.msra.mxu0 0.0
      %3617 = vmatprep.subr.mxu0 0.0
      %3618 = vmatpush1.msra.mxu0 0.0
      %3619 = vmatprep.subr.mxu0 0.0
      %3620 = vmatpush1.msra.mxu0 0.0
      %3621 = vmatprep.mubr.f32.mxu0 0.0
      %3622 = vmatmul.mubr.f32.gmra.mrb[0].mxu0 %v3482
      %v3623 = vpop.f32.mrb[0].mxu0
      %v3624 = vadd.f32 0.0, %v3623
      %v3625 = vpop.f32.mrb[0].mxu0
      %3626 = vmatprep.mubr.f32.mxu0 0.0
      %3627 = vmatmul.mubr.f32.gmra.mrb[0].mxu0 %v3484
      %v3628 = vpop.f32.mrb[0].mxu0
      %v3629 = vadd.f32 0.0, %v3628
      %v3630 = vpop.f32.mrb[0].mxu0
      %3631 = vmatprep.mubr.f32.mxu0 0.0
      %3632 = vmatmul.mubr.f32.gmra.mrb[0].mxu0 %v3486
      %v3633 = vpop.f32.mrb[0].mxu0
      %v3634 = vadd.f32 0.0, %v3633
      %v3635 = vpop.f32.mrb[0].mxu0
      %3636 = vmatprep.mubr.f32.mxu0 0.0
      %3637 = vmatmul.mubr.f32.gmra.mrb[0].mxu0 %v3488
      %v3638 = vpop.f32.mrb[0].mxu0
      %v3639 = vadd.f32 0.0, %v3638
      %v3640 = vpop.f32.mrb[0].mxu0
      %3641 = vmatprep.mubr.f32.mxu0 0.0
      %3642 = vmatmul.mubr.f32.gmra.mrb[0].mxu0 %v3490
      %v3643 = vpop.f32.mrb[0].mxu0
      %v3644 = vadd.f32 0.0, %v3643
      %v3645 = vpop.f32.mrb[0].mxu0
      %3646 = vmatprep.mubr.f32.mxu0 0.0
      %3647 = vmatmul.mubr.f32.gmra.mrb[0].mxu0 %v3492
      %v3648 = vpop.f32.mrb[0].mxu0
      %v3649 = vadd.f32 0.0, %v3648
      %v3650 = vpop.f32.mrb[0].mxu0
      %3651 = vmatprep.mubr.f32.mxu0 0.0
      %3652 = vmatmul.mubr.f32.gmra.mrb[0].mxu0 %v3494
      %v3653 = vpop.f32.mrb[0].mxu0
      %v3654 = vadd.f32 0.0, %v3653
      %v3655 = vpop.f32.mrb[0].mxu0
      %3656 = vmatprep.mubr.f32.mxu0 0.0
      %3657 = vmatmul.mubr.f32.gmra.mrb[0].mxu0 %v3496
      %v3658 = vpop.f32.mrb[0].mxu0
      %v3659 = vadd.f32 0.0, %v3658
      %v3660 = vpop.f32.mrb[0].mxu0
      %3661 = vmatprep.mubr.f32.mxu0 0.0
      %3662 = vmatmul.mubr.f32.gmra.mrb[0].mxu0 %v3498
      %v3663 = vpop.f32.mrb[0].mxu0
      %v3664 = vadd.f32 0.0, %v3663
      %v3665 = vpop.f32.mrb[0].mxu0
      %3666 = vmatprep.mubr.f32.mxu0 0.0
      %3667 = vmatmul.mubr.f32.gmra.mrb[0].mxu0 %v3500
      %v3668 = vpop.f32.mrb[0].mxu0
      %v3669 = vadd.f32 0.0, %v3668
      %v3670 = vpop.f32.mrb[0].mxu0
      %3671 = vmatprep.mubr.f32.mxu0 0.0
      %3672 = vmatmul.mubr.f32.gmra.mrb[0].mxu0 %v3502
      %v3673 = vpop.f32.mrb[0].mxu0
      %v3674 = vadd.f32 0.0, %v3673
      %v3675 = vpop.f32.mrb[0].mxu0
      %3676 = vmatprep.mubr.f32.mxu0 0.0
      %3677 = vmatmul.mubr.f32.gmra.mrb[0].mxu0 %v3504
      %v3678 = vpop.f32.mrb[0].mxu0
      %v3679 = vadd.f32 0.0, %v3678
      %v3680 = vpop.f32.mrb[0].mxu0
      %3681 = vmatprep.mubr.f32.mxu0 0.0
      %3682 = vmatmul.mubr.f32.gmra.mrb[0].mxu0 %v3506
      %v3683 = vpop.f32.mrb[0].mxu0
      %v3684 = vadd.f32 0.0, %v3683
      %v3685 = vpop.f32.mrb[0].mxu0
      %3686 = vmatprep.mubr.f32.mxu0 0.0
      %3687 = vmatmul.mubr.f32.gmra.mrb[0].mxu0 %v3508
      %v3688 = vpop.f32.mrb[0].mxu0
      %v3689 = vadd.f32 0.0, %v3688
      %v3690 = vpop.f32.mrb[0].mxu0
      %3691 = vmatprep.mubr.f32.mxu0 0.0
      %3692 = vmatmul.mubr.f32.gmra.mrb[0].mxu0 %v3510
      %v3693 = vpop.f32.mrb[0].mxu0
      %v3694 = vadd.f32 0.0, %v3693
      %v3695 = vpop.f32.mrb[0].mxu0
      %3696 = vmatprep.mubr.f32.mxu0 0.0
      %3697 = vmatmul.mubr.f32.gmra.mrb[0].mxu0 %v3512
      %v3698 = vpop.f32.mrb[0].mxu0
      %v3699 = vadd.f32 0.0, %v3698
      %v3700 = vpop.f32.mrb[0].mxu0
      %3701 = vmatprep.mubr.f32.mxu0 0.0
      %3702 = vmatmul.mubr.f32.gmra.mrb[0].mxu0 %v3514
      %v3703 = vpop.f32.mrb[0].mxu0
      %v3704 = vadd.f32 0.0, %v3703
      %v3705 = vpop.f32.mrb[0].mxu0
      %3706 = vmatprep.mubr.f32.mxu0 0.0
      %3707 = vmatmul.mubr.f32.gmra.mrb[0].mxu0 %v3516
      %v3708 = vpop.f32.mrb[0].mxu0
      %v3709 = vadd.f32 0.0, %v3708
      %v3710 = vpop.f32.mrb[0].mxu0
      %3711 = vmatprep.mubr.f32.mxu0 0.0
      %3712 = vmatmul.mubr.f32.gmra.mrb[0].mxu0 %v3518
      %v3713 = vpop.f32.mrb[0].mxu0
      %v3714 = vadd.f32 0.0, %v3713
      %v3715 = vpop.f32.mrb[0].mxu0
      %3716 = vmatprep.mubr.f32.mxu0 0.0
      %3717 = vmatmul.mubr.f32.gmra.mrb[0].mxu0 %v3520
      %v3718 = vpop.f32.mrb[0].mxu0
      %v3719 = vadd.f32 0.0, %v3718
      %v3720 = vpop.f32.mrb[0].mxu0
      %3721 = vmatprep.mubr.f32.mxu0 0.0
      %3722 = vmatmul.mubr.f32.gmra.mrb[0].mxu0 %v3522
      %v3723 = vpop.f32.mrb[0].mxu0
      %v3724 = vadd.f32 0.0, %v3723
      %v3725 = vpop.f32.mrb[0].mxu0
      %3726 = vmatprep.mubr.f32.mxu0 0.0
      %3727 = vmatmul.mubr.f32.gmra.mrb[0].mxu0 %v3524
      %v3728 = vpop.f32.mrb[0].mxu0
      %v3729 = vadd.f32 0.0, %v3728
      %v3730 = vpop.f32.mrb[0].mxu0
      %3731 = vmatprep.mubr.f32.mxu0 0.0
      %3732 = vmatmul.mubr.f32.gmra.mrb[0].mxu0 %v3526
      %v3733 = vpop.f32.mrb[0].mxu0
      %v3734 = vadd.f32 0.0, %v3733
      %v3735 = vpop.f32.mrb[0].mxu0
      %3736 = vmatprep.mubr.f32.mxu0 0.0
      %3737 = vmatmul.mubr.f32.gmra.mrb[0].mxu0 %v3528
      %v3738 = vpop.f32.mrb[0].mxu0
      %v3739 = vadd.f32 0.0, %v3738
      %v3740 = vpop.f32.mrb[0].mxu0
      %3741 = vmatprep.mubr.f32.mxu0 0.0
      %3742 = vmatmul.mubr.f32.gmra.mrb[0].mxu0 %v3530
      %v3743 = vpop.f32.mrb[0].mxu0
      %v3744 = vadd.f32 0.0, %v3743
      %v3745 = vpop.f32.mrb[0].mxu0
      %3746 = vmatprep.mubr.f32.mxu0 0.0
      %3747 = vmatmul.mubr.f32.gmra.mrb[0].mxu0 %v3532
      %v3748 = vpop.f32.mrb[0].mxu0
      %v3749 = vadd.f32 0.0, %v3748
      %v3750 = vpop.f32.mrb[0].mxu0
      %3751 = vmatprep.mubr.f32.mxu0 0.0
      %3752 = vmatmul.mubr.f32.gmra.mrb[0].mxu0 %v3534
      %v3753 = vpop.f32.mrb[0].mxu0
      %v3754 = vadd.f32 0.0, %v3753
      %v3755 = vpop.f32.mrb[0].mxu0
      %3756 = vmatprep.mubr.f32.mxu0 0.0
      %3757 = vmatmul.mubr.f32.gmra.mrb[0].mxu0 %v3536
      %v3758 = vpop.f32.mrb[0].mxu0
      %v3759 = vadd.f32 0.0, %v3758
      %v3760 = vpop.f32.mrb[0].mxu0
      %3761 = vmatprep.mubr.f32.mxu0 0.0
      %3762 = vmatmul.mubr.f32.gmra.mrb[0].mxu0 %v3538
      %v3763 = vpop.f32.mrb[0].mxu0
      %v3764 = vadd.f32 0.0, %v3763
      %v3765 = vpop.f32.mrb[0].mxu0
      %3766 = vmatprep.mubr.f32.mxu0 0.0
      %3767 = vmatmul.mubr.f32.gmra.mrb[0].mxu0 %v3540
      %v3768 = vpop.f32.mrb[0].mxu0
      %v3769 = vadd.f32 0.0, %v3768
      %v3770 = vpop.f32.mrb[0].mxu0
      %3771 = vmatprep.mubr.f32.mxu0 0.0
      %3772 = vmatmul.mubr.f32.gmra.mrb[0].mxu0 %v3542
      %v3773 = vpop.f32.mrb[0].mxu0
      %v3774 = vadd.f32 0.0, %v3773
      %v3775 = vpop.f32.mrb[0].mxu0
      %3776 = vmatprep.mubr.f32.mxu0 0.0
      %3777 = vmatmul.mubr.f32.gmra.mrb[0].mxu0 %v3544
      %v3778 = vpop.f32.mrb[0].mxu0
      %v3779 = vadd.f32 0.0, %v3778
      %v3780 = vpop.f32.mrb[0].mxu0
      %3781 = vmatprep.mubr.f32.mxu0 0.0
      %3782 = vmatmul.mubr.f32.gmra.mrb[0].mxu0 %v3546
      %v3783 = vpop.f32.mrb[0].mxu0
      %v3784 = vadd.f32 0.0, %v3783
      %v3785 = vpop.f32.mrb[0].mxu0
      %3786 = vmatprep.mubr.f32.mxu0 0.0
      %3787 = vmatmul.mubr.f32.gmra.mrb[0].mxu0 %v3548
      %v3788 = vpop.f32.mrb[0].mxu0
      %v3789 = vadd.f32 0.0, %v3788
      %v3790 = vpop.f32.mrb[0].mxu0
      %3791 = vmatprep.mubr.f32.mxu0 0.0
      %3792 = vmatmul.mubr.f32.gmra.mrb[0].mxu0 %v3550
      %v3793 = vpop.f32.mrb[0].mxu0
      %v3794 = vadd.f32 0.0, %v3793
      %v3795 = vpop.f32.mrb[0].mxu0
      %3796 = vmatprep.mubr.f32.mxu0 0.0
      %3797 = vmatmul.mubr.f32.gmra.mrb[0].mxu0 %v3552
      %v3798 = vpop.f32.mrb[0].mxu0
      %v3799 = vadd.f32 0.0, %v3798
      %v3800 = vpop.f32.mrb[0].mxu0
      %3801 = vdwg.mxu0
      %v3802 = vadd.f32 %v3370, %v3624
      %v3803 = vadd.f32 %v3371, %v3629
      %v3804 = vadd.f32 %v3372, %v3634
      %v3805 = vadd.f32 %v3373, %v3639
      %v3806 = vadd.f32 %v3374, %v3644
      %v3807 = vadd.f32 %v3375, %v3649
      %v3808 = vadd.f32 %v3376, %v3654
      %v3809 = vadd.f32 %v3377, %v3659
      %v3810 = vadd.f32 %v3378, %v3664
      %v3811 = vadd.f32 %v3379, %v3669
      %v3812 = vadd.f32 %v3380, %v3674
      %v3813 = vadd.f32 %v3381, %v3679
      %v3814 = vadd.f32 %v3382, %v3684
      %v3815 = vadd.f32 %v3383, %v3689
      %v3816 = vadd.f32 %v3384, %v3694
      %v3817 = vadd.f32 %v3385, %v3699
      %v3818 = vadd.f32 %v3386, %v3704
      %v3819 = vadd.f32 %v3387, %v3709
      %v3820 = vadd.f32 %v3388, %v3714
      %v3821 = vadd.f32 %v3389, %v3719
      %v3822 = vadd.f32 %v3390, %v3724
      %v3823 = vadd.f32 %v3391, %v3729
      %v3824 = vadd.f32 %v3392, %v3734
      %v3825 = vadd.f32 %v3393, %v3739
      %v3826 = vadd.f32 %v3394, %v3744
      %v3827 = vadd.f32 %v3395, %v3749
      %v3828 = vadd.f32 %v3396, %v3754
      %v3829 = vadd.f32 %v3397, %v3759
      %v3830 = vadd.f32 %v3398, %v3764
      %v3831 = vadd.f32 %v3399, %v3769
      %v3832 = vadd.f32 %v3400, %v3774
      %v3833 = vadd.f32 %v3401, %v3779
      %v3834 = vadd.f32 %v3402, %v3784
      %v3835 = vadd.f32 %v3403, %v3789
      %v3836 = vadd.f32 %v3404, %v3794
      %v3837 = vadd.f32 %v3405, %v3799
      %s3838 = scalar_lea.vmem %s1, 20
      %v3839 = vld [vmem:[%s3838] sm:$0xf]
      %v3840 = vrot.slane %v1350, 4
      %v3841 = vrot.slane %v1367, 4
      %v3842 = vsel %vm2077, %v3840, %v3841
      %v3843 = vrot.slane %v1384, 4
      %v3844 = vsel %vm2077, %v3841, %v3843
      %v3845 = vrot.slane %v1401, 4
      %v3846 = vsel %vm2077, %v3843, %v3845
      %v3847 = vrot.slane %v1418, 4
      %v3848 = vsel %vm2077, %v3845, %v3847
      %v3849 = vrot.slane %v1435, 4
      %v3850 = vsel %vm2077, %v3847, %v3849
      %v3851 = vrot.slane %v1452, 4
      %v3852 = vsel %vm2077, %v3849, %v3851
      %v3853 = vrot.slane %v1469, 4
      %v3854 = vsel %vm2077, %v3851, %v3853
      %v3855 = vrot.slane %v1486, 4
      %v3856 = vsel %vm2077, %v3853, %v3855
      %v3857 = vrot.slane %v1503, 4
      %v3858 = vsel %vm2077, %v3855, %v3857
      %v3859 = vrot.slane %v1520, 4
      %v3860 = vsel %vm2077, %v3857, %v3859
      %v3861 = vrot.slane %v1537, 4
      %v3862 = vsel %vm2077, %v3859, %v3861
      %v3863 = vrot.slane %v1554, 4
      %v3864 = vsel %vm2077, %v3861, %v3863
      %v3865 = vrot.slane %v1571, 4
      %v3866 = vsel %vm2077, %v3863, %v3865
      %v3867 = vrot.slane %v1588, 4
      %v3868 = vsel %vm2077, %v3865, %v3867
      %v3869 = vrot.slane %v1605, 4
      %v3870 = vsel %vm2077, %v3867, %v3869
      %v3871 = vrot.slane %v1622, 4
      %v3872 = vsel %vm2077, %v3869, %v3871
      %v3873 = vrot.slane %v1639, 4
      %v3874 = vsel %vm2077, %v3871, %v3873
      %v3875 = vrot.slane %v1656, 4
      %v3876 = vsel %vm2077, %v3873, %v3875
      %v3877 = vrot.slane %v1673, 4
      %v3878 = vsel %vm2077, %v3875, %v3877
      %v3879 = vrot.slane %v1690, 4
      %v3880 = vsel %vm2077, %v3877, %v3879
      %v3881 = vrot.slane %v1707, 4
      %v3882 = vsel %vm2077, %v3879, %v3881
      %v3883 = vrot.slane %v1724, 4
      %v3884 = vsel %vm2077, %v3881, %v3883
      %v3885 = vrot.slane %v1741, 4
      %v3886 = vsel %vm2077, %v3883, %v3885
      %v3887 = vrot.slane %v1758, 4
      %v3888 = vsel %vm2077, %v3885, %v3887
      %v3889 = vrot.slane %v1775, 4
      %v3890 = vsel %vm2077, %v3887, %v3889
      %v3891 = vrot.slane %v1792, 4
      %v3892 = vsel %vm2077, %v3889, %v3891
      %v3893 = vrot.slane %v1809, 4
      %v3894 = vsel %vm2077, %v3891, %v3893
      %v3895 = vrot.slane %v1826, 4
      %v3896 = vsel %vm2077, %v3893, %v3895
      %v3897 = vrot.slane %v1843, 4
      %v3898 = vsel %vm2077, %v3895, %v3897
      %v3899 = vrot.slane %v1860, 4
      %v3900 = vsel %vm2077, %v3897, %v3899
      %v3901 = vrot.slane %v1877, 4
      %v3902 = vsel %vm2077, %v3899, %v3901
      %v3903 = vrot.slane %v1894, 4
      %v3904 = vsel %vm2077, %v3901, %v3903
      %v3905 = vrot.slane %v1911, 4
      %v3906 = vsel %vm2077, %v3903, %v3905
      %v3907 = vrot.slane %v1928, 4
      %v3908 = vsel %vm2077, %v3905, %v3907
      %v3909 = vrot.slane %v3094, 4
      %v3910 = vsel %vm2077, %v3907, %v3909
      %v3911 = vrot.slane %v3111, 4
      %v3912 = vsel %vm2077, %v3909, %v3911
      %v3913 = vsel %vm378, %v3842, 0
      %v3915 = vsel %vm378, %v3844, 0
      %v3917 = vsel %vm378, %v3846, 0
      %v3919 = vsel %vm378, %v3848, 0
      %v3921 = vsel %vm378, %v3850, 0
      %v3923 = vsel %vm378, %v3852, 0
      %v3925 = vsel %vm378, %v3854, 0
      %v3927 = vsel %vm378, %v3856, 0
      %v3929 = vsel %vm378, %v3858, 0
      %v3931 = vsel %vm378, %v3860, 0
      %v3933 = vsel %vm378, %v3862, 0
      %v3935 = vsel %vm378, %v3864, 0
      %v3937 = vsel %vm378, %v3866, 0
      %v3939 = vsel %vm378, %v3868, 0
      %v3941 = vsel %vm378, %v3870, 0
      %v3943 = vsel %vm378, %v3872, 0
      %v3945 = vsel %vm378, %v3874, 0
      %v3947 = vsel %vm378, %v3876, 0
      %v3949 = vsel %vm378, %v3878, 0
      %v3951 = vsel %vm378, %v3880, 0
      %v3953 = vsel %vm378, %v3882, 0
      %v3955 = vsel %vm378, %v3884, 0
      %v3957 = vsel %vm378, %v3886, 0
      %v3959 = vsel %vm378, %v3888, 0
      %v3961 = vsel %vm378, %v3890, 0
      %v3963 = vsel %vm378, %v3892, 0
      %v3965 = vsel %vm378, %v3894, 0
      %v3967 = vsel %vm378, %v3896, 0
      %v3969 = vsel %vm378, %v3898, 0
      %v3971 = vsel %vm378, %v3900, 0
      %v3973 = vsel %vm378, %v3902, 0
      %v3975 = vsel %vm378, %v3904, 0
      %v3977 = vsel %vm378, %v3906, 0
      %v3979 = vsel %vm378, %v3908, 0
      %v3981 = vsel %vm378, %v3910, 0
      %v3983 = vsel %vm378, %v3912, 0
      %v3986 = vsel %vm2077, %v3839, 0
      %3988 = vmatprep.subr.mxu0 0.0
      %3989 = vmatpush1.msra.mxu0 %v3986
      %3990 = vmatprep.subr.mxu0 0.0
      %3991 = vmatpush1.msra.mxu0 0.0
      %3992 = vmatprep.subr.mxu0 0.0
      %3993 = vmatpush1.msra.mxu0 0.0
      %3994 = vmatprep.subr.mxu0 0.0
      %3995 = vmatpush1.msra.mxu0 0.0
      %3996 = vmatprep.subr.mxu0 0.0
      %3997 = vmatpush1.msra.mxu0 0.0
      %3998 = vmatprep.subr.mxu0 0.0
      %3999 = vmatpush1.msra.mxu0 0.0
      %4000 = vmatprep.subr.mxu0 0.0
      %4001 = vmatpush1.msra.mxu0 0.0
      %4002 = vmatprep.subr.mxu0 0.0
      %4003 = vmatpush1.msra.mxu0 0.0
      %4004 = vmatprep.subr.mxu0 0.0
      %4005 = vmatpush1.msra.mxu0 0.0
      %4006 = vmatprep.subr.mxu0 0.0
      %4007 = vmatpush1.msra.mxu0 0.0
      %4008 = vmatprep.subr.mxu0 0.0
      %4009 = vmatpush1.msra.mxu0 0.0
      %4010 = vmatprep.subr.mxu0 0.0
      %4011 = vmatpush1.msra.mxu0 0.0
      %4012 = vmatprep.subr.mxu0 0.0
      %4013 = vmatpush1.msra.mxu0 0.0
      %4014 = vmatprep.subr.mxu0 0.0
      %4015 = vmatpush1.msra.mxu0 0.0
      %4016 = vmatprep.subr.mxu0 0.0
      %4017 = vmatpush1.msra.mxu0 0.0
      %4018 = vmatprep.subr.mxu0 0.0
      %4019 = vmatpush1.msra.mxu0 0.0
      %4020 = vmatprep.subr.mxu0 0.0
      %4021 = vmatpush1.msra.mxu0 0.0
      %4022 = vmatprep.subr.mxu0 0.0
      %4023 = vmatpush1.msra.mxu0 0.0
      %4024 = vmatprep.subr.mxu0 0.0
      %4025 = vmatpush1.msra.mxu0 0.0
      %4026 = vmatprep.subr.mxu0 0.0
      %4027 = vmatpush1.msra.mxu0 0.0
      %4028 = vmatprep.subr.mxu0 0.0
      %4029 = vmatpush1.msra.mxu0 0.0
      %4030 = vmatprep.subr.mxu0 0.0
      %4031 = vmatpush1.msra.mxu0 0.0
      %4032 = vmatprep.subr.mxu0 0.0
      %4033 = vmatpush1.msra.mxu0 0.0
      %4034 = vmatprep.subr.mxu0 0.0
      %4035 = vmatpush1.msra.mxu0 0.0
      %4036 = vmatprep.subr.mxu0 0.0
      %4037 = vmatpush1.msra.mxu0 0.0
      %4038 = vmatprep.subr.mxu0 0.0
      %4039 = vmatpush1.msra.mxu0 0.0
      %4040 = vmatprep.subr.mxu0 0.0
      %4041 = vmatpush1.msra.mxu0 0.0
      %4042 = vmatprep.subr.mxu0 0.0
      %4043 = vmatpush1.msra.mxu0 0.0
      %4044 = vmatprep.subr.mxu0 0.0
      %4045 = vmatpush1.msra.mxu0 0.0
      %4046 = vmatprep.subr.mxu0 0.0
      %4047 = vmatpush1.msra.mxu0 0.0
      %4048 = vmatprep.subr.mxu0 0.0
      %4049 = vmatpush1.msra.mxu0 0.0
      %4050 = vmatprep.subr.mxu0 0.0
      %4051 = vmatpush1.msra.mxu0 0.0
      %4052 = vmatprep.mubr.f32.mxu0 0.0
      %4053 = vmatmul.mubr.f32.gmra.mrb[0].mxu0 %v3913
      %v4054 = vpop.f32.mrb[0].mxu0
      %v4055 = vadd.f32 0.0, %v4054
      %v4056 = vpop.f32.mrb[0].mxu0
      %4057 = vmatprep.mubr.f32.mxu0 0.0
      %4058 = vmatmul.mubr.f32.gmra.mrb[0].mxu0 %v3915
      %v4059 = vpop.f32.mrb[0].mxu0
      %v4060 = vadd.f32 0.0, %v4059
      %v4061 = vpop.f32.mrb[0].mxu0
      %4062 = vmatprep.mubr.f32.mxu0 0.0
      %4063 = vmatmul.mubr.f32.gmra.mrb[0].mxu0 %v3917
      %v4064 = vpop.f32.mrb[0].mxu0
      %v4065 = vadd.f32 0.0, %v4064
      %v4066 = vpop.f32.mrb[0].mxu0
      %4067 = vmatprep.mubr.f32.mxu0 0.0
      %4068 = vmatmul.mubr.f32.gmra.mrb[0].mxu0 %v3919
      %v4069 = vpop.f32.mrb[0].mxu0
      %v4070 = vadd.f32 0.0, %v4069
      %v4071 = vpop.f32.mrb[0].mxu0
      %4072 = vmatprep.mubr.f32.mxu0 0.0
      %4073 = vmatmul.mubr.f32.gmra.mrb[0].mxu0 %v3921
      %v4074 = vpop.f32.mrb[0].mxu0
      %v4075 = vadd.f32 0.0, %v4074
      %v4076 = vpop.f32.mrb[0].mxu0
      %4077 = vmatprep.mubr.f32.mxu0 0.0
      %4078 = vmatmul.mubr.f32.gmra.mrb[0].mxu0 %v3923
      %v4079 = vpop.f32.mrb[0].mxu0
      %v4080 = vadd.f32 0.0, %v4079
      %v4081 = vpop.f32.mrb[0].mxu0
      %4082 = vmatprep.mubr.f32.mxu0 0.0
      %4083 = vmatmul.mubr.f32.gmra.mrb[0].mxu0 %v3925
      %v4084 = vpop.f32.mrb[0].mxu0
      %v4085 = vadd.f32 0.0, %v4084
      %v4086 = vpop.f32.mrb[0].mxu0
      %4087 = vmatprep.mubr.f32.mxu0 0.0
      %4088 = vmatmul.mubr.f32.gmra.mrb[0].mxu0 %v3927
      %v4089 = vpop.f32.mrb[0].mxu0
      %v4090 = vadd.f32 0.0, %v4089
      %v4091 = vpop.f32.mrb[0].mxu0
      %4092 = vmatprep.mubr.f32.mxu0 0.0
      %4093 = vmatmul.mubr.f32.gmra.mrb[0].mxu0 %v3929
      %v4094 = vpop.f32.mrb[0].mxu0
      %v4095 = vadd.f32 0.0, %v4094
      %v4096 = vpop.f32.mrb[0].mxu0
      %4097 = vmatprep.mubr.f32.mxu0 0.0
      %4098 = vmatmul.mubr.f32.gmra.mrb[0].mxu0 %v3931
      %v4099 = vpop.f32.mrb[0].mxu0
      %v4100 = vadd.f32 0.0, %v4099
      %v4101 = vpop.f32.mrb[0].mxu0
      %4102 = vmatprep.mubr.f32.mxu0 0.0
      %4103 = vmatmul.mubr.f32.gmra.mrb[0].mxu0 %v3933
      %v4104 = vpop.f32.mrb[0].mxu0
      %v4105 = vadd.f32 0.0, %v4104
      %v4106 = vpop.f32.mrb[0].mxu0
      %4107 = vmatprep.mubr.f32.mxu0 0.0
      %4108 = vmatmul.mubr.f32.gmra.mrb[0].mxu0 %v3935
      %v4109 = vpop.f32.mrb[0].mxu0
      %v4110 = vadd.f32 0.0, %v4109
      %v4111 = vpop.f32.mrb[0].mxu0
      %4112 = vmatprep.mubr.f32.mxu0 0.0
      %4113 = vmatmul.mubr.f32.gmra.mrb[0].mxu0 %v3937
      %v4114 = vpop.f32.mrb[0].mxu0
      %v4115 = vadd.f32 0.0, %v4114
      %v4116 = vpop.f32.mrb[0].mxu0
      %4117 = vmatprep.mubr.f32.mxu0 0.0
      %4118 = vmatmul.mubr.f32.gmra.mrb[0].mxu0 %v3939
      %v4119 = vpop.f32.mrb[0].mxu0
      %v4120 = vadd.f32 0.0, %v4119
      %v4121 = vpop.f32.mrb[0].mxu0
      %4122 = vmatprep.mubr.f32.mxu0 0.0
      %4123 = vmatmul.mubr.f32.gmra.mrb[0].mxu0 %v3941
      %v4124 = vpop.f32.mrb[0].mxu0
      %v4125 = vadd.f32 0.0, %v4124
      %v4126 = vpop.f32.mrb[0].mxu0
      %4127 = vmatprep.mubr.f32.mxu0 0.0
      %4128 = vmatmul.mubr.f32.gmra.mrb[0].mxu0 %v3943
      %v4129 = vpop.f32.mrb[0].mxu0
      %v4130 = vadd.f32 0.0, %v4129
      %v4131 = vpop.f32.mrb[0].mxu0
      %4132 = vmatprep.mubr.f32.mxu0 0.0
      %4133 = vmatmul.mubr.f32.gmra.mrb[0].mxu0 %v3945
      %v4134 = vpop.f32.mrb[0].mxu0
      %v4135 = vadd.f32 0.0, %v4134
      %v4136 = vpop.f32.mrb[0].mxu0
      %4137 = vmatprep.mubr.f32.mxu0 0.0
      %4138 = vmatmul.mubr.f32.gmra.mrb[0].mxu0 %v3947
      %v4139 = vpop.f32.mrb[0].mxu0
      %v4140 = vadd.f32 0.0, %v4139
      %v4141 = vpop.f32.mrb[0].mxu0
      %4142 = vmatprep.mubr.f32.mxu0 0.0
      %4143 = vmatmul.mubr.f32.gmra.mrb[0].mxu0 %v3949
      %v4144 = vpop.f32.mrb[0].mxu0
      %v4145 = vadd.f32 0.0, %v4144
      %v4146 = vpop.f32.mrb[0].mxu0
      %4147 = vmatprep.mubr.f32.mxu0 0.0
      %4148 = vmatmul.mubr.f32.gmra.mrb[0].mxu0 %v3951
      %v4149 = vpop.f32.mrb[0].mxu0
      %v4150 = vadd.f32 0.0, %v4149
      %v4151 = vpop.f32.mrb[0].mxu0
      %4152 = vmatprep.mubr.f32.mxu0 0.0
      %4153 = vmatmul.mubr.f32.gmra.mrb[0].mxu0 %v3953
      %v4154 = vpop.f32.mrb[0].mxu0
      %v4155 = vadd.f32 0.0, %v4154
      %v4156 = vpop.f32.mrb[0].mxu0
      %4157 = vmatprep.mubr.f32.mxu0 0.0
      %4158 = vmatmul.mubr.f32.gmra.mrb[0].mxu0 %v3955
      %v4159 = vpop.f32.mrb[0].mxu0
      %v4160 = vadd.f32 0.0, %v4159
      %v4161 = vpop.f32.mrb[0].mxu0
      %4162 = vmatprep.mubr.f32.mxu0 0.0
      %4163 = vmatmul.mubr.f32.gmra.mrb[0].mxu0 %v3957
      %v4164 = vpop.f32.mrb[0].mxu0
      %v4165 = vadd.f32 0.0, %v4164
      %v4166 = vpop.f32.mrb[0].mxu0
      %4167 = vmatprep.mubr.f32.mxu0 0.0
      %4168 = vmatmul.mubr.f32.gmra.mrb[0].mxu0 %v3959
      %v4169 = vpop.f32.mrb[0].mxu0
      %v4170 = vadd.f32 0.0, %v4169
      %v4171 = vpop.f32.mrb[0].mxu0
      %4172 = vmatprep.mubr.f32.mxu0 0.0
      %4173 = vmatmul.mubr.f32.gmra.mrb[0].mxu0 %v3961
      %v4174 = vpop.f32.mrb[0].mxu0
      %v4175 = vadd.f32 0.0, %v4174
      %v4176 = vpop.f32.mrb[0].mxu0
      %4177 = vmatprep.mubr.f32.mxu0 0.0
      %4178 = vmatmul.mubr.f32.gmra.mrb[0].mxu0 %v3963
      %v4179 = vpop.f32.mrb[0].mxu0
      %v4180 = vadd.f32 0.0, %v4179
      %v4181 = vpop.f32.mrb[0].mxu0
      %4182 = vmatprep.mubr.f32.mxu0 0.0
      %4183 = vmatmul.mubr.f32.gmra.mrb[0].mxu0 %v3965
      %v4184 = vpop.f32.mrb[0].mxu0
      %v4185 = vadd.f32 0.0, %v4184
      %v4186 = vpop.f32.mrb[0].mxu0
      %4187 = vmatprep.mubr.f32.mxu0 0.0
      %4188 = vmatmul.mubr.f32.gmra.mrb[0].mxu0 %v3967
      %v4189 = vpop.f32.mrb[0].mxu0
      %v4190 = vadd.f32 0.0, %v4189
      %v4191 = vpop.f32.mrb[0].mxu0
      %4192 = vmatprep.mubr.f32.mxu0 0.0
      %4193 = vmatmul.mubr.f32.gmra.mrb[0].mxu0 %v3969
      %v4194 = vpop.f32.mrb[0].mxu0
      %v4195 = vadd.f32 0.0, %v4194
      %v4196 = vpop.f32.mrb[0].mxu0
      %4197 = vmatprep.mubr.f32.mxu0 0.0
      %4198 = vmatmul.mubr.f32.gmra.mrb[0].mxu0 %v3971
      %v4199 = vpop.f32.mrb[0].mxu0
      %v4200 = vadd.f32 0.0, %v4199
      %v4201 = vpop.f32.mrb[0].mxu0
      %4202 = vmatprep.mubr.f32.mxu0 0.0
      %4203 = vmatmul.mubr.f32.gmra.mrb[0].mxu0 %v3973
      %v4204 = vpop.f32.mrb[0].mxu0
      %v4205 = vadd.f32 0.0, %v4204
      %v4206 = vpop.f32.mrb[0].mxu0
      %4207 = vmatprep.mubr.f32.mxu0 0.0
      %4208 = vmatmul.mubr.f32.gmra.mrb[0].mxu0 %v3975
      %v4209 = vpop.f32.mrb[0].mxu0
      %v4210 = vadd.f32 0.0, %v4209
      %v4211 = vpop.f32.mrb[0].mxu0
      %4212 = vmatprep.mubr.f32.mxu0 0.0
      %4213 = vmatmul.mubr.f32.gmra.mrb[0].mxu0 %v3977
      %v4214 = vpop.f32.mrb[0].mxu0
      %v4215 = vadd.f32 0.0, %v4214
      %v4216 = vpop.f32.mrb[0].mxu0
      %4217 = vmatprep.mubr.f32.mxu0 0.0
      %4218 = vmatmul.mubr.f32.gmra.mrb[0].mxu0 %v3979
      %v4219 = vpop.f32.mrb[0].mxu0
      %v4220 = vadd.f32 0.0, %v4219
      %v4221 = vpop.f32.mrb[0].mxu0
      %4222 = vmatprep.mubr.f32.mxu0 0.0
      %4223 = vmatmul.mubr.f32.gmra.mrb[0].mxu0 %v3981
      %v4224 = vpop.f32.mrb[0].mxu0
      %v4225 = vadd.f32 0.0, %v4224
      %v4226 = vpop.f32.mrb[0].mxu0
      %4227 = vmatprep.mubr.f32.mxu0 0.0
      %4228 = vmatmul.mubr.f32.gmra.mrb[0].mxu0 %v3983
      %v4229 = vpop.f32.mrb[0].mxu0
      %v4230 = vadd.f32 0.0, %v4229
      %v4231 = vpop.f32.mrb[0].mxu0
      %4232 = vdwg.mxu0
      %v4233 = vadd.f32 %v3802, %v4055
      %v4234 = vadd.f32 %v3803, %v4060
      %v4235 = vadd.f32 %v3804, %v4065
      %v4236 = vadd.f32 %v3805, %v4070
      %v4237 = vadd.f32 %v3806, %v4075
      %v4238 = vadd.f32 %v3807, %v4080
      %v4239 = vadd.f32 %v3808, %v4085
      %v4240 = vadd.f32 %v3809, %v4090
      %v4241 = vadd.f32 %v3810, %v4095
      %v4242 = vadd.f32 %v3811, %v4100
      %v4243 = vadd.f32 %v3812, %v4105
      %v4244 = vadd.f32 %v3813, %v4110
      %v4245 = vadd.f32 %v3814, %v4115
      %v4246 = vadd.f32 %v3815, %v4120
      %v4247 = vadd.f32 %v3816, %v4125
      %v4248 = vadd.f32 %v3817, %v4130
      %v4249 = vadd.f32 %v3818, %v4135
      %v4250 = vadd.f32 %v3819, %v4140
      %v4251 = vadd.f32 %v3820, %v4145
      %v4252 = vadd.f32 %v3821, %v4150
      %v4253 = vadd.f32 %v3822, %v4155
      %v4254 = vadd.f32 %v3823, %v4160
      %v4255 = vadd.f32 %v3824, %v4165
      %v4256 = vadd.f32 %v3825, %v4170
      %v4257 = vadd.f32 %v3826, %v4175
      %v4258 = vadd.f32 %v3827, %v4180
      %v4259 = vadd.f32 %v3828, %v4185
      %v4260 = vadd.f32 %v3829, %v4190
      %v4261 = vadd.f32 %v3830, %v4195
      %v4262 = vadd.f32 %v3831, %v4200
      %v4263 = vadd.f32 %v3832, %v4205
      %v4264 = vadd.f32 %v3833, %v4210
      %v4265 = vadd.f32 %v3834, %v4215
      %v4266 = vadd.f32 %v3835, %v4220
      %v4267 = vadd.f32 %v3836, %v4225
      %v4268 = vadd.f32 %v3837, %v4230
      %v4269 = vcombine.low %v1274, %v1282
      %v4270 = vcombine.low %v1290, %v1289
      %v4272 = vunpack.c.l.s4 1983009808
      %v4273 = vunpack.c.0.s8 %v4272
      %v4274 = vlaneseq
      %v4275 = vshrl.u32 %v4274, 7
      %v4276 = vsub.s32 %v4273, %v4275
      %v4277 = vrot.slane %v4269, %v4276
      %v4279 = vunpack.c.l.s4 1983009808
      %v4280 = vunpack.c.0.s8 %v4279
      %v4281 = vlaneseq
      %v4282 = vshrl.u32 %v4281, 7
      %v4283 = vsub.s32 %v4280, %v4282
      %v4284 = vrot.slane %v4270, %v4283
      %v4285 = vcombine.low %v4277, %v4284
      %v4286 = vcombine.low %v1291, %v1298
      %v4288 = vunpack.c.l.s4 1983009808
      %v4289 = vunpack.c.0.s8 %v4288
      %v4290 = vlaneseq
      %v4291 = vshrl.u32 %v4290, 7
      %v4292 = vsub.s32 %v4289, %v4291
      %v4293 = vrot.slane %v4286, %v4292
      %vm4296 = vcmask 1047556
      %v4297 = vrot.slane %v1316, 4
      %v4298 = vsel %vm4296, %v4297, %v4293
      %s4299 = scalar_lea.vmem %s1, 24
      %v4300 = vld [vmem:[%s4299] sm:$0xf]
      %v4302 = vrot.slane %v4285, 4
      %v4303 = vsel %vm2077, %v3911, %v4302
      %v4304 = vrot.slane %v4298, 4
      %v4305 = vsel %vm2077, %v4302, %v4304
      %v4306 = vsel %vm378, %v4303, 0
      %v4308 = vsel %vm378, %v4305, 0
      %v4311 = vsel %vm2077, %v4300, 0
      %4313 = vmatprep.subr.mxu0 0.0
      %4314 = vmatpush1.msra.mxu0 %v4311
      %4315 = vmatprep.subr.mxu0 0.0
      %4316 = vmatpush1.msra.mxu0 0.0
      %4317 = vmatprep.subr.mxu0 0.0
      %4318 = vmatpush1.msra.mxu0 0.0
      %4319 = vmatprep.subr.mxu0 0.0
      %4320 = vmatpush1.msra.mxu0 0.0
      %4321 = vmatprep.subr.mxu0 0.0
      %4322 = vmatpush1.msra.mxu0 0.0
      %4323 = vmatprep.subr.mxu0 0.0
      %4324 = vmatpush1.msra.mxu0 0.0
      %4325 = vmatprep.subr.mxu0 0.0
      %4326 = vmatpush1.msra.mxu0 0.0
      %4327 = vmatprep.subr.mxu0 0.0
      %4328 = vmatpush1.msra.mxu0 0.0
      %4329 = vmatprep.subr.mxu0 0.0
      %4330 = vmatpush1.msra.mxu0 0.0
      %4331 = vmatprep.subr.mxu0 0.0
      %4332 = vmatpush1.msra.mxu0 0.0
      %4333 = vmatprep.subr.mxu0 0.0
      %4334 = vmatpush1.msra.mxu0 0.0
      %4335 = vmatprep.subr.mxu0 0.0
      %4336 = vmatpush1.msra.mxu0 0.0
      %4337 = vmatprep.subr.mxu0 0.0
      %4338 = vmatpush1.msra.mxu0 0.0
      %4339 = vmatprep.subr.mxu0 0.0
      %4340 = vmatpush1.msra.mxu0 0.0
      %4341 = vmatprep.subr.mxu0 0.0
      %4342 = vmatpush1.msra.mxu0 0.0
      %4343 = vmatprep.subr.mxu0 0.0
      %4344 = vmatpush1.msra.mxu0 0.0
      %4345 = vmatprep.subr.mxu0 0.0
      %4346 = vmatpush1.msra.mxu0 0.0
      %4347 = vmatprep.subr.mxu0 0.0
      %4348 = vmatpush1.msra.mxu0 0.0
      %4349 = vmatprep.subr.mxu0 0.0
      %4350 = vmatpush1.msra.mxu0 0.0
      %4351 = vmatprep.subr.mxu0 0.0
      %4352 = vmatpush1.msra.mxu0 0.0
      %4353 = vmatprep.subr.mxu0 0.0
      %4354 = vmatpush1.msra.mxu0 0.0
      %4355 = vmatprep.subr.mxu0 0.0
      %4356 = vmatpush1.msra.mxu0 0.0
      %4357 = vmatprep.subr.mxu0 0.0
      %4358 = vmatpush1.msra.mxu0 0.0
      %4359 = vmatprep.subr.mxu0 0.0
      %4360 = vmatpush1.msra.mxu0 0.0
      %4361 = vmatprep.subr.mxu0 0.0
      %4362 = vmatpush1.msra.mxu0 0.0
      %4363 = vmatprep.subr.mxu0 0.0
      %4364 = vmatpush1.msra.mxu0 0.0
      %4365 = vmatprep.subr.mxu0 0.0
      %4366 = vmatpush1.msra.mxu0 0.0
      %4367 = vmatprep.subr.mxu0 0.0
      %4368 = vmatpush1.msra.mxu0 0.0
      %4369 = vmatprep.subr.mxu0 0.0
      %4370 = vmatpush1.msra.mxu0 0.0
      %4371 = vmatprep.subr.mxu0 0.0
      %4372 = vmatpush1.msra.mxu0 0.0
      %4373 = vmatprep.subr.mxu0 0.0
      %4374 = vmatpush1.msra.mxu0 0.0
      %4375 = vmatprep.subr.mxu0 0.0
      %4376 = vmatpush1.msra.mxu0 0.0
      %4377 = vmatprep.mubr.f32.mxu0 0.0
      %4378 = vmatmul.mubr.f32.gmra.mrb[0].mxu0 %v3917
      %v4379 = vpop.f32.mrb[0].mxu0
      %v4380 = vadd.f32 0.0, %v4379
      %v4381 = vpop.f32.mrb[0].mxu0
      %4382 = vmatprep.mubr.f32.mxu0 0.0
      %4383 = vmatmul.mubr.f32.gmra.mrb[0].mxu0 %v3919
      %v4384 = vpop.f32.mrb[0].mxu0
      %v4385 = vadd.f32 0.0, %v4384
      %v4386 = vpop.f32.mrb[0].mxu0
      %4387 = vmatprep.mubr.f32.mxu0 0.0
      %4388 = vmatmul.mubr.f32.gmra.mrb[0].mxu0 %v3921
      %v4389 = vpop.f32.mrb[0].mxu0
      %v4390 = vadd.f32 0.0, %v4389
      %v4391 = vpop.f32.mrb[0].mxu0
      %4392 = vmatprep.mubr.f32.mxu0 0.0
      %4393 = vmatmul.mubr.f32.gmra.mrb[0].mxu0 %v3923
      %v4394 = vpop.f32.mrb[0].mxu0
      %v4395 = vadd.f32 0.0, %v4394
      %v4396 = vpop.f32.mrb[0].mxu0
      %4397 = vmatprep.mubr.f32.mxu0 0.0
      %4398 = vmatmul.mubr.f32.gmra.mrb[0].mxu0 %v3925
      %v4399 = vpop.f32.mrb[0].mxu0
      %v4400 = vadd.f32 0.0, %v4399
      %v4401 = vpop.f32.mrb[0].mxu0
      %4402 = vmatprep.mubr.f32.mxu0 0.0
      %4403 = vmatmul.mubr.f32.gmra.mrb[0].mxu0 %v3927
      %v4404 = vpop.f32.mrb[0].mxu0
      %v4405 = vadd.f32 0.0, %v4404
      %v4406 = vpop.f32.mrb[0].mxu0
      %4407 = vmatprep.mubr.f32.mxu0 0.0
      %4408 = vmatmul.mubr.f32.gmra.mrb[0].mxu0 %v3929
      %v4409 = vpop.f32.mrb[0].mxu0
      %v4410 = vadd.f32 0.0, %v4409
      %v4411 = vpop.f32.mrb[0].mxu0
      %4412 = vmatprep.mubr.f32.mxu0 0.0
      %4413 = vmatmul.mubr.f32.gmra.mrb[0].mxu0 %v3931
      %v4414 = vpop.f32.mrb[0].mxu0
      %v4415 = vadd.f32 0.0, %v4414
      %v4416 = vpop.f32.mrb[0].mxu0
      %4417 = vmatprep.mubr.f32.mxu0 0.0
      %4418 = vmatmul.mubr.f32.gmra.mrb[0].mxu0 %v3933
      %v4419 = vpop.f32.mrb[0].mxu0
      %v4420 = vadd.f32 0.0, %v4419
      %v4421 = vpop.f32.mrb[0].mxu0
      %4422 = vmatprep.mubr.f32.mxu0 0.0
      %4423 = vmatmul.mubr.f32.gmra.mrb[0].mxu0 %v3935
      %v4424 = vpop.f32.mrb[0].mxu0
      %v4425 = vadd.f32 0.0, %v4424
      %v4426 = vpop.f32.mrb[0].mxu0
      %4427 = vmatprep.mubr.f32.mxu0 0.0
      %4428 = vmatmul.mubr.f32.gmra.mrb[0].mxu0 %v3937
      %v4429 = vpop.f32.mrb[0].mxu0
      %v4430 = vadd.f32 0.0, %v4429
      %v4431 = vpop.f32.mrb[0].mxu0
      %4432 = vmatprep.mubr.f32.mxu0 0.0
      %4433 = vmatmul.mubr.f32.gmra.mrb[0].mxu0 %v3939
      %v4434 = vpop.f32.mrb[0].mxu0
      %v4435 = vadd.f32 0.0, %v4434
      %v4436 = vpop.f32.mrb[0].mxu0
      %4437 = vmatprep.mubr.f32.mxu0 0.0
      %4438 = vmatmul.mubr.f32.gmra.mrb[0].mxu0 %v3941
      %v4439 = vpop.f32.mrb[0].mxu0
      %v4440 = vadd.f32 0.0, %v4439
      %v4441 = vpop.f32.mrb[0].mxu0
      %4442 = vmatprep.mubr.f32.mxu0 0.0
      %4443 = vmatmul.mubr.f32.gmra.mrb[0].mxu0 %v3943
      %v4444 = vpop.f32.mrb[0].mxu0
      %v4445 = vadd.f32 0.0, %v4444
      %v4446 = vpop.f32.mrb[0].mxu0
      %4447 = vmatprep.mubr.f32.mxu0 0.0
      %4448 = vmatmul.mubr.f32.gmra.mrb[0].mxu0 %v3945
      %v4449 = vpop.f32.mrb[0].mxu0
      %v4450 = vadd.f32 0.0, %v4449
      %v4451 = vpop.f32.mrb[0].mxu0
      %4452 = vmatprep.mubr.f32.mxu0 0.0
      %4453 = vmatmul.mubr.f32.gmra.mrb[0].mxu0 %v3947
      %v4454 = vpop.f32.mrb[0].mxu0
      %v4455 = vadd.f32 0.0, %v4454
      %v4456 = vpop.f32.mrb[0].mxu0
      %4457 = vmatprep.mubr.f32.mxu0 0.0
      %4458 = vmatmul.mubr.f32.gmra.mrb[0].mxu0 %v3949
      %v4459 = vpop.f32.mrb[0].mxu0
      %v4460 = vadd.f32 0.0, %v4459
      %v4461 = vpop.f32.mrb[0].mxu0
      %4462 = vmatprep.mubr.f32.mxu0 0.0
      %4463 = vmatmul.mubr.f32.gmra.mrb[0].mxu0 %v3951
      %v4464 = vpop.f32.mrb[0].mxu0
      %v4465 = vadd.f32 0.0, %v4464
      %v4466 = vpop.f32.mrb[0].mxu0
      %4467 = vmatprep.mubr.f32.mxu0 0.0
      %4468 = vmatmul.mubr.f32.gmra.mrb[0].mxu0 %v3953
      %v4469 = vpop.f32.mrb[0].mxu0
      %v4470 = vadd.f32 0.0, %v4469
      %v4471 = vpop.f32.mrb[0].mxu0
      %4472 = vmatprep.mubr.f32.mxu0 0.0
      %4473 = vmatmul.mubr.f32.gmra.mrb[0].mxu0 %v3955
      %v4474 = vpop.f32.mrb[0].mxu0
      %v4475 = vadd.f32 0.0, %v4474
      %v4476 = vpop.f32.mrb[0].mxu0
      %4477 = vmatprep.mubr.f32.mxu0 0.0
      %4478 = vmatmul.mubr.f32.gmra.mrb[0].mxu0 %v3957
      %v4479 = vpop.f32.mrb[0].mxu0
      %v4480 = vadd.f32 0.0, %v4479
      %v4481 = vpop.f32.mrb[0].mxu0
      %4482 = vmatprep.mubr.f32.mxu0 0.0
      %4483 = vmatmul.mubr.f32.gmra.mrb[0].mxu0 %v3959
      %v4484 = vpop.f32.mrb[0].mxu0
      %v4485 = vadd.f32 0.0, %v4484
      %v4486 = vpop.f32.mrb[0].mxu0
      %4487 = vmatprep.mubr.f32.mxu0 0.0
      %4488 = vmatmul.mubr.f32.gmra.mrb[0].mxu0 %v3961
      %v4489 = vpop.f32.mrb[0].mxu0
      %v4490 = vadd.f32 0.0, %v4489
      %v4491 = vpop.f32.mrb[0].mxu0
      %4492 = vmatprep.mubr.f32.mxu0 0.0
      %4493 = vmatmul.mubr.f32.gmra.mrb[0].mxu0 %v3963
      %v4494 = vpop.f32.mrb[0].mxu0
      %v4495 = vadd.f32 0.0, %v4494
      %v4496 = vpop.f32.mrb[0].mxu0
      %4497 = vmatprep.mubr.f32.mxu0 0.0
      %4498 = vmatmul.mubr.f32.gmra.mrb[0].mxu0 %v3965
      %v4499 = vpop.f32.mrb[0].mxu0
      %v4500 = vadd.f32 0.0, %v4499
      %v4501 = vpop.f32.mrb[0].mxu0
      %4502 = vmatprep.mubr.f32.mxu0 0.0
      %4503 = vmatmul.mubr.f32.gmra.mrb[0].mxu0 %v3967
      %v4504 = vpop.f32.mrb[0].mxu0
      %v4505 = vadd.f32 0.0, %v4504
      %v4506 = vpop.f32.mrb[0].mxu0
      %4507 = vmatprep.mubr.f32.mxu0 0.0
      %4508 = vmatmul.mubr.f32.gmra.mrb[0].mxu0 %v3969
      %v4509 = vpop.f32.mrb[0].mxu0
      %v4510 = vadd.f32 0.0, %v4509
      %v4511 = vpop.f32.mrb[0].mxu0
      %4512 = vmatprep.mubr.f32.mxu0 0.0
      %4513 = vmatmul.mubr.f32.gmra.mrb[0].mxu0 %v3971
      %v4514 = vpop.f32.mrb[0].mxu0
      %v4515 = vadd.f32 0.0, %v4514
      %v4516 = vpop.f32.mrb[0].mxu0
      %4517 = vmatprep.mubr.f32.mxu0 0.0
      %4518 = vmatmul.mubr.f32.gmra.mrb[0].mxu0 %v3973
      %v4519 = vpop.f32.mrb[0].mxu0
      %v4520 = vadd.f32 0.0, %v4519
      %v4521 = vpop.f32.mrb[0].mxu0
      %4522 = vmatprep.mubr.f32.mxu0 0.0
      %4523 = vmatmul.mubr.f32.gmra.mrb[0].mxu0 %v3975
      %v4524 = vpop.f32.mrb[0].mxu0
      %v4525 = vadd.f32 0.0, %v4524
      %v4526 = vpop.f32.mrb[0].mxu0
      %4527 = vmatprep.mubr.f32.mxu0 0.0
      %4528 = vmatmul.mubr.f32.gmra.mrb[0].mxu0 %v3977
      %v4529 = vpop.f32.mrb[0].mxu0
      %v4530 = vadd.f32 0.0, %v4529
      %v4531 = vpop.f32.mrb[0].mxu0
      %4532 = vmatprep.mubr.f32.mxu0 0.0
      %4533 = vmatmul.mubr.f32.gmra.mrb[0].mxu0 %v3979
      %v4534 = vpop.f32.mrb[0].mxu0
      %v4535 = vadd.f32 0.0, %v4534
      %v4536 = vpop.f32.mrb[0].mxu0
      %4537 = vmatprep.mubr.f32.mxu0 0.0
      %4538 = vmatmul.mubr.f32.gmra.mrb[0].mxu0 %v3981
      %v4539 = vpop.f32.mrb[0].mxu0
      %v4540 = vadd.f32 0.0, %v4539
      %v4541 = vpop.f32.mrb[0].mxu0
      %4542 = vmatprep.mubr.f32.mxu0 0.0
      %4543 = vmatmul.mubr.f32.gmra.mrb[0].mxu0 %v3983
      %v4544 = vpop.f32.mrb[0].mxu0
      %v4545 = vadd.f32 0.0, %v4544
      %v4546 = vpop.f32.mrb[0].mxu0
      %4547 = vmatprep.mubr.f32.mxu0 0.0
      %4548 = vmatmul.mubr.f32.gmra.mrb[0].mxu0 %v4306
      %v4549 = vpop.f32.mrb[0].mxu0
      %v4550 = vadd.f32 0.0, %v4549
      %v4551 = vpop.f32.mrb[0].mxu0
      %4552 = vmatprep.mubr.f32.mxu0 0.0
      %4553 = vmatmul.mubr.f32.gmra.mrb[0].mxu0 %v4308
      %v4554 = vpop.f32.mrb[0].mxu0
      %v4555 = vadd.f32 0.0, %v4554
      %v4556 = vpop.f32.mrb[0].mxu0
      %4557 = vdwg.mxu0
      %v4558 = vadd.f32 %v4233, %v4380
      %v4559 = vadd.f32 %v4234, %v4385
      %v4560 = vadd.f32 %v4235, %v4390
      %v4561 = vadd.f32 %v4236, %v4395
      %v4562 = vadd.f32 %v4237, %v4400
      %v4563 = vadd.f32 %v4238, %v4405
      %v4564 = vadd.f32 %v4239, %v4410
      %v4565 = vadd.f32 %v4240, %v4415
      %v4566 = vadd.f32 %v4241, %v4420
      %v4567 = vadd.f32 %v4242, %v4425
      %v4568 = vadd.f32 %v4243, %v4430
      %v4569 = vadd.f32 %v4244, %v4435
      %v4570 = vadd.f32 %v4245, %v4440
      %v4571 = vadd.f32 %v4246, %v4445
      %v4572 = vadd.f32 %v4247, %v4450
      %v4573 = vadd.f32 %v4248, %v4455
      %v4574 = vadd.f32 %v4249, %v4460
      %v4575 = vadd.f32 %v4250, %v4465
      %v4576 = vadd.f32 %v4251, %v4470
      %v4577 = vadd.f32 %v4252, %v4475
      %v4578 = vadd.f32 %v4253, %v4480
      %v4579 = vadd.f32 %v4254, %v4485
      %v4580 = vadd.f32 %v4255, %v4490
      %v4581 = vadd.f32 %v4256, %v4495
      %v4582 = vadd.f32 %v4257, %v4500
      %v4583 = vadd.f32 %v4258, %v4505
      %v4584 = vadd.f32 %v4259, %v4510
      %v4585 = vadd.f32 %v4260, %v4515
      %v4586 = vadd.f32 %v4261, %v4520
      %v4587 = vadd.f32 %v4262, %v4525
      %v4588 = vadd.f32 %v4263, %v4530
      %v4589 = vadd.f32 %v4264, %v4535
      %v4590 = vadd.f32 %v4265, %v4540
      %v4591 = vadd.f32 %v4266, %v4545
      %v4592 = vadd.f32 %v4267, %v4550
      %v4593 = vadd.f32 %v4268, %v4555
      %s4594 = scalar_lea.vmem %s1, 28
      %v4595 = vld [vmem:[%s4594] sm:$0xf]
      %vm4596 = vcmask 1042432
      %v4597 = vrot.slane %v1384, 5
      %v4598 = vrot.slane %v1401, 5
      %v4599 = vsel %vm4596, %v4597, %v4598
      %v4600 = vrot.slane %v1418, 5
      %v4601 = vsel %vm4596, %v4598, %v4600
      %v4602 = vrot.slane %v1435, 5
      %v4603 = vsel %vm4596, %v4600, %v4602
      %v4604 = vrot.slane %v1452, 5
      %v4605 = vsel %vm4596, %v4602, %v4604
      %v4606 = vrot.slane %v1469, 5
      %v4607 = vsel %vm4596, %v4604, %v4606
      %v4608 = vrot.slane %v1486, 5
      %v4609 = vsel %vm4596, %v4606, %v4608
      %v4610 = vrot.slane %v1503, 5
      %v4611 = vsel %vm4596, %v4608, %v4610
      %v4612 = vrot.slane %v1520, 5
      %v4613 = vsel %vm4596, %v4610, %v4612
      %v4614 = vrot.slane %v1537, 5
      %v4615 = vsel %vm4596, %v4612, %v4614
      %v4616 = vrot.slane %v1554, 5
      %v4617 = vsel %vm4596, %v4614, %v4616
      %v4618 = vrot.slane %v1571, 5
      %v4619 = vsel %vm4596, %v4616, %v4618
      %v4620 = vrot.slane %v1588, 5
      %v4621 = vsel %vm4596, %v4618, %v4620
      %v4622 = vrot.slane %v1605, 5
      %v4623 = vsel %vm4596, %v4620, %v4622
      %v4624 = vrot.slane %v1622, 5
      %v4625 = vsel %vm4596, %v4622, %v4624
      %v4626 = vrot.slane %v1639, 5
      %v4627 = vsel %vm4596, %v4624, %v4626
      %v4628 = vrot.slane %v1656, 5
      %v4629 = vsel %vm4596, %v4626, %v4628
      %v4630 = vrot.slane %v1673, 5
      %v4631 = vsel %vm4596, %v4628, %v4630
      %v4632 = vrot.slane %v1690, 5
      %v4633 = vsel %vm4596, %v4630, %v4632
      %v4634 = vrot.slane %v1707, 5
      %v4635 = vsel %vm4596, %v4632, %v4634
      %v4636 = vrot.slane %v1724, 5
      %v4637 = vsel %vm4596, %v4634, %v4636
      %v4638 = vrot.slane %v1741, 5
      %v4639 = vsel %vm4596, %v4636, %v4638
      %v4640 = vrot.slane %v1758, 5
      %v4641 = vsel %vm4596, %v4638, %v4640
      %v4642 = vrot.slane %v1775, 5
      %v4643 = vsel %vm4596, %v4640, %v4642
      %v4644 = vrot.slane %v1792, 5
      %v4645 = vsel %vm4596, %v4642, %v4644
      %v4646 = vrot.slane %v1809, 5
      %v4647 = vsel %vm4596, %v4644, %v4646
      %v4648 = vrot.slane %v1826, 5
      %v4649 = vsel %vm4596, %v4646, %v4648
      %v4650 = vrot.slane %v1843, 5
      %v4651 = vsel %vm4596, %v4648, %v4650
      %v4652 = vrot.slane %v1860, 5
      %v4653 = vsel %vm4596, %v4650, %v4652
      %v4654 = vrot.slane %v1877, 5
      %v4655 = vsel %vm4596, %v4652, %v4654
      %v4656 = vrot.slane %v1894, 5
      %v4657 = vsel %vm4596, %v4654, %v4656
      %v4658 = vrot.slane %v1911, 5
      %v4659 = vsel %vm4596, %v4656, %v4658
      %v4660 = vrot.slane %v1928, 5
      %v4661 = vsel %vm4596, %v4658, %v4660
      %v4662 = vrot.slane %v3094, 5
      %v4663 = vsel %vm4596, %v4660, %v4662
      %v4664 = vrot.slane %v3111, 5
      %v4665 = vsel %vm4596, %v4662, %v4664
      %v4666 = vrot.slane %v4285, 5
      %v4667 = vsel %vm4596, %v4664, %v4666
      %v4668 = vrot.slane %v4298, 5
      %v4669 = vsel %vm4596, %v4666, %v4668
      %v4670 = vsel %vm378, %v4599, 0
      %v4672 = vsel %vm378, %v4601, 0
      %v4674 = vsel %vm378, %v4603, 0
      %v4676 = vsel %vm378, %v4605, 0
      %v4678 = vsel %vm378, %v4607, 0
      %v4680 = vsel %vm378, %v4609, 0
      %v4682 = vsel %vm378, %v4611, 0
      %v4684 = vsel %vm378, %v4613, 0
      %v4686 = vsel %vm378, %v4615, 0
      %v4688 = vsel %vm378, %v4617, 0
      %v4690 = vsel %vm378, %v4619, 0
      %v4692 = vsel %vm378, %v4621, 0
      %v4694 = vsel %vm378, %v4623, 0
      %v4696 = vsel %vm378, %v4625, 0
      %v4698 = vsel %vm378, %v4627, 0
      %v4700 = vsel %vm378, %v4629, 0
      %v4702 = vsel %vm378, %v4631, 0
      %v4704 = vsel %vm378, %v4633, 0
      %v4706 = vsel %vm378, %v4635, 0
      %v4708 = vsel %vm378, %v4637, 0
      %v4710 = vsel %vm378, %v4639, 0
      %v4712 = vsel %vm378, %v4641, 0
      %v4714 = vsel %vm378, %v4643, 0
      %v4716 = vsel %vm378, %v4645, 0
      %v4718 = vsel %vm378, %v4647, 0
      %v4720 = vsel %vm378, %v4649, 0
      %v4722 = vsel %vm378, %v4651, 0
      %v4724 = vsel %vm378, %v4653, 0
      %v4726 = vsel %vm378, %v4655, 0
      %v4728 = vsel %vm378, %v4657, 0
      %v4730 = vsel %vm378, %v4659, 0
      %v4732 = vsel %vm378, %v4661, 0
      %v4734 = vsel %vm378, %v4663, 0
      %v4736 = vsel %vm378, %v4665, 0
      %v4738 = vsel %vm378, %v4667, 0
      %v4740 = vsel %vm378, %v4669, 0
      %v4743 = vsel %vm2077, %v4595, 0
      %4745 = vmatprep.subr.mxu0 0.0
      %4746 = vmatpush1.msra.mxu0 %v4743
      %4747 = vmatprep.subr.mxu0 0.0
      %4748 = vmatpush1.msra.mxu0 0.0
      %4749 = vmatprep.subr.mxu0 0.0
      %4750 = vmatpush1.msra.mxu0 0.0
      %4751 = vmatprep.subr.mxu0 0.0
      %4752 = vmatpush1.msra.mxu0 0.0
      %4753 = vmatprep.subr.mxu0 0.0
      %4754 = vmatpush1.msra.mxu0 0.0
      %4755 = vmatprep.subr.mxu0 0.0
      %4756 = vmatpush1.msra.mxu0 0.0
      %4757 = vmatprep.subr.mxu0 0.0
      %4758 = vmatpush1.msra.mxu0 0.0
      %4759 = vmatprep.subr.mxu0 0.0
      %4760 = vmatpush1.msra.mxu0 0.0
      %4761 = vmatprep.subr.mxu0 0.0
      %4762 = vmatpush1.msra.mxu0 0.0
      %4763 = vmatprep.subr.mxu0 0.0
      %4764 = vmatpush1.msra.mxu0 0.0
      %4765 = vmatprep.subr.mxu0 0.0
      %4766 = vmatpush1.msra.mxu0 0.0
      %4767 = vmatprep.subr.mxu0 0.0
      %4768 = vmatpush1.msra.mxu0 0.0
      %4769 = vmatprep.subr.mxu0 0.0
      %4770 = vmatpush1.msra.mxu0 0.0
      %4771 = vmatprep.subr.mxu0 0.0
      %4772 = vmatpush1.msra.mxu0 0.0
      %4773 = vmatprep.subr.mxu0 0.0
      %4774 = vmatpush1.msra.mxu0 0.0
      %4775 = vmatprep.subr.mxu0 0.0
      %4776 = vmatpush1.msra.mxu0 0.0
      %4777 = vmatprep.subr.mxu0 0.0
      %4778 = vmatpush1.msra.mxu0 0.0
      %4779 = vmatprep.subr.mxu0 0.0
      %4780 = vmatpush1.msra.mxu0 0.0
      %4781 = vmatprep.subr.mxu0 0.0
      %4782 = vmatpush1.msra.mxu0 0.0
      %4783 = vmatprep.subr.mxu0 0.0
      %4784 = vmatpush1.msra.mxu0 0.0
      %4785 = vmatprep.subr.mxu0 0.0
      %4786 = vmatpush1.msra.mxu0 0.0
      %4787 = vmatprep.subr.mxu0 0.0
      %4788 = vmatpush1.msra.mxu0 0.0
      %4789 = vmatprep.subr.mxu0 0.0
      %4790 = vmatpush1.msra.mxu0 0.0
      %4791 = vmatprep.subr.mxu0 0.0
      %4792 = vmatpush1.msra.mxu0 0.0
      %4793 = vmatprep.subr.mxu0 0.0
      %4794 = vmatpush1.msra.mxu0 0.0
      %4795 = vmatprep.subr.mxu0 0.0
      %4796 = vmatpush1.msra.mxu0 0.0
      %4797 = vmatprep.subr.mxu0 0.0
      %4798 = vmatpush1.msra.mxu0 0.0
      %4799 = vmatprep.subr.mxu0 0.0
      %4800 = vmatpush1.msra.mxu0 0.0
      %4801 = vmatprep.subr.mxu0 0.0
      %4802 = vmatpush1.msra.mxu0 0.0
      %4803 = vmatprep.subr.mxu0 0.0
      %4804 = vmatpush1.msra.mxu0 0.0
      %4805 = vmatprep.subr.mxu0 0.0
      %4806 = vmatpush1.msra.mxu0 0.0
      %4807 = vmatprep.subr.mxu0 0.0
      %4808 = vmatpush1.msra.mxu0 0.0
      %4809 = vmatprep.mubr.f32.mxu0 0.0
      %4810 = vmatmul.mubr.f32.gmra.mrb[0].mxu0 %v4670
      %v4811 = vpop.f32.mrb[0].mxu0
      %v4812 = vadd.f32 0.0, %v4811
      %v4813 = vpop.f32.mrb[0].mxu0
      %4814 = vmatprep.mubr.f32.mxu0 0.0
      %4815 = vmatmul.mubr.f32.gmra.mrb[0].mxu0 %v4672
      %v4816 = vpop.f32.mrb[0].mxu0
      %v4817 = vadd.f32 0.0, %v4816
      %v4818 = vpop.f32.mrb[0].mxu0
      %4819 = vmatprep.mubr.f32.mxu0 0.0
      %4820 = vmatmul.mubr.f32.gmra.mrb[0].mxu0 %v4674
      %v4821 = vpop.f32.mrb[0].mxu0
      %v4822 = vadd.f32 0.0, %v4821
      %v4823 = vpop.f32.mrb[0].mxu0
      %4824 = vmatprep.mubr.f32.mxu0 0.0
      %4825 = vmatmul.mubr.f32.gmra.mrb[0].mxu0 %v4676
      %v4826 = vpop.f32.mrb[0].mxu0
      %v4827 = vadd.f32 0.0, %v4826
      %v4828 = vpop.f32.mrb[0].mxu0
      %4829 = vmatprep.mubr.f32.mxu0 0.0
      %4830 = vmatmul.mubr.f32.gmra.mrb[0].mxu0 %v4678
      %v4831 = vpop.f32.mrb[0].mxu0
      %v4832 = vadd.f32 0.0, %v4831
      %v4833 = vpop.f32.mrb[0].mxu0
      %4834 = vmatprep.mubr.f32.mxu0 0.0
      %4835 = vmatmul.mubr.f32.gmra.mrb[0].mxu0 %v4680
      %v4836 = vpop.f32.mrb[0].mxu0
      %v4837 = vadd.f32 0.0, %v4836
      %v4838 = vpop.f32.mrb[0].mxu0
      %4839 = vmatprep.mubr.f32.mxu0 0.0
      %4840 = vmatmul.mubr.f32.gmra.mrb[0].mxu0 %v4682
      %v4841 = vpop.f32.mrb[0].mxu0
      %v4842 = vadd.f32 0.0, %v4841
      %v4843 = vpop.f32.mrb[0].mxu0
      %4844 = vmatprep.mubr.f32.mxu0 0.0
      %4845 = vmatmul.mubr.f32.gmra.mrb[0].mxu0 %v4684
      %v4846 = vpop.f32.mrb[0].mxu0
      %v4847 = vadd.f32 0.0, %v4846
      %v4848 = vpop.f32.mrb[0].mxu0
      %4849 = vmatprep.mubr.f32.mxu0 0.0
      %4850 = vmatmul.mubr.f32.gmra.mrb[0].mxu0 %v4686
      %v4851 = vpop.f32.mrb[0].mxu0
      %v4852 = vadd.f32 0.0, %v4851
      %v4853 = vpop.f32.mrb[0].mxu0
      %4854 = vmatprep.mubr.f32.mxu0 0.0
      %4855 = vmatmul.mubr.f32.gmra.mrb[0].mxu0 %v4688
      %v4856 = vpop.f32.mrb[0].mxu0
      %v4857 = vadd.f32 0.0, %v4856
      %v4858 = vpop.f32.mrb[0].mxu0
      %4859 = vmatprep.mubr.f32.mxu0 0.0
      %4860 = vmatmul.mubr.f32.gmra.mrb[0].mxu0 %v4690
      %v4861 = vpop.f32.mrb[0].mxu0
      %v4862 = vadd.f32 0.0, %v4861
      %v4863 = vpop.f32.mrb[0].mxu0
      %4864 = vmatprep.mubr.f32.mxu0 0.0
      %4865 = vmatmul.mubr.f32.gmra.mrb[0].mxu0 %v4692
      %v4866 = vpop.f32.mrb[0].mxu0
      %v4867 = vadd.f32 0.0, %v4866
      %v4868 = vpop.f32.mrb[0].mxu0
      %4869 = vmatprep.mubr.f32.mxu0 0.0
      %4870 = vmatmul.mubr.f32.gmra.mrb[0].mxu0 %v4694
      %v4871 = vpop.f32.mrb[0].mxu0
      %v4872 = vadd.f32 0.0, %v4871
      %v4873 = vpop.f32.mrb[0].mxu0
      %4874 = vmatprep.mubr.f32.mxu0 0.0
      %4875 = vmatmul.mubr.f32.gmra.mrb[0].mxu0 %v4696
      %v4876 = vpop.f32.mrb[0].mxu0
      %v4877 = vadd.f32 0.0, %v4876
      %v4878 = vpop.f32.mrb[0].mxu0
      %4879 = vmatprep.mubr.f32.mxu0 0.0
      %4880 = vmatmul.mubr.f32.gmra.mrb[0].mxu0 %v4698
      %v4881 = vpop.f32.mrb[0].mxu0
      %v4882 = vadd.f32 0.0, %v4881
      %v4883 = vpop.f32.mrb[0].mxu0
      %4884 = vmatprep.mubr.f32.mxu0 0.0
      %4885 = vmatmul.mubr.f32.gmra.mrb[0].mxu0 %v4700
      %v4886 = vpop.f32.mrb[0].mxu0
      %v4887 = vadd.f32 0.0, %v4886
      %v4888 = vpop.f32.mrb[0].mxu0
      %4889 = vmatprep.mubr.f32.mxu0 0.0
      %4890 = vmatmul.mubr.f32.gmra.mrb[0].mxu0 %v4702
      %v4891 = vpop.f32.mrb[0].mxu0
      %v4892 = vadd.f32 0.0, %v4891
      %v4893 = vpop.f32.mrb[0].mxu0
      %4894 = vmatprep.mubr.f32.mxu0 0.0
      %4895 = vmatmul.mubr.f32.gmra.mrb[0].mxu0 %v4704
      %v4896 = vpop.f32.mrb[0].mxu0
      %v4897 = vadd.f32 0.0, %v4896
      %v4898 = vpop.f32.mrb[0].mxu0
      %4899 = vmatprep.mubr.f32.mxu0 0.0
      %4900 = vmatmul.mubr.f32.gmra.mrb[0].mxu0 %v4706
      %v4901 = vpop.f32.mrb[0].mxu0
      %v4902 = vadd.f32 0.0, %v4901
      %v4903 = vpop.f32.mrb[0].mxu0
      %4904 = vmatprep.mubr.f32.mxu0 0.0
      %4905 = vmatmul.mubr.f32.gmra.mrb[0].mxu0 %v4708
      %v4906 = vpop.f32.mrb[0].mxu0
      %v4907 = vadd.f32 0.0, %v4906
      %v4908 = vpop.f32.mrb[0].mxu0
      %4909 = vmatprep.mubr.f32.mxu0 0.0
      %4910 = vmatmul.mubr.f32.gmra.mrb[0].mxu0 %v4710
      %v4911 = vpop.f32.mrb[0].mxu0
      %v4912 = vadd.f32 0.0, %v4911
      %v4913 = vpop.f32.mrb[0].mxu0
      %4914 = vmatprep.mubr.f32.mxu0 0.0
      %4915 = vmatmul.mubr.f32.gmra.mrb[0].mxu0 %v4712
      %v4916 = vpop.f32.mrb[0].mxu0
      %v4917 = vadd.f32 0.0, %v4916
      %v4918 = vpop.f32.mrb[0].mxu0
      %4919 = vmatprep.mubr.f32.mxu0 0.0
      %4920 = vmatmul.mubr.f32.gmra.mrb[0].mxu0 %v4714
      %v4921 = vpop.f32.mrb[0].mxu0
      %v4922 = vadd.f32 0.0, %v4921
      %v4923 = vpop.f32.mrb[0].mxu0
      %4924 = vmatprep.mubr.f32.mxu0 0.0
      %4925 = vmatmul.mubr.f32.gmra.mrb[0].mxu0 %v4716
      %v4926 = vpop.f32.mrb[0].mxu0
      %v4927 = vadd.f32 0.0, %v4926
      %v4928 = vpop.f32.mrb[0].mxu0
      %4929 = vmatprep.mubr.f32.mxu0 0.0
      %4930 = vmatmul.mubr.f32.gmra.mrb[0].mxu0 %v4718
      %v4931 = vpop.f32.mrb[0].mxu0
      %v4932 = vadd.f32 0.0, %v4931
      %v4933 = vpop.f32.mrb[0].mxu0
      %4934 = vmatprep.mubr.f32.mxu0 0.0
      %4935 = vmatmul.mubr.f32.gmra.mrb[0].mxu0 %v4720
      %v4936 = vpop.f32.mrb[0].mxu0
      %v4937 = vadd.f32 0.0, %v4936
      %v4938 = vpop.f32.mrb[0].mxu0
      %4939 = vmatprep.mubr.f32.mxu0 0.0
      %4940 = vmatmul.mubr.f32.gmra.mrb[0].mxu0 %v4722
      %v4941 = vpop.f32.mrb[0].mxu0
      %v4942 = vadd.f32 0.0, %v4941
      %v4943 = vpop.f32.mrb[0].mxu0
      %4944 = vmatprep.mubr.f32.mxu0 0.0
      %4945 = vmatmul.mubr.f32.gmra.mrb[0].mxu0 %v4724
      %v4946 = vpop.f32.mrb[0].mxu0
      %v4947 = vadd.f32 0.0, %v4946
      %v4948 = vpop.f32.mrb[0].mxu0
      %4949 = vmatprep.mubr.f32.mxu0 0.0
      %4950 = vmatmul.mubr.f32.gmra.mrb[0].mxu0 %v4726
      %v4951 = vpop.f32.mrb[0].mxu0
      %v4952 = vadd.f32 0.0, %v4951
      %v4953 = vpop.f32.mrb[0].mxu0
      %4954 = vmatprep.mubr.f32.mxu0 0.0
      %4955 = vmatmul.mubr.f32.gmra.mrb[0].mxu0 %v4728
      %v4956 = vpop.f32.mrb[0].mxu0
      %v4957 = vadd.f32 0.0, %v4956
      %v4958 = vpop.f32.mrb[0].mxu0
      %4959 = vmatprep.mubr.f32.mxu0 0.0
      %4960 = vmatmul.mubr.f32.gmra.mrb[0].mxu0 %v4730
      %v4961 = vpop.f32.mrb[0].mxu0
      %v4962 = vadd.f32 0.0, %v4961
      %v4963 = vpop.f32.mrb[0].mxu0
      %4964 = vmatprep.mubr.f32.mxu0 0.0
      %4965 = vmatmul.mubr.f32.gmra.mrb[0].mxu0 %v4732
      %v4966 = vpop.f32.mrb[0].mxu0
      %v4967 = vadd.f32 0.0, %v4966
      %v4968 = vpop.f32.mrb[0].mxu0
      %4969 = vmatprep.mubr.f32.mxu0 0.0
      %4970 = vmatmul.mubr.f32.gmra.mrb[0].mxu0 %v4734
      %v4971 = vpop.f32.mrb[0].mxu0
      %v4972 = vadd.f32 0.0, %v4971
      %v4973 = vpop.f32.mrb[0].mxu0
      %4974 = vmatprep.mubr.f32.mxu0 0.0
      %4975 = vmatmul.mubr.f32.gmra.mrb[0].mxu0 %v4736
      %v4976 = vpop.f32.mrb[0].mxu0
      %v4977 = vadd.f32 0.0, %v4976
      %v4978 = vpop.f32.mrb[0].mxu0
      %4979 = vmatprep.mubr.f32.mxu0 0.0
      %4980 = vmatmul.mubr.f32.gmra.mrb[0].mxu0 %v4738
      %v4981 = vpop.f32.mrb[0].mxu0
      %v4982 = vadd.f32 0.0, %v4981
      %v4983 = vpop.f32.mrb[0].mxu0
      %4984 = vmatprep.mubr.f32.mxu0 0.0
      %4985 = vmatmul.mubr.f32.gmra.mrb[0].mxu0 %v4740
      %v4986 = vpop.f32.mrb[0].mxu0
      %v4987 = vadd.f32 0.0, %v4986
      %v4988 = vpop.f32.mrb[0].mxu0
      %4989 = vdwg.mxu0
      %v4990 = vadd.f32 %v4558, %v4812
      %v4991 = vadd.f32 %v4559, %v4817
      %v4992 = vadd.f32 %v4560, %v4822
      %v4993 = vadd.f32 %v4561, %v4827
      %v4994 = vadd.f32 %v4562, %v4832
      %v4995 = vadd.f32 %v4563, %v4837
      %v4996 = vadd.f32 %v4564, %v4842
      %v4997 = vadd.f32 %v4565, %v4847
      %v4998 = vadd.f32 %v4566, %v4852
      %v4999 = vadd.f32 %v4567, %v4857
      %v5000 = vadd.f32 %v4568, %v4862
      %v5001 = vadd.f32 %v4569, %v4867
      %v5002 = vadd.f32 %v4570, %v4872
      %v5003 = vadd.f32 %v4571, %v4877
      %v5004 = vadd.f32 %v4572, %v4882
      %v5005 = vadd.f32 %v4573, %v4887
      %v5006 = vadd.f32 %v4574, %v4892
      %v5007 = vadd.f32 %v4575, %v4897
      %v5008 = vadd.f32 %v4576, %v4902
      %v5009 = vadd.f32 %v4577, %v4907
      %v5010 = vadd.f32 %v4578, %v4912
      %v5011 = vadd.f32 %v4579, %v4917
      %v5012 = vadd.f32 %v4580, %v4922
      %v5013 = vadd.f32 %v4581, %v4927
      %v5014 = vadd.f32 %v4582, %v4932
      %v5015 = vadd.f32 %v4583, %v4937
      %v5016 = vadd.f32 %v4584, %v4942
      %v5017 = vadd.f32 %v4585, %v4947
      %v5018 = vadd.f32 %v4586, %v4952
      %v5019 = vadd.f32 %v4587, %v4957
      %v5020 = vadd.f32 %v4588, %v4962
      %v5021 = vadd.f32 %v4589, %v4967
      %v5022 = vadd.f32 %v4590, %v4972
      %v5023 = vadd.f32 %v4591, %v4977
      %v5024 = vadd.f32 %v4592, %v4982
      %v5025 = vadd.f32 %v4593, %v4987
      %s5026 = scalar_lea.vmem %s1, 32
      %v5027 = vld [vmem:[%s5026] sm:$0xf]
      %vm5028 = vcmask 1041408
      %v5029 = vrot.slane %v1384, 6
      %v5030 = vrot.slane %v1401, 6
      %v5031 = vsel %vm5028, %v5029, %v5030
      %v5032 = vrot.slane %v1418, 6
      %v5033 = vsel %vm5028, %v5030, %v5032
      %v5034 = vrot.slane %v1435, 6
      %v5035 = vsel %vm5028, %v5032, %v5034
      %v5036 = vrot.slane %v1452, 6
      %v5037 = vsel %vm5028, %v5034, %v5036
      %v5038 = vrot.slane %v1469, 6
      %v5039 = vsel %vm5028, %v5036, %v5038
      %v5040 = vrot.slane %v1486, 6
      %v5041 = vsel %vm5028, %v5038, %v5040
      %v5042 = vrot.slane %v1503, 6
      %v5043 = vsel %vm5028, %v5040, %v5042
      %v5044 = vrot.slane %v1520, 6
      %v5045 = vsel %vm5028, %v5042, %v5044
      %v5046 = vrot.slane %v1537, 6
      %v5047 = vsel %vm5028, %v5044, %v5046
      %v5048 = vrot.slane %v1554, 6
      %v5049 = vsel %vm5028, %v5046, %v5048
      %v5050 = vrot.slane %v1571, 6
      %v5051 = vsel %vm5028, %v5048, %v5050
      %v5052 = vrot.slane %v1588, 6
      %v5053 = vsel %vm5028, %v5050, %v5052
      %v5054 = vrot.slane %v1605, 6
      %v5055 = vsel %vm5028, %v5052, %v5054
      %v5056 = vrot.slane %v1622, 6
      %v5057 = vsel %vm5028, %v5054, %v5056
      %v5058 = vrot.slane %v1639, 6
      %v5059 = vsel %vm5028, %v5056, %v5058
      %v5060 = vrot.slane %v1656, 6
      %v5061 = vsel %vm5028, %v5058, %v5060
      %v5062 = vrot.slane %v1673, 6
      %v5063 = vsel %vm5028, %v5060, %v5062
      %v5064 = vrot.slane %v1690, 6
      %v5065 = vsel %vm5028, %v5062, %v5064
      %v5066 = vrot.slane %v1707, 6
      %v5067 = vsel %vm5028, %v5064, %v5066
      %v5068 = vrot.slane %v1724, 6
      %v5069 = vsel %vm5028, %v5066, %v5068
      %v5070 = vrot.slane %v1741, 6
      %v5071 = vsel %vm5028, %v5068, %v5070
      %v5072 = vrot.slane %v1758, 6
      %v5073 = vsel %vm5028, %v5070, %v5072
      %v5074 = vrot.slane %v1775, 6
      %v5075 = vsel %vm5028, %v5072, %v5074
      %v5076 = vrot.slane %v1792, 6
      %v5077 = vsel %vm5028, %v5074, %v5076
      %v5078 = vrot.slane %v1809, 6
      %v5079 = vsel %vm5028, %v5076, %v5078
      %v5080 = vrot.slane %v1826, 6
      %v5081 = vsel %vm5028, %v5078, %v5080
      %v5082 = vrot.slane %v1843, 6
      %v5083 = vsel %vm5028, %v5080, %v5082
      %v5084 = vrot.slane %v1860, 6
      %v5085 = vsel %vm5028, %v5082, %v5084
      %v5086 = vrot.slane %v1877, 6
      %v5087 = vsel %vm5028, %v5084, %v5086
      %v5088 = vrot.slane %v1894, 6
      %v5089 = vsel %vm5028, %v5086, %v5088
      %v5090 = vrot.slane %v1911, 6
      %v5091 = vsel %vm5028, %v5088, %v5090
      %v5092 = vrot.slane %v1928, 6
      %v5093 = vsel %vm5028, %v5090, %v5092
      %v5094 = vrot.slane %v3094, 6
      %v5095 = vsel %vm5028, %v5092, %v5094
      %v5096 = vrot.slane %v3111, 6
      %v5097 = vsel %vm5028, %v5094, %v5096
      %v5098 = vrot.slane %v4285, 6
      %v5099 = vsel %vm5028, %v5096, %v5098
      %v5100 = vrot.slane %v4298, 6
      %v5101 = vsel %vm5028, %v5098, %v5100
      %v5102 = vsel %vm378, %v5031, 0
      %v5104 = vsel %vm378, %v5033, 0
      %v5106 = vsel %vm378, %v5035, 0
      %v5108 = vsel %vm378, %v5037, 0
      %v5110 = vsel %vm378, %v5039, 0
      %v5112 = vsel %vm378, %v5041, 0
      %v5114 = vsel %vm378, %v5043, 0
      %v5116 = vsel %vm378, %v5045, 0
      %v5118 = vsel %vm378, %v5047, 0
      %v5120 = vsel %vm378, %v5049, 0
      %v5122 = vsel %vm378, %v5051, 0
      %v5124 = vsel %vm378, %v5053, 0
      %v5126 = vsel %vm378, %v5055, 0
      %v5128 = vsel %vm378, %v5057, 0
      %v5130 = vsel %vm378, %v5059, 0
      %v5132 = vsel %vm378, %v5061, 0
      %v5134 = vsel %vm378, %v5063, 0
      %v5136 = vsel %vm378, %v5065, 0
      %v5138 = vsel %vm378, %v5067, 0
      %v5140 = vsel %vm378, %v5069, 0
      %v5142 = vsel %vm378, %v5071, 0
      %v5144 = vsel %vm378, %v5073, 0
      %v5146 = vsel %vm378, %v5075, 0
      %v5148 = vsel %vm378, %v5077, 0
      %v5150 = vsel %vm378, %v5079, 0
      %v5152 = vsel %vm378, %v5081, 0
      %v5154 = vsel %vm378, %v5083, 0
      %v5156 = vsel %vm378, %v5085, 0
      %v5158 = vsel %vm378, %v5087, 0
      %v5160 = vsel %vm378, %v5089, 0
      %v5162 = vsel %vm378, %v5091, 0
      %v5164 = vsel %vm378, %v5093, 0
      %v5166 = vsel %vm378, %v5095, 0
      %v5168 = vsel %vm378, %v5097, 0
      %v5170 = vsel %vm378, %v5099, 0
      %v5172 = vsel %vm378, %v5101, 0
      %v5175 = vsel %vm2077, %v5027, 0
      %5177 = vmatprep.subr.mxu0 0.0
      %5178 = vmatpush1.msra.mxu0 %v5175
      %5179 = vmatprep.subr.mxu0 0.0
      %5180 = vmatpush1.msra.mxu0 0.0
      %5181 = vmatprep.subr.mxu0 0.0
      %5182 = vmatpush1.msra.mxu0 0.0
      %5183 = vmatprep.subr.mxu0 0.0
      %5184 = vmatpush1.msra.mxu0 0.0
      %5185 = vmatprep.subr.mxu0 0.0
      %5186 = vmatpush1.msra.mxu0 0.0
      %5187 = vmatprep.subr.mxu0 0.0
      %5188 = vmatpush1.msra.mxu0 0.0
      %5189 = vmatprep.subr.mxu0 0.0
      %5190 = vmatpush1.msra.mxu0 0.0
      %5191 = vmatprep.subr.mxu0 0.0
      %5192 = vmatpush1.msra.mxu0 0.0
      %5193 = vmatprep.subr.mxu0 0.0
      %5194 = vmatpush1.msra.mxu0 0.0
      %5195 = vmatprep.subr.mxu0 0.0
      %5196 = vmatpush1.msra.mxu0 0.0
      %5197 = vmatprep.subr.mxu0 0.0
      %5198 = vmatpush1.msra.mxu0 0.0
      %5199 = vmatprep.subr.mxu0 0.0
      %5200 = vmatpush1.msra.mxu0 0.0
      %5201 = vmatprep.subr.mxu0 0.0
      %5202 = vmatpush1.msra.mxu0 0.0
      %5203 = vmatprep.subr.mxu0 0.0
      %5204 = vmatpush1.msra.mxu0 0.0
      %5205 = vmatprep.subr.mxu0 0.0
      %5206 = vmatpush1.msra.mxu0 0.0
      %5207 = vmatprep.subr.mxu0 0.0
      %5208 = vmatpush1.msra.mxu0 0.0
      %5209 = vmatprep.subr.mxu0 0.0
      %5210 = vmatpush1.msra.mxu0 0.0
      %5211 = vmatprep.subr.mxu0 0.0
      %5212 = vmatpush1.msra.mxu0 0.0
      %5213 = vmatprep.subr.mxu0 0.0
      %5214 = vmatpush1.msra.mxu0 0.0
      %5215 = vmatprep.subr.mxu0 0.0
      %5216 = vmatpush1.msra.mxu0 0.0
      %5217 = vmatprep.subr.mxu0 0.0
      %5218 = vmatpush1.msra.mxu0 0.0
      %5219 = vmatprep.subr.mxu0 0.0
      %5220 = vmatpush1.msra.mxu0 0.0
      %5221 = vmatprep.subr.mxu0 0.0
      %5222 = vmatpush1.msra.mxu0 0.0
      %5223 = vmatprep.subr.mxu0 0.0
      %5224 = vmatpush1.msra.mxu0 0.0
      %5225 = vmatprep.subr.mxu0 0.0
      %5226 = vmatpush1.msra.mxu0 0.0
      %5227 = vmatprep.subr.mxu0 0.0
      %5228 = vmatpush1.msra.mxu0 0.0
      %5229 = vmatprep.subr.mxu0 0.0
      %5230 = vmatpush1.msra.mxu0 0.0
      %5231 = vmatprep.subr.mxu0 0.0
      %5232 = vmatpush1.msra.mxu0 0.0
      %5233 = vmatprep.subr.mxu0 0.0
      %5234 = vmatpush1.msra.mxu0 0.0
      %5235 = vmatprep.subr.mxu0 0.0
      %5236 = vmatpush1.msra.mxu0 0.0
      %5237 = vmatprep.subr.mxu0 0.0
      %5238 = vmatpush1.msra.mxu0 0.0
      %5239 = vmatprep.subr.mxu0 0.0
      %5240 = vmatpush1.msra.mxu0 0.0
      %5241 = vmatprep.mubr.f32.mxu0 0.0
      %5242 = vmatmul.mubr.f32.gmra.mrb[0].mxu0 %v5102
      %v5243 = vpop.f32.mrb[0].mxu0
      %v5244 = vadd.f32 0.0, %v5243
      %v5245 = vpop.f32.mrb[0].mxu0
      %5246 = vmatprep.mubr.f32.mxu0 0.0
      %5247 = vmatmul.mubr.f32.gmra.mrb[0].mxu0 %v5104
      %v5248 = vpop.f32.mrb[0].mxu0
      %v5249 = vadd.f32 0.0, %v5248
      %v5250 = vpop.f32.mrb[0].mxu0
      %5251 = vmatprep.mubr.f32.mxu0 0.0
      %5252 = vmatmul.mubr.f32.gmra.mrb[0].mxu0 %v5106
      %v5253 = vpop.f32.mrb[0].mxu0
      %v5254 = vadd.f32 0.0, %v5253
      %v5255 = vpop.f32.mrb[0].mxu0
      %5256 = vmatprep.mubr.f32.mxu0 0.0
      %5257 = vmatmul.mubr.f32.gmra.mrb[0].mxu0 %v5108
      %v5258 = vpop.f32.mrb[0].mxu0
      %v5259 = vadd.f32 0.0, %v5258
      %v5260 = vpop.f32.mrb[0].mxu0
      %5261 = vmatprep.mubr.f32.mxu0 0.0
      %5262 = vmatmul.mubr.f32.gmra.mrb[0].mxu0 %v5110
      %v5263 = vpop.f32.mrb[0].mxu0
      %v5264 = vadd.f32 0.0, %v5263
      %v5265 = vpop.f32.mrb[0].mxu0
      %5266 = vmatprep.mubr.f32.mxu0 0.0
      %5267 = vmatmul.mubr.f32.gmra.mrb[0].mxu0 %v5112
      %v5268 = vpop.f32.mrb[0].mxu0
      %v5269 = vadd.f32 0.0, %v5268
      %v5270 = vpop.f32.mrb[0].mxu0
      %5271 = vmatprep.mubr.f32.mxu0 0.0
      %5272 = vmatmul.mubr.f32.gmra.mrb[0].mxu0 %v5114
      %v5273 = vpop.f32.mrb[0].mxu0
      %v5274 = vadd.f32 0.0, %v5273
      %v5275 = vpop.f32.mrb[0].mxu0
      %5276 = vmatprep.mubr.f32.mxu0 0.0
      %5277 = vmatmul.mubr.f32.gmra.mrb[0].mxu0 %v5116
      %v5278 = vpop.f32.mrb[0].mxu0
      %v5279 = vadd.f32 0.0, %v5278
      %v5280 = vpop.f32.mrb[0].mxu0
      %5281 = vmatprep.mubr.f32.mxu0 0.0
      %5282 = vmatmul.mubr.f32.gmra.mrb[0].mxu0 %v5118
      %v5283 = vpop.f32.mrb[0].mxu0
      %v5284 = vadd.f32 0.0, %v5283
      %v5285 = vpop.f32.mrb[0].mxu0
      %5286 = vmatprep.mubr.f32.mxu0 0.0
      %5287 = vmatmul.mubr.f32.gmra.mrb[0].mxu0 %v5120
      %v5288 = vpop.f32.mrb[0].mxu0
      %v5289 = vadd.f32 0.0, %v5288
      %v5290 = vpop.f32.mrb[0].mxu0
      %5291 = vmatprep.mubr.f32.mxu0 0.0
      %5292 = vmatmul.mubr.f32.gmra.mrb[0].mxu0 %v5122
      %v5293 = vpop.f32.mrb[0].mxu0
      %v5294 = vadd.f32 0.0, %v5293
      %v5295 = vpop.f32.mrb[0].mxu0
      %5296 = vmatprep.mubr.f32.mxu0 0.0
      %5297 = vmatmul.mubr.f32.gmra.mrb[0].mxu0 %v5124
      %v5298 = vpop.f32.mrb[0].mxu0
      %v5299 = vadd.f32 0.0, %v5298
      %v5300 = vpop.f32.mrb[0].mxu0
      %5301 = vmatprep.mubr.f32.mxu0 0.0
      %5302 = vmatmul.mubr.f32.gmra.mrb[0].mxu0 %v5126
      %v5303 = vpop.f32.mrb[0].mxu0
      %v5304 = vadd.f32 0.0, %v5303
      %v5305 = vpop.f32.mrb[0].mxu0
      %5306 = vmatprep.mubr.f32.mxu0 0.0
      %5307 = vmatmul.mubr.f32.gmra.mrb[0].mxu0 %v5128
      %v5308 = vpop.f32.mrb[0].mxu0
      %v5309 = vadd.f32 0.0, %v5308
      %v5310 = vpop.f32.mrb[0].mxu0
      %5311 = vmatprep.mubr.f32.mxu0 0.0
      %5312 = vmatmul.mubr.f32.gmra.mrb[0].mxu0 %v5130
      %v5313 = vpop.f32.mrb[0].mxu0
      %v5314 = vadd.f32 0.0, %v5313
      %v5315 = vpop.f32.mrb[0].mxu0
      %5316 = vmatprep.mubr.f32.mxu0 0.0
      %5317 = vmatmul.mubr.f32.gmra.mrb[0].mxu0 %v5132
      %v5318 = vpop.f32.mrb[0].mxu0
      %v5319 = vadd.f32 0.0, %v5318
      %v5320 = vpop.f32.mrb[0].mxu0
      %5321 = vmatprep.mubr.f32.mxu0 0.0
      %5322 = vmatmul.mubr.f32.gmra.mrb[0].mxu0 %v5134
      %v5323 = vpop.f32.mrb[0].mxu0
      %v5324 = vadd.f32 0.0, %v5323
      %v5325 = vpop.f32.mrb[0].mxu0
      %5326 = vmatprep.mubr.f32.mxu0 0.0
      %5327 = vmatmul.mubr.f32.gmra.mrb[0].mxu0 %v5136
      %v5328 = vpop.f32.mrb[0].mxu0
      %v5329 = vadd.f32 0.0, %v5328
      %v5330 = vpop.f32.mrb[0].mxu0
      %5331 = vmatprep.mubr.f32.mxu0 0.0
      %5332 = vmatmul.mubr.f32.gmra.mrb[0].mxu0 %v5138
      %v5333 = vpop.f32.mrb[0].mxu0
      %v5334 = vadd.f32 0.0, %v5333
      %v5335 = vpop.f32.mrb[0].mxu0
      %5336 = vmatprep.mubr.f32.mxu0 0.0
      %5337 = vmatmul.mubr.f32.gmra.mrb[0].mxu0 %v5140
      %v5338 = vpop.f32.mrb[0].mxu0
      %v5339 = vadd.f32 0.0, %v5338
      %v5340 = vpop.f32.mrb[0].mxu0
      %5341 = vmatprep.mubr.f32.mxu0 0.0
      %5342 = vmatmul.mubr.f32.gmra.mrb[0].mxu0 %v5142
      %v5343 = vpop.f32.mrb[0].mxu0
      %v5344 = vadd.f32 0.0, %v5343
      %v5345 = vpop.f32.mrb[0].mxu0
      %5346 = vmatprep.mubr.f32.mxu0 0.0
      %5347 = vmatmul.mubr.f32.gmra.mrb[0].mxu0 %v5144
      %v5348 = vpop.f32.mrb[0].mxu0
      %v5349 = vadd.f32 0.0, %v5348
      %v5350 = vpop.f32.mrb[0].mxu0
      %5351 = vmatprep.mubr.f32.mxu0 0.0
      %5352 = vmatmul.mubr.f32.gmra.mrb[0].mxu0 %v5146
      %v5353 = vpop.f32.mrb[0].mxu0
      %v5354 = vadd.f32 0.0, %v5353
      %v5355 = vpop.f32.mrb[0].mxu0
      %5356 = vmatprep.mubr.f32.mxu0 0.0
      %5357 = vmatmul.mubr.f32.gmra.mrb[0].mxu0 %v5148
      %v5358 = vpop.f32.mrb[0].mxu0
      %v5359 = vadd.f32 0.0, %v5358
      %v5360 = vpop.f32.mrb[0].mxu0
      %5361 = vmatprep.mubr.f32.mxu0 0.0
      %5362 = vmatmul.mubr.f32.gmra.mrb[0].mxu0 %v5150
      %v5363 = vpop.f32.mrb[0].mxu0
      %v5364 = vadd.f32 0.0, %v5363
      %v5365 = vpop.f32.mrb[0].mxu0
      %5366 = vmatprep.mubr.f32.mxu0 0.0
      %5367 = vmatmul.mubr.f32.gmra.mrb[0].mxu0 %v5152
      %v5368 = vpop.f32.mrb[0].mxu0
      %v5369 = vadd.f32 0.0, %v5368
      %v5370 = vpop.f32.mrb[0].mxu0
      %5371 = vmatprep.mubr.f32.mxu0 0.0
      %5372 = vmatmul.mubr.f32.gmra.mrb[0].mxu0 %v5154
      %v5373 = vpop.f32.mrb[0].mxu0
      %v5374 = vadd.f32 0.0, %v5373
      %v5375 = vpop.f32.mrb[0].mxu0
      %5376 = vmatprep.mubr.f32.mxu0 0.0
      %5377 = vmatmul.mubr.f32.gmra.mrb[0].mxu0 %v5156
      %v5378 = vpop.f32.mrb[0].mxu0
      %v5379 = vadd.f32 0.0, %v5378
      %v5380 = vpop.f32.mrb[0].mxu0
      %5381 = vmatprep.mubr.f32.mxu0 0.0
      %5382 = vmatmul.mubr.f32.gmra.mrb[0].mxu0 %v5158
      %v5383 = vpop.f32.mrb[0].mxu0
      %v5384 = vadd.f32 0.0, %v5383
      %v5385 = vpop.f32.mrb[0].mxu0
      %5386 = vmatprep.mubr.f32.mxu0 0.0
      %5387 = vmatmul.mubr.f32.gmra.mrb[0].mxu0 %v5160
      %v5388 = vpop.f32.mrb[0].mxu0
      %v5389 = vadd.f32 0.0, %v5388
      %v5390 = vpop.f32.mrb[0].mxu0
      %5391 = vmatprep.mubr.f32.mxu0 0.0
      %5392 = vmatmul.mubr.f32.gmra.mrb[0].mxu0 %v5162
      %v5393 = vpop.f32.mrb[0].mxu0
      %v5394 = vadd.f32 0.0, %v5393
      %v5395 = vpop.f32.mrb[0].mxu0
      %5396 = vmatprep.mubr.f32.mxu0 0.0
      %5397 = vmatmul.mubr.f32.gmra.mrb[0].mxu0 %v5164
      %v5398 = vpop.f32.mrb[0].mxu0
      %v5399 = vadd.f32 0.0, %v5398
      %v5400 = vpop.f32.mrb[0].mxu0
      %5401 = vmatprep.mubr.f32.mxu0 0.0
      %5402 = vmatmul.mubr.f32.gmra.mrb[0].mxu0 %v5166
      %v5403 = vpop.f32.mrb[0].mxu0
      %v5404 = vadd.f32 0.0, %v5403
      %v5405 = vpop.f32.mrb[0].mxu0
      %5406 = vmatprep.mubr.f32.mxu0 0.0
      %5407 = vmatmul.mubr.f32.gmra.mrb[0].mxu0 %v5168
      %v5408 = vpop.f32.mrb[0].mxu0
      %v5409 = vadd.f32 0.0, %v5408
      %v5410 = vpop.f32.mrb[0].mxu0
      %5411 = vmatprep.mubr.f32.mxu0 0.0
      %5412 = vmatmul.mubr.f32.gmra.mrb[0].mxu0 %v5170
      %v5413 = vpop.f32.mrb[0].mxu0
      %v5414 = vadd.f32 0.0, %v5413
      %v5415 = vpop.f32.mrb[0].mxu0
      %5416 = vmatprep.mubr.f32.mxu0 0.0
      %5417 = vmatmul.mubr.f32.gmra.mrb[0].mxu0 %v5172
      %v5418 = vpop.f32.mrb[0].mxu0
      %v5419 = vadd.f32 0.0, %v5418
      %v5420 = vpop.f32.mrb[0].mxu0
      %5421 = vdwg.mxu0
      %v5422 = vadd.f32 %v4990, %v5244
      %v5423 = vadd.f32 %v4991, %v5249
      %v5424 = vadd.f32 %v4992, %v5254
      %v5425 = vadd.f32 %v4993, %v5259
      %v5426 = vadd.f32 %v4994, %v5264
      %v5427 = vadd.f32 %v4995, %v5269
      %v5428 = vadd.f32 %v4996, %v5274
      %v5429 = vadd.f32 %v4997, %v5279
      %v5430 = vadd.f32 %v4998, %v5284
      %v5431 = vadd.f32 %v4999, %v5289
      %v5432 = vadd.f32 %v5000, %v5294
      %v5433 = vadd.f32 %v5001, %v5299
      %v5434 = vadd.f32 %v5002, %v5304
      %v5435 = vadd.f32 %v5003, %v5309
      %v5436 = vadd.f32 %v5004, %v5314
      %v5437 = vadd.f32 %v5005, %v5319
      %v5438 = vadd.f32 %v5006, %v5324
      %v5439 = vadd.f32 %v5007, %v5329
      %v5440 = vadd.f32 %v5008, %v5334
      %v5441 = vadd.f32 %v5009, %v5339
      %v5442 = vadd.f32 %v5010, %v5344
      %v5443 = vadd.f32 %v5011, %v5349
      %v5444 = vadd.f32 %v5012, %v5354
      %v5445 = vadd.f32 %v5013, %v5359
      %v5446 = vadd.f32 %v5014, %v5364
      %v5447 = vadd.f32 %v5015, %v5369
      %v5448 = vadd.f32 %v5016, %v5374
      %v5449 = vadd.f32 %v5017, %v5379
      %v5450 = vadd.f32 %v5018, %v5384
      %v5451 = vadd.f32 %v5019, %v5389
      %v5452 = vadd.f32 %v5020, %v5394
      %v5453 = vadd.f32 %v5021, %v5399
      %v5454 = vadd.f32 %v5022, %v5404
      %v5455 = vadd.f32 %v5023, %v5409
      %v5456 = vadd.f32 %v5024, %v5414
      %v5457 = vadd.f32 %v5025, %v5419
      %v5494 = vcombine.high %v5422, %v5422
      %v5496 = vunpack.c.l.s4 1983009808
      %v5497 = vunpack.c.0.s8 %v5496
      %v5498 = vlaneseq
      %v5499 = vshrl.u32 %v5498, 7
      %v5500 = vsub.s32 %v5497, %v5499
      %v5501 = vrot.slane %v5422, %v5500
      %v5503 = vunpack.c.l.s4 1983009808
      %v5504 = vunpack.c.0.s8 %v5503
      %v5505 = vlaneseq
      %v5506 = vshrl.u32 %v5505, 7
      %v5507 = vsub.s32 %v5504, %v5506
      %v5508 = vrot.slane %v5494, %v5507
      %v5509 = vcombine.high %v5501, %v5501
      %v5510 = vcombine.high %v5508, %v5508
      %v5511 = vcombine.high %v5423, %v5423
      %v5513 = vunpack.c.l.s4 1983009808
      %v5514 = vunpack.c.0.s8 %v5513
      %v5515 = vlaneseq
      %v5516 = vshrl.u32 %v5515, 7
      %v5517 = vsub.s32 %v5514, %v5516
      %v5518 = vrot.slane %v5423, %v5517
      %v5520 = vunpack.c.l.s4 1983009808
      %v5521 = vunpack.c.0.s8 %v5520
      %v5522 = vlaneseq
      %v5523 = vshrl.u32 %v5522, 7
      %v5524 = vsub.s32 %v5521, %v5523
      %v5525 = vrot.slane %v5511, %v5524
      %v5526 = vcombine.high %v5518, %v5518
      %v5527 = vcombine.high %v5525, %v5525
      %v5528 = vcombine.high %v5424, %v5424
      %v5530 = vunpack.c.l.s4 1983009808
      %v5531 = vunpack.c.0.s8 %v5530
      %v5532 = vlaneseq
      %v5533 = vshrl.u32 %v5532, 7
      %v5534 = vsub.s32 %v5531, %v5533
      %v5535 = vrot.slane %v5424, %v5534
      %v5537 = vunpack.c.l.s4 1983009808
      %v5538 = vunpack.c.0.s8 %v5537
      %v5539 = vlaneseq
      %v5540 = vshrl.u32 %v5539, 7
      %v5541 = vsub.s32 %v5538, %v5540
      %v5542 = vrot.slane %v5528, %v5541
      %v5543 = vcombine.high %v5535, %v5535
      %v5544 = vcombine.high %v5542, %v5542
      %v5545 = vcombine.high %v5425, %v5425
      %v5547 = vunpack.c.l.s4 1983009808
      %v5548 = vunpack.c.0.s8 %v5547
      %v5549 = vlaneseq
      %v5550 = vshrl.u32 %v5549, 7
      %v5551 = vsub.s32 %v5548, %v5550
      %v5552 = vrot.slane %v5425, %v5551
      %v5554 = vunpack.c.l.s4 1983009808
      %v5555 = vunpack.c.0.s8 %v5554
      %v5556 = vlaneseq
      %v5557 = vshrl.u32 %v5556, 7
      %v5558 = vsub.s32 %v5555, %v5557
      %v5559 = vrot.slane %v5545, %v5558
      %v5560 = vcombine.high %v5552, %v5552
      %v5561 = vcombine.high %v5559, %v5559
      %v5562 = vcombine.high %v5426, %v5426
      %v5564 = vunpack.c.l.s4 1983009808
      %v5565 = vunpack.c.0.s8 %v5564
      %v5566 = vlaneseq
      %v5567 = vshrl.u32 %v5566, 7
      %v5568 = vsub.s32 %v5565, %v5567
      %v5569 = vrot.slane %v5426, %v5568
      %v5571 = vunpack.c.l.s4 1983009808
      %v5572 = vunpack.c.0.s8 %v5571
      %v5573 = vlaneseq
      %v5574 = vshrl.u32 %v5573, 7
      %v5575 = vsub.s32 %v5572, %v5574
      %v5576 = vrot.slane %v5562, %v5575
      %v5577 = vcombine.high %v5576, %v5576
      %v5578 = vcombine.high %v5427, %v5427
      %v5580 = vunpack.c.l.s4 1983009808
      %v5581 = vunpack.c.0.s8 %v5580
      %v5582 = vlaneseq
      %v5583 = vshrl.u32 %v5582, 7
      %v5584 = vsub.s32 %v5581, %v5583
      %v5585 = vrot.slane %v5427, %v5584
      %v5587 = vunpack.c.l.s4 1983009808
      %v5588 = vunpack.c.0.s8 %v5587
      %v5589 = vlaneseq
      %v5590 = vshrl.u32 %v5589, 7
      %v5591 = vsub.s32 %v5588, %v5590
      %v5592 = vrot.slane %v5578, %v5591
      %v5593 = vcombine.high %v5585, %v5585
      %v5594 = vcombine.high %v5592, %v5592
      %v5595 = vcombine.high %v5428, %v5428
      %v5597 = vunpack.c.l.s4 1983009808
      %v5598 = vunpack.c.0.s8 %v5597
      %v5599 = vlaneseq
      %v5600 = vshrl.u32 %v5599, 7
      %v5601 = vsub.s32 %v5598, %v5600
      %v5602 = vrot.slane %v5428, %v5601
      %v5604 = vunpack.c.l.s4 1983009808
      %v5605 = vunpack.c.0.s8 %v5604
      %v5606 = vlaneseq
      %v5607 = vshrl.u32 %v5606, 7
      %v5608 = vsub.s32 %v5605, %v5607
      %v5609 = vrot.slane %v5595, %v5608
      %v5610 = vcombine.high %v5602, %v5602
      %v5611 = vcombine.high %v5609, %v5609
      %v5612 = vcombine.high %v5429, %v5429
      %v5614 = vunpack.c.l.s4 1983009808
      %v5615 = vunpack.c.0.s8 %v5614
      %v5616 = vlaneseq
      %v5617 = vshrl.u32 %v5616, 7
      %v5618 = vsub.s32 %v5615, %v5617
      %v5619 = vrot.slane %v5429, %v5618
      %v5621 = vunpack.c.l.s4 1983009808
      %v5622 = vunpack.c.0.s8 %v5621
      %v5623 = vlaneseq
      %v5624 = vshrl.u32 %v5623, 7
      %v5625 = vsub.s32 %v5622, %v5624
      %v5626 = vrot.slane %v5612, %v5625
      %v5627 = vcombine.high %v5619, %v5619
      %v5628 = vcombine.high %v5626, %v5626
      %v5629 = vcombine.high %v5430, %v5430
      %v5631 = vunpack.c.l.s4 1983009808
      %v5632 = vunpack.c.0.s8 %v5631
      %v5633 = vlaneseq
      %v5634 = vshrl.u32 %v5633, 7
      %v5635 = vsub.s32 %v5632, %v5634
      %v5636 = vrot.slane %v5430, %v5635
      %v5638 = vunpack.c.l.s4 1983009808
      %v5639 = vunpack.c.0.s8 %v5638
      %v5640 = vlaneseq
      %v5641 = vshrl.u32 %v5640, 7
      %v5642 = vsub.s32 %v5639, %v5641
      %v5643 = vrot.slane %v5629, %v5642
      %v5644 = vcombine.high %v5636, %v5636
      %v5645 = vcombine.high %v5431, %v5431
      %v5647 = vunpack.c.l.s4 1983009808
      %v5648 = vunpack.c.0.s8 %v5647
      %v5649 = vlaneseq
      %v5650 = vshrl.u32 %v5649, 7
      %v5651 = vsub.s32 %v5648, %v5650
      %v5652 = vrot.slane %v5431, %v5651
      %v5654 = vunpack.c.l.s4 1983009808
      %v5655 = vunpack.c.0.s8 %v5654
      %v5656 = vlaneseq
      %v5657 = vshrl.u32 %v5656, 7
      %v5658 = vsub.s32 %v5655, %v5657
      %v5659 = vrot.slane %v5645, %v5658
      %v5660 = vcombine.high %v5652, %v5652
      %v5661 = vcombine.high %v5659, %v5659
      %v5662 = vcombine.high %v5432, %v5432
      %v5664 = vunpack.c.l.s4 1983009808
      %v5665 = vunpack.c.0.s8 %v5664
      %v5666 = vlaneseq
      %v5667 = vshrl.u32 %v5666, 7
      %v5668 = vsub.s32 %v5665, %v5667
      %v5669 = vrot.slane %v5432, %v5668
      %v5671 = vunpack.c.l.s4 1983009808
      %v5672 = vunpack.c.0.s8 %v5671
      %v5673 = vlaneseq
      %v5674 = vshrl.u32 %v5673, 7
      %v5675 = vsub.s32 %v5672, %v5674
      %v5676 = vrot.slane %v5662, %v5675
      %v5677 = vcombine.high %v5669, %v5669
      %v5678 = vcombine.high %v5676, %v5676
      %v5679 = vcombine.high %v5433, %v5433
      %v5681 = vunpack.c.l.s4 1983009808
      %v5682 = vunpack.c.0.s8 %v5681
      %v5683 = vlaneseq
      %v5684 = vshrl.u32 %v5683, 7
      %v5685 = vsub.s32 %v5682, %v5684
      %v5686 = vrot.slane %v5433, %v5685
      %v5688 = vunpack.c.l.s4 1983009808
      %v5689 = vunpack.c.0.s8 %v5688
      %v5690 = vlaneseq
      %v5691 = vshrl.u32 %v5690, 7
      %v5692 = vsub.s32 %v5689, %v5691
      %v5693 = vrot.slane %v5679, %v5692
      %v5694 = vcombine.high %v5686, %v5686
      %v5695 = vcombine.high %v5693, %v5693
      %v5696 = vcombine.high %v5434, %v5434
      %v5698 = vunpack.c.l.s4 1983009808
      %v5699 = vunpack.c.0.s8 %v5698
      %v5700 = vlaneseq
      %v5701 = vshrl.u32 %v5700, 7
      %v5702 = vsub.s32 %v5699, %v5701
      %v5703 = vrot.slane %v5434, %v5702
      %v5705 = vunpack.c.l.s4 1983009808
      %v5706 = vunpack.c.0.s8 %v5705
      %v5707 = vlaneseq
      %v5708 = vshrl.u32 %v5707, 7
      %v5709 = vsub.s32 %v5706, %v5708
      %v5710 = vrot.slane %v5696, %v5709
      %v5711 = vcombine.high %v5703, %v5703
      %v5712 = vcombine.high %v5710, %v5710
      %v5713 = vcombine.high %v5435, %v5435
      %v5715 = vunpack.c.l.s4 1983009808
      %v5716 = vunpack.c.0.s8 %v5715
      %v5717 = vlaneseq
      %v5718 = vshrl.u32 %v5717, 7
      %v5719 = vsub.s32 %v5716, %v5718
      %v5720 = vrot.slane %v5435, %v5719
      %v5722 = vunpack.c.l.s4 1983009808
      %v5723 = vunpack.c.0.s8 %v5722
      %v5724 = vlaneseq
      %v5725 = vshrl.u32 %v5724, 7
      %v5726 = vsub.s32 %v5723, %v5725
      %v5727 = vrot.slane %v5713, %v5726
      %v5728 = vcombine.high %v5727, %v5727
      %v5729 = vcombine.high %v5436, %v5436
      %v5731 = vunpack.c.l.s4 1983009808
      %v5732 = vunpack.c.0.s8 %v5731
      %v5733 = vlaneseq
      %v5734 = vshrl.u32 %v5733, 7
      %v5735 = vsub.s32 %v5732, %v5734
      %v5736 = vrot.slane %v5436, %v5735
      %v5738 = vunpack.c.l.s4 1983009808
      %v5739 = vunpack.c.0.s8 %v5738
      %v5740 = vlaneseq
      %v5741 = vshrl.u32 %v5740, 7
      %v5742 = vsub.s32 %v5739, %v5741
      %v5743 = vrot.slane %v5729, %v5742
      %v5744 = vcombine.high %v5736, %v5736
      %v5745 = vcombine.high %v5743, %v5743
      %v5746 = vcombine.high %v5437, %v5437
      %v5748 = vunpack.c.l.s4 1983009808
      %v5749 = vunpack.c.0.s8 %v5748
      %v5750 = vlaneseq
      %v5751 = vshrl.u32 %v5750, 7
      %v5752 = vsub.s32 %v5749, %v5751
      %v5753 = vrot.slane %v5437, %v5752
      %v5755 = vunpack.c.l.s4 1983009808
      %v5756 = vunpack.c.0.s8 %v5755
      %v5757 = vlaneseq
      %v5758 = vshrl.u32 %v5757, 7
      %v5759 = vsub.s32 %v5756, %v5758
      %v5760 = vrot.slane %v5746, %v5759
      %v5761 = vcombine.high %v5753, %v5753
      %v5762 = vcombine.high %v5760, %v5760
      %v5763 = vcombine.high %v5438, %v5438
      %v5765 = vunpack.c.l.s4 1983009808
      %v5766 = vunpack.c.0.s8 %v5765
      %v5767 = vlaneseq
      %v5768 = vshrl.u32 %v5767, 7
      %v5769 = vsub.s32 %v5766, %v5768
      %v5770 = vrot.slane %v5438, %v5769
      %v5772 = vunpack.c.l.s4 1983009808
      %v5773 = vunpack.c.0.s8 %v5772
      %v5774 = vlaneseq
      %v5775 = vshrl.u32 %v5774, 7
      %v5776 = vsub.s32 %v5773, %v5775
      %v5777 = vrot.slane %v5763, %v5776
      %v5778 = vcombine.high %v5770, %v5770
      %v5779 = vcombine.high %v5777, %v5777
      %v5780 = vcombine.high %v5439, %v5439
      %v5782 = vunpack.c.l.s4 1983009808
      %v5783 = vunpack.c.0.s8 %v5782
      %v5784 = vlaneseq
      %v5785 = vshrl.u32 %v5784, 7
      %v5786 = vsub.s32 %v5783, %v5785
      %v5787 = vrot.slane %v5439, %v5786
      %v5789 = vunpack.c.l.s4 1983009808
      %v5790 = vunpack.c.0.s8 %v5789
      %v5791 = vlaneseq
      %v5792 = vshrl.u32 %v5791, 7
      %v5793 = vsub.s32 %v5790, %v5792
      %v5794 = vrot.slane %v5780, %v5793
      %v5795 = vcombine.high %v5787, %v5787
      %v5796 = vcombine.high %v5440, %v5440
      %v5798 = vunpack.c.l.s4 1983009808
      %v5799 = vunpack.c.0.s8 %v5798
      %v5800 = vlaneseq
      %v5801 = vshrl.u32 %v5800, 7
      %v5802 = vsub.s32 %v5799, %v5801
      %v5803 = vrot.slane %v5440, %v5802
      %v5805 = vunpack.c.l.s4 1983009808
      %v5806 = vunpack.c.0.s8 %v5805
      %v5807 = vlaneseq
      %v5808 = vshrl.u32 %v5807, 7
      %v5809 = vsub.s32 %v5806, %v5808
      %v5810 = vrot.slane %v5796, %v5809
      %v5811 = vcombine.high %v5803, %v5803
      %v5812 = vcombine.high %v5810, %v5810
      %v5813 = vcombine.high %v5441, %v5441
      %v5815 = vunpack.c.l.s4 1983009808
      %v5816 = vunpack.c.0.s8 %v5815
      %v5817 = vlaneseq
      %v5818 = vshrl.u32 %v5817, 7
      %v5819 = vsub.s32 %v5816, %v5818
      %v5820 = vrot.slane %v5441, %v5819
      %v5822 = vunpack.c.l.s4 1983009808
      %v5823 = vunpack.c.0.s8 %v5822
      %v5824 = vlaneseq
      %v5825 = vshrl.u32 %v5824, 7
      %v5826 = vsub.s32 %v5823, %v5825
      %v5827 = vrot.slane %v5813, %v5826
      %v5828 = vcombine.high %v5820, %v5820
      %v5829 = vcombine.high %v5827, %v5827
      %v5830 = vcombine.high %v5442, %v5442
      %v5832 = vunpack.c.l.s4 1983009808
      %v5833 = vunpack.c.0.s8 %v5832
      %v5834 = vlaneseq
      %v5835 = vshrl.u32 %v5834, 7
      %v5836 = vsub.s32 %v5833, %v5835
      %v5837 = vrot.slane %v5442, %v5836
      %v5839 = vunpack.c.l.s4 1983009808
      %v5840 = vunpack.c.0.s8 %v5839
      %v5841 = vlaneseq
      %v5842 = vshrl.u32 %v5841, 7
      %v5843 = vsub.s32 %v5840, %v5842
      %v5844 = vrot.slane %v5830, %v5843
      %v5845 = vcombine.high %v5837, %v5837
      %v5846 = vcombine.high %v5844, %v5844
      %v5847 = vcombine.high %v5443, %v5443
      %v5849 = vunpack.c.l.s4 1983009808
      %v5850 = vunpack.c.0.s8 %v5849
      %v5851 = vlaneseq
      %v5852 = vshrl.u32 %v5851, 7
      %v5853 = vsub.s32 %v5850, %v5852
      %v5854 = vrot.slane %v5443, %v5853
      %v5856 = vunpack.c.l.s4 1983009808
      %v5857 = vunpack.c.0.s8 %v5856
      %v5858 = vlaneseq
      %v5859 = vshrl.u32 %v5858, 7
      %v5860 = vsub.s32 %v5857, %v5859
      %v5861 = vrot.slane %v5847, %v5860
      %v5862 = vcombine.high %v5854, %v5854
      %v5863 = vcombine.high %v5861, %v5861
      %v5864 = vcombine.high %v5444, %v5444
      %v5866 = vunpack.c.l.s4 1983009808
      %v5867 = vunpack.c.0.s8 %v5866
      %v5868 = vlaneseq
      %v5869 = vshrl.u32 %v5868, 7
      %v5870 = vsub.s32 %v5867, %v5869
      %v5871 = vrot.slane %v5444, %v5870
      %v5873 = vunpack.c.l.s4 1983009808
      %v5874 = vunpack.c.0.s8 %v5873
      %v5875 = vlaneseq
      %v5876 = vshrl.u32 %v5875, 7
      %v5877 = vsub.s32 %v5874, %v5876
      %v5878 = vrot.slane %v5864, %v5877
      %v5879 = vcombine.high %v5878, %v5878
      %v5880 = vcombine.high %v5445, %v5445
      %v5882 = vunpack.c.l.s4 1983009808
      %v5883 = vunpack.c.0.s8 %v5882
      %v5884 = vlaneseq
      %v5885 = vshrl.u32 %v5884, 7
      %v5886 = vsub.s32 %v5883, %v5885
      %v5887 = vrot.slane %v5445, %v5886
      %v5889 = vunpack.c.l.s4 1983009808
      %v5890 = vunpack.c.0.s8 %v5889
      %v5891 = vlaneseq
      %v5892 = vshrl.u32 %v5891, 7
      %v5893 = vsub.s32 %v5890, %v5892
      %v5894 = vrot.slane %v5880, %v5893
      %v5895 = vcombine.high %v5887, %v5887
      %v5896 = vcombine.high %v5894, %v5894
      %v5897 = vcombine.high %v5446, %v5446
      %v5899 = vunpack.c.l.s4 1983009808
      %v5900 = vunpack.c.0.s8 %v5899
      %v5901 = vlaneseq
      %v5902 = vshrl.u32 %v5901, 7
      %v5903 = vsub.s32 %v5900, %v5902
      %v5904 = vrot.slane %v5446, %v5903
      %v5906 = vunpack.c.l.s4 1983009808
      %v5907 = vunpack.c.0.s8 %v5906
      %v5908 = vlaneseq
      %v5909 = vshrl.u32 %v5908, 7
      %v5910 = vsub.s32 %v5907, %v5909
      %v5911 = vrot.slane %v5897, %v5910
      %v5912 = vcombine.high %v5904, %v5904
      %v5913 = vcombine.high %v5911, %v5911
      %v5914 = vcombine.high %v5447, %v5447
      %v5916 = vunpack.c.l.s4 1983009808
      %v5917 = vunpack.c.0.s8 %v5916
      %v5918 = vlaneseq
      %v5919 = vshrl.u32 %v5918, 7
      %v5920 = vsub.s32 %v5917, %v5919
      %v5921 = vrot.slane %v5447, %v5920
      %v5923 = vunpack.c.l.s4 1983009808
      %v5924 = vunpack.c.0.s8 %v5923
      %v5925 = vlaneseq
      %v5926 = vshrl.u32 %v5925, 7
      %v5927 = vsub.s32 %v5924, %v5926
      %v5928 = vrot.slane %v5914, %v5927
      %v5929 = vcombine.high %v5921, %v5921
      %v5930 = vcombine.high %v5928, %v5928
      %v5931 = vcombine.high %v5448, %v5448
      %v5933 = vunpack.c.l.s4 1983009808
      %v5934 = vunpack.c.0.s8 %v5933
      %v5935 = vlaneseq
      %v5936 = vshrl.u32 %v5935, 7
      %v5937 = vsub.s32 %v5934, %v5936
      %v5938 = vrot.slane %v5448, %v5937
      %v5940 = vunpack.c.l.s4 1983009808
      %v5941 = vunpack.c.0.s8 %v5940
      %v5942 = vlaneseq
      %v5943 = vshrl.u32 %v5942, 7
      %v5944 = vsub.s32 %v5941, %v5943
      %v5945 = vrot.slane %v5931, %v5944
      %v5946 = vcombine.high %v5938, %v5938
      %v5947 = vcombine.high %v5449, %v5449
      %v5949 = vunpack.c.l.s4 1983009808
      %v5950 = vunpack.c.0.s8 %v5949
      %v5951 = vlaneseq
      %v5952 = vshrl.u32 %v5951, 7
      %v5953 = vsub.s32 %v5950, %v5952
      %v5954 = vrot.slane %v5449, %v5953
      %v5956 = vunpack.c.l.s4 1983009808
      %v5957 = vunpack.c.0.s8 %v5956
      %v5958 = vlaneseq
      %v5959 = vshrl.u32 %v5958, 7
      %v5960 = vsub.s32 %v5957, %v5959
      %v5961 = vrot.slane %v5947, %v5960
      %v5962 = vcombine.high %v5954, %v5954
      %v5963 = vcombine.high %v5961, %v5961
      %v5964 = vcombine.high %v5450, %v5450
      %v5966 = vunpack.c.l.s4 1983009808
      %v5967 = vunpack.c.0.s8 %v5966
      %v5968 = vlaneseq
      %v5969 = vshrl.u32 %v5968, 7
      %v5970 = vsub.s32 %v5967, %v5969
      %v5971 = vrot.slane %v5450, %v5970
      %v5973 = vunpack.c.l.s4 1983009808
      %v5974 = vunpack.c.0.s8 %v5973
      %v5975 = vlaneseq
      %v5976 = vshrl.u32 %v5975, 7
      %v5977 = vsub.s32 %v5974, %v5976
      %v5978 = vrot.slane %v5964, %v5977
      %v5979 = vcombine.high %v5971, %v5971
      %v5980 = vcombine.high %v5978, %v5978
      %v5981 = vcombine.high %v5451, %v5451
      %v5983 = vunpack.c.l.s4 1983009808
      %v5984 = vunpack.c.0.s8 %v5983
      %v5985 = vlaneseq
      %v5986 = vshrl.u32 %v5985, 7
      %v5987 = vsub.s32 %v5984, %v5986
      %v5988 = vrot.slane %v5451, %v5987
      %v5990 = vunpack.c.l.s4 1983009808
      %v5991 = vunpack.c.0.s8 %v5990
      %v5992 = vlaneseq
      %v5993 = vshrl.u32 %v5992, 7
      %v5994 = vsub.s32 %v5991, %v5993
      %v5995 = vrot.slane %v5981, %v5994
      %v5996 = vcombine.high %v5988, %v5988
      %v5997 = vcombine.high %v5995, %v5995
      %v5998 = vcombine.high %v5452, %v5452
      %v6000 = vunpack.c.l.s4 1983009808
      %v6001 = vunpack.c.0.s8 %v6000
      %v6002 = vlaneseq
      %v6003 = vshrl.u32 %v6002, 7
      %v6004 = vsub.s32 %v6001, %v6003
      %v6005 = vrot.slane %v5452, %v6004
      %v6007 = vunpack.c.l.s4 1983009808
      %v6008 = vunpack.c.0.s8 %v6007
      %v6009 = vlaneseq
      %v6010 = vshrl.u32 %v6009, 7
      %v6011 = vsub.s32 %v6008, %v6010
      %v6012 = vrot.slane %v5998, %v6011
      %v6013 = vcombine.high %v6005, %v6005
      %v6014 = vcombine.high %v6012, %v6012
      %v6015 = vcombine.high %v5453, %v5453
      %v6017 = vunpack.c.l.s4 1983009808
      %v6018 = vunpack.c.0.s8 %v6017
      %v6019 = vlaneseq
      %v6020 = vshrl.u32 %v6019, 7
      %v6021 = vsub.s32 %v6018, %v6020
      %v6022 = vrot.slane %v5453, %v6021
      %v6024 = vunpack.c.l.s4 1983009808
      %v6025 = vunpack.c.0.s8 %v6024
      %v6026 = vlaneseq
      %v6027 = vshrl.u32 %v6026, 7
      %v6028 = vsub.s32 %v6025, %v6027
      %v6029 = vrot.slane %v6015, %v6028
      %v6030 = vcombine.high %v6029, %v6029
      %v6031 = vcombine.high %v5454, %v5454
      %v6033 = vunpack.c.l.s4 1983009808
      %v6034 = vunpack.c.0.s8 %v6033
      %v6035 = vlaneseq
      %v6036 = vshrl.u32 %v6035, 7
      %v6037 = vsub.s32 %v6034, %v6036
      %v6038 = vrot.slane %v5454, %v6037
      %v6040 = vunpack.c.l.s4 1983009808
      %v6041 = vunpack.c.0.s8 %v6040
      %v6042 = vlaneseq
      %v6043 = vshrl.u32 %v6042, 7
      %v6044 = vsub.s32 %v6041, %v6043
      %v6045 = vrot.slane %v6031, %v6044
      %v6046 = vcombine.high %v6038, %v6038
      %v6047 = vcombine.high %v6045, %v6045
      %v6048 = vcombine.high %v5455, %v5455
      %v6050 = vunpack.c.l.s4 1983009808
      %v6051 = vunpack.c.0.s8 %v6050
      %v6052 = vlaneseq
      %v6053 = vshrl.u32 %v6052, 7
      %v6054 = vsub.s32 %v6051, %v6053
      %v6055 = vrot.slane %v5455, %v6054
      %v6057 = vunpack.c.l.s4 1983009808
      %v6058 = vunpack.c.0.s8 %v6057
      %v6059 = vlaneseq
      %v6060 = vshrl.u32 %v6059, 7
      %v6061 = vsub.s32 %v6058, %v6060
      %v6062 = vrot.slane %v6048, %v6061
      %v6063 = vcombine.high %v6055, %v6055
      %v6064 = vcombine.high %v6062, %v6062
      %v6065 = vcombine.high %v5456, %v5456
      %v6067 = vunpack.c.l.s4 1983009808
      %v6068 = vunpack.c.0.s8 %v6067
      %v6069 = vlaneseq
      %v6070 = vshrl.u32 %v6069, 7
      %v6071 = vsub.s32 %v6068, %v6070
      %v6072 = vrot.slane %v5456, %v6071
      %v6074 = vunpack.c.l.s4 1983009808
      %v6075 = vunpack.c.0.s8 %v6074
      %v6076 = vlaneseq
      %v6077 = vshrl.u32 %v6076, 7
      %v6078 = vsub.s32 %v6075, %v6077
      %v6079 = vrot.slane %v6065, %v6078
      %v6080 = vcombine.high %v6072, %v6072
      %v6081 = vcombine.high %v6079, %v6079
      %v6082 = vcombine.high %v5457, %v5457
      %v6084 = vunpack.c.l.s4 1983009808
      %v6085 = vunpack.c.0.s8 %v6084
      %v6086 = vlaneseq
      %v6087 = vshrl.u32 %v6086, 7
      %v6088 = vsub.s32 %v6085, %v6087
      %v6089 = vrot.slane %v5457, %v6088
      %v6091 = vunpack.c.l.s4 1983009808
      %v6092 = vunpack.c.0.s8 %v6091
      %v6093 = vlaneseq
      %v6094 = vshrl.u32 %v6093, 7
      %v6095 = vsub.s32 %v6092, %v6094
      %v6096 = vrot.slane %v6082, %v6095
      %v6097 = vcombine.high %v6089, %v6089
      %v6226 = vcombine.low %v5501, %v5509
      %v6227 = vcombine.low %v5508, %v5510
      %v6229 = vunpack.c.l.s4 1983009808
      %v6230 = vunpack.c.0.s8 %v6229
      %v6231 = vlaneseq
      %v6232 = vshrl.u32 %v6231, 7
      %v6233 = vsub.s32 %v6230, %v6232
      %v6234 = vrot.slane %v6226, %v6233
      %v6236 = vunpack.c.l.s4 1983009808
      %v6237 = vunpack.c.0.s8 %v6236
      %v6238 = vlaneseq
      %v6239 = vshrl.u32 %v6238, 7
      %v6240 = vsub.s32 %v6237, %v6239
      %v6241 = vrot.slane %v6227, %v6240
      %v6242 = vcombine.low %v6234, %v6241
      %v6243 = vcombine.low %v5518, %v5526
      %v6244 = vcombine.low %v5525, %v5527
      %v6246 = vunpack.c.l.s4 1983009808
      %v6247 = vunpack.c.0.s8 %v6246
      %v6248 = vlaneseq
      %v6249 = vshrl.u32 %v6248, 7
      %v6250 = vsub.s32 %v6247, %v6249
      %v6251 = vrot.slane %v6243, %v6250
      %v6253 = vunpack.c.l.s4 1983009808
      %v6254 = vunpack.c.0.s8 %v6253
      %v6255 = vlaneseq
      %v6256 = vshrl.u32 %v6255, 7
      %v6257 = vsub.s32 %v6254, %v6256
      %v6258 = vrot.slane %v6244, %v6257
      %v6259 = vcombine.low %v6251, %v6258
      %v6260 = vcombine.low %v5543, %v5542
      %v6261 = vcombine.low %v5544, %v5552
      %v6263 = vunpack.c.l.s4 1983009808
      %v6264 = vunpack.c.0.s8 %v6263
      %v6265 = vlaneseq
      %v6266 = vshrl.u32 %v6265, 7
      %v6267 = vsub.s32 %v6264, %v6266
      %v6268 = vrot.slane %v6260, %v6267
      %v6270 = vunpack.c.l.s4 1983009808
      %v6271 = vunpack.c.0.s8 %v6270
      %v6272 = vlaneseq
      %v6273 = vshrl.u32 %v6272, 7
      %v6274 = vsub.s32 %v6271, %v6273
      %v6275 = vrot.slane %v6261, %v6274
      %v6276 = vcombine.low %v6268, %v6275
      %v6277 = vcombine.low %v5560, %v5559
      %v6278 = vcombine.low %v5561, %v5569
      %v6280 = vunpack.c.l.s4 1983009808
      %v6281 = vunpack.c.0.s8 %v6280
      %v6282 = vlaneseq
      %v6283 = vshrl.u32 %v6282, 7
      %v6284 = vsub.s32 %v6281, %v6283
      %v6285 = vrot.slane %v6277, %v6284
      %v6287 = vunpack.c.l.s4 1983009808
      %v6288 = vunpack.c.0.s8 %v6287
      %v6289 = vlaneseq
      %v6290 = vshrl.u32 %v6289, 7
      %v6291 = vsub.s32 %v6288, %v6290
      %v6292 = vrot.slane %v6278, %v6291
      %v6293 = vcombine.low %v6285, %v6292
      %v6294 = vcombine.low %v5576, %v5577
      %v6295 = vcombine.low %v5585, %v5593
      %v6297 = vunpack.c.l.s4 1983009808
      %v6298 = vunpack.c.0.s8 %v6297
      %v6299 = vlaneseq
      %v6300 = vshrl.u32 %v6299, 7
      %v6301 = vsub.s32 %v6298, %v6300
      %v6302 = vrot.slane %v6294, %v6301
      %v6304 = vunpack.c.l.s4 1983009808
      %v6305 = vunpack.c.0.s8 %v6304
      %v6306 = vlaneseq
      %v6307 = vshrl.u32 %v6306, 7
      %v6308 = vsub.s32 %v6305, %v6307
      %v6309 = vrot.slane %v6295, %v6308
      %v6310 = vcombine.low %v6302, %v6309
      %v6311 = vcombine.low %v5592, %v5594
      %v6312 = vcombine.low %v5602, %v5610
      %v6314 = vunpack.c.l.s4 1983009808
      %v6315 = vunpack.c.0.s8 %v6314
      %v6316 = vlaneseq
      %v6317 = vshrl.u32 %v6316, 7
      %v6318 = vsub.s32 %v6315, %v6317
      %v6319 = vrot.slane %v6311, %v6318
      %v6321 = vunpack.c.l.s4 1983009808
      %v6322 = vunpack.c.0.s8 %v6321
      %v6323 = vlaneseq
      %v6324 = vshrl.u32 %v6323, 7
      %v6325 = vsub.s32 %v6322, %v6324
      %v6326 = vrot.slane %v6312, %v6325
      %v6327 = vcombine.low %v6319, %v6326
      %v6328 = vcombine.low %v5611, %v5619
      %v6329 = vcombine.low %v5627, %v5626
      %v6331 = vunpack.c.l.s4 1983009808
      %v6332 = vunpack.c.0.s8 %v6331
      %v6333 = vlaneseq
      %v6334 = vshrl.u32 %v6333, 7
      %v6335 = vsub.s32 %v6332, %v6334
      %v6336 = vrot.slane %v6328, %v6335
      %v6338 = vunpack.c.l.s4 1983009808
      %v6339 = vunpack.c.0.s8 %v6338
      %v6340 = vlaneseq
      %v6341 = vshrl.u32 %v6340, 7
      %v6342 = vsub.s32 %v6339, %v6341
      %v6343 = vrot.slane %v6329, %v6342
      %v6344 = vcombine.low %v6336, %v6343
      %v6345 = vcombine.low %v5628, %v5636
      %v6346 = vcombine.low %v5644, %v5643
      %v6348 = vunpack.c.l.s4 1983009808
      %v6349 = vunpack.c.0.s8 %v6348
      %v6350 = vlaneseq
      %v6351 = vshrl.u32 %v6350, 7
      %v6352 = vsub.s32 %v6349, %v6351
      %v6353 = vrot.slane %v6345, %v6352
      %v6355 = vunpack.c.l.s4 1983009808
      %v6356 = vunpack.c.0.s8 %v6355
      %v6357 = vlaneseq
      %v6358 = vshrl.u32 %v6357, 7
      %v6359 = vsub.s32 %v6356, %v6358
      %v6360 = vrot.slane %v6346, %v6359
      %v6361 = vcombine.low %v6353, %v6360
      %v6362 = vcombine.low %v5652, %v5660
      %v6363 = vcombine.low %v5659, %v5661
      %v6365 = vunpack.c.l.s4 1983009808
      %v6366 = vunpack.c.0.s8 %v6365
      %v6367 = vlaneseq
      %v6368 = vshrl.u32 %v6367, 7
      %v6369 = vsub.s32 %v6366, %v6368
      %v6370 = vrot.slane %v6362, %v6369
      %v6372 = vunpack.c.l.s4 1983009808
      %v6373 = vunpack.c.0.s8 %v6372
      %v6374 = vlaneseq
      %v6375 = vshrl.u32 %v6374, 7
      %v6376 = vsub.s32 %v6373, %v6375
      %v6377 = vrot.slane %v6363, %v6376
      %v6378 = vcombine.low %v6370, %v6377
      %v6379 = vcombine.low %v5669, %v5677
      %v6380 = vcombine.low %v5676, %v5678
      %v6382 = vunpack.c.l.s4 1983009808
      %v6383 = vunpack.c.0.s8 %v6382
      %v6384 = vlaneseq
      %v6385 = vshrl.u32 %v6384, 7
      %v6386 = vsub.s32 %v6383, %v6385
      %v6387 = vrot.slane %v6379, %v6386
      %v6389 = vunpack.c.l.s4 1983009808
      %v6390 = vunpack.c.0.s8 %v6389
      %v6391 = vlaneseq
      %v6392 = vshrl.u32 %v6391, 7
      %v6393 = vsub.s32 %v6390, %v6392
      %v6394 = vrot.slane %v6380, %v6393
      %v6395 = vcombine.low %v6387, %v6394
      %v6396 = vcombine.low %v5694, %v5693
      %v6397 = vcombine.low %v5695, %v5703
      %v6399 = vunpack.c.l.s4 1983009808
      %v6400 = vunpack.c.0.s8 %v6399
      %v6401 = vlaneseq
      %v6402 = vshrl.u32 %v6401, 7
      %v6403 = vsub.s32 %v6400, %v6402
      %v6404 = vrot.slane %v6396, %v6403
      %v6406 = vunpack.c.l.s4 1983009808
      %v6407 = vunpack.c.0.s8 %v6406
      %v6408 = vlaneseq
      %v6409 = vshrl.u32 %v6408, 7
      %v6410 = vsub.s32 %v6407, %v6409
      %v6411 = vrot.slane %v6397, %v6410
      %v6412 = vcombine.low %v6404, %v6411
      %v6413 = vcombine.low %v5711, %v5710
      %v6414 = vcombine.low %v5712, %v5720
      %v6416 = vunpack.c.l.s4 1983009808
      %v6417 = vunpack.c.0.s8 %v6416
      %v6418 = vlaneseq
      %v6419 = vshrl.u32 %v6418, 7
      %v6420 = vsub.s32 %v6417, %v6419
      %v6421 = vrot.slane %v6413, %v6420
      %v6423 = vunpack.c.l.s4 1983009808
      %v6424 = vunpack.c.0.s8 %v6423
      %v6425 = vlaneseq
      %v6426 = vshrl.u32 %v6425, 7
      %v6427 = vsub.s32 %v6424, %v6426
      %v6428 = vrot.slane %v6414, %v6427
      %v6429 = vcombine.low %v6421, %v6428
      %v6430 = vcombine.low %v5727, %v5728
      %v6431 = vcombine.low %v5736, %v5744
      %v6433 = vunpack.c.l.s4 1983009808
      %v6434 = vunpack.c.0.s8 %v6433
      %v6435 = vlaneseq
      %v6436 = vshrl.u32 %v6435, 7
      %v6437 = vsub.s32 %v6434, %v6436
      %v6438 = vrot.slane %v6430, %v6437
      %v6440 = vunpack.c.l.s4 1983009808
      %v6441 = vunpack.c.0.s8 %v6440
      %v6442 = vlaneseq
      %v6443 = vshrl.u32 %v6442, 7
      %v6444 = vsub.s32 %v6441, %v6443
      %v6445 = vrot.slane %v6431, %v6444
      %v6446 = vcombine.low %v6438, %v6445
      %v6447 = vcombine.low %v5743, %v5745
      %v6448 = vcombine.low %v5753, %v5761
      %v6450 = vunpack.c.l.s4 1983009808
      %v6451 = vunpack.c.0.s8 %v6450
      %v6452 = vlaneseq
      %v6453 = vshrl.u32 %v6452, 7
      %v6454 = vsub.s32 %v6451, %v6453
      %v6455 = vrot.slane %v6447, %v6454
      %v6457 = vunpack.c.l.s4 1983009808
      %v6458 = vunpack.c.0.s8 %v6457
      %v6459 = vlaneseq
      %v6460 = vshrl.u32 %v6459, 7
      %v6461 = vsub.s32 %v6458, %v6460
      %v6462 = vrot.slane %v6448, %v6461
      %v6463 = vcombine.low %v6455, %v6462
      %v6464 = vcombine.low %v5762, %v5770
      %v6465 = vcombine.low %v5778, %v5777
      %v6467 = vunpack.c.l.s4 1983009808
      %v6468 = vunpack.c.0.s8 %v6467
      %v6469 = vlaneseq
      %v6470 = vshrl.u32 %v6469, 7
      %v6471 = vsub.s32 %v6468, %v6470
      %v6472 = vrot.slane %v6464, %v6471
      %v6474 = vunpack.c.l.s4 1983009808
      %v6475 = vunpack.c.0.s8 %v6474
      %v6476 = vlaneseq
      %v6477 = vshrl.u32 %v6476, 7
      %v6478 = vsub.s32 %v6475, %v6477
      %v6479 = vrot.slane %v6465, %v6478
      %v6480 = vcombine.low %v6472, %v6479
      %v6481 = vcombine.low %v5779, %v5787
      %v6482 = vcombine.low %v5795, %v5794
      %v6484 = vunpack.c.l.s4 1983009808
      %v6485 = vunpack.c.0.s8 %v6484
      %v6486 = vlaneseq
      %v6487 = vshrl.u32 %v6486, 7
      %v6488 = vsub.s32 %v6485, %v6487
      %v6489 = vrot.slane %v6481, %v6488
      %v6491 = vunpack.c.l.s4 1983009808
      %v6492 = vunpack.c.0.s8 %v6491
      %v6493 = vlaneseq
      %v6494 = vshrl.u32 %v6493, 7
      %v6495 = vsub.s32 %v6492, %v6494
      %v6496 = vrot.slane %v6482, %v6495
      %v6497 = vcombine.low %v6489, %v6496
      %v6498 = vcombine.low %v5803, %v5811
      %v6499 = vcombine.low %v5810, %v5812
      %v6501 = vunpack.c.l.s4 1983009808
      %v6502 = vunpack.c.0.s8 %v6501
      %v6503 = vlaneseq
      %v6504 = vshrl.u32 %v6503, 7
      %v6505 = vsub.s32 %v6502, %v6504
      %v6506 = vrot.slane %v6498, %v6505
      %v6508 = vunpack.c.l.s4 1983009808
      %v6509 = vunpack.c.0.s8 %v6508
      %v6510 = vlaneseq
      %v6511 = vshrl.u32 %v6510, 7
      %v6512 = vsub.s32 %v6509, %v6511
      %v6513 = vrot.slane %v6499, %v6512
      %v6514 = vcombine.low %v6506, %v6513
      %v6515 = vcombine.low %v5820, %v5828
      %v6516 = vcombine.low %v5827, %v5829
      %v6518 = vunpack.c.l.s4 1983009808
      %v6519 = vunpack.c.0.s8 %v6518
      %v6520 = vlaneseq
      %v6521 = vshrl.u32 %v6520, 7
      %v6522 = vsub.s32 %v6519, %v6521
      %v6523 = vrot.slane %v6515, %v6522
      %v6525 = vunpack.c.l.s4 1983009808
      %v6526 = vunpack.c.0.s8 %v6525
      %v6527 = vlaneseq
      %v6528 = vshrl.u32 %v6527, 7
      %v6529 = vsub.s32 %v6526, %v6528
      %v6530 = vrot.slane %v6516, %v6529
      %v6531 = vcombine.low %v6523, %v6530
      %v6532 = vcombine.low %v5845, %v5844
      %v6533 = vcombine.low %v5846, %v5854
      %v6535 = vunpack.c.l.s4 1983009808
      %v6536 = vunpack.c.0.s8 %v6535
      %v6537 = vlaneseq
      %v6538 = vshrl.u32 %v6537, 7
      %v6539 = vsub.s32 %v6536, %v6538
      %v6540 = vrot.slane %v6532, %v6539
      %v6542 = vunpack.c.l.s4 1983009808
      %v6543 = vunpack.c.0.s8 %v6542
      %v6544 = vlaneseq
      %v6545 = vshrl.u32 %v6544, 7
      %v6546 = vsub.s32 %v6543, %v6545
      %v6547 = vrot.slane %v6533, %v6546
      %v6548 = vcombine.low %v6540, %v6547
      %v6549 = vcombine.low %v5862, %v5861
      %v6550 = vcombine.low %v5863, %v5871
      %v6552 = vunpack.c.l.s4 1983009808
      %v6553 = vunpack.c.0.s8 %v6552
      %v6554 = vlaneseq
      %v6555 = vshrl.u32 %v6554, 7
      %v6556 = vsub.s32 %v6553, %v6555
      %v6557 = vrot.slane %v6549, %v6556
      %v6559 = vunpack.c.l.s4 1983009808
      %v6560 = vunpack.c.0.s8 %v6559
      %v6561 = vlaneseq
      %v6562 = vshrl.u32 %v6561, 7
      %v6563 = vsub.s32 %v6560, %v6562
      %v6564 = vrot.slane %v6550, %v6563
      %v6565 = vcombine.low %v6557, %v6564
      %v6566 = vcombine.low %v5878, %v5879
      %v6567 = vcombine.low %v5887, %v5895
      %v6569 = vunpack.c.l.s4 1983009808
      %v6570 = vunpack.c.0.s8 %v6569
      %v6571 = vlaneseq
      %v6572 = vshrl.u32 %v6571, 7
      %v6573 = vsub.s32 %v6570, %v6572
      %v6574 = vrot.slane %v6566, %v6573
      %v6576 = vunpack.c.l.s4 1983009808
      %v6577 = vunpack.c.0.s8 %v6576
      %v6578 = vlaneseq
      %v6579 = vshrl.u32 %v6578, 7
      %v6580 = vsub.s32 %v6577, %v6579
      %v6581 = vrot.slane %v6567, %v6580
      %v6582 = vcombine.low %v6574, %v6581
      %v6583 = vcombine.low %v5894, %v5896
      %v6584 = vcombine.low %v5904, %v5912
      %v6586 = vunpack.c.l.s4 1983009808
      %v6587 = vunpack.c.0.s8 %v6586
      %v6588 = vlaneseq
      %v6589 = vshrl.u32 %v6588, 7
      %v6590 = vsub.s32 %v6587, %v6589
      %v6591 = vrot.slane %v6583, %v6590
      %v6593 = vunpack.c.l.s4 1983009808
      %v6594 = vunpack.c.0.s8 %v6593
      %v6595 = vlaneseq
      %v6596 = vshrl.u32 %v6595, 7
      %v6597 = vsub.s32 %v6594, %v6596
      %v6598 = vrot.slane %v6584, %v6597
      %v6599 = vcombine.low %v6591, %v6598
      %v6600 = vcombine.low %v5913, %v5921
      %v6601 = vcombine.low %v5929, %v5928
      %v6603 = vunpack.c.l.s4 1983009808
      %v6604 = vunpack.c.0.s8 %v6603
      %v6605 = vlaneseq
      %v6606 = vshrl.u32 %v6605, 7
      %v6607 = vsub.s32 %v6604, %v6606
      %v6608 = vrot.slane %v6600, %v6607
      %v6610 = vunpack.c.l.s4 1983009808
      %v6611 = vunpack.c.0.s8 %v6610
      %v6612 = vlaneseq
      %v6613 = vshrl.u32 %v6612, 7
      %v6614 = vsub.s32 %v6611, %v6613
      %v6615 = vrot.slane %v6601, %v6614
      %v6616 = vcombine.low %v6608, %v6615
      %v6617 = vcombine.low %v5930, %v5938
      %v6618 = vcombine.low %v5946, %v5945
      %v6620 = vunpack.c.l.s4 1983009808
      %v6621 = vunpack.c.0.s8 %v6620
      %v6622 = vlaneseq
      %v6623 = vshrl.u32 %v6622, 7
      %v6624 = vsub.s32 %v6621, %v6623
      %v6625 = vrot.slane %v6617, %v6624
      %v6627 = vunpack.c.l.s4 1983009808
      %v6628 = vunpack.c.0.s8 %v6627
      %v6629 = vlaneseq
      %v6630 = vshrl.u32 %v6629, 7
      %v6631 = vsub.s32 %v6628, %v6630
      %v6632 = vrot.slane %v6618, %v6631
      %v6633 = vcombine.low %v6625, %v6632
      %v6634 = vcombine.low %v5954, %v5962
      %v6635 = vcombine.low %v5961, %v5963
      %v6637 = vunpack.c.l.s4 1983009808
      %v6638 = vunpack.c.0.s8 %v6637
      %v6639 = vlaneseq
      %v6640 = vshrl.u32 %v6639, 7
      %v6641 = vsub.s32 %v6638, %v6640
      %v6642 = vrot.slane %v6634, %v6641
      %v6644 = vunpack.c.l.s4 1983009808
      %v6645 = vunpack.c.0.s8 %v6644
      %v6646 = vlaneseq
      %v6647 = vshrl.u32 %v6646, 7
      %v6648 = vsub.s32 %v6645, %v6647
      %v6649 = vrot.slane %v6635, %v6648
      %v6650 = vcombine.low %v6642, %v6649
      %v6651 = vcombine.low %v5971, %v5979
      %v6652 = vcombine.low %v5978, %v5980
      %v6654 = vunpack.c.l.s4 1983009808
      %v6655 = vunpack.c.0.s8 %v6654
      %v6656 = vlaneseq
      %v6657 = vshrl.u32 %v6656, 7
      %v6658 = vsub.s32 %v6655, %v6657
      %v6659 = vrot.slane %v6651, %v6658
      %v6661 = vunpack.c.l.s4 1983009808
      %v6662 = vunpack.c.0.s8 %v6661
      %v6663 = vlaneseq
      %v6664 = vshrl.u32 %v6663, 7
      %v6665 = vsub.s32 %v6662, %v6664
      %v6666 = vrot.slane %v6652, %v6665
      %v6667 = vcombine.low %v6659, %v6666
      %v6668 = vcombine.low %v5996, %v5995
      %v6669 = vcombine.low %v5997, %v6005
      %v6671 = vunpack.c.l.s4 1983009808
      %v6672 = vunpack.c.0.s8 %v6671
      %v6673 = vlaneseq
      %v6674 = vshrl.u32 %v6673, 7
      %v6675 = vsub.s32 %v6672, %v6674
      %v6676 = vrot.slane %v6668, %v6675
      %v6678 = vunpack.c.l.s4 1983009808
      %v6679 = vunpack.c.0.s8 %v6678
      %v6680 = vlaneseq
      %v6681 = vshrl.u32 %v6680, 7
      %v6682 = vsub.s32 %v6679, %v6681
      %v6683 = vrot.slane %v6669, %v6682
      %v6684 = vcombine.low %v6676, %v6683
      %v6685 = vcombine.low %v6013, %v6012
      %v6686 = vcombine.low %v6014, %v6022
      %v6688 = vunpack.c.l.s4 1983009808
      %v6689 = vunpack.c.0.s8 %v6688
      %v6690 = vlaneseq
      %v6691 = vshrl.u32 %v6690, 7
      %v6692 = vsub.s32 %v6689, %v6691
      %v6693 = vrot.slane %v6685, %v6692
      %v6695 = vunpack.c.l.s4 1983009808
      %v6696 = vunpack.c.0.s8 %v6695
      %v6697 = vlaneseq
      %v6698 = vshrl.u32 %v6697, 7
      %v6699 = vsub.s32 %v6696, %v6698
      %v6700 = vrot.slane %v6686, %v6699
      %v6701 = vcombine.low %v6693, %v6700
      %v6702 = vcombine.low %v6029, %v6030
      %v6703 = vcombine.low %v6038, %v6046
      %v6705 = vunpack.c.l.s4 1983009808
      %v6706 = vunpack.c.0.s8 %v6705
      %v6707 = vlaneseq
      %v6708 = vshrl.u32 %v6707, 7
      %v6709 = vsub.s32 %v6706, %v6708
      %v6710 = vrot.slane %v6702, %v6709
      %v6712 = vunpack.c.l.s4 1983009808
      %v6713 = vunpack.c.0.s8 %v6712
      %v6714 = vlaneseq
      %v6715 = vshrl.u32 %v6714, 7
      %v6716 = vsub.s32 %v6713, %v6715
      %v6717 = vrot.slane %v6703, %v6716
      %v6718 = vcombine.low %v6710, %v6717
      %v6719 = vcombine.low %v6045, %v6047
      %v6720 = vcombine.low %v6055, %v6063
      %v6722 = vunpack.c.l.s4 1983009808
      %v6723 = vunpack.c.0.s8 %v6722
      %v6724 = vlaneseq
      %v6725 = vshrl.u32 %v6724, 7
      %v6726 = vsub.s32 %v6723, %v6725
      %v6727 = vrot.slane %v6719, %v6726
      %v6729 = vunpack.c.l.s4 1983009808
      %v6730 = vunpack.c.0.s8 %v6729
      %v6731 = vlaneseq
      %v6732 = vshrl.u32 %v6731, 7
      %v6733 = vsub.s32 %v6730, %v6732
      %v6734 = vrot.slane %v6720, %v6733
      %v6735 = vcombine.low %v6727, %v6734
      %v6736 = vcombine.low %v6064, %v6072
      %v6737 = vcombine.low %v6080, %v6079
      %v6739 = vunpack.c.l.s4 1983009808
      %v6740 = vunpack.c.0.s8 %v6739
      %v6741 = vlaneseq
      %v6742 = vshrl.u32 %v6741, 7
      %v6743 = vsub.s32 %v6740, %v6742
      %v6744 = vrot.slane %v6736, %v6743
      %v6746 = vunpack.c.l.s4 1983009808
      %v6747 = vunpack.c.0.s8 %v6746
      %v6748 = vlaneseq
      %v6749 = vshrl.u32 %v6748, 7
      %v6750 = vsub.s32 %v6747, %v6749
      %v6751 = vrot.slane %v6737, %v6750
      %v6752 = vcombine.low %v6744, %v6751
      %v6753 = vcombine.low %v6081, %v6089
      %v6754 = vcombine.low %v6097, %v6096
      %v6756 = vunpack.c.l.s4 1983009808
      %v6757 = vunpack.c.0.s8 %v6756
      %v6758 = vlaneseq
      %v6759 = vshrl.u32 %v6758, 7
      %v6760 = vsub.s32 %v6757, %v6759
      %v6761 = vrot.slane %v6753, %v6760
      %v6763 = vunpack.c.l.s4 1983009808
      %v6764 = vunpack.c.0.s8 %v6763
      %v6765 = vlaneseq
      %v6766 = vshrl.u32 %v6765, 7
      %v6767 = vsub.s32 %v6764, %v6766
      %v6768 = vrot.slane %v6754, %v6767
      %v6769 = vcombine.low %v6761, %v6768
      %6802 = vst.msk [vmem:[%s231] sm:$0xff] %vm378, %v6242
      %6803 = vst.msk [vmem:[%s231 + $0x8] sm:$0xff] %vm378, %v6259
      %6804 = vst.msk [vmem:[%s231 + $0x10] sm:$0xff] %vm378, %v6276
      %6805 = vst.msk [vmem:[%s231 + $0x18] sm:$0xff] %vm378, %v6293
      %6806 = vst.msk [vmem:[%s231 + $0x20] sm:$0xff] %vm378, %v6310
      %6807 = vst.msk [vmem:[%s231 + $0x28] sm:$0xff] %vm378, %v6327
      %6808 = vst.msk [vmem:[%s231 + $0x30] sm:$0xff] %vm378, %v6344
      %6809 = vst.msk [vmem:[%s231 + $0x38] sm:$0xff] %vm378, %v6361
      %6810 = vst.msk [vmem:[%s231 + $0x40] sm:$0xff] %vm378, %v6378
      %6811 = vst.msk [vmem:[%s231 + $0x48] sm:$0xff] %vm378, %v6395
      %6812 = vst.msk [vmem:[%s231 + $0x50] sm:$0xff] %vm378, %v6412
      %6813 = vst.msk [vmem:[%s231 + $0x58] sm:$0xff] %vm378, %v6429
      %6814 = vst.msk [vmem:[%s231 + $0x60] sm:$0xff] %vm378, %v6446
      %6815 = vst.msk [vmem:[%s231 + $0x68] sm:$0xff] %vm378, %v6463
      %6816 = vst.msk [vmem:[%s231 + $0x70] sm:$0xff] %vm378, %v6480
      %6817 = vst.msk [vmem:[%s231 + $0x78] sm:$0xff] %vm378, %v6497
      %6818 = vst.msk [vmem:[%s231 + $0x80] sm:$0xff] %vm378, %v6514
      %6819 = vst.msk [vmem:[%s231 + $0x88] sm:$0xff] %vm378, %v6531
      %6820 = vst.msk [vmem:[%s231 + $0x90] sm:$0xff] %vm378, %v6548
      %6821 = vst.msk [vmem:[%s231 + $0x98] sm:$0xff] %vm378, %v6565
      %6822 = vst.msk [vmem:[%s231 + $0xa0] sm:$0xff] %vm378, %v6582
      %6823 = vst.msk [vmem:[%s231 + $0xa8] sm:$0xff] %vm378, %v6599
      %6824 = vst.msk [vmem:[%s231 + $0xb0] sm:$0xff] %vm378, %v6616
      %6825 = vst.msk [vmem:[%s231 + $0xb8] sm:$0xff] %vm378, %v6633
      %6826 = vst.msk [vmem:[%s231 + $0xc0] sm:$0xff] %vm378, %v6650
      %6827 = vst.msk [vmem:[%s231 + $0xc8] sm:$0xff] %vm378, %v6667
      %6828 = vst.msk [vmem:[%s231 + $0xd0] sm:$0xff] %vm378, %v6684
      %6829 = vst.msk [vmem:[%s231 + $0xd8] sm:$0xff] %vm378, %v6701
      %6830 = vst.msk [vmem:[%s231 + $0xe0] sm:$0xff] %vm378, %v6718
      %6831 = vst.msk [vmem:[%s231 + $0xe8] sm:$0xff] %vm378, %v6735
      %6832 = vst.msk [vmem:[%s231 + $0xf0] sm:$0xff] %vm378, %v6752
      %6833 = vst.msk [vmem:[%s231 + $0xf8] sm:$0xff] %vm378, %v6769
      %v6834 = vsel %vm378, %v6242, 0.0
      %v6835 = vsel %vm378, %v6259, 0.0
      %v6836 = vadd.f32 %v6834, %v6835
      %v6837 = vsel %vm378, %v6276, 0.0
      %v6838 = vadd.f32 %v6836, %v6837
      %v6839 = vsel %vm378, %v6293, 0.0
      %v6840 = vadd.f32 %v6838, %v6839
      %v6841 = vsel %vm378, %v6310, 0.0
      %v6842 = vadd.f32 %v6840, %v6841
      %v6843 = vsel %vm378, %v6327, 0.0
      %v6844 = vadd.f32 %v6842, %v6843
      %v6845 = vsel %vm378, %v6344, 0.0
      %v6846 = vadd.f32 %v6844, %v6845
      %v6847 = vsel %vm378, %v6361, 0.0
      %v6848 = vadd.f32 %v6846, %v6847
      %v6849 = vsel %vm378, %v6378, 0.0
      %v6850 = vadd.f32 %v6848, %v6849
      %v6851 = vsel %vm378, %v6395, 0.0
      %v6852 = vadd.f32 %v6850, %v6851
      %v6853 = vsel %vm378, %v6412, 0.0
      %v6854 = vadd.f32 %v6852, %v6853
      %v6855 = vsel %vm378, %v6429, 0.0
      %v6856 = vadd.f32 %v6854, %v6855
      %v6857 = vsel %vm378, %v6446, 0.0
      %v6858 = vadd.f32 %v6856, %v6857
      %v6859 = vsel %vm378, %v6463, 0.0
      %v6860 = vadd.f32 %v6858, %v6859
      %v6861 = vsel %vm378, %v6480, 0.0
      %v6862 = vadd.f32 %v6860, %v6861
      %v6863 = vsel %vm378, %v6497, 0.0
      %v6864 = vadd.f32 %v6862, %v6863
      %v6865 = vsel %vm378, %v6514, 0.0
      %v6866 = vadd.f32 %v6864, %v6865
      %v6867 = vsel %vm378, %v6531, 0.0
      %v6868 = vadd.f32 %v6866, %v6867
      %v6869 = vsel %vm378, %v6548, 0.0
      %v6870 = vadd.f32 %v6868, %v6869
      %v6871 = vsel %vm378, %v6565, 0.0
      %v6872 = vadd.f32 %v6870, %v6871
      %v6873 = vsel %vm378, %v6582, 0.0
      %v6874 = vadd.f32 %v6872, %v6873
      %v6875 = vsel %vm378, %v6599, 0.0
      %v6876 = vadd.f32 %v6874, %v6875
      %v6877 = vsel %vm378, %v6616, 0.0
      %v6878 = vadd.f32 %v6876, %v6877
      %v6879 = vsel %vm378, %v6633, 0.0
      %v6880 = vadd.f32 %v6878, %v6879
      %v6881 = vsel %vm378, %v6650, 0.0
      %v6882 = vadd.f32 %v6880, %v6881
      %v6883 = vsel %vm378, %v6667, 0.0
      %v6884 = vadd.f32 %v6882, %v6883
      %v6885 = vsel %vm378, %v6684, 0.0
      %v6886 = vadd.f32 %v6884, %v6885
      %v6887 = vsel %vm378, %v6701, 0.0
      %v6888 = vadd.f32 %v6886, %v6887
      %v6889 = vsel %vm378, %v6718, 0.0
      %v6890 = vadd.f32 %v6888, %v6889
      %v6891 = vsel %vm378, %v6735, 0.0
      %v6892 = vadd.f32 %v6890, %v6891
      %v6893 = vsel %vm378, %v6752, 0.0
      %v6894 = vadd.f32 %v6892, %v6893
      %v6895 = vsel %vm378, %v6769, 0.0
      %v6896 = vadd.f32 %v6894, %v6895
      %v6897 = vrot.slane %v6896, 4
      %v6898 = vadd.f32 %v6896, %v6897
      %v6899 = vrot.slane %v6898, 2
      %v6900 = vadd.f32 %v6898, %v6899
      %v6901 = vrot.slane %v6900, 1
      %v6902 = vadd.f32 %v6900, %v6901
      %6903 = vst.msk [vmem:[%s235] sm:$0x1] %vm388, %v6902
      %v6904 = vmul.f32 %v5501, %v5501
      %v6905 = vmul.f32 %v5509, %v5509
      %v6906 = vmul.f32 %v5508, %v5508
      %v6907 = vmul.f32 %v5510, %v5510
      %v6908 = vmul.f32 %v5518, %v5518
      %v6909 = vmul.f32 %v5526, %v5526
      %v6910 = vmul.f32 %v5525, %v5525
      %v6911 = vmul.f32 %v5527, %v5527
      %v6912 = vmul.f32 %v5543, %v5543
      %v6913 = vmul.f32 %v5542, %v5542
      %v6914 = vmul.f32 %v5544, %v5544
      %v6915 = vmul.f32 %v5552, %v5552
      %v6916 = vmul.f32 %v5560, %v5560
      %v6917 = vmul.f32 %v5559, %v5559
      %v6918 = vmul.f32 %v5561, %v5561
      %v6919 = vmul.f32 %v5569, %v5569
      %v6920 = vmul.f32 %v5576, %v5576
      %v6921 = vmul.f32 %v5577, %v5577
      %v6922 = vmul.f32 %v5585, %v5585
      %v6923 = vmul.f32 %v5593, %v5593
      %v6924 = vmul.f32 %v5592, %v5592
      %v6925 = vmul.f32 %v5594, %v5594
      %v6926 = vmul.f32 %v5602, %v5602
      %v6927 = vmul.f32 %v5610, %v5610
      %v6928 = vmul.f32 %v5611, %v5611
      %v6929 = vmul.f32 %v5619, %v5619
      %v6930 = vmul.f32 %v5627, %v5627
      %v6931 = vmul.f32 %v5626, %v5626
      %v6932 = vmul.f32 %v5628, %v5628
      %v6933 = vmul.f32 %v5636, %v5636
      %v6934 = vmul.f32 %v5644, %v5644
      %v6935 = vmul.f32 %v5643, %v5643
      %v6936 = vmul.f32 %v5652, %v5652
      %v6937 = vmul.f32 %v5660, %v5660
      %v6938 = vmul.f32 %v5659, %v5659
      %v6939 = vmul.f32 %v5661, %v5661
      %v6940 = vmul.f32 %v5669, %v5669
      %v6941 = vmul.f32 %v5677, %v5677
      %v6942 = vmul.f32 %v5676, %v5676
      %v6943 = vmul.f32 %v5678, %v5678
      %v6944 = vmul.f32 %v5694, %v5694
      %v6945 = vmul.f32 %v5693, %v5693
      %v6946 = vmul.f32 %v5695, %v5695
      %v6947 = vmul.f32 %v5703, %v5703
      %v6948 = vmul.f32 %v5711, %v5711
      %v6949 = vmul.f32 %v5710, %v5710
      %v6950 = vmul.f32 %v5712, %v5712
      %v6951 = vmul.f32 %v5720, %v5720
      %v6952 = vmul.f32 %v5727, %v5727
      %v6953 = vmul.f32 %v5728, %v5728
      %v6954 = vmul.f32 %v5736, %v5736
      %v6955 = vmul.f32 %v5744, %v5744
      %v6956 = vmul.f32 %v5743, %v5743
      %v6957 = vmul.f32 %v5745, %v5745
      %v6958 = vmul.f32 %v5753, %v5753
      %v6959 = vmul.f32 %v5761, %v5761
      %v6960 = vmul.f32 %v5762, %v5762
      %v6961 = vmul.f32 %v5770, %v5770
      %v6962 = vmul.f32 %v5778, %v5778
      %v6963 = vmul.f32 %v5777, %v5777
      %v6964 = vmul.f32 %v5779, %v5779
      %v6965 = vmul.f32 %v5787, %v5787
      %v6966 = vmul.f32 %v5795, %v5795
      %v6967 = vmul.f32 %v5794, %v5794
      %v6968 = vmul.f32 %v5803, %v5803
      %v6969 = vmul.f32 %v5811, %v5811
      %v6970 = vmul.f32 %v5810, %v5810
      %v6971 = vmul.f32 %v5812, %v5812
      %v6972 = vmul.f32 %v5820, %v5820
      %v6973 = vmul.f32 %v5828, %v5828
      %v6974 = vmul.f32 %v5827, %v5827
      %v6975 = vmul.f32 %v5829, %v5829
      %v6976 = vmul.f32 %v5845, %v5845
      %v6977 = vmul.f32 %v5844, %v5844
      %v6978 = vmul.f32 %v5846, %v5846
      %v6979 = vmul.f32 %v5854, %v5854
      %v6980 = vmul.f32 %v5862, %v5862
      %v6981 = vmul.f32 %v5861, %v5861
      %v6982 = vmul.f32 %v5863, %v5863
      %v6983 = vmul.f32 %v5871, %v5871
      %v6984 = vmul.f32 %v5878, %v5878
      %v6985 = vmul.f32 %v5879, %v5879
      %v6986 = vmul.f32 %v5887, %v5887
      %v6987 = vmul.f32 %v5895, %v5895
      %v6988 = vmul.f32 %v5894, %v5894
      %v6989 = vmul.f32 %v5896, %v5896
      %v6990 = vmul.f32 %v5904, %v5904
      %v6991 = vmul.f32 %v5912, %v5912
      %v6992 = vmul.f32 %v5913, %v5913
      %v6993 = vmul.f32 %v5921, %v5921
      %v6994 = vmul.f32 %v5929, %v5929
      %v6995 = vmul.f32 %v5928, %v5928
      %v6996 = vmul.f32 %v5930, %v5930
      %v6997 = vmul.f32 %v5938, %v5938
      %v6998 = vmul.f32 %v5946, %v5946
      %v6999 = vmul.f32 %v5945, %v5945
      %v7000 = vmul.f32 %v5954, %v5954
      %v7001 = vmul.f32 %v5962, %v5962
      %v7002 = vmul.f32 %v5961, %v5961
      %v7003 = vmul.f32 %v5963, %v5963
      %v7004 = vmul.f32 %v5971, %v5971
      %v7005 = vmul.f32 %v5979, %v5979
      %v7006 = vmul.f32 %v5978, %v5978
      %v7007 = vmul.f32 %v5980, %v5980
      %v7008 = vmul.f32 %v5996, %v5996
      %v7009 = vmul.f32 %v5995, %v5995
      %v7010 = vmul.f32 %v5997, %v5997
      %v7011 = vmul.f32 %v6005, %v6005
      %v7012 = vmul.f32 %v6013, %v6013
      %v7013 = vmul.f32 %v6012, %v6012
      %v7014 = vmul.f32 %v6014, %v6014
      %v7015 = vmul.f32 %v6022, %v6022
      %v7016 = vmul.f32 %v6029, %v6029
      %v7017 = vmul.f32 %v6030, %v6030
      %v7018 = vmul.f32 %v6038, %v6038
      %v7019 = vmul.f32 %v6046, %v6046
      %v7020 = vmul.f32 %v6045, %v6045
      %v7021 = vmul.f32 %v6047, %v6047
      %v7022 = vmul.f32 %v6055, %v6055
      %v7023 = vmul.f32 %v6063, %v6063
      %v7024 = vmul.f32 %v6064, %v6064
      %v7025 = vmul.f32 %v6072, %v6072
      %v7026 = vmul.f32 %v6080, %v6080
      %v7027 = vmul.f32 %v6079, %v6079
      %v7028 = vmul.f32 %v6081, %v6081
      %v7029 = vmul.f32 %v6089, %v6089
      %v7030 = vmul.f32 %v6097, %v6097
      %v7031 = vmul.f32 %v6096, %v6096
      %v7160 = vcombine.low %v6904, %v6905
      %v7161 = vcombine.low %v6906, %v6907
      %v7163 = vunpack.c.l.s4 1983009808
      %v7164 = vunpack.c.0.s8 %v7163
      %v7165 = vlaneseq
      %v7166 = vshrl.u32 %v7165, 7
      %v7167 = vsub.s32 %v7164, %v7166
      %v7168 = vrot.slane %v7160, %v7167
      %v7170 = vunpack.c.l.s4 1983009808
      %v7171 = vunpack.c.0.s8 %v7170
      %v7172 = vlaneseq
      %v7173 = vshrl.u32 %v7172, 7
      %v7174 = vsub.s32 %v7171, %v7173
      %v7175 = vrot.slane %v7161, %v7174
      %v7176 = vcombine.low %v7168, %v7175
      %v7177 = vcombine.low %v6908, %v6909
      %v7178 = vcombine.low %v6910, %v6911
      %v7180 = vunpack.c.l.s4 1983009808
      %v7181 = vunpack.c.0.s8 %v7180
      %v7182 = vlaneseq
      %v7183 = vshrl.u32 %v7182, 7
      %v7184 = vsub.s32 %v7181, %v7183
      %v7185 = vrot.slane %v7177, %v7184
      %v7187 = vunpack.c.l.s4 1983009808
      %v7188 = vunpack.c.0.s8 %v7187
      %v7189 = vlaneseq
      %v7190 = vshrl.u32 %v7189, 7
      %v7191 = vsub.s32 %v7188, %v7190
      %v7192 = vrot.slane %v7178, %v7191
      %v7193 = vcombine.low %v7185, %v7192
      %v7194 = vcombine.low %v6912, %v6913
      %v7195 = vcombine.low %v6914, %v6915
      %v7197 = vunpack.c.l.s4 1983009808
      %v7198 = vunpack.c.0.s8 %v7197
      %v7199 = vlaneseq
      %v7200 = vshrl.u32 %v7199, 7
      %v7201 = vsub.s32 %v7198, %v7200
      %v7202 = vrot.slane %v7194, %v7201
      %v7204 = vunpack.c.l.s4 1983009808
      %v7205 = vunpack.c.0.s8 %v7204
      %v7206 = vlaneseq
      %v7207 = vshrl.u32 %v7206, 7
      %v7208 = vsub.s32 %v7205, %v7207
      %v7209 = vrot.slane %v7195, %v7208
      %v7210 = vcombine.low %v7202, %v7209
      %v7211 = vcombine.low %v6916, %v6917
      %v7212 = vcombine.low %v6918, %v6919
      %v7214 = vunpack.c.l.s4 1983009808
      %v7215 = vunpack.c.0.s8 %v7214
      %v7216 = vlaneseq
      %v7217 = vshrl.u32 %v7216, 7
      %v7218 = vsub.s32 %v7215, %v7217
      %v7219 = vrot.slane %v7211, %v7218
      %v7221 = vunpack.c.l.s4 1983009808
      %v7222 = vunpack.c.0.s8 %v7221
      %v7223 = vlaneseq
      %v7224 = vshrl.u32 %v7223, 7
      %v7225 = vsub.s32 %v7222, %v7224
      %v7226 = vrot.slane %v7212, %v7225
      %v7227 = vcombine.low %v7219, %v7226
      %v7228 = vcombine.low %v6920, %v6921
      %v7229 = vcombine.low %v6922, %v6923
      %v7231 = vunpack.c.l.s4 1983009808
      %v7232 = vunpack.c.0.s8 %v7231
      %v7233 = vlaneseq
      %v7234 = vshrl.u32 %v7233, 7
      %v7235 = vsub.s32 %v7232, %v7234
      %v7236 = vrot.slane %v7228, %v7235
      %v7238 = vunpack.c.l.s4 1983009808
      %v7239 = vunpack.c.0.s8 %v7238
      %v7240 = vlaneseq
      %v7241 = vshrl.u32 %v7240, 7
      %v7242 = vsub.s32 %v7239, %v7241
      %v7243 = vrot.slane %v7229, %v7242
      %v7244 = vcombine.low %v7236, %v7243
      %v7245 = vcombine.low %v6924, %v6925
      %v7246 = vcombine.low %v6926, %v6927
      %v7248 = vunpack.c.l.s4 1983009808
      %v7249 = vunpack.c.0.s8 %v7248
      %v7250 = vlaneseq
      %v7251 = vshrl.u32 %v7250, 7
      %v7252 = vsub.s32 %v7249, %v7251
      %v7253 = vrot.slane %v7245, %v7252
      %v7255 = vunpack.c.l.s4 1983009808
      %v7256 = vunpack.c.0.s8 %v7255
      %v7257 = vlaneseq
      %v7258 = vshrl.u32 %v7257, 7
      %v7259 = vsub.s32 %v7256, %v7258
      %v7260 = vrot.slane %v7246, %v7259
      %v7261 = vcombine.low %v7253, %v7260
      %v7262 = vcombine.low %v6928, %v6929
      %v7263 = vcombine.low %v6930, %v6931
      %v7265 = vunpack.c.l.s4 1983009808
      %v7266 = vunpack.c.0.s8 %v7265
      %v7267 = vlaneseq
      %v7268 = vshrl.u32 %v7267, 7
      %v7269 = vsub.s32 %v7266, %v7268
      %v7270 = vrot.slane %v7262, %v7269
      %v7272 = vunpack.c.l.s4 1983009808
      %v7273 = vunpack.c.0.s8 %v7272
      %v7274 = vlaneseq
      %v7275 = vshrl.u32 %v7274, 7
      %v7276 = vsub.s32 %v7273, %v7275
      %v7277 = vrot.slane %v7263, %v7276
      %v7278 = vcombine.low %v7270, %v7277
      %v7279 = vcombine.low %v6932, %v6933
      %v7280 = vcombine.low %v6934, %v6935
      %v7282 = vunpack.c.l.s4 1983009808
      %v7283 = vunpack.c.0.s8 %v7282
      %v7284 = vlaneseq
      %v7285 = vshrl.u32 %v7284, 7
      %v7286 = vsub.s32 %v7283, %v7285
      %v7287 = vrot.slane %v7279, %v7286
      %v7289 = vunpack.c.l.s4 1983009808
      %v7290 = vunpack.c.0.s8 %v7289
      %v7291 = vlaneseq
      %v7292 = vshrl.u32 %v7291, 7
      %v7293 = vsub.s32 %v7290, %v7292
      %v7294 = vrot.slane %v7280, %v7293
      %v7295 = vcombine.low %v7287, %v7294
      %v7296 = vcombine.low %v6936, %v6937
      %v7297 = vcombine.low %v6938, %v6939
      %v7299 = vunpack.c.l.s4 1983009808
      %v7300 = vunpack.c.0.s8 %v7299
      %v7301 = vlaneseq
      %v7302 = vshrl.u32 %v7301, 7
      %v7303 = vsub.s32 %v7300, %v7302
      %v7304 = vrot.slane %v7296, %v7303
      %v7306 = vunpack.c.l.s4 1983009808
      %v7307 = vunpack.c.0.s8 %v7306
      %v7308 = vlaneseq
      %v7309 = vshrl.u32 %v7308, 7
      %v7310 = vsub.s32 %v7307, %v7309
      %v7311 = vrot.slane %v7297, %v7310
      %v7312 = vcombine.low %v7304, %v7311
      %v7313 = vcombine.low %v6940, %v6941
      %v7314 = vcombine.low %v6942, %v6943
      %v7316 = vunpack.c.l.s4 1983009808
      %v7317 = vunpack.c.0.s8 %v7316
      %v7318 = vlaneseq
      %v7319 = vshrl.u32 %v7318, 7
      %v7320 = vsub.s32 %v7317, %v7319
      %v7321 = vrot.slane %v7313, %v7320
      %v7323 = vunpack.c.l.s4 1983009808
      %v7324 = vunpack.c.0.s8 %v7323
      %v7325 = vlaneseq
      %v7326 = vshrl.u32 %v7325, 7
      %v7327 = vsub.s32 %v7324, %v7326
      %v7328 = vrot.slane %v7314, %v7327
      %v7329 = vcombine.low %v7321, %v7328
      %v7330 = vcombine.low %v6944, %v6945
      %v7331 = vcombine.low %v6946, %v6947
      %v7333 = vunpack.c.l.s4 1983009808
      %v7334 = vunpack.c.0.s8 %v7333
      %v7335 = vlaneseq
      %v7336 = vshrl.u32 %v7335, 7
      %v7337 = vsub.s32 %v7334, %v7336
      %v7338 = vrot.slane %v7330, %v7337
      %v7340 = vunpack.c.l.s4 1983009808
      %v7341 = vunpack.c.0.s8 %v7340
      %v7342 = vlaneseq
      %v7343 = vshrl.u32 %v7342, 7
      %v7344 = vsub.s32 %v7341, %v7343
      %v7345 = vrot.slane %v7331, %v7344
      %v7346 = vcombine.low %v7338, %v7345
      %v7347 = vcombine.low %v6948, %v6949
      %v7348 = vcombine.low %v6950, %v6951
      %v7350 = vunpack.c.l.s4 1983009808
      %v7351 = vunpack.c.0.s8 %v7350
      %v7352 = vlaneseq
      %v7353 = vshrl.u32 %v7352, 7
      %v7354 = vsub.s32 %v7351, %v7353
      %v7355 = vrot.slane %v7347, %v7354
      %v7357 = vunpack.c.l.s4 1983009808
      %v7358 = vunpack.c.0.s8 %v7357
      %v7359 = vlaneseq
      %v7360 = vshrl.u32 %v7359, 7
      %v7361 = vsub.s32 %v7358, %v7360
      %v7362 = vrot.slane %v7348, %v7361
      %v7363 = vcombine.low %v7355, %v7362
      %v7364 = vcombine.low %v6952, %v6953
      %v7365 = vcombine.low %v6954, %v6955
      %v7367 = vunpack.c.l.s4 1983009808
      %v7368 = vunpack.c.0.s8 %v7367
      %v7369 = vlaneseq
      %v7370 = vshrl.u32 %v7369, 7
      %v7371 = vsub.s32 %v7368, %v7370
      %v7372 = vrot.slane %v7364, %v7371
      %v7374 = vunpack.c.l.s4 1983009808
      %v7375 = vunpack.c.0.s8 %v7374
      %v7376 = vlaneseq
      %v7377 = vshrl.u32 %v7376, 7
      %v7378 = vsub.s32 %v7375, %v7377
      %v7379 = vrot.slane %v7365, %v7378
      %v7380 = vcombine.low %v7372, %v7379
      %v7381 = vcombine.low %v6956, %v6957
      %v7382 = vcombine.low %v6958, %v6959
      %v7384 = vunpack.c.l.s4 1983009808
      %v7385 = vunpack.c.0.s8 %v7384
      %v7386 = vlaneseq
      %v7387 = vshrl.u32 %v7386, 7
      %v7388 = vsub.s32 %v7385, %v7387
      %v7389 = vrot.slane %v7381, %v7388
      %v7391 = vunpack.c.l.s4 1983009808
      %v7392 = vunpack.c.0.s8 %v7391
      %v7393 = vlaneseq
      %v7394 = vshrl.u32 %v7393, 7
      %v7395 = vsub.s32 %v7392, %v7394
      %v7396 = vrot.slane %v7382, %v7395
      %v7397 = vcombine.low %v7389, %v7396
      %v7398 = vcombine.low %v6960, %v6961
      %v7399 = vcombine.low %v6962, %v6963
      %v7401 = vunpack.c.l.s4 1983009808
      %v7402 = vunpack.c.0.s8 %v7401
      %v7403 = vlaneseq
      %v7404 = vshrl.u32 %v7403, 7
      %v7405 = vsub.s32 %v7402, %v7404
      %v7406 = vrot.slane %v7398, %v7405
      %v7408 = vunpack.c.l.s4 1983009808
      %v7409 = vunpack.c.0.s8 %v7408
      %v7410 = vlaneseq
      %v7411 = vshrl.u32 %v7410, 7
      %v7412 = vsub.s32 %v7409, %v7411
      %v7413 = vrot.slane %v7399, %v7412
      %v7414 = vcombine.low %v7406, %v7413
      %v7415 = vcombine.low %v6964, %v6965
      %v7416 = vcombine.low %v6966, %v6967
      %v7418 = vunpack.c.l.s4 1983009808
      %v7419 = vunpack.c.0.s8 %v7418
      %v7420 = vlaneseq
      %v7421 = vshrl.u32 %v7420, 7
      %v7422 = vsub.s32 %v7419, %v7421
      %v7423 = vrot.slane %v7415, %v7422
      %v7425 = vunpack.c.l.s4 1983009808
      %v7426 = vunpack.c.0.s8 %v7425
      %v7427 = vlaneseq
      %v7428 = vshrl.u32 %v7427, 7
      %v7429 = vsub.s32 %v7426, %v7428
      %v7430 = vrot.slane %v7416, %v7429
      %v7431 = vcombine.low %v7423, %v7430
      %v7432 = vcombine.low %v6968, %v6969
      %v7433 = vcombine.low %v6970, %v6971
      %v7435 = vunpack.c.l.s4 1983009808
      %v7436 = vunpack.c.0.s8 %v7435
      %v7437 = vlaneseq
      %v7438 = vshrl.u32 %v7437, 7
      %v7439 = vsub.s32 %v7436, %v7438
      %v7440 = vrot.slane %v7432, %v7439
      %v7442 = vunpack.c.l.s4 1983009808
      %v7443 = vunpack.c.0.s8 %v7442
      %v7444 = vlaneseq
      %v7445 = vshrl.u32 %v7444, 7
      %v7446 = vsub.s32 %v7443, %v7445
      %v7447 = vrot.slane %v7433, %v7446
      %v7448 = vcombine.low %v7440, %v7447
      %v7449 = vcombine.low %v6972, %v6973
      %v7450 = vcombine.low %v6974, %v6975
      %v7452 = vunpack.c.l.s4 1983009808
      %v7453 = vunpack.c.0.s8 %v7452
      %v7454 = vlaneseq
      %v7455 = vshrl.u32 %v7454, 7
      %v7456 = vsub.s32 %v7453, %v7455
      %v7457 = vrot.slane %v7449, %v7456
      %v7459 = vunpack.c.l.s4 1983009808
      %v7460 = vunpack.c.0.s8 %v7459
      %v7461 = vlaneseq
      %v7462 = vshrl.u32 %v7461, 7
      %v7463 = vsub.s32 %v7460, %v7462
      %v7464 = vrot.slane %v7450, %v7463
      %v7465 = vcombine.low %v7457, %v7464
      %v7466 = vcombine.low %v6976, %v6977
      %v7467 = vcombine.low %v6978, %v6979
      %v7469 = vunpack.c.l.s4 1983009808
      %v7470 = vunpack.c.0.s8 %v7469
      %v7471 = vlaneseq
      %v7472 = vshrl.u32 %v7471, 7
      %v7473 = vsub.s32 %v7470, %v7472
      %v7474 = vrot.slane %v7466, %v7473
      %v7476 = vunpack.c.l.s4 1983009808
      %v7477 = vunpack.c.0.s8 %v7476
      %v7478 = vlaneseq
      %v7479 = vshrl.u32 %v7478, 7
      %v7480 = vsub.s32 %v7477, %v7479
      %v7481 = vrot.slane %v7467, %v7480
      %v7482 = vcombine.low %v7474, %v7481
      %v7483 = vcombine.low %v6980, %v6981
      %v7484 = vcombine.low %v6982, %v6983
      %v7486 = vunpack.c.l.s4 1983009808
      %v7487 = vunpack.c.0.s8 %v7486
      %v7488 = vlaneseq
      %v7489 = vshrl.u32 %v7488, 7
      %v7490 = vsub.s32 %v7487, %v7489
      %v7491 = vrot.slane %v7483, %v7490
      %v7493 = vunpack.c.l.s4 1983009808
      %v7494 = vunpack.c.0.s8 %v7493
      %v7495 = vlaneseq
      %v7496 = vshrl.u32 %v7495, 7
      %v7497 = vsub.s32 %v7494, %v7496
      %v7498 = vrot.slane %v7484, %v7497
      %v7499 = vcombine.low %v7491, %v7498
      %v7500 = vcombine.low %v6984, %v6985
      %v7501 = vcombine.low %v6986, %v6987
      %v7503 = vunpack.c.l.s4 1983009808
      %v7504 = vunpack.c.0.s8 %v7503
      %v7505 = vlaneseq
      %v7506 = vshrl.u32 %v7505, 7
      %v7507 = vsub.s32 %v7504, %v7506
      %v7508 = vrot.slane %v7500, %v7507
      %v7510 = vunpack.c.l.s4 1983009808
      %v7511 = vunpack.c.0.s8 %v7510
      %v7512 = vlaneseq
      %v7513 = vshrl.u32 %v7512, 7
      %v7514 = vsub.s32 %v7511, %v7513
      %v7515 = vrot.slane %v7501, %v7514
      %v7516 = vcombine.low %v7508, %v7515
      %v7517 = vcombine.low %v6988, %v6989
      %v7518 = vcombine.low %v6990, %v6991
      %v7520 = vunpack.c.l.s4 1983009808
      %v7521 = vunpack.c.0.s8 %v7520
      %v7522 = vlaneseq
      %v7523 = vshrl.u32 %v7522, 7
      %v7524 = vsub.s32 %v7521, %v7523
      %v7525 = vrot.slane %v7517, %v7524
      %v7527 = vunpack.c.l.s4 1983009808
      %v7528 = vunpack.c.0.s8 %v7527
      %v7529 = vlaneseq
      %v7530 = vshrl.u32 %v7529, 7
      %v7531 = vsub.s32 %v7528, %v7530
      %v7532 = vrot.slane %v7518, %v7531
      %v7533 = vcombine.low %v7525, %v7532
      %v7534 = vcombine.low %v6992, %v6993
      %v7535 = vcombine.low %v6994, %v6995
      %v7537 = vunpack.c.l.s4 1983009808
      %v7538 = vunpack.c.0.s8 %v7537
      %v7539 = vlaneseq
      %v7540 = vshrl.u32 %v7539, 7
      %v7541 = vsub.s32 %v7538, %v7540
      %v7542 = vrot.slane %v7534, %v7541
      %v7544 = vunpack.c.l.s4 1983009808
      %v7545 = vunpack.c.0.s8 %v7544
      %v7546 = vlaneseq
      %v7547 = vshrl.u32 %v7546, 7
      %v7548 = vsub.s32 %v7545, %v7547
      %v7549 = vrot.slane %v7535, %v7548
      %v7550 = vcombine.low %v7542, %v7549
      %v7551 = vcombine.low %v6996, %v6997
      %v7552 = vcombine.low %v6998, %v6999
      %v7554 = vunpack.c.l.s4 1983009808
      %v7555 = vunpack.c.0.s8 %v7554
      %v7556 = vlaneseq
      %v7557 = vshrl.u32 %v7556, 7
      %v7558 = vsub.s32 %v7555, %v7557
      %v7559 = vrot.slane %v7551, %v7558
      %v7561 = vunpack.c.l.s4 1983009808
      %v7562 = vunpack.c.0.s8 %v7561
      %v7563 = vlaneseq
      %v7564 = vshrl.u32 %v7563, 7
      %v7565 = vsub.s32 %v7562, %v7564
      %v7566 = vrot.slane %v7552, %v7565
      %v7567 = vcombine.low %v7559, %v7566
      %v7568 = vcombine.low %v7000, %v7001
      %v7569 = vcombine.low %v7002, %v7003
      %v7571 = vunpack.c.l.s4 1983009808
      %v7572 = vunpack.c.0.s8 %v7571
      %v7573 = vlaneseq
      %v7574 = vshrl.u32 %v7573, 7
      %v7575 = vsub.s32 %v7572, %v7574
      %v7576 = vrot.slane %v7568, %v7575
      %v7578 = vunpack.c.l.s4 1983009808
      %v7579 = vunpack.c.0.s8 %v7578
      %v7580 = vlaneseq
      %v7581 = vshrl.u32 %v7580, 7
      %v7582 = vsub.s32 %v7579, %v7581
      %v7583 = vrot.slane %v7569, %v7582
      %v7584 = vcombine.low %v7576, %v7583
      %v7585 = vcombine.low %v7004, %v7005
      %v7586 = vcombine.low %v7006, %v7007
      %v7588 = vunpack.c.l.s4 1983009808
      %v7589 = vunpack.c.0.s8 %v7588
      %v7590 = vlaneseq
      %v7591 = vshrl.u32 %v7590, 7
      %v7592 = vsub.s32 %v7589, %v7591
      %v7593 = vrot.slane %v7585, %v7592
      %v7595 = vunpack.c.l.s4 1983009808
      %v7596 = vunpack.c.0.s8 %v7595
      %v7597 = vlaneseq
      %v7598 = vshrl.u32 %v7597, 7
      %v7599 = vsub.s32 %v7596, %v7598
      %v7600 = vrot.slane %v7586, %v7599
      %v7601 = vcombine.low %v7593, %v7600
      %v7602 = vcombine.low %v7008, %v7009
      %v7603 = vcombine.low %v7010, %v7011
      %v7605 = vunpack.c.l.s4 1983009808
      %v7606 = vunpack.c.0.s8 %v7605
      %v7607 = vlaneseq
      %v7608 = vshrl.u32 %v7607, 7
      %v7609 = vsub.s32 %v7606, %v7608
      %v7610 = vrot.slane %v7602, %v7609
      %v7612 = vunpack.c.l.s4 1983009808
      %v7613 = vunpack.c.0.s8 %v7612
      %v7614 = vlaneseq
      %v7615 = vshrl.u32 %v7614, 7
      %v7616 = vsub.s32 %v7613, %v7615
      %v7617 = vrot.slane %v7603, %v7616
      %v7618 = vcombine.low %v7610, %v7617
      %v7619 = vcombine.low %v7012, %v7013
      %v7620 = vcombine.low %v7014, %v7015
      %v7622 = vunpack.c.l.s4 1983009808
      %v7623 = vunpack.c.0.s8 %v7622
      %v7624 = vlaneseq
      %v7625 = vshrl.u32 %v7624, 7
      %v7626 = vsub.s32 %v7623, %v7625
      %v7627 = vrot.slane %v7619, %v7626
      %v7629 = vunpack.c.l.s4 1983009808
      %v7630 = vunpack.c.0.s8 %v7629
      %v7631 = vlaneseq
      %v7632 = vshrl.u32 %v7631, 7
      %v7633 = vsub.s32 %v7630, %v7632
      %v7634 = vrot.slane %v7620, %v7633
      %v7635 = vcombine.low %v7627, %v7634
      %v7636 = vcombine.low %v7016, %v7017
      %v7637 = vcombine.low %v7018, %v7019
      %v7639 = vunpack.c.l.s4 1983009808
      %v7640 = vunpack.c.0.s8 %v7639
      %v7641 = vlaneseq
      %v7642 = vshrl.u32 %v7641, 7
      %v7643 = vsub.s32 %v7640, %v7642
      %v7644 = vrot.slane %v7636, %v7643
      %v7646 = vunpack.c.l.s4 1983009808
      %v7647 = vunpack.c.0.s8 %v7646
      %v7648 = vlaneseq
      %v7649 = vshrl.u32 %v7648, 7
      %v7650 = vsub.s32 %v7647, %v7649
      %v7651 = vrot.slane %v7637, %v7650
      %v7652 = vcombine.low %v7644, %v7651
      %v7653 = vcombine.low %v7020, %v7021
      %v7654 = vcombine.low %v7022, %v7023
      %v7656 = vunpack.c.l.s4 1983009808
      %v7657 = vunpack.c.0.s8 %v7656
      %v7658 = vlaneseq
      %v7659 = vshrl.u32 %v7658, 7
      %v7660 = vsub.s32 %v7657, %v7659
      %v7661 = vrot.slane %v7653, %v7660
      %v7663 = vunpack.c.l.s4 1983009808
      %v7664 = vunpack.c.0.s8 %v7663
      %v7665 = vlaneseq
      %v7666 = vshrl.u32 %v7665, 7
      %v7667 = vsub.s32 %v7664, %v7666
      %v7668 = vrot.slane %v7654, %v7667
      %v7669 = vcombine.low %v7661, %v7668
      %v7670 = vcombine.low %v7024, %v7025
      %v7671 = vcombine.low %v7026, %v7027
      %v7673 = vunpack.c.l.s4 1983009808
      %v7674 = vunpack.c.0.s8 %v7673
      %v7675 = vlaneseq
      %v7676 = vshrl.u32 %v7675, 7
      %v7677 = vsub.s32 %v7674, %v7676
      %v7678 = vrot.slane %v7670, %v7677
      %v7680 = vunpack.c.l.s4 1983009808
      %v7681 = vunpack.c.0.s8 %v7680
      %v7682 = vlaneseq
      %v7683 = vshrl.u32 %v7682, 7
      %v7684 = vsub.s32 %v7681, %v7683
      %v7685 = vrot.slane %v7671, %v7684
      %v7686 = vcombine.low %v7678, %v7685
      %v7687 = vcombine.low %v7028, %v7029
      %v7688 = vcombine.low %v7030, %v7031
      %v7690 = vunpack.c.l.s4 1983009808
      %v7691 = vunpack.c.0.s8 %v7690
      %v7692 = vlaneseq
      %v7693 = vshrl.u32 %v7692, 7
      %v7694 = vsub.s32 %v7691, %v7693
      %v7695 = vrot.slane %v7687, %v7694
      %v7697 = vunpack.c.l.s4 1983009808
      %v7698 = vunpack.c.0.s8 %v7697
      %v7699 = vlaneseq
      %v7700 = vshrl.u32 %v7699, 7
      %v7701 = vsub.s32 %v7698, %v7700
      %v7702 = vrot.slane %v7688, %v7701
      %v7703 = vcombine.low %v7695, %v7702
      %v7736 = vsel %vm378, %v7176, 0.0
      %v7737 = vsel %vm378, %v7193, 0.0
      %v7738 = vadd.f32 %v7736, %v7737
      %v7739 = vsel %vm378, %v7210, 0.0
      %v7740 = vadd.f32 %v7738, %v7739
      %v7741 = vsel %vm378, %v7227, 0.0
      %v7742 = vadd.f32 %v7740, %v7741
      %v7743 = vsel %vm378, %v7244, 0.0
      %v7744 = vadd.f32 %v7742, %v7743
      %v7745 = vsel %vm378, %v7261, 0.0
      %v7746 = vadd.f32 %v7744, %v7745
      %v7747 = vsel %vm378, %v7278, 0.0
      %v7748 = vadd.f32 %v7746, %v7747
      %v7749 = vsel %vm378, %v7295, 0.0
      %v7750 = vadd.f32 %v7748, %v7749
      %v7751 = vsel %vm378, %v7312, 0.0
      %v7752 = vadd.f32 %v7750, %v7751
      %v7753 = vsel %vm378, %v7329, 0.0
      %v7754 = vadd.f32 %v7752, %v7753
      %v7755 = vsel %vm378, %v7346, 0.0
      %v7756 = vadd.f32 %v7754, %v7755
      %v7757 = vsel %vm378, %v7363, 0.0
      %v7758 = vadd.f32 %v7756, %v7757
      %v7759 = vsel %vm378, %v7380, 0.0
      %v7760 = vadd.f32 %v7758, %v7759
      %v7761 = vsel %vm378, %v7397, 0.0
      %v7762 = vadd.f32 %v7760, %v7761
      %v7763 = vsel %vm378, %v7414, 0.0
      %v7764 = vadd.f32 %v7762, %v7763
      %v7765 = vsel %vm378, %v7431, 0.0
      %v7766 = vadd.f32 %v7764, %v7765
      %v7767 = vsel %vm378, %v7448, 0.0
      %v7768 = vadd.f32 %v7766, %v7767
      %v7769 = vsel %vm378, %v7465, 0.0
      %v7770 = vadd.f32 %v7768, %v7769
      %v7771 = vsel %vm378, %v7482, 0.0
      %v7772 = vadd.f32 %v7770, %v7771
      %v7773 = vsel %vm378, %v7499, 0.0
      %v7774 = vadd.f32 %v7772, %v7773
      %v7775 = vsel %vm378, %v7516, 0.0
      %v7776 = vadd.f32 %v7774, %v7775
      %v7777 = vsel %vm378, %v7533, 0.0
      %v7778 = vadd.f32 %v7776, %v7777
      %v7779 = vsel %vm378, %v7550, 0.0
      %v7780 = vadd.f32 %v7778, %v7779
      %v7781 = vsel %vm378, %v7567, 0.0
      %v7782 = vadd.f32 %v7780, %v7781
      %v7783 = vsel %vm378, %v7584, 0.0
      %v7784 = vadd.f32 %v7782, %v7783
      %v7785 = vsel %vm378, %v7601, 0.0
      %v7786 = vadd.f32 %v7784, %v7785
      %v7787 = vsel %vm378, %v7618, 0.0
      %v7788 = vadd.f32 %v7786, %v7787
      %v7789 = vsel %vm378, %v7635, 0.0
      %v7790 = vadd.f32 %v7788, %v7789
      %v7791 = vsel %vm378, %v7652, 0.0
      %v7792 = vadd.f32 %v7790, %v7791
      %v7793 = vsel %vm378, %v7669, 0.0
      %v7794 = vadd.f32 %v7792, %v7793
      %v7795 = vsel %vm378, %v7686, 0.0
      %v7796 = vadd.f32 %v7794, %v7795
      %v7797 = vsel %vm378, %v7703, 0.0
      %v7798 = vadd.f32 %v7796, %v7797
      %v7799 = vrot.slane %v7798, 4
      %v7800 = vadd.f32 %v7798, %v7799
      %v7801 = vrot.slane %v7800, 2
      %v7802 = vadd.f32 %v7800, %v7801
      %v7803 = vrot.slane %v7802, 1
      %v7804 = vadd.f32 %v7802, %v7803
      %7805 = vst.msk [vmem:[%s235 + $0x1] sm:$0x1] %vm388, %v7804
      %p7806 = scmp.lt.s32.totalorder %s17, 1
      %s7807 = scalar_select %p7806, %s17, 1
      %s7808 = smul.addr %s7807, 32
      %s7809 = smul.addr %s7808, 8
      %s7810 = scalar_lea.vmem %s4, %s7809
      %p7811 = scmp.lt.s32.totalorder %s17, 1
      %s7812 = scalar_select %p7811, %s17, 1
      %s7813 = smul.addr %s7812, 2
      %s7814 = scalar_lea.vmem %s5, %s7813
      // Predicated region
      $region37: #{bottleneck_forward.5} parent=35 // pred_check
        %p7815 = pneg %p124
      $region38: #{bottleneck_forward.5} parent=35 // pred_check_branch
        %7817 = sbr.rel (%p7815) target = $region40
      $region39: #{bottleneck_forward.5} parent=35 // pred_region
        _
      $region40: #{bottleneck_forward.5} parent=35 // pred_fallthru
        _
      // Predicated region
      $region41: #{bottleneck_forward.5} parent=35 // pred_check
        %p7818 = pneg %p150
      $region42: #{bottleneck_forward.5} parent=35 // pred_check_branch
        %7820 = sbr.rel (%p7818) target = $region44
      $region43: #{bottleneck_forward.5} parent=35 // pred_region
        _
      $region44: #{bottleneck_forward.5} parent=35 // pred_fallthru
        _
    $region36: #{bottleneck_forward.5} parent=5 // pred_fallthru
      _
    %p7821 = scmp.le.s32.totalorder 2, %s12
    // Predicated region
    $region45: #{bottleneck_forward.5} parent=5 // pred_check
      %p7822 = pneg %p7821
    $region46: #{bottleneck_forward.5} parent=5 // pred_check_branch
      %7824 = sbr.rel (%p7822) target = $region48
    $region47: #{bottleneck_forward.5} parent=5 // pred_region
      %s7825 = ssub.s32 %s12, 2
      // Predicated region
      $region49: #{bottleneck_forward.5} parent=47 // pred_check
        %p7826 = pneg %p130
      $region50: #{bottleneck_forward.5} parent=47 // pred_check_branch
        %7828 = sbr.rel (%p7826) target = $region52
      $region51: #{bottleneck_forward.5} parent=47 // pred_region
        %p7829 = scmp.lt.s32.totalorder %s18, 1
        %s7830 = scalar_select %p7829, %s18, 1
        %s7831 = smul.addr %s7830, 32
        %s7832 = smul.addr %s7831, 8
        %s7833 = scalar_lea.vmem %s4, %s7832
      $region52: #{bottleneck_forward.5} parent=47 // pred_fallthru
        _
      // Predicated region
      $region53: #{bottleneck_forward.5} parent=47 // pred_check
        %p7834 = pneg %p156
      $region54: #{bottleneck_forward.5} parent=47 // pred_check_branch
        %7836 = sbr.rel (%p7834) target = $region56
      $region55: #{bottleneck_forward.5} parent=47 // pred_region
        %p7837 = scmp.lt.s32.totalorder %s18, 1
        %s7838 = scalar_select %p7837, %s18, 1
        %s7839 = smul.addr %s7838, 2
        %s7840 = scalar_lea.vmem %s5, %s7839
      $region56: #{bottleneck_forward.5} parent=47 // pred_fallthru
        _
    $region48: #{bottleneck_forward.5} parent=5 // pred_fallthru
      _
  $region6: #{bottleneck_forward.5} parent=0 // loop_footer
    %s16 = sadd.s32 1, %s12
  $region7: #{bottleneck_forward.5} parent=0 // loop_footer_branch
    %11 = sbr.rel target = $region3
  $region8: #{bottleneck_forward.5} parent=0 // loop_exit
    _

</llo_original>
